<compile_context>
chip_gen: v6e
topology: v6e:2x2x1
jax: 0.10.0
libtpu: 0.0.40
codegen_flags: <defaults>
</compile_context>

<pallas_src>
import math

import jax
import jax.numpy as jnp
from jax.experimental import pallas as pl
from jax.experimental.pallas import tpu as pltpu

# ---- problem sizes (small, consistent with the module's forward) -----------
N_LAYERS = 2
D_MODEL = 32
N_HEADS = 4
D_HEAD = D_MODEL // N_HEADS
D_FF = 64
T_TGT = 8      # target (decoder) sequence length
S_SRC = 16     # memory (encoder) sequence length
BATCH = 2
EPS = 1e-6
SCALE = 1.0 / math.sqrt(D_HEAD)

LAYER_PARAM_NAMES = (
    "ln_a", "ln_b",
    "sa_wqkv", "sa_bqkv", "sa_wo", "sa_bo",
    "ca_wq", "ca_bq", "ca_wkv", "ca_bkv", "ca_wo", "ca_bo",
    "ff_w1", "ff_b1", "ff_w2", "ff_b2",
)


# ---- fused Pallas kernel -----------------------------------------------------
def decoder_kernel(x_ref, mem_ref, tadd_ref, sadd_ref,
                   ln_a_ref, ln_b_ref,
                   sa_wqkv_ref, sa_bqkv_ref, sa_wo_ref, sa_bo_ref,
                   ca_wq_ref, ca_bq_ref, ca_wkv_ref, ca_bkv_ref, ca_wo_ref, ca_bo_ref,
                   ff_w1_ref, ff_b1_ref, ff_w2_ref, ff_b2_ref,
                   fina_ref, finb_ref, out_ref):
    D = D_MODEL
    x = x_ref[...]          # (B*T, D)
    mem = mem_ref[...]      # (B*S, D)
    tadd = tadd_ref[...]    # (B*T, T)   additive mask (0 / -1e9)
    sadd = sadd_ref[...]    # (B, S)     additive mask (0 / -1e9)

    # per-example masks, hoisted out of the layer loop
    tgt_masks = [tadd[b * T_TGT:(b + 1) * T_TGT, :] for b in range(BATCH)]   # (T, T)
    src_masks = [sadd[b:b + 1, :] for b in range(BATCH)]                     # (1, S)

    def layer_norm(z, a, b):
        mean = jnp.mean(z, axis=-1, keepdims=True)
        c = z - mean
        var = jnp.sum(c * c, axis=-1, keepdims=True) * (1.0 / (D - 1))
        inv = pl.reciprocal(jnp.sqrt(var) + EPS, approx=True)
        return a * (c * inv) + b

    def softmax_last(s):
        m = jnp.max(s, axis=-1, keepdims=True)
        e = jnp.exp(s - m)
        r = pl.reciprocal(jnp.sum(e, axis=-1, keepdims=True), approx=True)
        return e * r

    def attention(q, k, v, wo, bo, masks, kv_rows):
        # q: (B*T, D); k, v: (B*kv_rows, D); masks[b] broadcastable to (T, kv_rows)
        ctx_rows = []
        for b in range(BATCH):
            qb = q[b * T_TGT:(b + 1) * T_TGT, :]
            kb = k[b * kv_rows:(b + 1) * kv_rows, :]
            vb = v[b * kv_rows:(b + 1) * kv_rows, :]
            amask = masks[b]
            heads = []
            for h in range(N_HEADS):
                lo, hi = h * D_HEAD, (h + 1) * D_HEAD
                qh = qb[:, lo:hi]
                kh = kb[:, lo:hi]
                vh = vb[:, lo:hi]
                s = jax.lax.dot_general(qh, kh, (((1,), (1,)), ((), ())),
                                        preferred_element_type=jnp.float32)
                s = s * SCALE + amask
                p = softmax_last(s)
                heads.append(jnp.dot(p, vh, preferred_element_type=jnp.float32))
            ctx_rows.append(jnp.concatenate(heads, axis=-1))    # (T, D), head-major
        ctx = jnp.concatenate(ctx_rows, axis=0)                 # (B*T, D)
        return jnp.dot(ctx, wo, preferred_element_type=jnp.float32) + bo

    for layer in range(N_LAYERS):
        lna = ln_a_ref[layer]     # (3, D)
        lnb = ln_b_ref[layer]     # (3, D)

        # ---- sublayer 1: masked self-attention (pre-norm + residual) ----
        h1 = layer_norm(x, lna[0:1], lnb[0:1])
        qkv = jnp.dot(h1, sa_wqkv_ref[layer],
                      preferred_element_type=jnp.float32) + sa_bqkv_ref[layer]
        q = qkv[:, 0:D]
        k = qkv[:, D:2 * D]
        v = qkv[:, 2 * D:3 * D]
        x = x + attention(q, k, v, sa_wo_ref[layer], sa_bo_ref[layer],
                          tgt_masks, T_TGT)

        # ---- sublayer 2: cross-attention over encoder memory ----
        h2 = layer_norm(x, lna[1:2], lnb[1:2])
        q = jnp.dot(h2, ca_wq_ref[layer],
                    preferred_element_type=jnp.float32) + ca_bq_ref[layer]
        kv = jnp.dot(mem, ca_wkv_ref[layer],
                     preferred_element_type=jnp.float32) + ca_bkv_ref[layer]
        k = kv[:, 0:D]
        v = kv[:, D:2 * D]
        x = x + attention(q, k, v, ca_wo_ref[layer], ca_bo_ref[layer],
                          src_masks, S_SRC)

        # ---- sublayer 3: position-wise feed-forward ----
        h3 = layer_norm(x, lna[2:3], lnb[2:3])
        a1 = jnp.maximum(jnp.dot(h3, ff_w1_ref[layer],
                                 preferred_element_type=jnp.float32) + ff_b1_ref[layer],
                         0.0)
        x = x + jnp.dot(a1, ff_w2_ref[layer],
                        preferred_element_type=jnp.float32) + ff_b2_ref[layer]

    # ---- final custom LayerNorm, single store of the whole (B*T, D) block ----
    out_ref[...] = layer_norm(x, fina_ref[...], finb_ref[...])


# ---- wrapper -----------------------------------------------------------------
def decoder_forward(x, memory, tgt_mask, src_mask, layer_params, final_a, final_b):
    B, T, D = x.shape
    S = memory.shape[1]
    assert (B, T, D, S) == (BATCH, T_TGT, D_MODEL, S_SRC)
    assert len(layer_params) == N_LAYERS

    # stack per-layer params along a leading layer axis (loaded once, sliced in-kernel)
    stacked = [jnp.stack([p[name] for p in layer_params], axis=0)
               for name in LAYER_PARAM_NAMES]

    # fold batch into rows; precompute additive masks on the host
    x2d = x.reshape(B * T, D)
    mem2d = memory.reshape(B * S, D)
    tadd = jnp.where(tgt_mask == 0.0, -1e9, 0.0).astype(jnp.float32).reshape(B * T, T)
    sadd = jnp.where(src_mask == 0.0, -1e9, 0.0).astype(jnp.float32).reshape(B, S)

    inputs = [x2d, mem2d, tadd, sadd] + stacked + [final_a, final_b]

    out2d = pl.pallas_call(
        decoder_kernel,
        out_shape=jax.ShapeDtypeStruct((B * T, D), jnp.float32),
        in_specs=[pl.BlockSpec(memory_space=pltpu.MemorySpace.VMEM) for _ in inputs],
        out_specs=pl.BlockSpec(memory_space=pltpu.MemorySpace.VMEM),
        compiler_params=pltpu.CompilerParams(vmem_limit_bytes=16 * 1024 * 1024),
    )(*inputs)
    return out2d.reshape(B, T, D)


# ---- pure-JAX reference (torch-equivalent math, exact divisions) -------------
def _layer_norm_ref(x, a, b):
    d = x.shape[-1]
    mean = jnp.mean(x, axis=-1, keepdims=True)
    var = jnp.sum((x - mean) ** 2, axis=-1, keepdims=True) / (d - 1)
    return a * (x - mean) / (jnp.sqrt(var) + EPS) + b


def _mha_ref(q_in, kv_in, mask, wq, bq, wk, bk, wv, bv, wo, bo):
    tq, tk = q_in.shape[0], kv_in.shape[0]
    q = (q_in @ wq + bq).reshape(tq, N_HEADS, D_HEAD).transpose(1, 0, 2)
    k = (kv_in @ wk + bk).reshape(tk, N_HEADS, D_HEAD).transpose(1, 0, 2)
    v = (kv_in @ wv + bv).reshape(tk, N_HEADS, D_HEAD).transpose(1, 0, 2)
    scores = jnp.einsum("hqd,hkd->hqk", q, k) / math.sqrt(D_HEAD)
    scores = jnp.where(mask[None, ...] == 0.0, -1e9, scores)
    p = jax.nn.softmax(scores, axis=-1)
    ctx = jnp.einsum("hqk,hkd->hqd", p, v).transpose(1, 0, 2).reshape(tq, D_MODEL)
    return ctx @ wo + bo


def _decoder_layer_ref(x, mem, tgt_mask, src_mask, p):
    D = D_MODEL
    h = _layer_norm_ref(x, p["ln_a"][0], p["ln_b"][0])
    wqkv, bqkv = p["sa_wqkv"], p["sa_bqkv"][0]
    x = x + _mha_ref(h, h, tgt_mask,
                     wqkv[:, :D], bqkv[:D], wqkv[:, D:2 * D], bqkv[D:2 * D],
                     wqkv[:, 2 * D:], bqkv[2 * D:], p["sa_wo"], p["sa_bo"][0])
    h = _layer_norm_ref(x, p["ln_a"][1], p["ln_b"][1])
    wkv, bkv = p["ca_wkv"], p["ca_bkv"][0]
    x = x + _mha_ref(h, mem, src_mask,
                     p["ca_wq"], p["ca_bq"][0], wkv[:, :D], bkv[:D],
                     wkv[:, D:], bkv[D:], p["ca_wo"], p["ca_bo"][0])
    h = _layer_norm_ref(x, p["ln_a"][2], p["ln_b"][2])
    ff = jnp.maximum(h @ p["ff_w1"] + p["ff_b1"][0], 0.0)
    return x + ff @ p["ff_w2"] + p["ff_b2"][0]


def decoder_ref(x, memory, tgt_mask, src_mask, layer_params, final_a, final_b):
    def per_example(xe, me, tm, sm):
        for p in layer_params:
            xe = _decoder_layer_ref(xe, me, tm, sm, p)
        return _layer_norm_ref(xe, final_a[0], final_b[0])
    return jax.vmap(per_example)(x, memory, tgt_mask, src_mask)


# ---- deterministic parameter init --------------------------------------------
def init_layer_params(key):
    ks = jax.random.split(key, 14)
    s = 0.1
    D, Dff = D_MODEL, D_FF
    return {
        "ln_a": jnp.ones((3, D), jnp.float32),       # torch init: ones
        "ln_b": jnp.zeros((3, D), jnp.float32),      # torch init: zeros
        "sa_wqkv": s * jax.random.normal(ks[0], (D, 3 * D), jnp.float32),
        "sa_bqkv": s * jax.random.normal(ks[1], (1, 3 * D), jnp.float32),
        "sa_wo":   s * jax.random.normal(ks[2], (D, D), jnp.float32),
        "sa_bo":   s * jax.random.normal(ks[3], (1, D), jnp.float32),
        "ca_wq":   s * jax.random.normal(ks[4], (D, D), jnp.float32),
        "ca_bq":   s * jax.random.normal(ks[5], (1, D), jnp.float32),
        "ca_wkv":  s * jax.random.normal(ks[6], (D, 2 * D), jnp.float32),
        "ca_bkv":  s * jax.random.normal(ks[7], (1, 2 * D), jnp.float32),
        "ca_wo":   s * jax.random.normal(ks[8], (D, D), jnp.float32),
        "ca_bo":   s * jax.random.normal(ks[9], (1, D), jnp.float32),
        "ff_w1":   s * jax.random.normal(ks[10], (D, Dff), jnp.float32),
        "ff_b1":   s * jax.random.normal(ks[11], (1, Dff), jnp.float32),
        "ff_w2":   s * jax.random.normal(ks[12], (Dff, D), jnp.float32),
        "ff_b2":   s * jax.random.normal(ks[13], (1, D), jnp.float32),
    }


if __name__ == "__main__":
    key = jax.random.PRNGKey(0)
    keys = jax.random.split(key, 2 + N_LAYERS)
    k_x, k_m, k_layers = keys[0], keys[1], keys[2:]

    x = jax.random.normal(k_x, (BATCH, T_TGT, D_MODEL), jnp.float32)
    memory = jax.random.normal(k_m, (BATCH, S_SRC, D_MODEL), jnp.float32)
    # causal target mask, full source mask (1 = keep, 0 = masked)
    tgt_mask = jnp.broadcast_to(
        jnp.tril(jnp.ones((T_TGT, T_TGT), jnp.float32)), (BATCH, T_TGT, T_TGT))
    src_mask = jnp.ones((BATCH, 1, S_SRC), jnp.float32)

    layer_params = [init_layer_params(k) for k in k_layers]
    final_a = jnp.ones((1, D_MODEL), jnp.float32)
    final_b = jnp.zeros((1, D_MODEL), jnp.float32)

    out = decoder_forward(x, memory, tgt_mask, src_mask, layer_params, final_a, final_b)
    out = jax.block_until_ready(out)
    assert out.shape == (BATCH, T_TGT, D_MODEL)

    ref = decoder_ref(x, memory, tgt_mask, src_mask, layer_params, final_a, final_b)
    max_err = float(jnp.max(jnp.abs(out - ref)))
    assert jnp.allclose(out, ref, atol=2e-2, rtol=2e-2), f"max_err={max_err}"

    print("KERNEL_OK")
</pallas_src>

<mosaic_0001>
module attributes {stable_mosaic.version = 11 : i64} {
  func.func @decoder_kernel(%arg0: memref<16x32xf32, #tpu.memory_space<vmem>>, %arg1: memref<32x32xf32, #tpu.memory_space<vmem>>, %arg2: memref<16x8xf32, #tpu.memory_space<vmem>>, %arg3: memref<2x16xf32, #tpu.memory_space<vmem>>, %arg4: memref<2x3x32xf32, #tpu.memory_space<vmem>>, %arg5: memref<2x3x32xf32, #tpu.memory_space<vmem>>, %arg6: memref<2x32x96xf32, #tpu.memory_space<vmem>>, %arg7: memref<2x1x96xf32, #tpu.memory_space<vmem>>, %arg8: memref<2x32x32xf32, #tpu.memory_space<vmem>>, %arg9: memref<2x1x32xf32, #tpu.memory_space<vmem>>, %arg10: memref<2x32x32xf32, #tpu.memory_space<vmem>>, %arg11: memref<2x1x32xf32, #tpu.memory_space<vmem>>, %arg12: memref<2x32x64xf32, #tpu.memory_space<vmem>>, %arg13: memref<2x1x64xf32, #tpu.memory_space<vmem>>, %arg14: memref<2x32x32xf32, #tpu.memory_space<vmem>>, %arg15: memref<2x1x32xf32, #tpu.memory_space<vmem>>, %arg16: memref<2x32x64xf32, #tpu.memory_space<vmem>>, %arg17: memref<2x1x64xf32, #tpu.memory_space<vmem>>, %arg18: memref<2x64x32xf32, #tpu.memory_space<vmem>>, %arg19: memref<2x1x32xf32, #tpu.memory_space<vmem>>, %arg20: memref<1x32xf32, #tpu.memory_space<vmem>>, %arg21: memref<1x32xf32, #tpu.memory_space<vmem>>, %arg22: memref<16x32xf32, #tpu.memory_space<vmem>>) attributes {dimension_semantics = [], scalar_prefetch = 0 : i64, scratch_operands = 0 : i64, tpu.core_type = #tpu.core_type<tc>} {
    %c0 = arith.constant 0 : index
    %c0_0 = arith.constant 0 : index
    %0 = vector.load %arg0[%c0, %c0_0] : memref<16x32xf32, #tpu.memory_space<vmem>>, vector<16x32xf32>
    %c0_1 = arith.constant 0 : index
    %c0_2 = arith.constant 0 : index
    %1 = vector.load %arg1[%c0_1, %c0_2] : memref<32x32xf32, #tpu.memory_space<vmem>>, vector<32x32xf32>
    %c0_3 = arith.constant 0 : index
    %c0_4 = arith.constant 0 : index
    %2 = vector.load %arg2[%c0_3, %c0_4] : memref<16x8xf32, #tpu.memory_space<vmem>>, vector<16x8xf32>
    %c0_5 = arith.constant 0 : index
    %c0_6 = arith.constant 0 : index
    %3 = vector.load %arg3[%c0_5, %c0_6] : memref<2x16xf32, #tpu.memory_space<vmem>>, vector<2x16xf32>
    %4 = vector.extract_strided_slice %2 {offsets = [0, 0], sizes = [8, 8], strides = [1, 1]} : vector<16x8xf32> to vector<8x8xf32>
    %5 = vector.extract_strided_slice %2 {offsets = [8, 0], sizes = [8, 8], strides = [1, 1]} : vector<16x8xf32> to vector<8x8xf32>
    %6 = vector.extract_strided_slice %3 {offsets = [0, 0], sizes = [1, 16], strides = [1, 1]} : vector<2x16xf32> to vector<1x16xf32>
    %7 = vector.extract_strided_slice %3 {offsets = [1, 0], sizes = [1, 16], strides = [1, 1]} : vector<2x16xf32> to vector<1x16xf32>
    %c0_7 = arith.constant 0 : index
    %c0_8 = arith.constant 0 : index
    %c0_9 = arith.constant 0 : index
    %8 = vector.load %arg4[%c0_7, %c0_8, %c0_9] : memref<2x3x32xf32, #tpu.memory_space<vmem>>, vector<1x3x32xf32>
    %9 = vector.shape_cast %8 : vector<1x3x32xf32> to vector<3x32xf32>
    %c0_10 = arith.constant 0 : index
    %c0_11 = arith.constant 0 : index
    %c0_12 = arith.constant 0 : index
    %10 = vector.load %arg5[%c0_10, %c0_11, %c0_12] : memref<2x3x32xf32, #tpu.memory_space<vmem>>, vector<1x3x32xf32>
    %11 = vector.shape_cast %10 : vector<1x3x32xf32> to vector<3x32xf32>
    %12 = vector.extract_strided_slice %9 {offsets = [0, 0], sizes = [1, 32], strides = [1, 1]} : vector<3x32xf32> to vector<1x32xf32>
    %13 = vector.extract_strided_slice %11 {offsets = [0, 0], sizes = [1, 32], strides = [1, 1]} : vector<3x32xf32> to vector<1x32xf32>
    %cst = arith.constant dense<0.000000e+00> : vector<16xf32>
    %14 = vector.multi_reduction <add>, %0, %cst [1] : vector<16x32xf32> to vector<16xf32>
    %15 = vector.shape_cast %14 : vector<16xf32> to vector<16x1xf32>
    %cst_13 = arith.constant 3.200000e+01 : f32
    %16 = vector.broadcast %cst_13 : f32 to vector<16x1xf32>
    %17 = arith.divf %15, %16 : vector<16x1xf32>
    %18 = vector.broadcast %17 : vector<16x1xf32> to vector<16x32xf32>
    %19 = arith.subf %0, %18 : vector<16x32xf32>
    %20 = arith.mulf %19, %19 : vector<16x32xf32>
    %cst_14 = arith.constant dense<0.000000e+00> : vector<16xf32>
    %21 = vector.multi_reduction <add>, %20, %cst_14 [1] : vector<16x32xf32> to vector<16xf32>
    %22 = vector.shape_cast %21 : vector<16xf32> to vector<16x1xf32>
    %cst_15 = arith.constant 0.0322580636 : f32
    %23 = vector.broadcast %cst_15 : f32 to vector<16x1xf32>
    %24 = arith.mulf %22, %23 : vector<16x1xf32>
    %25 = math.sqrt %24 : vector<16x1xf32>
    %cst_16 = arith.constant 9.99999997E-7 : f32
    %26 = vector.broadcast %cst_16 : f32 to vector<16x1xf32>
    %27 = arith.addf %25, %26 : vector<16x1xf32>
    %28 = tpu.reciprocal %27 {approx = true} : vector<16x1xf32> -> vector<16x1xf32>
    %29 = vector.broadcast %28 : vector<16x1xf32> to vector<16x32xf32>
    %30 = arith.mulf %19, %29 : vector<16x32xf32>
    %31 = vector.broadcast %12 : vector<1x32xf32> to vector<16x32xf32>
    %32 = arith.mulf %31, %30 : vector<16x32xf32>
    %33 = vector.broadcast %13 : vector<1x32xf32> to vector<16x32xf32>
    %34 = arith.addf %32, %33 : vector<16x32xf32>
    %c0_17 = arith.constant 0 : index
    %c0_18 = arith.constant 0 : index
    %c0_19 = arith.constant 0 : index
    %35 = vector.load %arg6[%c0_17, %c0_18, %c0_19] : memref<2x32x96xf32, #tpu.memory_space<vmem>>, vector<1x32x96xf32>
    %36 = vector.shape_cast %35 : vector<1x32x96xf32> to vector<32x96xf32>
    %cst_20 = arith.constant dense<0.000000e+00> : vector<16x96xf32>
    %37 = tpu.matmul %34, %36, %cst_20 {dimension_numbers = #tpu.dot_dimension_numbers<[1], [0], [0], [1], [0, 0, 1, 1], [], []>} : vector<16x32xf32>, vector<32x96xf32>, vector<16x96xf32> -> vector<16x96xf32>
    %c0_21 = arith.constant 0 : index
    %c0_22 = arith.constant 0 : index
    %c0_23 = arith.constant 0 : index
    %38 = vector.load %arg7[%c0_21, %c0_22, %c0_23] : memref<2x1x96xf32, #tpu.memory_space<vmem>>, vector<1x1x96xf32>
    %39 = vector.shape_cast %38 : vector<1x1x96xf32> to vector<1x96xf32>
    %40 = vector.broadcast %39 : vector<1x96xf32> to vector<16x96xf32>
    %41 = arith.addf %37, %40 : vector<16x96xf32>
    %42 = vector.extract_strided_slice %41 {offsets = [0, 0], sizes = [16, 32], strides = [1, 1]} : vector<16x96xf32> to vector<16x32xf32>
    %43 = vector.extract_strided_slice %41 {offsets = [0, 32], sizes = [16, 32], strides = [1, 1]} : vector<16x96xf32> to vector<16x32xf32>
    %44 = vector.extract_strided_slice %41 {offsets = [0, 64], sizes = [16, 32], strides = [1, 1]} : vector<16x96xf32> to vector<16x32xf32>
    %c0_24 = arith.constant 0 : index
    %c0_25 = arith.constant 0 : index
    %c0_26 = arith.constant 0 : index
    %45 = vector.load %arg8[%c0_24, %c0_25, %c0_26] : memref<2x32x32xf32, #tpu.memory_space<vmem>>, vector<1x32x32xf32>
    %46 = vector.shape_cast %45 : vector<1x32x32xf32> to vector<32x32xf32>
    %c0_27 = arith.constant 0 : index
    %c0_28 = arith.constant 0 : index
    %c0_29 = arith.constant 0 : index
    %47 = vector.load %arg9[%c0_27, %c0_28, %c0_29] : memref<2x1x32xf32, #tpu.memory_space<vmem>>, vector<1x1x32xf32>
    %48 = vector.shape_cast %47 : vector<1x1x32xf32> to vector<1x32xf32>
    %49 = vector.extract_strided_slice %42 {offsets = [0, 0], sizes = [8, 32], strides = [1, 1]} : vector<16x32xf32> to vector<8x32xf32>
    %50 = vector.extract_strided_slice %43 {offsets = [0, 0], sizes = [8, 32], strides = [1, 1]} : vector<16x32xf32> to vector<8x32xf32>
    %51 = vector.extract_strided_slice %44 {offsets = [0, 0], sizes = [8, 32], strides = [1, 1]} : vector<16x32xf32> to vector<8x32xf32>
    %52 = vector.extract_strided_slice %49 {offsets = [0, 0], sizes = [8, 8], strides = [1, 1]} : vector<8x32xf32> to vector<8x8xf32>
    %53 = vector.extract_strided_slice %50 {offsets = [0, 0], sizes = [8, 8], strides = [1, 1]} : vector<8x32xf32> to vector<8x8xf32>
    %54 = vector.extract_strided_slice %51 {offsets = [0, 0], sizes = [8, 8], strides = [1, 1]} : vector<8x32xf32> to vector<8x8xf32>
    %cst_30 = arith.constant dense<0.000000e+00> : vector<8x8xf32>
    %55 = tpu.matmul %52, %53, %cst_30 {dimension_numbers = #tpu.dot_dimension_numbers<[1], [1], [0], [0], [0, 0, 1, 0], [], []>} : vector<8x8xf32>, vector<8x8xf32>, vector<8x8xf32> -> vector<8x8xf32>
    %cst_31 = arith.constant 0.353553385 : f32
    %56 = vector.broadcast %cst_31 : f32 to vector<8x8xf32>
    %57 = arith.mulf %55, %56 : vector<8x8xf32>
    %58 = arith.addf %57, %4 : vector<8x8xf32>
    %cst_32 = arith.constant dense<0xFF800000> : vector<8xf32>
    %59 = vector.multi_reduction <maximumf>, %58, %cst_32 [1] : vector<8x8xf32> to vector<8xf32>
    %60 = vector.shape_cast %59 : vector<8xf32> to vector<8x1xf32>
    %61 = vector.broadcast %60 : vector<8x1xf32> to vector<8x8xf32>
    %62 = arith.subf %58, %61 : vector<8x8xf32>
    %63 = math.exp %62 : vector<8x8xf32>
    %cst_33 = arith.constant dense<0.000000e+00> : vector<8xf32>
    %64 = vector.multi_reduction <add>, %63, %cst_33 [1] : vector<8x8xf32> to vector<8xf32>
    %65 = vector.shape_cast %64 : vector<8xf32> to vector<8x1xf32>
    %66 = tpu.reciprocal %65 {approx = true} : vector<8x1xf32> -> vector<8x1xf32>
    %67 = vector.broadcast %66 : vector<8x1xf32> to vector<8x8xf32>
    %68 = arith.mulf %63, %67 : vector<8x8xf32>
    %cst_34 = arith.constant dense<0.000000e+00> : vector<8x8xf32>
    %69 = tpu.matmul %68, %54, %cst_34 {dimension_numbers = #tpu.dot_dimension_numbers<[1], [0], [0], [1], [0, 0, 1, 1], [], []>} : vector<8x8xf32>, vector<8x8xf32>, vector<8x8xf32> -> vector<8x8xf32>
    %70 = vector.extract_strided_slice %49 {offsets = [0, 8], sizes = [8, 8], strides = [1, 1]} : vector<8x32xf32> to vector<8x8xf32>
    %71 = vector.extract_strided_slice %50 {offsets = [0, 8], sizes = [8, 8], strides = [1, 1]} : vector<8x32xf32> to vector<8x8xf32>
    %72 = vector.extract_strided_slice %51 {offsets = [0, 8], sizes = [8, 8], strides = [1, 1]} : vector<8x32xf32> to vector<8x8xf32>
    %cst_35 = arith.constant dense<0.000000e+00> : vector<8x8xf32>
    %73 = tpu.matmul %70, %71, %cst_35 {dimension_numbers = #tpu.dot_dimension_numbers<[1], [1], [0], [0], [0, 0, 1, 0], [], []>} : vector<8x8xf32>, vector<8x8xf32>, vector<8x8xf32> -> vector<8x8xf32>
    %cst_36 = arith.constant 0.353553385 : f32
    %74 = vector.broadcast %cst_36 : f32 to vector<8x8xf32>
    %75 = arith.mulf %73, %74 : vector<8x8xf32>
    %76 = arith.addf %75, %4 : vector<8x8xf32>
    %cst_37 = arith.constant dense<0xFF800000> : vector<8xf32>
    %77 = vector.multi_reduction <maximumf>, %76, %cst_37 [1] : vector<8x8xf32> to vector<8xf32>
    %78 = vector.shape_cast %77 : vector<8xf32> to vector<8x1xf32>
    %79 = vector.broadcast %78 : vector<8x1xf32> to vector<8x8xf32>
    %80 = arith.subf %76, %79 : vector<8x8xf32>
    %81 = math.exp %80 : vector<8x8xf32>
    %cst_38 = arith.constant dense<0.000000e+00> : vector<8xf32>
    %82 = vector.multi_reduction <add>, %81, %cst_38 [1] : vector<8x8xf32> to vector<8xf32>
    %83 = vector.shape_cast %82 : vector<8xf32> to vector<8x1xf32>
    %84 = tpu.reciprocal %83 {approx = true} : vector<8x1xf32> -> vector<8x1xf32>
    %85 = vector.broadcast %84 : vector<8x1xf32> to vector<8x8xf32>
    %86 = arith.mulf %81, %85 : vector<8x8xf32>
    %cst_39 = arith.constant dense<0.000000e+00> : vector<8x8xf32>
    %87 = tpu.matmul %86, %72, %cst_39 {dimension_numbers = #tpu.dot_dimension_numbers<[1], [0], [0], [1], [0, 0, 1, 1], [], []>} : vector<8x8xf32>, vector<8x8xf32>, vector<8x8xf32> -> vector<8x8xf32>
    %88 = vector.extract_strided_slice %49 {offsets = [0, 16], sizes = [8, 8], strides = [1, 1]} : vector<8x32xf32> to vector<8x8xf32>
    %89 = vector.extract_strided_slice %50 {offsets = [0, 16], sizes = [8, 8], strides = [1, 1]} : vector<8x32xf32> to vector<8x8xf32>
    %90 = vector.extract_strided_slice %51 {offsets = [0, 16], sizes = [8, 8], strides = [1, 1]} : vector<8x32xf32> to vector<8x8xf32>
    %cst_40 = arith.constant dense<0.000000e+00> : vector<8x8xf32>
    %91 = tpu.matmul %88, %89, %cst_40 {dimension_numbers = #tpu.dot_dimension_numbers<[1], [1], [0], [0], [0, 0, 1, 0], [], []>} : vector<8x8xf32>, vector<8x8xf32>, vector<8x8xf32> -> vector<8x8xf32>
    %cst_41 = arith.constant 0.353553385 : f32
    %92 = vector.broadcast %cst_41 : f32 to vector<8x8xf32>
    %93 = arith.mulf %91, %92 : vector<8x8xf32>
    %94 = arith.addf %93, %4 : vector<8x8xf32>
    %cst_42 = arith.constant dense<0xFF800000> : vector<8xf32>
    %95 = vector.multi_reduction <maximumf>, %94, %cst_42 [1] : vector<8x8xf32> to vector<8xf32>
    %96 = vector.shape_cast %95 : vector<8xf32> to vector<8x1xf32>
    %97 = vector.broadcast %96 : vector<8x1xf32> to vector<8x8xf32>
    %98 = arith.subf %94, %97 : vector<8x8xf32>
    %99 = math.exp %98 : vector<8x8xf32>
    %cst_43 = arith.constant dense<0.000000e+00> : vector<8xf32>
    %100 = vector.multi_reduction <add>, %99, %cst_43 [1] : vector<8x8xf32> to vector<8xf32>
    %101 = vector.shape_cast %100 : vector<8xf32> to vector<8x1xf32>
    %102 = tpu.reciprocal %101 {approx = true} : vector<8x1xf32> -> vector<8x1xf32>
    %103 = vector.broadcast %102 : vector<8x1xf32> to vector<8x8xf32>
    %104 = arith.mulf %99, %103 : vector<8x8xf32>
    %cst_44 = arith.constant dense<0.000000e+00> : vector<8x8xf32>
    %105 = tpu.matmul %104, %90, %cst_44 {dimension_numbers = #tpu.dot_dimension_numbers<[1], [0], [0], [1], [0, 0, 1, 1], [], []>} : vector<8x8xf32>, vector<8x8xf32>, vector<8x8xf32> -> vector<8x8xf32>
    %106 = vector.extract_strided_slice %49 {offsets = [0, 24], sizes = [8, 8], strides = [1, 1]} : vector<8x32xf32> to vector<8x8xf32>
    %107 = vector.extract_strided_slice %50 {offsets = [0, 24], sizes = [8, 8], strides = [1, 1]} : vector<8x32xf32> to vector<8x8xf32>
    %108 = vector.extract_strided_slice %51 {offsets = [0, 24], sizes = [8, 8], strides = [1, 1]} : vector<8x32xf32> to vector<8x8xf32>
    %cst_45 = arith.constant dense<0.000000e+00> : vector<8x8xf32>
    %109 = tpu.matmul %106, %107, %cst_45 {dimension_numbers = #tpu.dot_dimension_numbers<[1], [1], [0], [0], [0, 0, 1, 0], [], []>} : vector<8x8xf32>, vector<8x8xf32>, vector<8x8xf32> -> vector<8x8xf32>
    %cst_46 = arith.constant 0.353553385 : f32
    %110 = vector.broadcast %cst_46 : f32 to vector<8x8xf32>
    %111 = arith.mulf %109, %110 : vector<8x8xf32>
    %112 = arith.addf %111, %4 : vector<8x8xf32>
    %cst_47 = arith.constant dense<0xFF800000> : vector<8xf32>
    %113 = vector.multi_reduction <maximumf>, %112, %cst_47 [1] : vector<8x8xf32> to vector<8xf32>
    %114 = vector.shape_cast %113 : vector<8xf32> to vector<8x1xf32>
    %115 = vector.broadcast %114 : vector<8x1xf32> to vector<8x8xf32>
    %116 = arith.subf %112, %115 : vector<8x8xf32>
    %117 = math.exp %116 : vector<8x8xf32>
    %cst_48 = arith.constant dense<0.000000e+00> : vector<8xf32>
    %118 = vector.multi_reduction <add>, %117, %cst_48 [1] : vector<8x8xf32> to vector<8xf32>
    %119 = vector.shape_cast %118 : vector<8xf32> to vector<8x1xf32>
    %120 = tpu.reciprocal %119 {approx = true} : vector<8x1xf32> -> vector<8x1xf32>
    %121 = vector.broadcast %120 : vector<8x1xf32> to vector<8x8xf32>
    %122 = arith.mulf %117, %121 : vector<8x8xf32>
    %cst_49 = arith.constant dense<0.000000e+00> : vector<8x8xf32>
    %123 = tpu.matmul %122, %108, %cst_49 {dimension_numbers = #tpu.dot_dimension_numbers<[1], [0], [0], [1], [0, 0, 1, 1], [], []>} : vector<8x8xf32>, vector<8x8xf32>, vector<8x8xf32> -> vector<8x8xf32>
    %124 = tpu.concatenate %69, %87, %105, %123 in 1 : vector<8x8xf32>, vector<8x8xf32>, vector<8x8xf32>, vector<8x8xf32> -> vector<8x32xf32>
    %125 = vector.extract_strided_slice %42 {offsets = [8, 0], sizes = [8, 32], strides = [1, 1]} : vector<16x32xf32> to vector<8x32xf32>
    %126 = vector.extract_strided_slice %43 {offsets = [8, 0], sizes = [8, 32], strides = [1, 1]} : vector<16x32xf32> to vector<8x32xf32>
    %127 = vector.extract_strided_slice %44 {offsets = [8, 0], sizes = [8, 32], strides = [1, 1]} : vector<16x32xf32> to vector<8x32xf32>
    %128 = vector.extract_strided_slice %125 {offsets = [0, 0], sizes = [8, 8], strides = [1, 1]} : vector<8x32xf32> to vector<8x8xf32>
    %129 = vector.extract_strided_slice %126 {offsets = [0, 0], sizes = [8, 8], strides = [1, 1]} : vector<8x32xf32> to vector<8x8xf32>
    %130 = vector.extract_strided_slice %127 {offsets = [0, 0], sizes = [8, 8], strides = [1, 1]} : vector<8x32xf32> to vector<8x8xf32>
    %cst_50 = arith.constant dense<0.000000e+00> : vector<8x8xf32>
    %131 = tpu.matmul %128, %129, %cst_50 {dimension_numbers = #tpu.dot_dimension_numbers<[1], [1], [0], [0], [0, 0, 1, 0], [], []>} : vector<8x8xf32>, vector<8x8xf32>, vector<8x8xf32> -> vector<8x8xf32>
    %cst_51 = arith.constant 0.353553385 : f32
    %132 = vector.broadcast %cst_51 : f32 to vector<8x8xf32>
    %133 = arith.mulf %131, %132 : vector<8x8xf32>
    %134 = arith.addf %133, %5 : vector<8x8xf32>
    %cst_52 = arith.constant dense<0xFF800000> : vector<8xf32>
    %135 = vector.multi_reduction <maximumf>, %134, %cst_52 [1] : vector<8x8xf32> to vector<8xf32>
    %136 = vector.shape_cast %135 : vector<8xf32> to vector<8x1xf32>
    %137 = vector.broadcast %136 : vector<8x1xf32> to vector<8x8xf32>
    %138 = arith.subf %134, %137 : vector<8x8xf32>
    %139 = math.exp %138 : vector<8x8xf32>
    %cst_53 = arith.constant dense<0.000000e+00> : vector<8xf32>
    %140 = vector.multi_reduction <add>, %139, %cst_53 [1] : vector<8x8xf32> to vector<8xf32>
    %141 = vector.shape_cast %140 : vector<8xf32> to vector<8x1xf32>
    %142 = tpu.reciprocal %141 {approx = true} : vector<8x1xf32> -> vector<8x1xf32>
    %143 = vector.broadcast %142 : vector<8x1xf32> to vector<8x8xf32>
    %144 = arith.mulf %139, %143 : vector<8x8xf32>
    %cst_54 = arith.constant dense<0.000000e+00> : vector<8x8xf32>
    %145 = tpu.matmul %144, %130, %cst_54 {dimension_numbers = #tpu.dot_dimension_numbers<[1], [0], [0], [1], [0, 0, 1, 1], [], []>} : vector<8x8xf32>, vector<8x8xf32>, vector<8x8xf32> -> vector<8x8xf32>
    %146 = vector.extract_strided_slice %125 {offsets = [0, 8], sizes = [8, 8], strides = [1, 1]} : vector<8x32xf32> to vector<8x8xf32>
    %147 = vector.extract_strided_slice %126 {offsets = [0, 8], sizes = [8, 8], strides = [1, 1]} : vector<8x32xf32> to vector<8x8xf32>
    %148 = vector.extract_strided_slice %127 {offsets = [0, 8], sizes = [8, 8], strides = [1, 1]} : vector<8x32xf32> to vector<8x8xf32>
    %cst_55 = arith.constant dense<0.000000e+00> : vector<8x8xf32>
    %149 = tpu.matmul %146, %147, %cst_55 {dimension_numbers = #tpu.dot_dimension_numbers<[1], [1], [0], [0], [0, 0, 1, 0], [], []>} : vector<8x8xf32>, vector<8x8xf32>, vector<8x8xf32> -> vector<8x8xf32>
    %cst_56 = arith.constant 0.353553385 : f32
    %150 = vector.broadcast %cst_56 : f32 to vector<8x8xf32>
    %151 = arith.mulf %149, %150 : vector<8x8xf32>
    %152 = arith.addf %151, %5 : vector<8x8xf32>
    %cst_57 = arith.constant dense<0xFF800000> : vector<8xf32>
    %153 = vector.multi_reduction <maximumf>, %152, %cst_57 [1] : vector<8x8xf32> to vector<8xf32>
    %154 = vector.shape_cast %153 : vector<8xf32> to vector<8x1xf32>
    %155 = vector.broadcast %154 : vector<8x1xf32> to vector<8x8xf32>
    %156 = arith.subf %152, %155 : vector<8x8xf32>
    %157 = math.exp %156 : vector<8x8xf32>
    %cst_58 = arith.constant dense<0.000000e+00> : vector<8xf32>
    %158 = vector.multi_reduction <add>, %157, %cst_58 [1] : vector<8x8xf32> to vector<8xf32>
    %159 = vector.shape_cast %158 : vector<8xf32> to vector<8x1xf32>
    %160 = tpu.reciprocal %159 {approx = true} : vector<8x1xf32> -> vector<8x1xf32>
    %161 = vector.broadcast %160 : vector<8x1xf32> to vector<8x8xf32>
    %162 = arith.mulf %157, %161 : vector<8x8xf32>
    %cst_59 = arith.constant dense<0.000000e+00> : vector<8x8xf32>
    %163 = tpu.matmul %162, %148, %cst_59 {dimension_numbers = #tpu.dot_dimension_numbers<[1], [0], [0], [1], [0, 0, 1, 1], [], []>} : vector<8x8xf32>, vector<8x8xf32>, vector<8x8xf32> -> vector<8x8xf32>
    %164 = vector.extract_strided_slice %125 {offsets = [0, 16], sizes = [8, 8], strides = [1, 1]} : vector<8x32xf32> to vector<8x8xf32>
    %165 = vector.extract_strided_slice %126 {offsets = [0, 16], sizes = [8, 8], strides = [1, 1]} : vector<8x32xf32> to vector<8x8xf32>
    %166 = vector.extract_strided_slice %127 {offsets = [0, 16], sizes = [8, 8], strides = [1, 1]} : vector<8x32xf32> to vector<8x8xf32>
    %cst_60 = arith.constant dense<0.000000e+00> : vector<8x8xf32>
    %167 = tpu.matmul %164, %165, %cst_60 {dimension_numbers = #tpu.dot_dimension_numbers<[1], [1], [0], [0], [0, 0, 1, 0], [], []>} : vector<8x8xf32>, vector<8x8xf32>, vector<8x8xf32> -> vector<8x8xf32>
    %cst_61 = arith.constant 0.353553385 : f32
    %168 = vector.broadcast %cst_61 : f32 to vector<8x8xf32>
    %169 = arith.mulf %167, %168 : vector<8x8xf32>
    %170 = arith.addf %169, %5 : vector<8x8xf32>
    %cst_62 = arith.constant dense<0xFF800000> : vector<8xf32>
    %171 = vector.multi_reduction <maximumf>, %170, %cst_62 [1] : vector<8x8xf32> to vector<8xf32>
    %172 = vector.shape_cast %171 : vector<8xf32> to vector<8x1xf32>
    %173 = vector.broadcast %172 : vector<8x1xf32> to vector<8x8xf32>
    %174 = arith.subf %170, %173 : vector<8x8xf32>
    %175 = math.exp %174 : vector<8x8xf32>
    %cst_63 = arith.constant dense<0.000000e+00> : vector<8xf32>
    %176 = vector.multi_reduction <add>, %175, %cst_63 [1] : vector<8x8xf32> to vector<8xf32>
    %177 = vector.shape_cast %176 : vector<8xf32> to vector<8x1xf32>
    %178 = tpu.reciprocal %177 {approx = true} : vector<8x1xf32> -> vector<8x1xf32>
    %179 = vector.broadcast %178 : vector<8x1xf32> to vector<8x8xf32>
    %180 = arith.mulf %175, %179 : vector<8x8xf32>
    %cst_64 = arith.constant dense<0.000000e+00> : vector<8x8xf32>
    %181 = tpu.matmul %180, %166, %cst_64 {dimension_numbers = #tpu.dot_dimension_numbers<[1], [0], [0], [1], [0, 0, 1, 1], [], []>} : vector<8x8xf32>, vector<8x8xf32>, vector<8x8xf32> -> vector<8x8xf32>
    %182 = vector.extract_strided_slice %125 {offsets = [0, 24], sizes = [8, 8], strides = [1, 1]} : vector<8x32xf32> to vector<8x8xf32>
    %183 = vector.extract_strided_slice %126 {offsets = [0, 24], sizes = [8, 8], strides = [1, 1]} : vector<8x32xf32> to vector<8x8xf32>
    %184 = vector.extract_strided_slice %127 {offsets = [0, 24], sizes = [8, 8], strides = [1, 1]} : vector<8x32xf32> to vector<8x8xf32>
    %cst_65 = arith.constant dense<0.000000e+00> : vector<8x8xf32>
    %185 = tpu.matmul %182, %183, %cst_65 {dimension_numbers = #tpu.dot_dimension_numbers<[1], [1], [0], [0], [0, 0, 1, 0], [], []>} : vector<8x8xf32>, vector<8x8xf32>, vector<8x8xf32> -> vector<8x8xf32>
    %cst_66 = arith.constant 0.353553385 : f32
    %186 = vector.broadcast %cst_66 : f32 to vector<8x8xf32>
    %187 = arith.mulf %185, %186 : vector<8x8xf32>
    %188 = arith.addf %187, %5 : vector<8x8xf32>
    %cst_67 = arith.constant dense<0xFF800000> : vector<8xf32>
    %189 = vector.multi_reduction <maximumf>, %188, %cst_67 [1] : vector<8x8xf32> to vector<8xf32>
    %190 = vector.shape_cast %189 : vector<8xf32> to vector<8x1xf32>
    %191 = vector.broadcast %190 : vector<8x1xf32> to vector<8x8xf32>
    %192 = arith.subf %188, %191 : vector<8x8xf32>
    %193 = math.exp %192 : vector<8x8xf32>
    %cst_68 = arith.constant dense<0.000000e+00> : vector<8xf32>
    %194 = vector.multi_reduction <add>, %193, %cst_68 [1] : vector<8x8xf32> to vector<8xf32>
    %195 = vector.shape_cast %194 : vector<8xf32> to vector<8x1xf32>
    %196 = tpu.reciprocal %195 {approx = true} : vector<8x1xf32> -> vector<8x1xf32>
    %197 = vector.broadcast %196 : vector<8x1xf32> to vector<8x8xf32>
    %198 = arith.mulf %193, %197 : vector<8x8xf32>
    %cst_69 = arith.constant dense<0.000000e+00> : vector<8x8xf32>
    %199 = tpu.matmul %198, %184, %cst_69 {dimension_numbers = #tpu.dot_dimension_numbers<[1], [0], [0], [1], [0, 0, 1, 1], [], []>} : vector<8x8xf32>, vector<8x8xf32>, vector<8x8xf32> -> vector<8x8xf32>
    %200 = tpu.concatenate %145, %163, %181, %199 in 1 : vector<8x8xf32>, vector<8x8xf32>, vector<8x8xf32>, vector<8x8xf32> -> vector<8x32xf32>
    %201 = tpu.concatenate %124, %200 in 0 : vector<8x32xf32>, vector<8x32xf32> -> vector<16x32xf32>
    %cst_70 = arith.constant dense<0.000000e+00> : vector<16x32xf32>
    %202 = tpu.matmul %201, %46, %cst_70 {dimension_numbers = #tpu.dot_dimension_numbers<[1], [0], [0], [1], [0, 0, 1, 1], [], []>} : vector<16x32xf32>, vector<32x32xf32>, vector<16x32xf32> -> vector<16x32xf32>
    %203 = vector.broadcast %48 : vector<1x32xf32> to vector<16x32xf32>
    %204 = arith.addf %202, %203 : vector<16x32xf32>
    %205 = arith.addf %0, %204 : vector<16x32xf32>
    %206 = vector.extract_strided_slice %9 {offsets = [1, 0], sizes = [1, 32], strides = [1, 1]} : vector<3x32xf32> to vector<1x32xf32>
    %207 = vector.extract_strided_slice %11 {offsets = [1, 0], sizes = [1, 32], strides = [1, 1]} : vector<3x32xf32> to vector<1x32xf32>
    %cst_71 = arith.constant dense<0.000000e+00> : vector<16xf32>
    %208 = vector.multi_reduction <add>, %205, %cst_71 [1] : vector<16x32xf32> to vector<16xf32>
    %209 = vector.shape_cast %208 : vector<16xf32> to vector<16x1xf32>
    %cst_72 = arith.constant 3.200000e+01 : f32
    %210 = vector.broadcast %cst_72 : f32 to vector<16x1xf32>
    %211 = arith.divf %209, %210 : vector<16x1xf32>
    %212 = vector.broadcast %211 : vector<16x1xf32> to vector<16x32xf32>
    %213 = arith.subf %205, %212 : vector<16x32xf32>
    %214 = arith.mulf %213, %213 : vector<16x32xf32>
    %cst_73 = arith.constant dense<0.000000e+00> : vector<16xf32>
    %215 = vector.multi_reduction <add>, %214, %cst_73 [1] : vector<16x32xf32> to vector<16xf32>
    %216 = vector.shape_cast %215 : vector<16xf32> to vector<16x1xf32>
    %cst_74 = arith.constant 0.0322580636 : f32
    %217 = vector.broadcast %cst_74 : f32 to vector<16x1xf32>
    %218 = arith.mulf %216, %217 : vector<16x1xf32>
    %219 = math.sqrt %218 : vector<16x1xf32>
    %cst_75 = arith.constant 9.99999997E-7 : f32
    %220 = vector.broadcast %cst_75 : f32 to vector<16x1xf32>
    %221 = arith.addf %219, %220 : vector<16x1xf32>
    %222 = tpu.reciprocal %221 {approx = true} : vector<16x1xf32> -> vector<16x1xf32>
    %223 = vector.broadcast %222 : vector<16x1xf32> to vector<16x32xf32>
    %224 = arith.mulf %213, %223 : vector<16x32xf32>
    %225 = vector.broadcast %206 : vector<1x32xf32> to vector<16x32xf32>
    %226 = arith.mulf %225, %224 : vector<16x32xf32>
    %227 = vector.broadcast %207 : vector<1x32xf32> to vector<16x32xf32>
    %228 = arith.addf %226, %227 : vector<16x32xf32>
    %c0_76 = arith.constant 0 : index
    %c0_77 = arith.constant 0 : index
    %c0_78 = arith.constant 0 : index
    %229 = vector.load %arg10[%c0_76, %c0_77, %c0_78] : memref<2x32x32xf32, #tpu.memory_space<vmem>>, vector<1x32x32xf32>
    %230 = vector.shape_cast %229 : vector<1x32x32xf32> to vector<32x32xf32>
    %cst_79 = arith.constant dense<0.000000e+00> : vector<16x32xf32>
    %231 = tpu.matmul %228, %230, %cst_79 {dimension_numbers = #tpu.dot_dimension_numbers<[1], [0], [0], [1], [0, 0, 1, 1], [], []>} : vector<16x32xf32>, vector<32x32xf32>, vector<16x32xf32> -> vector<16x32xf32>
    %c0_80 = arith.constant 0 : index
    %c0_81 = arith.constant 0 : index
    %c0_82 = arith.constant 0 : index
    %232 = vector.load %arg11[%c0_80, %c0_81, %c0_82] : memref<2x1x32xf32, #tpu.memory_space<vmem>>, vector<1x1x32xf32>
    %233 = vector.shape_cast %232 : vector<1x1x32xf32> to vector<1x32xf32>
    %234 = vector.broadcast %233 : vector<1x32xf32> to vector<16x32xf32>
    %235 = arith.addf %231, %234 : vector<16x32xf32>
    %c0_83 = arith.constant 0 : index
    %c0_84 = arith.constant 0 : index
    %c0_85 = arith.constant 0 : index
    %236 = vector.load %arg12[%c0_83, %c0_84, %c0_85] : memref<2x32x64xf32, #tpu.memory_space<vmem>>, vector<1x32x64xf32>
    %237 = vector.shape_cast %236 : vector<1x32x64xf32> to vector<32x64xf32>
    %cst_86 = arith.constant dense<0.000000e+00> : vector<32x64xf32>
    %238 = tpu.matmul %1, %237, %cst_86 {dimension_numbers = #tpu.dot_dimension_numbers<[1], [0], [0], [1], [0, 0, 1, 1], [], []>} : vector<32x32xf32>, vector<32x64xf32>, vector<32x64xf32> -> vector<32x64xf32>
    %c0_87 = arith.constant 0 : index
    %c0_88 = arith.constant 0 : index
    %c0_89 = arith.constant 0 : index
    %239 = vector.load %arg13[%c0_87, %c0_88, %c0_89] : memref<2x1x64xf32, #tpu.memory_space<vmem>>, vector<1x1x64xf32>
    %240 = vector.shape_cast %239 : vector<1x1x64xf32> to vector<1x64xf32>
    %241 = vector.broadcast %240 : vector<1x64xf32> to vector<32x64xf32>
    %242 = arith.addf %238, %241 : vector<32x64xf32>
    %243 = vector.extract_strided_slice %242 {offsets = [0, 0], sizes = [32, 32], strides = [1, 1]} : vector<32x64xf32> to vector<32x32xf32>
    %244 = vector.extract_strided_slice %242 {offsets = [0, 32], sizes = [32, 32], strides = [1, 1]} : vector<32x64xf32> to vector<32x32xf32>
    %c0_90 = arith.constant 0 : index
    %c0_91 = arith.constant 0 : index
    %c0_92 = arith.constant 0 : index
    %245 = vector.load %arg14[%c0_90, %c0_91, %c0_92] : memref<2x32x32xf32, #tpu.memory_space<vmem>>, vector<1x32x32xf32>
    %246 = vector.shape_cast %245 : vector<1x32x32xf32> to vector<32x32xf32>
    %c0_93 = arith.constant 0 : index
    %c0_94 = arith.constant 0 : index
    %c0_95 = arith.constant 0 : index
    %247 = vector.load %arg15[%c0_93, %c0_94, %c0_95] : memref<2x1x32xf32, #tpu.memory_space<vmem>>, vector<1x1x32xf32>
    %248 = vector.shape_cast %247 : vector<1x1x32xf32> to vector<1x32xf32>
    %249 = vector.extract_strided_slice %235 {offsets = [0, 0], sizes = [8, 32], strides = [1, 1]} : vector<16x32xf32> to vector<8x32xf32>
    %250 = vector.extract_strided_slice %243 {offsets = [0, 0], sizes = [16, 32], strides = [1, 1]} : vector<32x32xf32> to vector<16x32xf32>
    %251 = vector.extract_strided_slice %244 {offsets = [0, 0], sizes = [16, 32], strides = [1, 1]} : vector<32x32xf32> to vector<16x32xf32>
    %252 = vector.extract_strided_slice %249 {offsets = [0, 0], sizes = [8, 8], strides = [1, 1]} : vector<8x32xf32> to vector<8x8xf32>
    %253 = vector.extract_strided_slice %250 {offsets = [0, 0], sizes = [16, 8], strides = [1, 1]} : vector<16x32xf32> to vector<16x8xf32>
    %254 = vector.extract_strided_slice %251 {offsets = [0, 0], sizes = [16, 8], strides = [1, 1]} : vector<16x32xf32> to vector<16x8xf32>
    %cst_96 = arith.constant dense<0.000000e+00> : vector<8x16xf32>
    %255 = tpu.matmul %252, %253, %cst_96 {dimension_numbers = #tpu.dot_dimension_numbers<[1], [1], [0], [0], [0, 0, 1, 0], [], []>} : vector<8x8xf32>, vector<16x8xf32>, vector<8x16xf32> -> vector<8x16xf32>
    %cst_97 = arith.constant 0.353553385 : f32
    %256 = vector.broadcast %cst_97 : f32 to vector<8x16xf32>
    %257 = arith.mulf %255, %256 : vector<8x16xf32>
    %258 = vector.broadcast %6 : vector<1x16xf32> to vector<8x16xf32>
    %259 = arith.addf %257, %258 : vector<8x16xf32>
    %cst_98 = arith.constant dense<0xFF800000> : vector<8xf32>
    %260 = vector.multi_reduction <maximumf>, %259, %cst_98 [1] : vector<8x16xf32> to vector<8xf32>
    %261 = vector.shape_cast %260 : vector<8xf32> to vector<8x1xf32>
    %262 = vector.broadcast %261 : vector<8x1xf32> to vector<8x16xf32>
    %263 = arith.subf %259, %262 : vector<8x16xf32>
    %264 = math.exp %263 : vector<8x16xf32>
    %cst_99 = arith.constant dense<0.000000e+00> : vector<8xf32>
    %265 = vector.multi_reduction <add>, %264, %cst_99 [1] : vector<8x16xf32> to vector<8xf32>
    %266 = vector.shape_cast %265 : vector<8xf32> to vector<8x1xf32>
    %267 = tpu.reciprocal %266 {approx = true} : vector<8x1xf32> -> vector<8x1xf32>
    %268 = vector.broadcast %267 : vector<8x1xf32> to vector<8x16xf32>
    %269 = arith.mulf %264, %268 : vector<8x16xf32>
    %cst_100 = arith.constant dense<0.000000e+00> : vector<8x8xf32>
    %270 = tpu.matmul %269, %254, %cst_100 {dimension_numbers = #tpu.dot_dimension_numbers<[1], [0], [0], [1], [0, 0, 1, 1], [], []>} : vector<8x16xf32>, vector<16x8xf32>, vector<8x8xf32> -> vector<8x8xf32>
    %271 = vector.extract_strided_slice %249 {offsets = [0, 8], sizes = [8, 8], strides = [1, 1]} : vector<8x32xf32> to vector<8x8xf32>
    %272 = vector.extract_strided_slice %250 {offsets = [0, 8], sizes = [16, 8], strides = [1, 1]} : vector<16x32xf32> to vector<16x8xf32>
    %273 = vector.extract_strided_slice %251 {offsets = [0, 8], sizes = [16, 8], strides = [1, 1]} : vector<16x32xf32> to vector<16x8xf32>
    %cst_101 = arith.constant dense<0.000000e+00> : vector<8x16xf32>
    %274 = tpu.matmul %271, %272, %cst_101 {dimension_numbers = #tpu.dot_dimension_numbers<[1], [1], [0], [0], [0, 0, 1, 0], [], []>} : vector<8x8xf32>, vector<16x8xf32>, vector<8x16xf32> -> vector<8x16xf32>
    %cst_102 = arith.constant 0.353553385 : f32
    %275 = vector.broadcast %cst_102 : f32 to vector<8x16xf32>
    %276 = arith.mulf %274, %275 : vector<8x16xf32>
    %277 = vector.broadcast %6 : vector<1x16xf32> to vector<8x16xf32>
    %278 = arith.addf %276, %277 : vector<8x16xf32>
    %cst_103 = arith.constant dense<0xFF800000> : vector<8xf32>
    %279 = vector.multi_reduction <maximumf>, %278, %cst_103 [1] : vector<8x16xf32> to vector<8xf32>
    %280 = vector.shape_cast %279 : vector<8xf32> to vector<8x1xf32>
    %281 = vector.broadcast %280 : vector<8x1xf32> to vector<8x16xf32>
    %282 = arith.subf %278, %281 : vector<8x16xf32>
    %283 = math.exp %282 : vector<8x16xf32>
    %cst_104 = arith.constant dense<0.000000e+00> : vector<8xf32>
    %284 = vector.multi_reduction <add>, %283, %cst_104 [1] : vector<8x16xf32> to vector<8xf32>
    %285 = vector.shape_cast %284 : vector<8xf32> to vector<8x1xf32>
    %286 = tpu.reciprocal %285 {approx = true} : vector<8x1xf32> -> vector<8x1xf32>
    %287 = vector.broadcast %286 : vector<8x1xf32> to vector<8x16xf32>
    %288 = arith.mulf %283, %287 : vector<8x16xf32>
    %cst_105 = arith.constant dense<0.000000e+00> : vector<8x8xf32>
    %289 = tpu.matmul %288, %273, %cst_105 {dimension_numbers = #tpu.dot_dimension_numbers<[1], [0], [0], [1], [0, 0, 1, 1], [], []>} : vector<8x16xf32>, vector<16x8xf32>, vector<8x8xf32> -> vector<8x8xf32>
    %290 = vector.extract_strided_slice %249 {offsets = [0, 16], sizes = [8, 8], strides = [1, 1]} : vector<8x32xf32> to vector<8x8xf32>
    %291 = vector.extract_strided_slice %250 {offsets = [0, 16], sizes = [16, 8], strides = [1, 1]} : vector<16x32xf32> to vector<16x8xf32>
    %292 = vector.extract_strided_slice %251 {offsets = [0, 16], sizes = [16, 8], strides = [1, 1]} : vector<16x32xf32> to vector<16x8xf32>
    %cst_106 = arith.constant dense<0.000000e+00> : vector<8x16xf32>
    %293 = tpu.matmul %290, %291, %cst_106 {dimension_numbers = #tpu.dot_dimension_numbers<[1], [1], [0], [0], [0, 0, 1, 0], [], []>} : vector<8x8xf32>, vector<16x8xf32>, vector<8x16xf32> -> vector<8x16xf32>
    %cst_107 = arith.constant 0.353553385 : f32
    %294 = vector.broadcast %cst_107 : f32 to vector<8x16xf32>
    %295 = arith.mulf %293, %294 : vector<8x16xf32>
    %296 = vector.broadcast %6 : vector<1x16xf32> to vector<8x16xf32>
    %297 = arith.addf %295, %296 : vector<8x16xf32>
    %cst_108 = arith.constant dense<0xFF800000> : vector<8xf32>
    %298 = vector.multi_reduction <maximumf>, %297, %cst_108 [1] : vector<8x16xf32> to vector<8xf32>
    %299 = vector.shape_cast %298 : vector<8xf32> to vector<8x1xf32>
    %300 = vector.broadcast %299 : vector<8x1xf32> to vector<8x16xf32>
    %301 = arith.subf %297, %300 : vector<8x16xf32>
    %302 = math.exp %301 : vector<8x16xf32>
    %cst_109 = arith.constant dense<0.000000e+00> : vector<8xf32>
    %303 = vector.multi_reduction <add>, %302, %cst_109 [1] : vector<8x16xf32> to vector<8xf32>
    %304 = vector.shape_cast %303 : vector<8xf32> to vector<8x1xf32>
    %305 = tpu.reciprocal %304 {approx = true} : vector<8x1xf32> -> vector<8x1xf32>
    %306 = vector.broadcast %305 : vector<8x1xf32> to vector<8x16xf32>
    %307 = arith.mulf %302, %306 : vector<8x16xf32>
    %cst_110 = arith.constant dense<0.000000e+00> : vector<8x8xf32>
    %308 = tpu.matmul %307, %292, %cst_110 {dimension_numbers = #tpu.dot_dimension_numbers<[1], [0], [0], [1], [0, 0, 1, 1], [], []>} : vector<8x16xf32>, vector<16x8xf32>, vector<8x8xf32> -> vector<8x8xf32>
    %309 = vector.extract_strided_slice %249 {offsets = [0, 24], sizes = [8, 8], strides = [1, 1]} : vector<8x32xf32> to vector<8x8xf32>
    %310 = vector.extract_strided_slice %250 {offsets = [0, 24], sizes = [16, 8], strides = [1, 1]} : vector<16x32xf32> to vector<16x8xf32>
    %311 = vector.extract_strided_slice %251 {offsets = [0, 24], sizes = [16, 8], strides = [1, 1]} : vector<16x32xf32> to vector<16x8xf32>
    %cst_111 = arith.constant dense<0.000000e+00> : vector<8x16xf32>
    %312 = tpu.matmul %309, %310, %cst_111 {dimension_numbers = #tpu.dot_dimension_numbers<[1], [1], [0], [0], [0, 0, 1, 0], [], []>} : vector<8x8xf32>, vector<16x8xf32>, vector<8x16xf32> -> vector<8x16xf32>
    %cst_112 = arith.constant 0.353553385 : f32
    %313 = vector.broadcast %cst_112 : f32 to vector<8x16xf32>
    %314 = arith.mulf %312, %313 : vector<8x16xf32>
    %315 = vector.broadcast %6 : vector<1x16xf32> to vector<8x16xf32>
    %316 = arith.addf %314, %315 : vector<8x16xf32>
    %cst_113 = arith.constant dense<0xFF800000> : vector<8xf32>
    %317 = vector.multi_reduction <maximumf>, %316, %cst_113 [1] : vector<8x16xf32> to vector<8xf32>
    %318 = vector.shape_cast %317 : vector<8xf32> to vector<8x1xf32>
    %319 = vector.broadcast %318 : vector<8x1xf32> to vector<8x16xf32>
    %320 = arith.subf %316, %319 : vector<8x16xf32>
    %321 = math.exp %320 : vector<8x16xf32>
    %cst_114 = arith.constant dense<0.000000e+00> : vector<8xf32>
    %322 = vector.multi_reduction <add>, %321, %cst_114 [1] : vector<8x16xf32> to vector<8xf32>
    %323 = vector.shape_cast %322 : vector<8xf32> to vector<8x1xf32>
    %324 = tpu.reciprocal %323 {approx = true} : vector<8x1xf32> -> vector<8x1xf32>
    %325 = vector.broadcast %324 : vector<8x1xf32> to vector<8x16xf32>
    %326 = arith.mulf %321, %325 : vector<8x16xf32>
    %cst_115 = arith.constant dense<0.000000e+00> : vector<8x8xf32>
    %327 = tpu.matmul %326, %311, %cst_115 {dimension_numbers = #tpu.dot_dimension_numbers<[1], [0], [0], [1], [0, 0, 1, 1], [], []>} : vector<8x16xf32>, vector<16x8xf32>, vector<8x8xf32> -> vector<8x8xf32>
    %328 = tpu.concatenate %270, %289, %308, %327 in 1 : vector<8x8xf32>, vector<8x8xf32>, vector<8x8xf32>, vector<8x8xf32> -> vector<8x32xf32>
    %329 = vector.extract_strided_slice %235 {offsets = [8, 0], sizes = [8, 32], strides = [1, 1]} : vector<16x32xf32> to vector<8x32xf32>
    %330 = vector.extract_strided_slice %243 {offsets = [16, 0], sizes = [16, 32], strides = [1, 1]} : vector<32x32xf32> to vector<16x32xf32>
    %331 = vector.extract_strided_slice %244 {offsets = [16, 0], sizes = [16, 32], strides = [1, 1]} : vector<32x32xf32> to vector<16x32xf32>
    %332 = vector.extract_strided_slice %329 {offsets = [0, 0], sizes = [8, 8], strides = [1, 1]} : vector<8x32xf32> to vector<8x8xf32>
    %333 = vector.extract_strided_slice %330 {offsets = [0, 0], sizes = [16, 8], strides = [1, 1]} : vector<16x32xf32> to vector<16x8xf32>
    %334 = vector.extract_strided_slice %331 {offsets = [0, 0], sizes = [16, 8], strides = [1, 1]} : vector<16x32xf32> to vector<16x8xf32>
    %cst_116 = arith.constant dense<0.000000e+00> : vector<8x16xf32>
    %335 = tpu.matmul %332, %333, %cst_116 {dimension_numbers = #tpu.dot_dimension_numbers<[1], [1], [0], [0], [0, 0, 1, 0], [], []>} : vector<8x8xf32>, vector<16x8xf32>, vector<8x16xf32> -> vector<8x16xf32>
    %cst_117 = arith.constant 0.353553385 : f32
    %336 = vector.broadcast %cst_117 : f32 to vector<8x16xf32>
    %337 = arith.mulf %335, %336 : vector<8x16xf32>
    %338 = vector.broadcast %7 : vector<1x16xf32> to vector<8x16xf32>
    %339 = arith.addf %337, %338 : vector<8x16xf32>
    %cst_118 = arith.constant dense<0xFF800000> : vector<8xf32>
    %340 = vector.multi_reduction <maximumf>, %339, %cst_118 [1] : vector<8x16xf32> to vector<8xf32>
    %341 = vector.shape_cast %340 : vector<8xf32> to vector<8x1xf32>
    %342 = vector.broadcast %341 : vector<8x1xf32> to vector<8x16xf32>
    %343 = arith.subf %339, %342 : vector<8x16xf32>
    %344 = math.exp %343 : vector<8x16xf32>
    %cst_119 = arith.constant dense<0.000000e+00> : vector<8xf32>
    %345 = vector.multi_reduction <add>, %344, %cst_119 [1] : vector<8x16xf32> to vector<8xf32>
    %346 = vector.shape_cast %345 : vector<8xf32> to vector<8x1xf32>
    %347 = tpu.reciprocal %346 {approx = true} : vector<8x1xf32> -> vector<8x1xf32>
    %348 = vector.broadcast %347 : vector<8x1xf32> to vector<8x16xf32>
    %349 = arith.mulf %344, %348 : vector<8x16xf32>
    %cst_120 = arith.constant dense<0.000000e+00> : vector<8x8xf32>
    %350 = tpu.matmul %349, %334, %cst_120 {dimension_numbers = #tpu.dot_dimension_numbers<[1], [0], [0], [1], [0, 0, 1, 1], [], []>} : vector<8x16xf32>, vector<16x8xf32>, vector<8x8xf32> -> vector<8x8xf32>
    %351 = vector.extract_strided_slice %329 {offsets = [0, 8], sizes = [8, 8], strides = [1, 1]} : vector<8x32xf32> to vector<8x8xf32>
    %352 = vector.extract_strided_slice %330 {offsets = [0, 8], sizes = [16, 8], strides = [1, 1]} : vector<16x32xf32> to vector<16x8xf32>
    %353 = vector.extract_strided_slice %331 {offsets = [0, 8], sizes = [16, 8], strides = [1, 1]} : vector<16x32xf32> to vector<16x8xf32>
    %cst_121 = arith.constant dense<0.000000e+00> : vector<8x16xf32>
    %354 = tpu.matmul %351, %352, %cst_121 {dimension_numbers = #tpu.dot_dimension_numbers<[1], [1], [0], [0], [0, 0, 1, 0], [], []>} : vector<8x8xf32>, vector<16x8xf32>, vector<8x16xf32> -> vector<8x16xf32>
    %cst_122 = arith.constant 0.353553385 : f32
    %355 = vector.broadcast %cst_122 : f32 to vector<8x16xf32>
    %356 = arith.mulf %354, %355 : vector<8x16xf32>
    %357 = vector.broadcast %7 : vector<1x16xf32> to vector<8x16xf32>
    %358 = arith.addf %356, %357 : vector<8x16xf32>
    %cst_123 = arith.constant dense<0xFF800000> : vector<8xf32>
    %359 = vector.multi_reduction <maximumf>, %358, %cst_123 [1] : vector<8x16xf32> to vector<8xf32>
    %360 = vector.shape_cast %359 : vector<8xf32> to vector<8x1xf32>
    %361 = vector.broadcast %360 : vector<8x1xf32> to vector<8x16xf32>
    %362 = arith.subf %358, %361 : vector<8x16xf32>
    %363 = math.exp %362 : vector<8x16xf32>
    %cst_124 = arith.constant dense<0.000000e+00> : vector<8xf32>
    %364 = vector.multi_reduction <add>, %363, %cst_124 [1] : vector<8x16xf32> to vector<8xf32>
    %365 = vector.shape_cast %364 : vector<8xf32> to vector<8x1xf32>
    %366 = tpu.reciprocal %365 {approx = true} : vector<8x1xf32> -> vector<8x1xf32>
    %367 = vector.broadcast %366 : vector<8x1xf32> to vector<8x16xf32>
    %368 = arith.mulf %363, %367 : vector<8x16xf32>
    %cst_125 = arith.constant dense<0.000000e+00> : vector<8x8xf32>
    %369 = tpu.matmul %368, %353, %cst_125 {dimension_numbers = #tpu.dot_dimension_numbers<[1], [0], [0], [1], [0, 0, 1, 1], [], []>} : vector<8x16xf32>, vector<16x8xf32>, vector<8x8xf32> -> vector<8x8xf32>
    %370 = vector.extract_strided_slice %329 {offsets = [0, 16], sizes = [8, 8], strides = [1, 1]} : vector<8x32xf32> to vector<8x8xf32>
    %371 = vector.extract_strided_slice %330 {offsets = [0, 16], sizes = [16, 8], strides = [1, 1]} : vector<16x32xf32> to vector<16x8xf32>
    %372 = vector.extract_strided_slice %331 {offsets = [0, 16], sizes = [16, 8], strides = [1, 1]} : vector<16x32xf32> to vector<16x8xf32>
    %cst_126 = arith.constant dense<0.000000e+00> : vector<8x16xf32>
    %373 = tpu.matmul %370, %371, %cst_126 {dimension_numbers = #tpu.dot_dimension_numbers<[1], [1], [0], [0], [0, 0, 1, 0], [], []>} : vector<8x8xf32>, vector<16x8xf32>, vector<8x16xf32> -> vector<8x16xf32>
    %cst_127 = arith.constant 0.353553385 : f32
    %374 = vector.broadcast %cst_127 : f32 to vector<8x16xf32>
    %375 = arith.mulf %373, %374 : vector<8x16xf32>
    %376 = vector.broadcast %7 : vector<1x16xf32> to vector<8x16xf32>
    %377 = arith.addf %375, %376 : vector<8x16xf32>
    %cst_128 = arith.constant dense<0xFF800000> : vector<8xf32>
    %378 = vector.multi_reduction <maximumf>, %377, %cst_128 [1] : vector<8x16xf32> to vector<8xf32>
    %379 = vector.shape_cast %378 : vector<8xf32> to vector<8x1xf32>
    %380 = vector.broadcast %379 : vector<8x1xf32> to vector<8x16xf32>
    %381 = arith.subf %377, %380 : vector<8x16xf32>
    %382 = math.exp %381 : vector<8x16xf32>
    %cst_129 = arith.constant dense<0.000000e+00> : vector<8xf32>
    %383 = vector.multi_reduction <add>, %382, %cst_129 [1] : vector<8x16xf32> to vector<8xf32>
    %384 = vector.shape_cast %383 : vector<8xf32> to vector<8x1xf32>
    %385 = tpu.reciprocal %384 {approx = true} : vector<8x1xf32> -> vector<8x1xf32>
    %386 = vector.broadcast %385 : vector<8x1xf32> to vector<8x16xf32>
    %387 = arith.mulf %382, %386 : vector<8x16xf32>
    %cst_130 = arith.constant dense<0.000000e+00> : vector<8x8xf32>
    %388 = tpu.matmul %387, %372, %cst_130 {dimension_numbers = #tpu.dot_dimension_numbers<[1], [0], [0], [1], [0, 0, 1, 1], [], []>} : vector<8x16xf32>, vector<16x8xf32>, vector<8x8xf32> -> vector<8x8xf32>
    %389 = vector.extract_strided_slice %329 {offsets = [0, 24], sizes = [8, 8], strides = [1, 1]} : vector<8x32xf32> to vector<8x8xf32>
    %390 = vector.extract_strided_slice %330 {offsets = [0, 24], sizes = [16, 8], strides = [1, 1]} : vector<16x32xf32> to vector<16x8xf32>
    %391 = vector.extract_strided_slice %331 {offsets = [0, 24], sizes = [16, 8], strides = [1, 1]} : vector<16x32xf32> to vector<16x8xf32>
    %cst_131 = arith.constant dense<0.000000e+00> : vector<8x16xf32>
    %392 = tpu.matmul %389, %390, %cst_131 {dimension_numbers = #tpu.dot_dimension_numbers<[1], [1], [0], [0], [0, 0, 1, 0], [], []>} : vector<8x8xf32>, vector<16x8xf32>, vector<8x16xf32> -> vector<8x16xf32>
    %cst_132 = arith.constant 0.353553385 : f32
    %393 = vector.broadcast %cst_132 : f32 to vector<8x16xf32>
    %394 = arith.mulf %392, %393 : vector<8x16xf32>
    %395 = vector.broadcast %7 : vector<1x16xf32> to vector<8x16xf32>
    %396 = arith.addf %394, %395 : vector<8x16xf32>
    %cst_133 = arith.constant dense<0xFF800000> : vector<8xf32>
    %397 = vector.multi_reduction <maximumf>, %396, %cst_133 [1] : vector<8x16xf32> to vector<8xf32>
    %398 = vector.shape_cast %397 : vector<8xf32> to vector<8x1xf32>
    %399 = vector.broadcast %398 : vector<8x1xf32> to vector<8x16xf32>
    %400 = arith.subf %396, %399 : vector<8x16xf32>
    %401 = math.exp %400 : vector<8x16xf32>
    %cst_134 = arith.constant dense<0.000000e+00> : vector<8xf32>
    %402 = vector.multi_reduction <add>, %401, %cst_134 [1] : vector<8x16xf32> to vector<8xf32>
    %403 = vector.shape_cast %402 : vector<8xf32> to vector<8x1xf32>
    %404 = tpu.reciprocal %403 {approx = true} : vector<8x1xf32> -> vector<8x1xf32>
    %405 = vector.broadcast %404 : vector<8x1xf32> to vector<8x16xf32>
    %406 = arith.mulf %401, %405 : vector<8x16xf32>
    %cst_135 = arith.constant dense<0.000000e+00> : vector<8x8xf32>
    %407 = tpu.matmul %406, %391, %cst_135 {dimension_numbers = #tpu.dot_dimension_numbers<[1], [0], [0], [1], [0, 0, 1, 1], [], []>} : vector<8x16xf32>, vector<16x8xf32>, vector<8x8xf32> -> vector<8x8xf32>
    %408 = tpu.concatenate %350, %369, %388, %407 in 1 : vector<8x8xf32>, vector<8x8xf32>, vector<8x8xf32>, vector<8x8xf32> -> vector<8x32xf32>
    %409 = tpu.concatenate %328, %408 in 0 : vector<8x32xf32>, vector<8x32xf32> -> vector<16x32xf32>
    %cst_136 = arith.constant dense<0.000000e+00> : vector<16x32xf32>
    %410 = tpu.matmul %409, %246, %cst_136 {dimension_numbers = #tpu.dot_dimension_numbers<[1], [0], [0], [1], [0, 0, 1, 1], [], []>} : vector<16x32xf32>, vector<32x32xf32>, vector<16x32xf32> -> vector<16x32xf32>
    %411 = vector.broadcast %248 : vector<1x32xf32> to vector<16x32xf32>
    %412 = arith.addf %410, %411 : vector<16x32xf32>
    %413 = arith.addf %205, %412 : vector<16x32xf32>
    %414 = vector.extract_strided_slice %9 {offsets = [2, 0], sizes = [1, 32], strides = [1, 1]} : vector<3x32xf32> to vector<1x32xf32>
    %415 = vector.extract_strided_slice %11 {offsets = [2, 0], sizes = [1, 32], strides = [1, 1]} : vector<3x32xf32> to vector<1x32xf32>
    %cst_137 = arith.constant dense<0.000000e+00> : vector<16xf32>
    %416 = vector.multi_reduction <add>, %413, %cst_137 [1] : vector<16x32xf32> to vector<16xf32>
    %417 = vector.shape_cast %416 : vector<16xf32> to vector<16x1xf32>
    %cst_138 = arith.constant 3.200000e+01 : f32
    %418 = vector.broadcast %cst_138 : f32 to vector<16x1xf32>
    %419 = arith.divf %417, %418 : vector<16x1xf32>
    %420 = vector.broadcast %419 : vector<16x1xf32> to vector<16x32xf32>
    %421 = arith.subf %413, %420 : vector<16x32xf32>
    %422 = arith.mulf %421, %421 : vector<16x32xf32>
    %cst_139 = arith.constant dense<0.000000e+00> : vector<16xf32>
    %423 = vector.multi_reduction <add>, %422, %cst_139 [1] : vector<16x32xf32> to vector<16xf32>
    %424 = vector.shape_cast %423 : vector<16xf32> to vector<16x1xf32>
    %cst_140 = arith.constant 0.0322580636 : f32
    %425 = vector.broadcast %cst_140 : f32 to vector<16x1xf32>
    %426 = arith.mulf %424, %425 : vector<16x1xf32>
    %427 = math.sqrt %426 : vector<16x1xf32>
    %cst_141 = arith.constant 9.99999997E-7 : f32
    %428 = vector.broadcast %cst_141 : f32 to vector<16x1xf32>
    %429 = arith.addf %427, %428 : vector<16x1xf32>
    %430 = tpu.reciprocal %429 {approx = true} : vector<16x1xf32> -> vector<16x1xf32>
    %431 = vector.broadcast %430 : vector<16x1xf32> to vector<16x32xf32>
    %432 = arith.mulf %421, %431 : vector<16x32xf32>
    %433 = vector.broadcast %414 : vector<1x32xf32> to vector<16x32xf32>
    %434 = arith.mulf %433, %432 : vector<16x32xf32>
    %435 = vector.broadcast %415 : vector<1x32xf32> to vector<16x32xf32>
    %436 = arith.addf %434, %435 : vector<16x32xf32>
    %c0_142 = arith.constant 0 : index
    %c0_143 = arith.constant 0 : index
    %c0_144 = arith.constant 0 : index
    %437 = vector.load %arg16[%c0_142, %c0_143, %c0_144] : memref<2x32x64xf32, #tpu.memory_space<vmem>>, vector<1x32x64xf32>
    %438 = vector.shape_cast %437 : vector<1x32x64xf32> to vector<32x64xf32>
    %cst_145 = arith.constant dense<0.000000e+00> : vector<16x64xf32>
    %439 = tpu.matmul %436, %438, %cst_145 {dimension_numbers = #tpu.dot_dimension_numbers<[1], [0], [0], [1], [0, 0, 1, 1], [], []>} : vector<16x32xf32>, vector<32x64xf32>, vector<16x64xf32> -> vector<16x64xf32>
    %c0_146 = arith.constant 0 : index
    %c0_147 = arith.constant 0 : index
    %c0_148 = arith.constant 0 : index
    %440 = vector.load %arg17[%c0_146, %c0_147, %c0_148] : memref<2x1x64xf32, #tpu.memory_space<vmem>>, vector<1x1x64xf32>
    %441 = vector.shape_cast %440 : vector<1x1x64xf32> to vector<1x64xf32>
    %442 = vector.broadcast %441 : vector<1x64xf32> to vector<16x64xf32>
    %443 = arith.addf %439, %442 : vector<16x64xf32>
    %cst_149 = arith.constant 0.000000e+00 : f32
    %444 = vector.broadcast %cst_149 : f32 to vector<16x64xf32>
    %445 = arith.maximumf %443, %444 : vector<16x64xf32>
    %c0_150 = arith.constant 0 : index
    %c0_151 = arith.constant 0 : index
    %c0_152 = arith.constant 0 : index
    %446 = vector.load %arg18[%c0_150, %c0_151, %c0_152] : memref<2x64x32xf32, #tpu.memory_space<vmem>>, vector<1x64x32xf32>
    %447 = vector.shape_cast %446 : vector<1x64x32xf32> to vector<64x32xf32>
    %cst_153 = arith.constant dense<0.000000e+00> : vector<16x32xf32>
    %448 = tpu.matmul %445, %447, %cst_153 {dimension_numbers = #tpu.dot_dimension_numbers<[1], [0], [0], [1], [0, 0, 1, 1], [], []>} : vector<16x64xf32>, vector<64x32xf32>, vector<16x32xf32> -> vector<16x32xf32>
    %449 = arith.addf %413, %448 : vector<16x32xf32>
    %c0_154 = arith.constant 0 : index
    %c0_155 = arith.constant 0 : index
    %c0_156 = arith.constant 0 : index
    %450 = vector.load %arg19[%c0_154, %c0_155, %c0_156] : memref<2x1x32xf32, #tpu.memory_space<vmem>>, vector<1x1x32xf32>
    %451 = vector.shape_cast %450 : vector<1x1x32xf32> to vector<1x32xf32>
    %452 = vector.broadcast %451 : vector<1x32xf32> to vector<16x32xf32>
    %453 = arith.addf %449, %452 : vector<16x32xf32>
    %c1 = arith.constant 1 : index
    %c0_157 = arith.constant 0 : index
    %c0_158 = arith.constant 0 : index
    %454 = vector.load %arg4[%c1, %c0_157, %c0_158] : memref<2x3x32xf32, #tpu.memory_space<vmem>>, vector<1x3x32xf32>
    %455 = vector.shape_cast %454 : vector<1x3x32xf32> to vector<3x32xf32>
    %c1_159 = arith.constant 1 : index
    %c0_160 = arith.constant 0 : index
    %c0_161 = arith.constant 0 : index
    %456 = vector.load %arg5[%c1_159, %c0_160, %c0_161] : memref<2x3x32xf32, #tpu.memory_space<vmem>>, vector<1x3x32xf32>
    %457 = vector.shape_cast %456 : vector<1x3x32xf32> to vector<3x32xf32>
    %458 = vector.extract_strided_slice %455 {offsets = [0, 0], sizes = [1, 32], strides = [1, 1]} : vector<3x32xf32> to vector<1x32xf32>
    %459 = vector.extract_strided_slice %457 {offsets = [0, 0], sizes = [1, 32], strides = [1, 1]} : vector<3x32xf32> to vector<1x32xf32>
    %cst_162 = arith.constant dense<0.000000e+00> : vector<16xf32>
    %460 = vector.multi_reduction <add>, %453, %cst_162 [1] : vector<16x32xf32> to vector<16xf32>
    %461 = vector.shape_cast %460 : vector<16xf32> to vector<16x1xf32>
    %cst_163 = arith.constant 3.200000e+01 : f32
    %462 = vector.broadcast %cst_163 : f32 to vector<16x1xf32>
    %463 = arith.divf %461, %462 : vector<16x1xf32>
    %464 = vector.broadcast %463 : vector<16x1xf32> to vector<16x32xf32>
    %465 = arith.subf %453, %464 : vector<16x32xf32>
    %466 = arith.mulf %465, %465 : vector<16x32xf32>
    %cst_164 = arith.constant dense<0.000000e+00> : vector<16xf32>
    %467 = vector.multi_reduction <add>, %466, %cst_164 [1] : vector<16x32xf32> to vector<16xf32>
    %468 = vector.shape_cast %467 : vector<16xf32> to vector<16x1xf32>
    %cst_165 = arith.constant 0.0322580636 : f32
    %469 = vector.broadcast %cst_165 : f32 to vector<16x1xf32>
    %470 = arith.mulf %468, %469 : vector<16x1xf32>
    %471 = math.sqrt %470 : vector<16x1xf32>
    %cst_166 = arith.constant 9.99999997E-7 : f32
    %472 = vector.broadcast %cst_166 : f32 to vector<16x1xf32>
    %473 = arith.addf %471, %472 : vector<16x1xf32>
    %474 = tpu.reciprocal %473 {approx = true} : vector<16x1xf32> -> vector<16x1xf32>
    %475 = vector.broadcast %474 : vector<16x1xf32> to vector<16x32xf32>
    %476 = arith.mulf %465, %475 : vector<16x32xf32>
    %477 = vector.broadcast %458 : vector<1x32xf32> to vector<16x32xf32>
    %478 = arith.mulf %477, %476 : vector<16x32xf32>
    %479 = vector.broadcast %459 : vector<1x32xf32> to vector<16x32xf32>
    %480 = arith.addf %478, %479 : vector<16x32xf32>
    %c1_167 = arith.constant 1 : index
    %c0_168 = arith.constant 0 : index
    %c0_169 = arith.constant 0 : index
    %481 = vector.load %arg6[%c1_167, %c0_168, %c0_169] : memref<2x32x96xf32, #tpu.memory_space<vmem>>, vector<1x32x96xf32>
    %482 = vector.shape_cast %481 : vector<1x32x96xf32> to vector<32x96xf32>
    %cst_170 = arith.constant dense<0.000000e+00> : vector<16x96xf32>
    %483 = tpu.matmul %480, %482, %cst_170 {dimension_numbers = #tpu.dot_dimension_numbers<[1], [0], [0], [1], [0, 0, 1, 1], [], []>} : vector<16x32xf32>, vector<32x96xf32>, vector<16x96xf32> -> vector<16x96xf32>
    %c1_171 = arith.constant 1 : index
    %c0_172 = arith.constant 0 : index
    %c0_173 = arith.constant 0 : index
    %484 = vector.load %arg7[%c1_171, %c0_172, %c0_173] : memref<2x1x96xf32, #tpu.memory_space<vmem>>, vector<1x1x96xf32>
    %485 = vector.shape_cast %484 : vector<1x1x96xf32> to vector<1x96xf32>
    %486 = vector.broadcast %485 : vector<1x96xf32> to vector<16x96xf32>
    %487 = arith.addf %483, %486 : vector<16x96xf32>
    %488 = vector.extract_strided_slice %487 {offsets = [0, 0], sizes = [16, 32], strides = [1, 1]} : vector<16x96xf32> to vector<16x32xf32>
    %489 = vector.extract_strided_slice %487 {offsets = [0, 32], sizes = [16, 32], strides = [1, 1]} : vector<16x96xf32> to vector<16x32xf32>
    %490 = vector.extract_strided_slice %487 {offsets = [0, 64], sizes = [16, 32], strides = [1, 1]} : vector<16x96xf32> to vector<16x32xf32>
    %c1_174 = arith.constant 1 : index
    %c0_175 = arith.constant 0 : index
    %c0_176 = arith.constant 0 : index
    %491 = vector.load %arg8[%c1_174, %c0_175, %c0_176] : memref<2x32x32xf32, #tpu.memory_space<vmem>>, vector<1x32x32xf32>
    %492 = vector.shape_cast %491 : vector<1x32x32xf32> to vector<32x32xf32>
    %c1_177 = arith.constant 1 : index
    %c0_178 = arith.constant 0 : index
    %c0_179 = arith.constant 0 : index
    %493 = vector.load %arg9[%c1_177, %c0_178, %c0_179] : memref<2x1x32xf32, #tpu.memory_space<vmem>>, vector<1x1x32xf32>
    %494 = vector.shape_cast %493 : vector<1x1x32xf32> to vector<1x32xf32>
    %495 = vector.extract_strided_slice %488 {offsets = [0, 0], sizes = [8, 32], strides = [1, 1]} : vector<16x32xf32> to vector<8x32xf32>
    %496 = vector.extract_strided_slice %489 {offsets = [0, 0], sizes = [8, 32], strides = [1, 1]} : vector<16x32xf32> to vector<8x32xf32>
    %497 = vector.extract_strided_slice %490 {offsets = [0, 0], sizes = [8, 32], strides = [1, 1]} : vector<16x32xf32> to vector<8x32xf32>
    %498 = vector.extract_strided_slice %495 {offsets = [0, 0], sizes = [8, 8], strides = [1, 1]} : vector<8x32xf32> to vector<8x8xf32>
    %499 = vector.extract_strided_slice %496 {offsets = [0, 0], sizes = [8, 8], strides = [1, 1]} : vector<8x32xf32> to vector<8x8xf32>
    %500 = vector.extract_strided_slice %497 {offsets = [0, 0], sizes = [8, 8], strides = [1, 1]} : vector<8x32xf32> to vector<8x8xf32>
    %cst_180 = arith.constant dense<0.000000e+00> : vector<8x8xf32>
    %501 = tpu.matmul %498, %499, %cst_180 {dimension_numbers = #tpu.dot_dimension_numbers<[1], [1], [0], [0], [0, 0, 1, 0], [], []>} : vector<8x8xf32>, vector<8x8xf32>, vector<8x8xf32> -> vector<8x8xf32>
    %cst_181 = arith.constant 0.353553385 : f32
    %502 = vector.broadcast %cst_181 : f32 to vector<8x8xf32>
    %503 = arith.mulf %501, %502 : vector<8x8xf32>
    %504 = arith.addf %503, %4 : vector<8x8xf32>
    %cst_182 = arith.constant dense<0xFF800000> : vector<8xf32>
    %505 = vector.multi_reduction <maximumf>, %504, %cst_182 [1] : vector<8x8xf32> to vector<8xf32>
    %506 = vector.shape_cast %505 : vector<8xf32> to vector<8x1xf32>
    %507 = vector.broadcast %506 : vector<8x1xf32> to vector<8x8xf32>
    %508 = arith.subf %504, %507 : vector<8x8xf32>
    %509 = math.exp %508 : vector<8x8xf32>
    %cst_183 = arith.constant dense<0.000000e+00> : vector<8xf32>
    %510 = vector.multi_reduction <add>, %509, %cst_183 [1] : vector<8x8xf32> to vector<8xf32>
    %511 = vector.shape_cast %510 : vector<8xf32> to vector<8x1xf32>
    %512 = tpu.reciprocal %511 {approx = true} : vector<8x1xf32> -> vector<8x1xf32>
    %513 = vector.broadcast %512 : vector<8x1xf32> to vector<8x8xf32>
    %514 = arith.mulf %509, %513 : vector<8x8xf32>
    %cst_184 = arith.constant dense<0.000000e+00> : vector<8x8xf32>
    %515 = tpu.matmul %514, %500, %cst_184 {dimension_numbers = #tpu.dot_dimension_numbers<[1], [0], [0], [1], [0, 0, 1, 1], [], []>} : vector<8x8xf32>, vector<8x8xf32>, vector<8x8xf32> -> vector<8x8xf32>
    %516 = vector.extract_strided_slice %495 {offsets = [0, 8], sizes = [8, 8], strides = [1, 1]} : vector<8x32xf32> to vector<8x8xf32>
    %517 = vector.extract_strided_slice %496 {offsets = [0, 8], sizes = [8, 8], strides = [1, 1]} : vector<8x32xf32> to vector<8x8xf32>
    %518 = vector.extract_strided_slice %497 {offsets = [0, 8], sizes = [8, 8], strides = [1, 1]} : vector<8x32xf32> to vector<8x8xf32>
    %cst_185 = arith.constant dense<0.000000e+00> : vector<8x8xf32>
    %519 = tpu.matmul %516, %517, %cst_185 {dimension_numbers = #tpu.dot_dimension_numbers<[1], [1], [0], [0], [0, 0, 1, 0], [], []>} : vector<8x8xf32>, vector<8x8xf32>, vector<8x8xf32> -> vector<8x8xf32>
    %cst_186 = arith.constant 0.353553385 : f32
    %520 = vector.broadcast %cst_186 : f32 to vector<8x8xf32>
    %521 = arith.mulf %519, %520 : vector<8x8xf32>
    %522 = arith.addf %521, %4 : vector<8x8xf32>
    %cst_187 = arith.constant dense<0xFF800000> : vector<8xf32>
    %523 = vector.multi_reduction <maximumf>, %522, %cst_187 [1] : vector<8x8xf32> to vector<8xf32>
    %524 = vector.shape_cast %523 : vector<8xf32> to vector<8x1xf32>
    %525 = vector.broadcast %524 : vector<8x1xf32> to vector<8x8xf32>
    %526 = arith.subf %522, %525 : vector<8x8xf32>
    %527 = math.exp %526 : vector<8x8xf32>
    %cst_188 = arith.constant dense<0.000000e+00> : vector<8xf32>
    %528 = vector.multi_reduction <add>, %527, %cst_188 [1] : vector<8x8xf32> to vector<8xf32>
    %529 = vector.shape_cast %528 : vector<8xf32> to vector<8x1xf32>
    %530 = tpu.reciprocal %529 {approx = true} : vector<8x1xf32> -> vector<8x1xf32>
    %531 = vector.broadcast %530 : vector<8x1xf32> to vector<8x8xf32>
    %532 = arith.mulf %527, %531 : vector<8x8xf32>
    %cst_189 = arith.constant dense<0.000000e+00> : vector<8x8xf32>
    %533 = tpu.matmul %532, %518, %cst_189 {dimension_numbers = #tpu.dot_dimension_numbers<[1], [0], [0], [1], [0, 0, 1, 1], [], []>} : vector<8x8xf32>, vector<8x8xf32>, vector<8x8xf32> -> vector<8x8xf32>
    %534 = vector.extract_strided_slice %495 {offsets = [0, 16], sizes = [8, 8], strides = [1, 1]} : vector<8x32xf32> to vector<8x8xf32>
    %535 = vector.extract_strided_slice %496 {offsets = [0, 16], sizes = [8, 8], strides = [1, 1]} : vector<8x32xf32> to vector<8x8xf32>
    %536 = vector.extract_strided_slice %497 {offsets = [0, 16], sizes = [8, 8], strides = [1, 1]} : vector<8x32xf32> to vector<8x8xf32>
    %cst_190 = arith.constant dense<0.000000e+00> : vector<8x8xf32>
    %537 = tpu.matmul %534, %535, %cst_190 {dimension_numbers = #tpu.dot_dimension_numbers<[1], [1], [0], [0], [0, 0, 1, 0], [], []>} : vector<8x8xf32>, vector<8x8xf32>, vector<8x8xf32> -> vector<8x8xf32>
    %cst_191 = arith.constant 0.353553385 : f32
    %538 = vector.broadcast %cst_191 : f32 to vector<8x8xf32>
    %539 = arith.mulf %537, %538 : vector<8x8xf32>
    %540 = arith.addf %539, %4 : vector<8x8xf32>
    %cst_192 = arith.constant dense<0xFF800000> : vector<8xf32>
    %541 = vector.multi_reduction <maximumf>, %540, %cst_192 [1] : vector<8x8xf32> to vector<8xf32>
    %542 = vector.shape_cast %541 : vector<8xf32> to vector<8x1xf32>
    %543 = vector.broadcast %542 : vector<8x1xf32> to vector<8x8xf32>
    %544 = arith.subf %540, %543 : vector<8x8xf32>
    %545 = math.exp %544 : vector<8x8xf32>
    %cst_193 = arith.constant dense<0.000000e+00> : vector<8xf32>
    %546 = vector.multi_reduction <add>, %545, %cst_193 [1] : vector<8x8xf32> to vector<8xf32>
    %547 = vector.shape_cast %546 : vector<8xf32> to vector<8x1xf32>
    %548 = tpu.reciprocal %547 {approx = true} : vector<8x1xf32> -> vector<8x1xf32>
    %549 = vector.broadcast %548 : vector<8x1xf32> to vector<8x8xf32>
    %550 = arith.mulf %545, %549 : vector<8x8xf32>
    %cst_194 = arith.constant dense<0.000000e+00> : vector<8x8xf32>
    %551 = tpu.matmul %550, %536, %cst_194 {dimension_numbers = #tpu.dot_dimension_numbers<[1], [0], [0], [1], [0, 0, 1, 1], [], []>} : vector<8x8xf32>, vector<8x8xf32>, vector<8x8xf32> -> vector<8x8xf32>
    %552 = vector.extract_strided_slice %495 {offsets = [0, 24], sizes = [8, 8], strides = [1, 1]} : vector<8x32xf32> to vector<8x8xf32>
    %553 = vector.extract_strided_slice %496 {offsets = [0, 24], sizes = [8, 8], strides = [1, 1]} : vector<8x32xf32> to vector<8x8xf32>
    %554 = vector.extract_strided_slice %497 {offsets = [0, 24], sizes = [8, 8], strides = [1, 1]} : vector<8x32xf32> to vector<8x8xf32>
    %cst_195 = arith.constant dense<0.000000e+00> : vector<8x8xf32>
    %555 = tpu.matmul %552, %553, %cst_195 {dimension_numbers = #tpu.dot_dimension_numbers<[1], [1], [0], [0], [0, 0, 1, 0], [], []>} : vector<8x8xf32>, vector<8x8xf32>, vector<8x8xf32> -> vector<8x8xf32>
    %cst_196 = arith.constant 0.353553385 : f32
    %556 = vector.broadcast %cst_196 : f32 to vector<8x8xf32>
    %557 = arith.mulf %555, %556 : vector<8x8xf32>
    %558 = arith.addf %557, %4 : vector<8x8xf32>
    %cst_197 = arith.constant dense<0xFF800000> : vector<8xf32>
    %559 = vector.multi_reduction <maximumf>, %558, %cst_197 [1] : vector<8x8xf32> to vector<8xf32>
    %560 = vector.shape_cast %559 : vector<8xf32> to vector<8x1xf32>
    %561 = vector.broadcast %560 : vector<8x1xf32> to vector<8x8xf32>
    %562 = arith.subf %558, %561 : vector<8x8xf32>
    %563 = math.exp %562 : vector<8x8xf32>
    %cst_198 = arith.constant dense<0.000000e+00> : vector<8xf32>
    %564 = vector.multi_reduction <add>, %563, %cst_198 [1] : vector<8x8xf32> to vector<8xf32>
    %565 = vector.shape_cast %564 : vector<8xf32> to vector<8x1xf32>
    %566 = tpu.reciprocal %565 {approx = true} : vector<8x1xf32> -> vector<8x1xf32>
    %567 = vector.broadcast %566 : vector<8x1xf32> to vector<8x8xf32>
    %568 = arith.mulf %563, %567 : vector<8x8xf32>
    %cst_199 = arith.constant dense<0.000000e+00> : vector<8x8xf32>
    %569 = tpu.matmul %568, %554, %cst_199 {dimension_numbers = #tpu.dot_dimension_numbers<[1], [0], [0], [1], [0, 0, 1, 1], [], []>} : vector<8x8xf32>, vector<8x8xf32>, vector<8x8xf32> -> vector<8x8xf32>
    %570 = tpu.concatenate %515, %533, %551, %569 in 1 : vector<8x8xf32>, vector<8x8xf32>, vector<8x8xf32>, vector<8x8xf32> -> vector<8x32xf32>
    %571 = vector.extract_strided_slice %488 {offsets = [8, 0], sizes = [8, 32], strides = [1, 1]} : vector<16x32xf32> to vector<8x32xf32>
    %572 = vector.extract_strided_slice %489 {offsets = [8, 0], sizes = [8, 32], strides = [1, 1]} : vector<16x32xf32> to vector<8x32xf32>
    %573 = vector.extract_strided_slice %490 {offsets = [8, 0], sizes = [8, 32], strides = [1, 1]} : vector<16x32xf32> to vector<8x32xf32>
    %574 = vector.extract_strided_slice %571 {offsets = [0, 0], sizes = [8, 8], strides = [1, 1]} : vector<8x32xf32> to vector<8x8xf32>
    %575 = vector.extract_strided_slice %572 {offsets = [0, 0], sizes = [8, 8], strides = [1, 1]} : vector<8x32xf32> to vector<8x8xf32>
    %576 = vector.extract_strided_slice %573 {offsets = [0, 0], sizes = [8, 8], strides = [1, 1]} : vector<8x32xf32> to vector<8x8xf32>
    %cst_200 = arith.constant dense<0.000000e+00> : vector<8x8xf32>
    %577 = tpu.matmul %574, %575, %cst_200 {dimension_numbers = #tpu.dot_dimension_numbers<[1], [1], [0], [0], [0, 0, 1, 0], [], []>} : vector<8x8xf32>, vector<8x8xf32>, vector<8x8xf32> -> vector<8x8xf32>
    %cst_201 = arith.constant 0.353553385 : f32
    %578 = vector.broadcast %cst_201 : f32 to vector<8x8xf32>
    %579 = arith.mulf %577, %578 : vector<8x8xf32>
    %580 = arith.addf %579, %5 : vector<8x8xf32>
    %cst_202 = arith.constant dense<0xFF800000> : vector<8xf32>
    %581 = vector.multi_reduction <maximumf>, %580, %cst_202 [1] : vector<8x8xf32> to vector<8xf32>
    %582 = vector.shape_cast %581 : vector<8xf32> to vector<8x1xf32>
    %583 = vector.broadcast %582 : vector<8x1xf32> to vector<8x8xf32>
    %584 = arith.subf %580, %583 : vector<8x8xf32>
    %585 = math.exp %584 : vector<8x8xf32>
    %cst_203 = arith.constant dense<0.000000e+00> : vector<8xf32>
    %586 = vector.multi_reduction <add>, %585, %cst_203 [1] : vector<8x8xf32> to vector<8xf32>
    %587 = vector.shape_cast %586 : vector<8xf32> to vector<8x1xf32>
    %588 = tpu.reciprocal %587 {approx = true} : vector<8x1xf32> -> vector<8x1xf32>
    %589 = vector.broadcast %588 : vector<8x1xf32> to vector<8x8xf32>
    %590 = arith.mulf %585, %589 : vector<8x8xf32>
    %cst_204 = arith.constant dense<0.000000e+00> : vector<8x8xf32>
    %591 = tpu.matmul %590, %576, %cst_204 {dimension_numbers = #tpu.dot_dimension_numbers<[1], [0], [0], [1], [0, 0, 1, 1], [], []>} : vector<8x8xf32>, vector<8x8xf32>, vector<8x8xf32> -> vector<8x8xf32>
    %592 = vector.extract_strided_slice %571 {offsets = [0, 8], sizes = [8, 8], strides = [1, 1]} : vector<8x32xf32> to vector<8x8xf32>
    %593 = vector.extract_strided_slice %572 {offsets = [0, 8], sizes = [8, 8], strides = [1, 1]} : vector<8x32xf32> to vector<8x8xf32>
    %594 = vector.extract_strided_slice %573 {offsets = [0, 8], sizes = [8, 8], strides = [1, 1]} : vector<8x32xf32> to vector<8x8xf32>
    %cst_205 = arith.constant dense<0.000000e+00> : vector<8x8xf32>
    %595 = tpu.matmul %592, %593, %cst_205 {dimension_numbers = #tpu.dot_dimension_numbers<[1], [1], [0], [0], [0, 0, 1, 0], [], []>} : vector<8x8xf32>, vector<8x8xf32>, vector<8x8xf32> -> vector<8x8xf32>
    %cst_206 = arith.constant 0.353553385 : f32
    %596 = vector.broadcast %cst_206 : f32 to vector<8x8xf32>
    %597 = arith.mulf %595, %596 : vector<8x8xf32>
    %598 = arith.addf %597, %5 : vector<8x8xf32>
    %cst_207 = arith.constant dense<0xFF800000> : vector<8xf32>
    %599 = vector.multi_reduction <maximumf>, %598, %cst_207 [1] : vector<8x8xf32> to vector<8xf32>
    %600 = vector.shape_cast %599 : vector<8xf32> to vector<8x1xf32>
    %601 = vector.broadcast %600 : vector<8x1xf32> to vector<8x8xf32>
    %602 = arith.subf %598, %601 : vector<8x8xf32>
    %603 = math.exp %602 : vector<8x8xf32>
    %cst_208 = arith.constant dense<0.000000e+00> : vector<8xf32>
    %604 = vector.multi_reduction <add>, %603, %cst_208 [1] : vector<8x8xf32> to vector<8xf32>
    %605 = vector.shape_cast %604 : vector<8xf32> to vector<8x1xf32>
    %606 = tpu.reciprocal %605 {approx = true} : vector<8x1xf32> -> vector<8x1xf32>
    %607 = vector.broadcast %606 : vector<8x1xf32> to vector<8x8xf32>
    %608 = arith.mulf %603, %607 : vector<8x8xf32>
    %cst_209 = arith.constant dense<0.000000e+00> : vector<8x8xf32>
    %609 = tpu.matmul %608, %594, %cst_209 {dimension_numbers = #tpu.dot_dimension_numbers<[1], [0], [0], [1], [0, 0, 1, 1], [], []>} : vector<8x8xf32>, vector<8x8xf32>, vector<8x8xf32> -> vector<8x8xf32>
    %610 = vector.extract_strided_slice %571 {offsets = [0, 16], sizes = [8, 8], strides = [1, 1]} : vector<8x32xf32> to vector<8x8xf32>
    %611 = vector.extract_strided_slice %572 {offsets = [0, 16], sizes = [8, 8], strides = [1, 1]} : vector<8x32xf32> to vector<8x8xf32>
    %612 = vector.extract_strided_slice %573 {offsets = [0, 16], sizes = [8, 8], strides = [1, 1]} : vector<8x32xf32> to vector<8x8xf32>
    %cst_210 = arith.constant dense<0.000000e+00> : vector<8x8xf32>
    %613 = tpu.matmul %610, %611, %cst_210 {dimension_numbers = #tpu.dot_dimension_numbers<[1], [1], [0], [0], [0, 0, 1, 0], [], []>} : vector<8x8xf32>, vector<8x8xf32>, vector<8x8xf32> -> vector<8x8xf32>
    %cst_211 = arith.constant 0.353553385 : f32
    %614 = vector.broadcast %cst_211 : f32 to vector<8x8xf32>
    %615 = arith.mulf %613, %614 : vector<8x8xf32>
    %616 = arith.addf %615, %5 : vector<8x8xf32>
    %cst_212 = arith.constant dense<0xFF800000> : vector<8xf32>
    %617 = vector.multi_reduction <maximumf>, %616, %cst_212 [1] : vector<8x8xf32> to vector<8xf32>
    %618 = vector.shape_cast %617 : vector<8xf32> to vector<8x1xf32>
    %619 = vector.broadcast %618 : vector<8x1xf32> to vector<8x8xf32>
    %620 = arith.subf %616, %619 : vector<8x8xf32>
    %621 = math.exp %620 : vector<8x8xf32>
    %cst_213 = arith.constant dense<0.000000e+00> : vector<8xf32>
    %622 = vector.multi_reduction <add>, %621, %cst_213 [1] : vector<8x8xf32> to vector<8xf32>
    %623 = vector.shape_cast %622 : vector<8xf32> to vector<8x1xf32>
    %624 = tpu.reciprocal %623 {approx = true} : vector<8x1xf32> -> vector<8x1xf32>
    %625 = vector.broadcast %624 : vector<8x1xf32> to vector<8x8xf32>
    %626 = arith.mulf %621, %625 : vector<8x8xf32>
    %cst_214 = arith.constant dense<0.000000e+00> : vector<8x8xf32>
    %627 = tpu.matmul %626, %612, %cst_214 {dimension_numbers = #tpu.dot_dimension_numbers<[1], [0], [0], [1], [0, 0, 1, 1], [], []>} : vector<8x8xf32>, vector<8x8xf32>, vector<8x8xf32> -> vector<8x8xf32>
    %628 = vector.extract_strided_slice %571 {offsets = [0, 24], sizes = [8, 8], strides = [1, 1]} : vector<8x32xf32> to vector<8x8xf32>
    %629 = vector.extract_strided_slice %572 {offsets = [0, 24], sizes = [8, 8], strides = [1, 1]} : vector<8x32xf32> to vector<8x8xf32>
    %630 = vector.extract_strided_slice %573 {offsets = [0, 24], sizes = [8, 8], strides = [1, 1]} : vector<8x32xf32> to vector<8x8xf32>
    %cst_215 = arith.constant dense<0.000000e+00> : vector<8x8xf32>
    %631 = tpu.matmul %628, %629, %cst_215 {dimension_numbers = #tpu.dot_dimension_numbers<[1], [1], [0], [0], [0, 0, 1, 0], [], []>} : vector<8x8xf32>, vector<8x8xf32>, vector<8x8xf32> -> vector<8x8xf32>
    %cst_216 = arith.constant 0.353553385 : f32
    %632 = vector.broadcast %cst_216 : f32 to vector<8x8xf32>
    %633 = arith.mulf %631, %632 : vector<8x8xf32>
    %634 = arith.addf %633, %5 : vector<8x8xf32>
    %cst_217 = arith.constant dense<0xFF800000> : vector<8xf32>
    %635 = vector.multi_reduction <maximumf>, %634, %cst_217 [1] : vector<8x8xf32> to vector<8xf32>
    %636 = vector.shape_cast %635 : vector<8xf32> to vector<8x1xf32>
    %637 = vector.broadcast %636 : vector<8x1xf32> to vector<8x8xf32>
    %638 = arith.subf %634, %637 : vector<8x8xf32>
    %639 = math.exp %638 : vector<8x8xf32>
    %cst_218 = arith.constant dense<0.000000e+00> : vector<8xf32>
    %640 = vector.multi_reduction <add>, %639, %cst_218 [1] : vector<8x8xf32> to vector<8xf32>
    %641 = vector.shape_cast %640 : vector<8xf32> to vector<8x1xf32>
    %642 = tpu.reciprocal %641 {approx = true} : vector<8x1xf32> -> vector<8x1xf32>
    %643 = vector.broadcast %642 : vector<8x1xf32> to vector<8x8xf32>
    %644 = arith.mulf %639, %643 : vector<8x8xf32>
    %cst_219 = arith.constant dense<0.000000e+00> : vector<8x8xf32>
    %645 = tpu.matmul %644, %630, %cst_219 {dimension_numbers = #tpu.dot_dimension_numbers<[1], [0], [0], [1], [0, 0, 1, 1], [], []>} : vector<8x8xf32>, vector<8x8xf32>, vector<8x8xf32> -> vector<8x8xf32>
    %646 = tpu.concatenate %591, %609, %627, %645 in 1 : vector<8x8xf32>, vector<8x8xf32>, vector<8x8xf32>, vector<8x8xf32> -> vector<8x32xf32>
    %647 = tpu.concatenate %570, %646 in 0 : vector<8x32xf32>, vector<8x32xf32> -> vector<16x32xf32>
    %cst_220 = arith.constant dense<0.000000e+00> : vector<16x32xf32>
    %648 = tpu.matmul %647, %492, %cst_220 {dimension_numbers = #tpu.dot_dimension_numbers<[1], [0], [0], [1], [0, 0, 1, 1], [], []>} : vector<16x32xf32>, vector<32x32xf32>, vector<16x32xf32> -> vector<16x32xf32>
    %649 = vector.broadcast %494 : vector<1x32xf32> to vector<16x32xf32>
    %650 = arith.addf %648, %649 : vector<16x32xf32>
    %651 = arith.addf %453, %650 : vector<16x32xf32>
    %652 = vector.extract_strided_slice %455 {offsets = [1, 0], sizes = [1, 32], strides = [1, 1]} : vector<3x32xf32> to vector<1x32xf32>
    %653 = vector.extract_strided_slice %457 {offsets = [1, 0], sizes = [1, 32], strides = [1, 1]} : vector<3x32xf32> to vector<1x32xf32>
    %cst_221 = arith.constant dense<0.000000e+00> : vector<16xf32>
    %654 = vector.multi_reduction <add>, %651, %cst_221 [1] : vector<16x32xf32> to vector<16xf32>
    %655 = vector.shape_cast %654 : vector<16xf32> to vector<16x1xf32>
    %cst_222 = arith.constant 3.200000e+01 : f32
    %656 = vector.broadcast %cst_222 : f32 to vector<16x1xf32>
    %657 = arith.divf %655, %656 : vector<16x1xf32>
    %658 = vector.broadcast %657 : vector<16x1xf32> to vector<16x32xf32>
    %659 = arith.subf %651, %658 : vector<16x32xf32>
    %660 = arith.mulf %659, %659 : vector<16x32xf32>
    %cst_223 = arith.constant dense<0.000000e+00> : vector<16xf32>
    %661 = vector.multi_reduction <add>, %660, %cst_223 [1] : vector<16x32xf32> to vector<16xf32>
    %662 = vector.shape_cast %661 : vector<16xf32> to vector<16x1xf32>
    %cst_224 = arith.constant 0.0322580636 : f32
    %663 = vector.broadcast %cst_224 : f32 to vector<16x1xf32>
    %664 = arith.mulf %662, %663 : vector<16x1xf32>
    %665 = math.sqrt %664 : vector<16x1xf32>
    %cst_225 = arith.constant 9.99999997E-7 : f32
    %666 = vector.broadcast %cst_225 : f32 to vector<16x1xf32>
    %667 = arith.addf %665, %666 : vector<16x1xf32>
    %668 = tpu.reciprocal %667 {approx = true} : vector<16x1xf32> -> vector<16x1xf32>
    %669 = vector.broadcast %668 : vector<16x1xf32> to vector<16x32xf32>
    %670 = arith.mulf %659, %669 : vector<16x32xf32>
    %671 = vector.broadcast %652 : vector<1x32xf32> to vector<16x32xf32>
    %672 = arith.mulf %671, %670 : vector<16x32xf32>
    %673 = vector.broadcast %653 : vector<1x32xf32> to vector<16x32xf32>
    %674 = arith.addf %672, %673 : vector<16x32xf32>
    %c1_226 = arith.constant 1 : index
    %c0_227 = arith.constant 0 : index
    %c0_228 = arith.constant 0 : index
    %675 = vector.load %arg10[%c1_226, %c0_227, %c0_228] : memref<2x32x32xf32, #tpu.memory_space<vmem>>, vector<1x32x32xf32>
    %676 = vector.shape_cast %675 : vector<1x32x32xf32> to vector<32x32xf32>
    %cst_229 = arith.constant dense<0.000000e+00> : vector<16x32xf32>
    %677 = tpu.matmul %674, %676, %cst_229 {dimension_numbers = #tpu.dot_dimension_numbers<[1], [0], [0], [1], [0, 0, 1, 1], [], []>} : vector<16x32xf32>, vector<32x32xf32>, vector<16x32xf32> -> vector<16x32xf32>
    %c1_230 = arith.constant 1 : index
    %c0_231 = arith.constant 0 : index
    %c0_232 = arith.constant 0 : index
    %678 = vector.load %arg11[%c1_230, %c0_231, %c0_232] : memref<2x1x32xf32, #tpu.memory_space<vmem>>, vector<1x1x32xf32>
    %679 = vector.shape_cast %678 : vector<1x1x32xf32> to vector<1x32xf32>
    %680 = vector.broadcast %679 : vector<1x32xf32> to vector<16x32xf32>
    %681 = arith.addf %677, %680 : vector<16x32xf32>
    %c1_233 = arith.constant 1 : index
    %c0_234 = arith.constant 0 : index
    %c0_235 = arith.constant 0 : index
    %682 = vector.load %arg12[%c1_233, %c0_234, %c0_235] : memref<2x32x64xf32, #tpu.memory_space<vmem>>, vector<1x32x64xf32>
    %683 = vector.shape_cast %682 : vector<1x32x64xf32> to vector<32x64xf32>
    %cst_236 = arith.constant dense<0.000000e+00> : vector<32x64xf32>
    %684 = tpu.matmul %1, %683, %cst_236 {dimension_numbers = #tpu.dot_dimension_numbers<[1], [0], [0], [1], [0, 0, 1, 1], [], []>} : vector<32x32xf32>, vector<32x64xf32>, vector<32x64xf32> -> vector<32x64xf32>
    %c1_237 = arith.constant 1 : index
    %c0_238 = arith.constant 0 : index
    %c0_239 = arith.constant 0 : index
    %685 = vector.load %arg13[%c1_237, %c0_238, %c0_239] : memref<2x1x64xf32, #tpu.memory_space<vmem>>, vector<1x1x64xf32>
    %686 = vector.shape_cast %685 : vector<1x1x64xf32> to vector<1x64xf32>
    %687 = vector.broadcast %686 : vector<1x64xf32> to vector<32x64xf32>
    %688 = arith.addf %684, %687 : vector<32x64xf32>
    %689 = vector.extract_strided_slice %688 {offsets = [0, 0], sizes = [32, 32], strides = [1, 1]} : vector<32x64xf32> to vector<32x32xf32>
    %690 = vector.extract_strided_slice %688 {offsets = [0, 32], sizes = [32, 32], strides = [1, 1]} : vector<32x64xf32> to vector<32x32xf32>
    %c1_240 = arith.constant 1 : index
    %c0_241 = arith.constant 0 : index
    %c0_242 = arith.constant 0 : index
    %691 = vector.load %arg14[%c1_240, %c0_241, %c0_242] : memref<2x32x32xf32, #tpu.memory_space<vmem>>, vector<1x32x32xf32>
    %692 = vector.shape_cast %691 : vector<1x32x32xf32> to vector<32x32xf32>
    %c1_243 = arith.constant 1 : index
    %c0_244 = arith.constant 0 : index
    %c0_245 = arith.constant 0 : index
    %693 = vector.load %arg15[%c1_243, %c0_244, %c0_245] : memref<2x1x32xf32, #tpu.memory_space<vmem>>, vector<1x1x32xf32>
    %694 = vector.shape_cast %693 : vector<1x1x32xf32> to vector<1x32xf32>
    %695 = vector.extract_strided_slice %681 {offsets = [0, 0], sizes = [8, 32], strides = [1, 1]} : vector<16x32xf32> to vector<8x32xf32>
    %696 = vector.extract_strided_slice %689 {offsets = [0, 0], sizes = [16, 32], strides = [1, 1]} : vector<32x32xf32> to vector<16x32xf32>
    %697 = vector.extract_strided_slice %690 {offsets = [0, 0], sizes = [16, 32], strides = [1, 1]} : vector<32x32xf32> to vector<16x32xf32>
    %698 = vector.extract_strided_slice %695 {offsets = [0, 0], sizes = [8, 8], strides = [1, 1]} : vector<8x32xf32> to vector<8x8xf32>
    %699 = vector.extract_strided_slice %696 {offsets = [0, 0], sizes = [16, 8], strides = [1, 1]} : vector<16x32xf32> to vector<16x8xf32>
    %700 = vector.extract_strided_slice %697 {offsets = [0, 0], sizes = [16, 8], strides = [1, 1]} : vector<16x32xf32> to vector<16x8xf32>
    %cst_246 = arith.constant dense<0.000000e+00> : vector<8x16xf32>
    %701 = tpu.matmul %698, %699, %cst_246 {dimension_numbers = #tpu.dot_dimension_numbers<[1], [1], [0], [0], [0, 0, 1, 0], [], []>} : vector<8x8xf32>, vector<16x8xf32>, vector<8x16xf32> -> vector<8x16xf32>
    %cst_247 = arith.constant 0.353553385 : f32
    %702 = vector.broadcast %cst_247 : f32 to vector<8x16xf32>
    %703 = arith.mulf %701, %702 : vector<8x16xf32>
    %704 = vector.broadcast %6 : vector<1x16xf32> to vector<8x16xf32>
    %705 = arith.addf %703, %704 : vector<8x16xf32>
    %cst_248 = arith.constant dense<0xFF800000> : vector<8xf32>
    %706 = vector.multi_reduction <maximumf>, %705, %cst_248 [1] : vector<8x16xf32> to vector<8xf32>
    %707 = vector.shape_cast %706 : vector<8xf32> to vector<8x1xf32>
    %708 = vector.broadcast %707 : vector<8x1xf32> to vector<8x16xf32>
    %709 = arith.subf %705, %708 : vector<8x16xf32>
    %710 = math.exp %709 : vector<8x16xf32>
    %cst_249 = arith.constant dense<0.000000e+00> : vector<8xf32>
    %711 = vector.multi_reduction <add>, %710, %cst_249 [1] : vector<8x16xf32> to vector<8xf32>
    %712 = vector.shape_cast %711 : vector<8xf32> to vector<8x1xf32>
    %713 = tpu.reciprocal %712 {approx = true} : vector<8x1xf32> -> vector<8x1xf32>
    %714 = vector.broadcast %713 : vector<8x1xf32> to vector<8x16xf32>
    %715 = arith.mulf %710, %714 : vector<8x16xf32>
    %cst_250 = arith.constant dense<0.000000e+00> : vector<8x8xf32>
    %716 = tpu.matmul %715, %700, %cst_250 {dimension_numbers = #tpu.dot_dimension_numbers<[1], [0], [0], [1], [0, 0, 1, 1], [], []>} : vector<8x16xf32>, vector<16x8xf32>, vector<8x8xf32> -> vector<8x8xf32>
    %717 = vector.extract_strided_slice %695 {offsets = [0, 8], sizes = [8, 8], strides = [1, 1]} : vector<8x32xf32> to vector<8x8xf32>
    %718 = vector.extract_strided_slice %696 {offsets = [0, 8], sizes = [16, 8], strides = [1, 1]} : vector<16x32xf32> to vector<16x8xf32>
    %719 = vector.extract_strided_slice %697 {offsets = [0, 8], sizes = [16, 8], strides = [1, 1]} : vector<16x32xf32> to vector<16x8xf32>
    %cst_251 = arith.constant dense<0.000000e+00> : vector<8x16xf32>
    %720 = tpu.matmul %717, %718, %cst_251 {dimension_numbers = #tpu.dot_dimension_numbers<[1], [1], [0], [0], [0, 0, 1, 0], [], []>} : vector<8x8xf32>, vector<16x8xf32>, vector<8x16xf32> -> vector<8x16xf32>
    %cst_252 = arith.constant 0.353553385 : f32
    %721 = vector.broadcast %cst_252 : f32 to vector<8x16xf32>
    %722 = arith.mulf %720, %721 : vector<8x16xf32>
    %723 = vector.broadcast %6 : vector<1x16xf32> to vector<8x16xf32>
    %724 = arith.addf %722, %723 : vector<8x16xf32>
    %cst_253 = arith.constant dense<0xFF800000> : vector<8xf32>
    %725 = vector.multi_reduction <maximumf>, %724, %cst_253 [1] : vector<8x16xf32> to vector<8xf32>
    %726 = vector.shape_cast %725 : vector<8xf32> to vector<8x1xf32>
    %727 = vector.broadcast %726 : vector<8x1xf32> to vector<8x16xf32>
    %728 = arith.subf %724, %727 : vector<8x16xf32>
    %729 = math.exp %728 : vector<8x16xf32>
    %cst_254 = arith.constant dense<0.000000e+00> : vector<8xf32>
    %730 = vector.multi_reduction <add>, %729, %cst_254 [1] : vector<8x16xf32> to vector<8xf32>
    %731 = vector.shape_cast %730 : vector<8xf32> to vector<8x1xf32>
    %732 = tpu.reciprocal %731 {approx = true} : vector<8x1xf32> -> vector<8x1xf32>
    %733 = vector.broadcast %732 : vector<8x1xf32> to vector<8x16xf32>
    %734 = arith.mulf %729, %733 : vector<8x16xf32>
    %cst_255 = arith.constant dense<0.000000e+00> : vector<8x8xf32>
    %735 = tpu.matmul %734, %719, %cst_255 {dimension_numbers = #tpu.dot_dimension_numbers<[1], [0], [0], [1], [0, 0, 1, 1], [], []>} : vector<8x16xf32>, vector<16x8xf32>, vector<8x8xf32> -> vector<8x8xf32>
    %736 = vector.extract_strided_slice %695 {offsets = [0, 16], sizes = [8, 8], strides = [1, 1]} : vector<8x32xf32> to vector<8x8xf32>
    %737 = vector.extract_strided_slice %696 {offsets = [0, 16], sizes = [16, 8], strides = [1, 1]} : vector<16x32xf32> to vector<16x8xf32>
    %738 = vector.extract_strided_slice %697 {offsets = [0, 16], sizes = [16, 8], strides = [1, 1]} : vector<16x32xf32> to vector<16x8xf32>
    %cst_256 = arith.constant dense<0.000000e+00> : vector<8x16xf32>
    %739 = tpu.matmul %736, %737, %cst_256 {dimension_numbers = #tpu.dot_dimension_numbers<[1], [1], [0], [0], [0, 0, 1, 0], [], []>} : vector<8x8xf32>, vector<16x8xf32>, vector<8x16xf32> -> vector<8x16xf32>
    %cst_257 = arith.constant 0.353553385 : f32
    %740 = vector.broadcast %cst_257 : f32 to vector<8x16xf32>
    %741 = arith.mulf %739, %740 : vector<8x16xf32>
    %742 = vector.broadcast %6 : vector<1x16xf32> to vector<8x16xf32>
    %743 = arith.addf %741, %742 : vector<8x16xf32>
    %cst_258 = arith.constant dense<0xFF800000> : vector<8xf32>
    %744 = vector.multi_reduction <maximumf>, %743, %cst_258 [1] : vector<8x16xf32> to vector<8xf32>
    %745 = vector.shape_cast %744 : vector<8xf32> to vector<8x1xf32>
    %746 = vector.broadcast %745 : vector<8x1xf32> to vector<8x16xf32>
    %747 = arith.subf %743, %746 : vector<8x16xf32>
    %748 = math.exp %747 : vector<8x16xf32>
    %cst_259 = arith.constant dense<0.000000e+00> : vector<8xf32>
    %749 = vector.multi_reduction <add>, %748, %cst_259 [1] : vector<8x16xf32> to vector<8xf32>
    %750 = vector.shape_cast %749 : vector<8xf32> to vector<8x1xf32>
    %751 = tpu.reciprocal %750 {approx = true} : vector<8x1xf32> -> vector<8x1xf32>
    %752 = vector.broadcast %751 : vector<8x1xf32> to vector<8x16xf32>
    %753 = arith.mulf %748, %752 : vector<8x16xf32>
    %cst_260 = arith.constant dense<0.000000e+00> : vector<8x8xf32>
    %754 = tpu.matmul %753, %738, %cst_260 {dimension_numbers = #tpu.dot_dimension_numbers<[1], [0], [0], [1], [0, 0, 1, 1], [], []>} : vector<8x16xf32>, vector<16x8xf32>, vector<8x8xf32> -> vector<8x8xf32>
    %755 = vector.extract_strided_slice %695 {offsets = [0, 24], sizes = [8, 8], strides = [1, 1]} : vector<8x32xf32> to vector<8x8xf32>
    %756 = vector.extract_strided_slice %696 {offsets = [0, 24], sizes = [16, 8], strides = [1, 1]} : vector<16x32xf32> to vector<16x8xf32>
    %757 = vector.extract_strided_slice %697 {offsets = [0, 24], sizes = [16, 8], strides = [1, 1]} : vector<16x32xf32> to vector<16x8xf32>
    %cst_261 = arith.constant dense<0.000000e+00> : vector<8x16xf32>
    %758 = tpu.matmul %755, %756, %cst_261 {dimension_numbers = #tpu.dot_dimension_numbers<[1], [1], [0], [0], [0, 0, 1, 0], [], []>} : vector<8x8xf32>, vector<16x8xf32>, vector<8x16xf32> -> vector<8x16xf32>
    %cst_262 = arith.constant 0.353553385 : f32
    %759 = vector.broadcast %cst_262 : f32 to vector<8x16xf32>
    %760 = arith.mulf %758, %759 : vector<8x16xf32>
    %761 = vector.broadcast %6 : vector<1x16xf32> to vector<8x16xf32>
    %762 = arith.addf %760, %761 : vector<8x16xf32>
    %cst_263 = arith.constant dense<0xFF800000> : vector<8xf32>
    %763 = vector.multi_reduction <maximumf>, %762, %cst_263 [1] : vector<8x16xf32> to vector<8xf32>
    %764 = vector.shape_cast %763 : vector<8xf32> to vector<8x1xf32>
    %765 = vector.broadcast %764 : vector<8x1xf32> to vector<8x16xf32>
    %766 = arith.subf %762, %765 : vector<8x16xf32>
    %767 = math.exp %766 : vector<8x16xf32>
    %cst_264 = arith.constant dense<0.000000e+00> : vector<8xf32>
    %768 = vector.multi_reduction <add>, %767, %cst_264 [1] : vector<8x16xf32> to vector<8xf32>
    %769 = vector.shape_cast %768 : vector<8xf32> to vector<8x1xf32>
    %770 = tpu.reciprocal %769 {approx = true} : vector<8x1xf32> -> vector<8x1xf32>
    %771 = vector.broadcast %770 : vector<8x1xf32> to vector<8x16xf32>
    %772 = arith.mulf %767, %771 : vector<8x16xf32>
    %cst_265 = arith.constant dense<0.000000e+00> : vector<8x8xf32>
    %773 = tpu.matmul %772, %757, %cst_265 {dimension_numbers = #tpu.dot_dimension_numbers<[1], [0], [0], [1], [0, 0, 1, 1], [], []>} : vector<8x16xf32>, vector<16x8xf32>, vector<8x8xf32> -> vector<8x8xf32>
    %774 = tpu.concatenate %716, %735, %754, %773 in 1 : vector<8x8xf32>, vector<8x8xf32>, vector<8x8xf32>, vector<8x8xf32> -> vector<8x32xf32>
    %775 = vector.extract_strided_slice %681 {offsets = [8, 0], sizes = [8, 32], strides = [1, 1]} : vector<16x32xf32> to vector<8x32xf32>
    %776 = vector.extract_strided_slice %689 {offsets = [16, 0], sizes = [16, 32], strides = [1, 1]} : vector<32x32xf32> to vector<16x32xf32>
    %777 = vector.extract_strided_slice %690 {offsets = [16, 0], sizes = [16, 32], strides = [1, 1]} : vector<32x32xf32> to vector<16x32xf32>
    %778 = vector.extract_strided_slice %775 {offsets = [0, 0], sizes = [8, 8], strides = [1, 1]} : vector<8x32xf32> to vector<8x8xf32>
    %779 = vector.extract_strided_slice %776 {offsets = [0, 0], sizes = [16, 8], strides = [1, 1]} : vector<16x32xf32> to vector<16x8xf32>
    %780 = vector.extract_strided_slice %777 {offsets = [0, 0], sizes = [16, 8], strides = [1, 1]} : vector<16x32xf32> to vector<16x8xf32>
    %cst_266 = arith.constant dense<0.000000e+00> : vector<8x16xf32>
    %781 = tpu.matmul %778, %779, %cst_266 {dimension_numbers = #tpu.dot_dimension_numbers<[1], [1], [0], [0], [0, 0, 1, 0], [], []>} : vector<8x8xf32>, vector<16x8xf32>, vector<8x16xf32> -> vector<8x16xf32>
    %cst_267 = arith.constant 0.353553385 : f32
    %782 = vector.broadcast %cst_267 : f32 to vector<8x16xf32>
    %783 = arith.mulf %781, %782 : vector<8x16xf32>
    %784 = vector.broadcast %7 : vector<1x16xf32> to vector<8x16xf32>
    %785 = arith.addf %783, %784 : vector<8x16xf32>
    %cst_268 = arith.constant dense<0xFF800000> : vector<8xf32>
    %786 = vector.multi_reduction <maximumf>, %785, %cst_268 [1] : vector<8x16xf32> to vector<8xf32>
    %787 = vector.shape_cast %786 : vector<8xf32> to vector<8x1xf32>
    %788 = vector.broadcast %787 : vector<8x1xf32> to vector<8x16xf32>
    %789 = arith.subf %785, %788 : vector<8x16xf32>
    %790 = math.exp %789 : vector<8x16xf32>
    %cst_269 = arith.constant dense<0.000000e+00> : vector<8xf32>
    %791 = vector.multi_reduction <add>, %790, %cst_269 [1] : vector<8x16xf32> to vector<8xf32>
    %792 = vector.shape_cast %791 : vector<8xf32> to vector<8x1xf32>
    %793 = tpu.reciprocal %792 {approx = true} : vector<8x1xf32> -> vector<8x1xf32>
    %794 = vector.broadcast %793 : vector<8x1xf32> to vector<8x16xf32>
    %795 = arith.mulf %790, %794 : vector<8x16xf32>
    %cst_270 = arith.constant dense<0.000000e+00> : vector<8x8xf32>
    %796 = tpu.matmul %795, %780, %cst_270 {dimension_numbers = #tpu.dot_dimension_numbers<[1], [0], [0], [1], [0, 0, 1, 1], [], []>} : vector<8x16xf32>, vector<16x8xf32>, vector<8x8xf32> -> vector<8x8xf32>
    %797 = vector.extract_strided_slice %775 {offsets = [0, 8], sizes = [8, 8], strides = [1, 1]} : vector<8x32xf32> to vector<8x8xf32>
    %798 = vector.extract_strided_slice %776 {offsets = [0, 8], sizes = [16, 8], strides = [1, 1]} : vector<16x32xf32> to vector<16x8xf32>
    %799 = vector.extract_strided_slice %777 {offsets = [0, 8], sizes = [16, 8], strides = [1, 1]} : vector<16x32xf32> to vector<16x8xf32>
    %cst_271 = arith.constant dense<0.000000e+00> : vector<8x16xf32>
    %800 = tpu.matmul %797, %798, %cst_271 {dimension_numbers = #tpu.dot_dimension_numbers<[1], [1], [0], [0], [0, 0, 1, 0], [], []>} : vector<8x8xf32>, vector<16x8xf32>, vector<8x16xf32> -> vector<8x16xf32>
    %cst_272 = arith.constant 0.353553385 : f32
    %801 = vector.broadcast %cst_272 : f32 to vector<8x16xf32>
    %802 = arith.mulf %800, %801 : vector<8x16xf32>
    %803 = vector.broadcast %7 : vector<1x16xf32> to vector<8x16xf32>
    %804 = arith.addf %802, %803 : vector<8x16xf32>
    %cst_273 = arith.constant dense<0xFF800000> : vector<8xf32>
    %805 = vector.multi_reduction <maximumf>, %804, %cst_273 [1] : vector<8x16xf32> to vector<8xf32>
    %806 = vector.shape_cast %805 : vector<8xf32> to vector<8x1xf32>
    %807 = vector.broadcast %806 : vector<8x1xf32> to vector<8x16xf32>
    %808 = arith.subf %804, %807 : vector<8x16xf32>
    %809 = math.exp %808 : vector<8x16xf32>
    %cst_274 = arith.constant dense<0.000000e+00> : vector<8xf32>
    %810 = vector.multi_reduction <add>, %809, %cst_274 [1] : vector<8x16xf32> to vector<8xf32>
    %811 = vector.shape_cast %810 : vector<8xf32> to vector<8x1xf32>
    %812 = tpu.reciprocal %811 {approx = true} : vector<8x1xf32> -> vector<8x1xf32>
    %813 = vector.broadcast %812 : vector<8x1xf32> to vector<8x16xf32>
    %814 = arith.mulf %809, %813 : vector<8x16xf32>
    %cst_275 = arith.constant dense<0.000000e+00> : vector<8x8xf32>
    %815 = tpu.matmul %814, %799, %cst_275 {dimension_numbers = #tpu.dot_dimension_numbers<[1], [0], [0], [1], [0, 0, 1, 1], [], []>} : vector<8x16xf32>, vector<16x8xf32>, vector<8x8xf32> -> vector<8x8xf32>
    %816 = vector.extract_strided_slice %775 {offsets = [0, 16], sizes = [8, 8], strides = [1, 1]} : vector<8x32xf32> to vector<8x8xf32>
    %817 = vector.extract_strided_slice %776 {offsets = [0, 16], sizes = [16, 8], strides = [1, 1]} : vector<16x32xf32> to vector<16x8xf32>
    %818 = vector.extract_strided_slice %777 {offsets = [0, 16], sizes = [16, 8], strides = [1, 1]} : vector<16x32xf32> to vector<16x8xf32>
    %cst_276 = arith.constant dense<0.000000e+00> : vector<8x16xf32>
    %819 = tpu.matmul %816, %817, %cst_276 {dimension_numbers = #tpu.dot_dimension_numbers<[1], [1], [0], [0], [0, 0, 1, 0], [], []>} : vector<8x8xf32>, vector<16x8xf32>, vector<8x16xf32> -> vector<8x16xf32>
    %cst_277 = arith.constant 0.353553385 : f32
    %820 = vector.broadcast %cst_277 : f32 to vector<8x16xf32>
    %821 = arith.mulf %819, %820 : vector<8x16xf32>
    %822 = vector.broadcast %7 : vector<1x16xf32> to vector<8x16xf32>
    %823 = arith.addf %821, %822 : vector<8x16xf32>
    %cst_278 = arith.constant dense<0xFF800000> : vector<8xf32>
    %824 = vector.multi_reduction <maximumf>, %823, %cst_278 [1] : vector<8x16xf32> to vector<8xf32>
    %825 = vector.shape_cast %824 : vector<8xf32> to vector<8x1xf32>
    %826 = vector.broadcast %825 : vector<8x1xf32> to vector<8x16xf32>
    %827 = arith.subf %823, %826 : vector<8x16xf32>
    %828 = math.exp %827 : vector<8x16xf32>
    %cst_279 = arith.constant dense<0.000000e+00> : vector<8xf32>
    %829 = vector.multi_reduction <add>, %828, %cst_279 [1] : vector<8x16xf32> to vector<8xf32>
    %830 = vector.shape_cast %829 : vector<8xf32> to vector<8x1xf32>
    %831 = tpu.reciprocal %830 {approx = true} : vector<8x1xf32> -> vector<8x1xf32>
    %832 = vector.broadcast %831 : vector<8x1xf32> to vector<8x16xf32>
    %833 = arith.mulf %828, %832 : vector<8x16xf32>
    %cst_280 = arith.constant dense<0.000000e+00> : vector<8x8xf32>
    %834 = tpu.matmul %833, %818, %cst_280 {dimension_numbers = #tpu.dot_dimension_numbers<[1], [0], [0], [1], [0, 0, 1, 1], [], []>} : vector<8x16xf32>, vector<16x8xf32>, vector<8x8xf32> -> vector<8x8xf32>
    %835 = vector.extract_strided_slice %775 {offsets = [0, 24], sizes = [8, 8], strides = [1, 1]} : vector<8x32xf32> to vector<8x8xf32>
    %836 = vector.extract_strided_slice %776 {offsets = [0, 24], sizes = [16, 8], strides = [1, 1]} : vector<16x32xf32> to vector<16x8xf32>
    %837 = vector.extract_strided_slice %777 {offsets = [0, 24], sizes = [16, 8], strides = [1, 1]} : vector<16x32xf32> to vector<16x8xf32>
    %cst_281 = arith.constant dense<0.000000e+00> : vector<8x16xf32>
    %838 = tpu.matmul %835, %836, %cst_281 {dimension_numbers = #tpu.dot_dimension_numbers<[1], [1], [0], [0], [0, 0, 1, 0], [], []>} : vector<8x8xf32>, vector<16x8xf32>, vector<8x16xf32> -> vector<8x16xf32>
    %cst_282 = arith.constant 0.353553385 : f32
    %839 = vector.broadcast %cst_282 : f32 to vector<8x16xf32>
    %840 = arith.mulf %838, %839 : vector<8x16xf32>
    %841 = vector.broadcast %7 : vector<1x16xf32> to vector<8x16xf32>
    %842 = arith.addf %840, %841 : vector<8x16xf32>
    %cst_283 = arith.constant dense<0xFF800000> : vector<8xf32>
    %843 = vector.multi_reduction <maximumf>, %842, %cst_283 [1] : vector<8x16xf32> to vector<8xf32>
    %844 = vector.shape_cast %843 : vector<8xf32> to vector<8x1xf32>
    %845 = vector.broadcast %844 : vector<8x1xf32> to vector<8x16xf32>
    %846 = arith.subf %842, %845 : vector<8x16xf32>
    %847 = math.exp %846 : vector<8x16xf32>
    %cst_284 = arith.constant dense<0.000000e+00> : vector<8xf32>
    %848 = vector.multi_reduction <add>, %847, %cst_284 [1] : vector<8x16xf32> to vector<8xf32>
    %849 = vector.shape_cast %848 : vector<8xf32> to vector<8x1xf32>
    %850 = tpu.reciprocal %849 {approx = true} : vector<8x1xf32> -> vector<8x1xf32>
    %851 = vector.broadcast %850 : vector<8x1xf32> to vector<8x16xf32>
    %852 = arith.mulf %847, %851 : vector<8x16xf32>
    %cst_285 = arith.constant dense<0.000000e+00> : vector<8x8xf32>
    %853 = tpu.matmul %852, %837, %cst_285 {dimension_numbers = #tpu.dot_dimension_numbers<[1], [0], [0], [1], [0, 0, 1, 1], [], []>} : vector<8x16xf32>, vector<16x8xf32>, vector<8x8xf32> -> vector<8x8xf32>
    %854 = tpu.concatenate %796, %815, %834, %853 in 1 : vector<8x8xf32>, vector<8x8xf32>, vector<8x8xf32>, vector<8x8xf32> -> vector<8x32xf32>
    %855 = tpu.concatenate %774, %854 in 0 : vector<8x32xf32>, vector<8x32xf32> -> vector<16x32xf32>
    %cst_286 = arith.constant dense<0.000000e+00> : vector<16x32xf32>
    %856 = tpu.matmul %855, %692, %cst_286 {dimension_numbers = #tpu.dot_dimension_numbers<[1], [0], [0], [1], [0, 0, 1, 1], [], []>} : vector<16x32xf32>, vector<32x32xf32>, vector<16x32xf32> -> vector<16x32xf32>
    %857 = vector.broadcast %694 : vector<1x32xf32> to vector<16x32xf32>
    %858 = arith.addf %856, %857 : vector<16x32xf32>
    %859 = arith.addf %651, %858 : vector<16x32xf32>
    %860 = vector.extract_strided_slice %455 {offsets = [2, 0], sizes = [1, 32], strides = [1, 1]} : vector<3x32xf32> to vector<1x32xf32>
    %861 = vector.extract_strided_slice %457 {offsets = [2, 0], sizes = [1, 32], strides = [1, 1]} : vector<3x32xf32> to vector<1x32xf32>
    %cst_287 = arith.constant dense<0.000000e+00> : vector<16xf32>
    %862 = vector.multi_reduction <add>, %859, %cst_287 [1] : vector<16x32xf32> to vector<16xf32>
    %863 = vector.shape_cast %862 : vector<16xf32> to vector<16x1xf32>
    %cst_288 = arith.constant 3.200000e+01 : f32
    %864 = vector.broadcast %cst_288 : f32 to vector<16x1xf32>
    %865 = arith.divf %863, %864 : vector<16x1xf32>
    %866 = vector.broadcast %865 : vector<16x1xf32> to vector<16x32xf32>
    %867 = arith.subf %859, %866 : vector<16x32xf32>
    %868 = arith.mulf %867, %867 : vector<16x32xf32>
    %cst_289 = arith.constant dense<0.000000e+00> : vector<16xf32>
    %869 = vector.multi_reduction <add>, %868, %cst_289 [1] : vector<16x32xf32> to vector<16xf32>
    %870 = vector.shape_cast %869 : vector<16xf32> to vector<16x1xf32>
    %cst_290 = arith.constant 0.0322580636 : f32
    %871 = vector.broadcast %cst_290 : f32 to vector<16x1xf32>
    %872 = arith.mulf %870, %871 : vector<16x1xf32>
    %873 = math.sqrt %872 : vector<16x1xf32>
    %cst_291 = arith.constant 9.99999997E-7 : f32
    %874 = vector.broadcast %cst_291 : f32 to vector<16x1xf32>
    %875 = arith.addf %873, %874 : vector<16x1xf32>
    %876 = tpu.reciprocal %875 {approx = true} : vector<16x1xf32> -> vector<16x1xf32>
    %877 = vector.broadcast %876 : vector<16x1xf32> to vector<16x32xf32>
    %878 = arith.mulf %867, %877 : vector<16x32xf32>
    %879 = vector.broadcast %860 : vector<1x32xf32> to vector<16x32xf32>
    %880 = arith.mulf %879, %878 : vector<16x32xf32>
    %881 = vector.broadcast %861 : vector<1x32xf32> to vector<16x32xf32>
    %882 = arith.addf %880, %881 : vector<16x32xf32>
    %c1_292 = arith.constant 1 : index
    %c0_293 = arith.constant 0 : index
    %c0_294 = arith.constant 0 : index
    %883 = vector.load %arg16[%c1_292, %c0_293, %c0_294] : memref<2x32x64xf32, #tpu.memory_space<vmem>>, vector<1x32x64xf32>
    %884 = vector.shape_cast %883 : vector<1x32x64xf32> to vector<32x64xf32>
    %cst_295 = arith.constant dense<0.000000e+00> : vector<16x64xf32>
    %885 = tpu.matmul %882, %884, %cst_295 {dimension_numbers = #tpu.dot_dimension_numbers<[1], [0], [0], [1], [0, 0, 1, 1], [], []>} : vector<16x32xf32>, vector<32x64xf32>, vector<16x64xf32> -> vector<16x64xf32>
    %c1_296 = arith.constant 1 : index
    %c0_297 = arith.constant 0 : index
    %c0_298 = arith.constant 0 : index
    %886 = vector.load %arg17[%c1_296, %c0_297, %c0_298] : memref<2x1x64xf32, #tpu.memory_space<vmem>>, vector<1x1x64xf32>
    %887 = vector.shape_cast %886 : vector<1x1x64xf32> to vector<1x64xf32>
    %888 = vector.broadcast %887 : vector<1x64xf32> to vector<16x64xf32>
    %889 = arith.addf %885, %888 : vector<16x64xf32>
    %cst_299 = arith.constant 0.000000e+00 : f32
    %890 = vector.broadcast %cst_299 : f32 to vector<16x64xf32>
    %891 = arith.maximumf %889, %890 : vector<16x64xf32>
    %c1_300 = arith.constant 1 : index
    %c0_301 = arith.constant 0 : index
    %c0_302 = arith.constant 0 : index
    %892 = vector.load %arg18[%c1_300, %c0_301, %c0_302] : memref<2x64x32xf32, #tpu.memory_space<vmem>>, vector<1x64x32xf32>
    %893 = vector.shape_cast %892 : vector<1x64x32xf32> to vector<64x32xf32>
    %cst_303 = arith.constant dense<0.000000e+00> : vector<16x32xf32>
    %894 = tpu.matmul %891, %893, %cst_303 {dimension_numbers = #tpu.dot_dimension_numbers<[1], [0], [0], [1], [0, 0, 1, 1], [], []>} : vector<16x64xf32>, vector<64x32xf32>, vector<16x32xf32> -> vector<16x32xf32>
    %895 = arith.addf %859, %894 : vector<16x32xf32>
    %c1_304 = arith.constant 1 : index
    %c0_305 = arith.constant 0 : index
    %c0_306 = arith.constant 0 : index
    %896 = vector.load %arg19[%c1_304, %c0_305, %c0_306] : memref<2x1x32xf32, #tpu.memory_space<vmem>>, vector<1x1x32xf32>
    %897 = vector.shape_cast %896 : vector<1x1x32xf32> to vector<1x32xf32>
    %898 = vector.broadcast %897 : vector<1x32xf32> to vector<16x32xf32>
    %899 = arith.addf %895, %898 : vector<16x32xf32>
    %c0_307 = arith.constant 0 : index
    %c0_308 = arith.constant 0 : index
    %900 = vector.load %arg20[%c0_307, %c0_308] : memref<1x32xf32, #tpu.memory_space<vmem>>, vector<1x32xf32>
    %c0_309 = arith.constant 0 : index
    %c0_310 = arith.constant 0 : index
    %901 = vector.load %arg21[%c0_309, %c0_310] : memref<1x32xf32, #tpu.memory_space<vmem>>, vector<1x32xf32>
    %cst_311 = arith.constant dense<0.000000e+00> : vector<16xf32>
    %902 = vector.multi_reduction <add>, %899, %cst_311 [1] : vector<16x32xf32> to vector<16xf32>
    %903 = vector.shape_cast %902 : vector<16xf32> to vector<16x1xf32>
    %cst_312 = arith.constant 3.200000e+01 : f32
    %904 = vector.broadcast %cst_312 : f32 to vector<16x1xf32>
    %905 = arith.divf %903, %904 : vector<16x1xf32>
    %906 = vector.broadcast %905 : vector<16x1xf32> to vector<16x32xf32>
    %907 = arith.subf %899, %906 : vector<16x32xf32>
    %908 = arith.mulf %907, %907 : vector<16x32xf32>
    %cst_313 = arith.constant dense<0.000000e+00> : vector<16xf32>
    %909 = vector.multi_reduction <add>, %908, %cst_313 [1] : vector<16x32xf32> to vector<16xf32>
    %910 = vector.shape_cast %909 : vector<16xf32> to vector<16x1xf32>
    %cst_314 = arith.constant 0.0322580636 : f32
    %911 = vector.broadcast %cst_314 : f32 to vector<16x1xf32>
    %912 = arith.mulf %910, %911 : vector<16x1xf32>
    %913 = math.sqrt %912 : vector<16x1xf32>
    %cst_315 = arith.constant 9.99999997E-7 : f32
    %914 = vector.broadcast %cst_315 : f32 to vector<16x1xf32>
    %915 = arith.addf %913, %914 : vector<16x1xf32>
    %916 = tpu.reciprocal %915 {approx = true} : vector<16x1xf32> -> vector<16x1xf32>
    %917 = vector.broadcast %916 : vector<16x1xf32> to vector<16x32xf32>
    %918 = arith.mulf %907, %917 : vector<16x32xf32>
    %919 = vector.broadcast %900 : vector<1x32xf32> to vector<16x32xf32>
    %920 = arith.mulf %919, %918 : vector<16x32xf32>
    %921 = vector.broadcast %901 : vector<1x32xf32> to vector<16x32xf32>
    %922 = arith.addf %920, %921 : vector<16x32xf32>
    %c0_316 = arith.constant 0 : index
    %c0_317 = arith.constant 0 : index
    %923 = vector.load %arg22[%c0_316, %c0_317] : memref<16x32xf32, #tpu.memory_space<vmem>>, vector<16x32xf32>
    tpu.vector_store %arg22[%c0_316, %c0_317], %922 {strides = array<i32>} : memref<16x32xf32, #tpu.memory_space<vmem>>, vector<16x32xf32>,
    return
  }
}

</mosaic_0001>

<llo_original>
// kernel: tpu_custom_call.1
$region0: #{tpu_custom_call.1}
  #allocation0 [shape = 'u32[]', space=smem, size = 0x4, offset = 0x4, fixed_abs, tag = 'smem constant byte address 0x4 - core index']
  #allocation1 [shape = 'u32[144,128]{1,0:T(1,128)}', space=vmem, size = 0x12000, scoped, tag = 'internal scratch']
  %s0 = inlined_call_operand.vmem [shape: f32[16,32], index: 0, kind: input, shape index: {}]
  %s1 = inlined_call_operand.hbm [shape: f32[32,32], index: 1, kind: input, shape index: {}]
  %s2 = inlined_call_operand.vmem [shape: f32[16,8], index: 2, kind: input, shape index: {}]
  %s3 = inlined_call_operand.vmem [shape: f32[2,16], index: 3, kind: input, shape index: {}]
  %s4 = inlined_call_operand.vmem [shape: f32[2,3,32], index: 4, kind: input, shape index: {}]
  %s5 = inlined_call_operand.vmem [shape: f32[2,3,32], index: 5, kind: input, shape index: {}]
  %s6 = inlined_call_operand.vmem [shape: f32[2,32,96], index: 6, kind: input, shape index: {}]
  %s7 = inlined_call_operand.vmem [shape: f32[2,1,96], index: 7, kind: input, shape index: {}]
  %s8 = inlined_call_operand.vmem [shape: f32[2,32,32], index: 8, kind: input, shape index: {}]
  %s9 = inlined_call_operand.hbm [shape: f32[2,1,32], index: 9, kind: input, shape index: {}]
  %s10 = inlined_call_operand.vmem [shape: f32[2,32,32], index: 10, kind: input, shape index: {}]
  %s11 = inlined_call_operand.hbm [shape: f32[2,1,32], index: 11, kind: input, shape index: {}]
  %s12 = inlined_call_operand.hbm [shape: f32[2,32,64], index: 12, kind: input, shape index: {}]
  %s13 = inlined_call_operand.hbm [shape: f32[2,1,64], index: 13, kind: input, shape index: {}]
  %s14 = inlined_call_operand.hbm [shape: f32[2,32,32], index: 14, kind: input, shape index: {}]
  %s15 = inlined_call_operand.hbm [shape: f32[2,1,32], index: 15, kind: input, shape index: {}]
  %s16 = inlined_call_operand.hbm [shape: f32[2,32,64], index: 16, kind: input, shape index: {}]
  %s17 = inlined_call_operand.hbm [shape: f32[2,1,64], index: 17, kind: input, shape index: {}]
  %s18 = inlined_call_operand.vmem [shape: f32[2,64,32], index: 18, kind: input, shape index: {}]
  %s19 = inlined_call_operand.hbm [shape: f32[2,1,32], index: 19, kind: input, shape index: {}]
  %s20 = inlined_call_operand.vmem [shape: f32[1,32], index: 20, kind: input, shape index: {}]
  %s21 = inlined_call_operand.vmem [shape: f32[1,32], index: 21, kind: input, shape index: {}]
  %s22 = inlined_call_operand.hbm [shape: f32[16,32], index: 22, kind: output, shape index: {}]
  %s23 = sld [smem:[#allocation0]]
  $region138: #{tpu_custom_call.1} parent=0
    _
  %s25 = ssub.s32 1, %s23
  %s26 = scalar_select 0, %s25, %s23
  $region1: #{tpu_custom_call.1} parent=0
    #allocation2 [shape = 'u8[16384]{0}', space=vmem, size = 0x4000, scoped, tag = 'input window, operand 1, single buffered']
    #allocation3 [shape = 's32[1]{0}', space=sflag, size = 0x4, scoped, tag = 'scoped memory for tpu_custom_call.1']
    #allocation4 [shape = 's32[1]{0}', space=sflag, size = 0x4, scoped, tag = 'scoped memory for tpu_custom_call.1']
    #allocation5 [shape = 'u8[1024]{0}', space=vmem, size = 0x400, scoped, tag = 'input window, operand 9, single buffered']
    #allocation6 [shape = 's32[1]{0}', space=sflag, size = 0x4, scoped, tag = 'scoped memory for tpu_custom_call.1']
    #allocation7 [shape = 'u8[1024]{0}', space=vmem, size = 0x400, scoped, tag = 'input window, operand 11, single buffered']
    #allocation8 [shape = 'u8[32768]{0}', space=vmem, size = 0x8000, scoped, tag = 'input window, operand 12, single buffered']
    #allocation9 [shape = 's32[1]{0}', space=sflag, size = 0x4, scoped, tag = 'scoped memory for tpu_custom_call.1']
    #allocation10 [shape = 'u8[1024]{0}', space=vmem, size = 0x400, scoped, tag = 'input window, operand 13, single buffered']
    #allocation11 [shape = 'u8[32768]{0}', space=vmem, size = 0x8000, scoped, tag = 'input window, operand 14, single buffered']
    #allocation12 [shape = 's32[1]{0}', space=sflag, size = 0x4, scoped, tag = 'scoped memory for tpu_custom_call.1']
    #allocation13 [shape = 'u8[1024]{0}', space=vmem, size = 0x400, scoped, tag = 'input window, operand 15, single buffered']
    #allocation14 [shape = 'u8[32768]{0}', space=vmem, size = 0x8000, scoped, tag = 'input window, operand 16, single buffered']
    #allocation15 [shape = 's32[1]{0}', space=sflag, size = 0x4, scoped, tag = 'scoped memory for tpu_custom_call.1']
    #allocation16 [shape = 'u8[1024]{0}', space=vmem, size = 0x400, scoped, tag = 'input window, operand 17, single buffered']
    #allocation17 [shape = 'u8[1024]{0}', space=vmem, size = 0x400, scoped, tag = 'input window, operand 19, single buffered']
    #allocation18 [shape = 's32[1]{0}', space=sflag, size = 0x4, scoped, tag = 'scoped memory for tpu_custom_call.1']
    #allocation19 [shape = 'u8[8192]{0}', space=vmem, size = 0x2000, scoped, tag = 'output window, operand 0, single buffered']
    %27 = vsyncpa [#allocation3], 0
    %28 = vsyncpa [#allocation6], 0
    %29 = vsyncpa [#allocation9], 0
    %30 = vsyncpa [#allocation12], 0
    %31 = vsyncpa [#allocation15], 0
    %32 = vsyncpa [#allocation18], 0
    %33 = vsyncpa [#allocation4], 0
    // Predicated region
    $region2: #{tpu_custom_call.1} parent=1 // pred_check
      _
    $region3: #{tpu_custom_call.1} parent=1 // pred_check_branch
      %35 = sbr.rel (0) target = $region5
    $region4: #{tpu_custom_call.1} parent=1 // pred_region
      _
    $region5: #{tpu_custom_call.1} parent=1 // pred_fallthru
      _
    // Predicated region
    $region6: #{tpu_custom_call.1} parent=1 // pred_check
      _
    $region7: #{tpu_custom_call.1} parent=1 // pred_check_branch
      %37 = sbr.rel (0) target = $region9
    $region8: #{tpu_custom_call.1} parent=1 // pred_region
      %s39 = ssub.s32 512, 512
      %40 = vsyncadd [#allocation3], %s39
      %s41 = sshll.u32 [#allocation2], 4
      %s42 = int_to_ptr.vmem [resolvable:$true] %s41
      %47 = dma.hbm_to_vmem [thread:$0]  %s1, 512, %s42, [#allocation3], 128, 128, 8
    $region9: #{tpu_custom_call.1} parent=1 // pred_fallthru
      _
    // Predicated region
    $region10: #{tpu_custom_call.1} parent=1 // pred_check
      _
    $region11: #{tpu_custom_call.1} parent=1 // pred_check_branch
      %49 = sbr.rel (0) target = $region13
    $region12: #{tpu_custom_call.1} parent=1 // pred_region
      _
    $region13: #{tpu_custom_call.1} parent=1 // pred_fallthru
      _
    // Predicated region
    $region14: #{tpu_custom_call.1} parent=1 // pred_check
      _
    $region15: #{tpu_custom_call.1} parent=1 // pred_check_branch
      %51 = sbr.rel (0) target = $region17
    $region16: #{tpu_custom_call.1} parent=1 // pred_region
      _
    $region17: #{tpu_custom_call.1} parent=1 // pred_fallthru
      _
    // Predicated region
    $region18: #{tpu_custom_call.1} parent=1 // pred_check
      _
    $region19: #{tpu_custom_call.1} parent=1 // pred_check_branch
      %53 = sbr.rel (0) target = $region21
    $region20: #{tpu_custom_call.1} parent=1 // pred_region
      _
    $region21: #{tpu_custom_call.1} parent=1 // pred_fallthru
      _
    // Predicated region
    $region22: #{tpu_custom_call.1} parent=1 // pred_check
      _
    $region23: #{tpu_custom_call.1} parent=1 // pred_check_branch
      %55 = sbr.rel (0) target = $region25
    $region24: #{tpu_custom_call.1} parent=1 // pred_region
      _
    $region25: #{tpu_custom_call.1} parent=1 // pred_fallthru
      _
    // Predicated region
    $region26: #{tpu_custom_call.1} parent=1 // pred_check
      _
    $region27: #{tpu_custom_call.1} parent=1 // pred_check_branch
      %57 = sbr.rel (0) target = $region29
    $region28: #{tpu_custom_call.1} parent=1 // pred_region
      _
    $region29: #{tpu_custom_call.1} parent=1 // pred_fallthru
      _
    // Predicated region
    $region30: #{tpu_custom_call.1} parent=1 // pred_check
      _
    $region31: #{tpu_custom_call.1} parent=1 // pred_check_branch
      %59 = sbr.rel (0) target = $region33
    $region32: #{tpu_custom_call.1} parent=1 // pred_region
      _
    $region33: #{tpu_custom_call.1} parent=1 // pred_fallthru
      _
    // Predicated region
    $region34: #{tpu_custom_call.1} parent=1 // pred_check
      _
    $region35: #{tpu_custom_call.1} parent=1 // pred_check_branch
      %61 = sbr.rel (0) target = $region37
    $region36: #{tpu_custom_call.1} parent=1 // pred_region
      _
    $region37: #{tpu_custom_call.1} parent=1 // pred_fallthru
      _
    // Predicated region
    $region38: #{tpu_custom_call.1} parent=1 // pred_check
      _
    $region39: #{tpu_custom_call.1} parent=1 // pred_check_branch
      %63 = sbr.rel (0) target = $region41
    $region40: #{tpu_custom_call.1} parent=1 // pred_region
      %s65 = ssub.s32 32, 32
      %66 = vsyncadd [#allocation6], %s65
      %s67 = sshll.u32 [#allocation5], 4
      %s68 = int_to_ptr.vmem [resolvable:$true] %s67
      %73 = dma.hbm_to_vmem [thread:$0]  %s9, 32, %s68, [#allocation6], 16, 16, 1
    $region41: #{tpu_custom_call.1} parent=1 // pred_fallthru
      _
    // Predicated region
    $region42: #{tpu_custom_call.1} parent=1 // pred_check
      _
    $region43: #{tpu_custom_call.1} parent=1 // pred_check_branch
      %75 = sbr.rel (0) target = $region45
    $region44: #{tpu_custom_call.1} parent=1 // pred_region
      _
    $region45: #{tpu_custom_call.1} parent=1 // pred_fallthru
      _
    // Predicated region
    $region46: #{tpu_custom_call.1} parent=1 // pred_check
      _
    $region47: #{tpu_custom_call.1} parent=1 // pred_check_branch
      %77 = sbr.rel (0) target = $region49
    $region48: #{tpu_custom_call.1} parent=1 // pred_region
      %s79 = ssub.s32 32, 32
      %80 = vsyncadd [#allocation6], %s79
      %s81 = sshll.u32 [#allocation7], 4
      %s82 = int_to_ptr.vmem [resolvable:$true] %s81
      %87 = dma.hbm_to_vmem [thread:$0]  %s11, 32, %s82, [#allocation6], 16, 16, 1
    $region49: #{tpu_custom_call.1} parent=1 // pred_fallthru
      _
    // Predicated region
    $region50: #{tpu_custom_call.1} parent=1 // pred_check
      _
    $region51: #{tpu_custom_call.1} parent=1 // pred_check_branch
      %89 = sbr.rel (0) target = $region53
    $region52: #{tpu_custom_call.1} parent=1 // pred_region
      %s91 = ssub.s32 1024, 1024
      %92 = vsyncadd [#allocation9], %s91
      %s93 = sshll.u32 [#allocation8], 4
      %s94 = int_to_ptr.vmem [resolvable:$true] %s93
      %99 = dma.hbm_to_vmem [thread:$0]  %s12, 1024, %s94, [#allocation9], 128, 128, 8
    $region53: #{tpu_custom_call.1} parent=1 // pred_fallthru
      _
    // Predicated region
    $region54: #{tpu_custom_call.1} parent=1 // pred_check
      _
    $region55: #{tpu_custom_call.1} parent=1 // pred_check_branch
      %101 = sbr.rel (0) target = $region57
    $region56: #{tpu_custom_call.1} parent=1 // pred_region
      %s103 = ssub.s32 32, 32
      %104 = vsyncadd [#allocation9], %s103
      %s105 = sshll.u32 [#allocation10], 4
      %s106 = int_to_ptr.vmem [resolvable:$true] %s105
      %111 = dma.hbm_to_vmem [thread:$0]  %s13, 32, %s106, [#allocation9], 16, 16, 1
    $region57: #{tpu_custom_call.1} parent=1 // pred_fallthru
      _
    // Predicated region
    $region58: #{tpu_custom_call.1} parent=1 // pred_check
      _
    $region59: #{tpu_custom_call.1} parent=1 // pred_check_branch
      %113 = sbr.rel (0) target = $region61
    $region60: #{tpu_custom_call.1} parent=1 // pred_region
      %s115 = ssub.s32 1024, 1024
      %116 = vsyncadd [#allocation12], %s115
      %s117 = sshll.u32 [#allocation11], 4
      %s118 = int_to_ptr.vmem [resolvable:$true] %s117
      %123 = dma.hbm_to_vmem [thread:$0]  %s14, 1024, %s118, [#allocation12], 128, 128, 8
    $region61: #{tpu_custom_call.1} parent=1 // pred_fallthru
      _
    // Predicated region
    $region62: #{tpu_custom_call.1} parent=1 // pred_check
      _
    $region63: #{tpu_custom_call.1} parent=1 // pred_check_branch
      %125 = sbr.rel (0) target = $region65
    $region64: #{tpu_custom_call.1} parent=1 // pred_region
      %s127 = ssub.s32 32, 32
      %128 = vsyncadd [#allocation12], %s127
      %s129 = sshll.u32 [#allocation13], 4
      %s130 = int_to_ptr.vmem [resolvable:$true] %s129
      %135 = dma.hbm_to_vmem [thread:$0]  %s15, 32, %s130, [#allocation12], 16, 16, 1
    $region65: #{tpu_custom_call.1} parent=1 // pred_fallthru
      _
    // Predicated region
    $region66: #{tpu_custom_call.1} parent=1 // pred_check
      _
    $region67: #{tpu_custom_call.1} parent=1 // pred_check_branch
      %137 = sbr.rel (0) target = $region69
    $region68: #{tpu_custom_call.1} parent=1 // pred_region
      %s139 = ssub.s32 1024, 1024
      %140 = vsyncadd [#allocation15], %s139
      %s141 = sshll.u32 [#allocation14], 4
      %s142 = int_to_ptr.vmem [resolvable:$true] %s141
      %147 = dma.hbm_to_vmem [thread:$0]  %s16, 1024, %s142, [#allocation15], 128, 128, 8
    $region69: #{tpu_custom_call.1} parent=1 // pred_fallthru
      _
    // Predicated region
    $region70: #{tpu_custom_call.1} parent=1 // pred_check
      _
    $region71: #{tpu_custom_call.1} parent=1 // pred_check_branch
      %149 = sbr.rel (0) target = $region73
    $region72: #{tpu_custom_call.1} parent=1 // pred_region
      %s151 = ssub.s32 32, 32
      %152 = vsyncadd [#allocation15], %s151
      %s153 = sshll.u32 [#allocation16], 4
      %s154 = int_to_ptr.vmem [resolvable:$true] %s153
      %159 = dma.hbm_to_vmem [thread:$0]  %s17, 32, %s154, [#allocation15], 16, 16, 1
    $region73: #{tpu_custom_call.1} parent=1 // pred_fallthru
      _
    // Predicated region
    $region74: #{tpu_custom_call.1} parent=1 // pred_check
      _
    $region75: #{tpu_custom_call.1} parent=1 // pred_check_branch
      %161 = sbr.rel (0) target = $region77
    $region76: #{tpu_custom_call.1} parent=1 // pred_region
      _
    $region77: #{tpu_custom_call.1} parent=1 // pred_fallthru
      _
    // Predicated region
    $region78: #{tpu_custom_call.1} parent=1 // pred_check
      _
    $region79: #{tpu_custom_call.1} parent=1 // pred_check_branch
      %163 = sbr.rel (0) target = $region81
    $region80: #{tpu_custom_call.1} parent=1 // pred_region
      %s165 = ssub.s32 32, 32
      %166 = vsyncadd [#allocation18], %s165
      %s167 = sshll.u32 [#allocation17], 4
      %s168 = int_to_ptr.vmem [resolvable:$true] %s167
      %173 = dma.hbm_to_vmem [thread:$0]  %s19, 32, %s168, [#allocation18], 16, 16, 1
    $region81: #{tpu_custom_call.1} parent=1 // pred_fallthru
      _
    // Predicated region
    $region82: #{tpu_custom_call.1} parent=1 // pred_check
      _
    $region83: #{tpu_custom_call.1} parent=1 // pred_check_branch
      %175 = sbr.rel (0) target = $region85
    $region84: #{tpu_custom_call.1} parent=1 // pred_region
      _
    $region85: #{tpu_custom_call.1} parent=1 // pred_fallthru
      _
    // Predicated region
    $region86: #{tpu_custom_call.1} parent=1 // pred_check
      _
    $region87: #{tpu_custom_call.1} parent=1 // pred_check_branch
      %177 = sbr.rel (0) target = $region89
    $region88: #{tpu_custom_call.1} parent=1 // pred_region
      _
    $region89: #{tpu_custom_call.1} parent=1 // pred_fallthru
      _
    // Predicated region
    $region90: #{tpu_custom_call.1} parent=1 // pred_check
      _
    $region91: #{tpu_custom_call.1} parent=1 // pred_check_branch
      %179 = sbr.rel (0) target = $region93
    $region92: #{tpu_custom_call.1} parent=1 // pred_region
      %180 = dma.done [#allocation3], 512
    $region93: #{tpu_custom_call.1} parent=1 // pred_fallthru
      _
    // Predicated region
    $region94: #{tpu_custom_call.1} parent=1 // pred_check
      _
    $region95: #{tpu_custom_call.1} parent=1 // pred_check_branch
      %182 = sbr.rel (0) target = $region97
    $region96: #{tpu_custom_call.1} parent=1 // pred_region
      %183 = dma.done [#allocation6], 32
    $region97: #{tpu_custom_call.1} parent=1 // pred_fallthru
      _
    // Predicated region
    $region98: #{tpu_custom_call.1} parent=1 // pred_check
      _
    $region99: #{tpu_custom_call.1} parent=1 // pred_check_branch
      %185 = sbr.rel (0) target = $region101
    $region100: #{tpu_custom_call.1} parent=1 // pred_region
      %186 = dma.done [#allocation6], 32
    $region101: #{tpu_custom_call.1} parent=1 // pred_fallthru
      _
    // Predicated region
    $region102: #{tpu_custom_call.1} parent=1 // pred_check
      _
    $region103: #{tpu_custom_call.1} parent=1 // pred_check_branch
      %188 = sbr.rel (0) target = $region105
    $region104: #{tpu_custom_call.1} parent=1 // pred_region
      %189 = dma.done [#allocation9], 1024
    $region105: #{tpu_custom_call.1} parent=1 // pred_fallthru
      _
    // Predicated region
    $region106: #{tpu_custom_call.1} parent=1 // pred_check
      _
    $region107: #{tpu_custom_call.1} parent=1 // pred_check_branch
      %191 = sbr.rel (0) target = $region109
    $region108: #{tpu_custom_call.1} parent=1 // pred_region
      %192 = dma.done [#allocation9], 32
    $region109: #{tpu_custom_call.1} parent=1 // pred_fallthru
      _
    // Predicated region
    $region110: #{tpu_custom_call.1} parent=1 // pred_check
      _
    $region111: #{tpu_custom_call.1} parent=1 // pred_check_branch
      %194 = sbr.rel (0) target = $region113
    $region112: #{tpu_custom_call.1} parent=1 // pred_region
      %195 = dma.done [#allocation12], 1024
    $region113: #{tpu_custom_call.1} parent=1 // pred_fallthru
      _
    // Predicated region
    $region114: #{tpu_custom_call.1} parent=1 // pred_check
      _
    $region115: #{tpu_custom_call.1} parent=1 // pred_check_branch
      %197 = sbr.rel (0) target = $region117
    $region116: #{tpu_custom_call.1} parent=1 // pred_region
      %198 = dma.done [#allocation12], 32
    $region117: #{tpu_custom_call.1} parent=1 // pred_fallthru
      _
    // Predicated region
    $region118: #{tpu_custom_call.1} parent=1 // pred_check
      _
    $region119: #{tpu_custom_call.1} parent=1 // pred_check_branch
      %200 = sbr.rel (0) target = $region121
    $region120: #{tpu_custom_call.1} parent=1 // pred_region
      %201 = dma.done [#allocation15], 1024
    $region121: #{tpu_custom_call.1} parent=1 // pred_fallthru
      _
    // Predicated region
    $region122: #{tpu_custom_call.1} parent=1 // pred_check
      _
    $region123: #{tpu_custom_call.1} parent=1 // pred_check_branch
      %203 = sbr.rel (0) target = $region125
    $region124: #{tpu_custom_call.1} parent=1 // pred_region
      %204 = dma.done [#allocation15], 32
    $region125: #{tpu_custom_call.1} parent=1 // pred_fallthru
      _
    // Predicated region
    $region126: #{tpu_custom_call.1} parent=1 // pred_check
      _
    $region127: #{tpu_custom_call.1} parent=1 // pred_check_branch
      %206 = sbr.rel (0) target = $region129
    $region128: #{tpu_custom_call.1} parent=1 // pred_region
      %207 = dma.done [#allocation18], 32
    $region129: #{tpu_custom_call.1} parent=1 // pred_fallthru
      _
    %v208 = vld [vmem:[%s0] sm:$0xff]
    %v209 = vld [vmem:[%s0 + $0x8] sm:$0xff]
    %v210 = vld [vmem:[#allocation2] sm:$0xff]
    %v211 = vld [vmem:[#allocation2 + $0x8] sm:$0xff]
    %v212 = vld [vmem:[#allocation2 + $0x10] sm:$0xff]
    %v213 = vld [vmem:[#allocation2 + $0x18] sm:$0xff]
    %v214 = vld [vmem:[%s2] sm:$0xff]
    %v215 = vld [vmem:[%s2 + $0x8] sm:$0xff]
    %v216 = vld [vmem:[%s3] sm:$0x3]
    %v217 = vld [vmem:[%s4] sm:$0x7]
    %v218 = vld [vmem:[%s5] sm:$0x7]
    %vm219 = vcmask 261120
    %v220 = vsel %vm219, %v208, 0.0
    %221 = vadd.xlane.f32.xlu0 %v220
    %v222 = vpop.xlane.xlu0 %221
    %v223 = vsel %vm219, %v209, 0.0
    %224 = vadd.xlane.f32.xlu0 %v223
    %v225 = vpop.xlane.xlu0 %224
    %v226 = vrcp.pop 32.0
    %v227 = vmul.f32 %v222, %v226
    %v228 = vmul.f32 %v225, %v226
    %v229 = vsub.f32 %v208, %v227
    %v230 = vsub.f32 %v209, %v228
    %v231 = vmul.f32 %v229, %v229
    %v232 = vmul.f32 %v230, %v230
    %v233 = vsel %vm219, %v231, 0.0
    %234 = vadd.xlane.f32.xlu0 %v233
    %v235 = vpop.xlane.xlu0 %234
    %v236 = vsel %vm219, %v232, 0.0
    %237 = vadd.xlane.f32.xlu0 %v236
    %v238 = vpop.xlane.xlu0 %237
    %v239 = vmul.f32 %v235, 0.032258064
    %v240 = vmul.f32 %v238, 0.032258064
    %v241 = vrsqrt.pop %v239
    %v242 = vmul.f32 %v239, %v241
    %vm243 = vcmp.eq.f32.partialorder %v239, inf
    %v244 = vsel %vm243, %v239, %v242
    %vm245 = vcmp.eq.f32.partialorder %v239, 0.0
    %v246 = vand.u32 %v239, 2147483648
    %v247 = vsel %vm245, %v246, %v244
    %v248 = vrsqrt.pop %v240
    %v249 = vmul.f32 %v240, %v248
    %vm250 = vcmp.eq.f32.partialorder %v240, inf
    %v251 = vsel %vm250, %v240, %v249
    %vm252 = vcmp.eq.f32.partialorder %v240, 0.0
    %v253 = vand.u32 %v240, 2147483648
    %v254 = vsel %vm252, %v253, %v251
    %v255 = vadd.f32 %v247, 1e-06
    %v256 = vadd.f32 %v254, 1e-06
    %v257 = vrcp.pop %v255
    %v258 = vrcp.pop %v256
    %v259 = vmul.f32 %v229, %v257
    %v260 = vmul.f32 %v230, %v258
    %v261 = vlaneseq
    %v262 = vshrl.u32 %v261, 7
    %v263 = vsub.s32 0, %v262
    %v264 = vrot.slane %v217, %v263
    %v265 = vmul.f32 %v264, %v259
    %v266 = vmul.f32 %v264, %v260
    %v267 = vlaneseq
    %v268 = vshrl.u32 %v267, 7
    %v269 = vsub.s32 0, %v268
    %v270 = vrot.slane %v218, %v269
    %v271 = vadd.f32 %v265, %v270
    %v272 = vadd.f32 %v266, %v270
    %v273 = vld [vmem:[%s6] sm:$0xff]
    %v274 = vld [vmem:[%s6 + $0x8] sm:$0xff]
    %v275 = vld [vmem:[%s6 + $0x10] sm:$0xff]
    %v276 = vld [vmem:[%s6 + $0x18] sm:$0xff]
    %v277 = vld [vmem:[%s7] sm:$0x1]
    %v279 = vlaneseq
    %v280 = vshrl.u32 %v279, 7
    %v281 = vsub.s32 0, %v280
    %v282 = vrot.slane %v277, %v281
    %v285 = vsel %vm219, %v271, 0
    %v288 = vsel %vm219, %v272, 0
    %290 = vmatprep.subr.mxu0 0.0
    %291 = vmatpush1.msra.mxu0 0.0
    %292 = vmatprep.subr.mxu0 0.0
    %293 = vmatpush1.msra.mxu0 0.0
    %294 = vmatprep.subr.mxu0 0.0
    %295 = vmatpush1.msra.mxu0 0.0
    %296 = vmatprep.subr.mxu0 0.0
    %297 = vmatpush1.msra.mxu0 0.0
    %298 = vmatprep.subr.mxu0 0.0
    %299 = vmatpush1.msra.mxu0 0.0
    %300 = vmatprep.subr.mxu0 0.0
    %301 = vmatpush1.msra.mxu0 0.0
    %302 = vmatprep.subr.mxu0 0.0
    %303 = vmatpush1.msra.mxu0 0.0
    %304 = vmatprep.subr.mxu0 0.0
    %305 = vmatpush1.msra.mxu0 0.0
    %306 = vmatprep.subr.mxu0 0.0
    %307 = vmatpush1.msra.mxu0 0.0
    %308 = vmatprep.subr.mxu0 0.0
    %309 = vmatpush1.msra.mxu0 0.0
    %310 = vmatprep.subr.mxu0 0.0
    %311 = vmatpush1.msra.mxu0 0.0
    %312 = vmatprep.subr.mxu0 0.0
    %313 = vmatpush1.msra.mxu0 0.0
    %314 = vmatprep.subr.mxu0 0.0
    %315 = vmatpush1.msra.mxu0 %v276
    %316 = vmatprep.subr.mxu0 0.0
    %317 = vmatpush1.msra.mxu0 %v275
    %318 = vmatprep.subr.mxu0 0.0
    %319 = vmatpush1.msra.mxu0 %v274
    %320 = vmatprep.subr.mxu0 0.0
    %321 = vmatpush1.msra.mxu0 %v273
    %322 = vmatprep.subr.mxu0 0.0
    %323 = vmatpush2.msra.mxu0 0.0
    %324 = vmatprep.subr.mxu0 0.0
    %325 = vmatpush2.msra.mxu0 0.0
    %326 = vmatprep.subr.mxu0 0.0
    %327 = vmatpush2.msra.mxu0 0.0
    %328 = vmatprep.subr.mxu0 0.0
    %329 = vmatpush2.msra.mxu0 0.0
    %330 = vmatprep.subr.mxu0 0.0
    %331 = vmatpush2.msra.mxu0 0.0
    %332 = vmatprep.subr.mxu0 0.0
    %333 = vmatpush2.msra.mxu0 0.0
    %334 = vmatprep.subr.mxu0 0.0
    %335 = vmatpush2.msra.mxu0 0.0
    %336 = vmatprep.subr.mxu0 0.0
    %337 = vmatpush2.msra.mxu0 0.0
    %338 = vmatprep.subr.mxu0 0.0
    %339 = vmatpush2.msra.mxu0 0.0
    %340 = vmatprep.subr.mxu0 0.0
    %341 = vmatpush2.msra.mxu0 0.0
    %342 = vmatprep.subr.mxu0 0.0
    %343 = vmatpush2.msra.mxu0 0.0
    %344 = vmatprep.subr.mxu0 0.0
    %345 = vmatpush2.msra.mxu0 0.0
    %346 = vmatprep.subr.mxu0 0.0
    %347 = vmatpush2.msra.mxu0 0.0
    %348 = vmatprep.subr.mxu0 0.0
    %349 = vmatpush2.msra.mxu0 0.0
    %350 = vmatprep.subr.mxu0 0.0
    %351 = vmatpush2.msra.mxu0 0.0
    %352 = vmatprep.subr.mxu0 0.0
    %353 = vmatpush2.msra.mxu0 0.0
    %354 = vmatprep.mubr.f32.mxu0 0.0
    %355 = vmatmul.mubr.f32.gmra.mxu0 %v285
    %v356 = vpop.f32.mrf.mxu0
    %v357 = vadd.f32 %v282, %v356
    %v358 = vpop.f32.mrf.mxu0
    %359 = vmatprep.mubr.f32.mxu0 0.0
    %360 = vmatmul.mubr.f32.gmra.mxu0 %v288
    %v361 = vpop.f32.mrf.mxu0
    %v362 = vadd.f32 %v282, %v361
    %v363 = vpop.f32.mrf.mxu0
    %364 = vdwg.mxu0
    %v365 = vld [vmem:[%s8] sm:$0xff]
    %v366 = vld [vmem:[%s8 + $0x8] sm:$0xff]
    %v367 = vld [vmem:[%s8 + $0x10] sm:$0xff]
    %v368 = vld [vmem:[%s8 + $0x18] sm:$0xff]
    %v369 = vld [vmem:[#allocation5] sm:$0x1]
    %371 = vrot.lane.b32.xlu0 %v357, 96
    %v372 = vpop.permute.xlu0 %371
    %vm373 = vcmask 64512
    %v374 = vsel %vm373, %v357, 0
    %v376 = vsel %vm373, %v372, 0
    %378 = vmatprep.subr.mxu0 0.0
    %379 = vmatpush1.xpose.msra.mxu0 0.0
    %380 = vmatprep.subr.mxu0 0.0
    %381 = vmatpush1.xpose.msra.mxu0 0.0
    %382 = vmatprep.subr.mxu0 0.0
    %383 = vmatpush1.xpose.msra.mxu0 0.0
    %384 = vmatprep.subr.mxu0 0.0
    %385 = vmatpush1.xpose.msra.mxu0 0.0
    %386 = vmatprep.subr.mxu0 0.0
    %387 = vmatpush1.xpose.msra.mxu0 0.0
    %388 = vmatprep.subr.mxu0 0.0
    %389 = vmatpush1.xpose.msra.mxu0 0.0
    %390 = vmatprep.subr.mxu0 0.0
    %391 = vmatpush1.xpose.msra.mxu0 0.0
    %392 = vmatprep.subr.mxu0 0.0
    %393 = vmatpush1.xpose.msra.mxu0 0.0
    %394 = vmatprep.subr.mxu0 0.0
    %395 = vmatpush1.xpose.msra.mxu0 0.0
    %396 = vmatprep.subr.mxu0 0.0
    %397 = vmatpush1.xpose.msra.mxu0 0.0
    %398 = vmatprep.subr.mxu0 0.0
    %399 = vmatpush1.xpose.msra.mxu0 0.0
    %400 = vmatprep.subr.mxu0 0.0
    %401 = vmatpush1.xpose.msra.mxu0 0.0
    %402 = vmatprep.subr.mxu0 0.0
    %403 = vmatpush1.xpose.msra.mxu0 0.0
    %404 = vmatprep.subr.mxu0 0.0
    %405 = vmatpush1.xpose.msra.mxu0 0.0
    %406 = vmatprep.subr.mxu0 0.0
    %407 = vmatpush1.xpose.msra.mxu0 0.0
    %408 = vmatprep.subr.mxu0 0.0
    %409 = vmatpush1.xpose.msra.mxu0 %v376
    %410 = vmatprep.subr.mxu0 0.0
    %411 = vmatpush2.xpose.msra.mxu0 0.0
    %412 = vmatprep.subr.mxu0 0.0
    %413 = vmatpush2.xpose.msra.mxu0 0.0
    %414 = vmatprep.subr.mxu0 0.0
    %415 = vmatpush2.xpose.msra.mxu0 0.0
    %416 = vmatprep.subr.mxu0 0.0
    %417 = vmatpush2.xpose.msra.mxu0 0.0
    %418 = vmatprep.subr.mxu0 0.0
    %419 = vmatpush2.xpose.msra.mxu0 0.0
    %420 = vmatprep.subr.mxu0 0.0
    %421 = vmatpush2.xpose.msra.mxu0 0.0
    %422 = vmatprep.subr.mxu0 0.0
    %423 = vmatpush2.xpose.msra.mxu0 0.0
    %424 = vmatprep.subr.mxu0 0.0
    %425 = vmatpush2.xpose.msra.mxu0 0.0
    %426 = vmatprep.subr.mxu0 0.0
    %427 = vmatpush2.xpose.msra.mxu0 0.0
    %428 = vmatprep.subr.mxu0 0.0
    %429 = vmatpush2.xpose.msra.mxu0 0.0
    %430 = vmatprep.subr.mxu0 0.0
    %431 = vmatpush2.xpose.msra.mxu0 0.0
    %432 = vmatprep.subr.mxu0 0.0
    %433 = vmatpush2.xpose.msra.mxu0 0.0
    %434 = vmatprep.subr.mxu0 0.0
    %435 = vmatpush2.xpose.msra.mxu0 0.0
    %436 = vmatprep.subr.mxu0 0.0
    %437 = vmatpush2.xpose.msra.mxu0 0.0
    %438 = vmatprep.subr.mxu0 0.0
    %439 = vmatpush2.xpose.msra.mxu0 0.0
    %440 = vmatprep.subr.mxu0 0.0
    %441 = vmatpush2.xpose.msra.mxu0 0.0
    %442 = vmatprep.mubr.f32.mxu0 0.0
    %443 = vmatmul.mubr.f32.gmra.mxu0 %v374
    %v444 = vpop.f32.mrf.mxu0
    %v445 = vadd.f32 0.0, %v444
    %v446 = vpop.f32.mrf.mxu0
    %447 = vdwg.mxu0
    %v448 = vmul.f32 %v445, 0.35355338
    %v449 = vadd.f32 %v448, %v214
    %v450 = vsel %vm373, %v449, -inf
    %451 = vmax.xlane.f32.xlu0 %v450
    %v452 = vpop.xlane.xlu0 %451
    %v453 = vsub.f32 %v449, %v452
    %v454 = vmul.f32 %v453, 1.442695
    %v455 = vpow.pop %v454
    %v456 = vsel %vm373, %v455, 0.0
    %457 = vadd.xlane.f32.xlu0 %v456
    %v458 = vpop.xlane.xlu0 %457
    %v459 = vrcp.pop %v458
    %v460 = vmul.f32 %v455, %v459
    %461 = vrot.lane.b32.xlu0 %v357, 64
    %v462 = vpop.permute.xlu0 %461
    %v465 = vsel %vm373, %v460, 0
    %467 = vmatprep.subr.mxu0 0.0
    %468 = vmatpush1.msra.mxu0 0.0
    %469 = vmatprep.subr.mxu0 0.0
    %470 = vmatpush1.msra.mxu0 0.0
    %471 = vmatprep.subr.mxu0 0.0
    %472 = vmatpush1.msra.mxu0 0.0
    %473 = vmatprep.subr.mxu0 0.0
    %474 = vmatpush1.msra.mxu0 0.0
    %475 = vmatprep.subr.mxu0 0.0
    %476 = vmatpush1.msra.mxu0 0.0
    %477 = vmatprep.subr.mxu0 0.0
    %478 = vmatpush1.msra.mxu0 0.0
    %479 = vmatprep.subr.mxu0 0.0
    %480 = vmatpush1.msra.mxu0 0.0
    %481 = vmatprep.subr.mxu0 0.0
    %482 = vmatpush1.msra.mxu0 0.0
    %483 = vmatprep.subr.mxu0 0.0
    %484 = vmatpush1.msra.mxu0 0.0
    %485 = vmatprep.subr.mxu0 0.0
    %486 = vmatpush1.msra.mxu0 0.0
    %487 = vmatprep.subr.mxu0 0.0
    %488 = vmatpush1.msra.mxu0 0.0
    %489 = vmatprep.subr.mxu0 0.0
    %490 = vmatpush1.msra.mxu0 0.0
    %491 = vmatprep.subr.mxu0 0.0
    %492 = vmatpush1.msra.mxu0 0.0
    %493 = vmatprep.subr.mxu0 0.0
    %494 = vmatpush1.msra.mxu0 0.0
    %495 = vmatprep.subr.mxu0 0.0
    %496 = vmatpush1.msra.mxu0 0.0
    %497 = vmatprep.subr.mxu0 0.0
    %498 = vmatpush1.msra.mxu0 %v462
    %499 = vmatprep.subr.mxu0 0.0
    %500 = vmatpush2.msra.mxu0 0.0
    %501 = vmatprep.subr.mxu0 0.0
    %502 = vmatpush2.msra.mxu0 0.0
    %503 = vmatprep.subr.mxu0 0.0
    %504 = vmatpush2.msra.mxu0 0.0
    %505 = vmatprep.subr.mxu0 0.0
    %506 = vmatpush2.msra.mxu0 0.0
    %507 = vmatprep.subr.mxu0 0.0
    %508 = vmatpush2.msra.mxu0 0.0
    %509 = vmatprep.subr.mxu0 0.0
    %510 = vmatpush2.msra.mxu0 0.0
    %511 = vmatprep.subr.mxu0 0.0
    %512 = vmatpush2.msra.mxu0 0.0
    %513 = vmatprep.subr.mxu0 0.0
    %514 = vmatpush2.msra.mxu0 0.0
    %515 = vmatprep.subr.mxu0 0.0
    %516 = vmatpush2.msra.mxu0 0.0
    %517 = vmatprep.subr.mxu0 0.0
    %518 = vmatpush2.msra.mxu0 0.0
    %519 = vmatprep.subr.mxu0 0.0
    %520 = vmatpush2.msra.mxu0 0.0
    %521 = vmatprep.subr.mxu0 0.0
    %522 = vmatpush2.msra.mxu0 0.0
    %523 = vmatprep.subr.mxu0 0.0
    %524 = vmatpush2.msra.mxu0 0.0
    %525 = vmatprep.subr.mxu0 0.0
    %526 = vmatpush2.msra.mxu0 0.0
    %527 = vmatprep.subr.mxu0 0.0
    %528 = vmatpush2.msra.mxu0 0.0
    %529 = vmatprep.subr.mxu0 0.0
    %530 = vmatpush2.msra.mxu0 0.0
    %531 = vmatprep.mubr.f32.mxu0 0.0
    %532 = vmatmul.mubr.f32.gmra.mxu0 %v465
    %v533 = vpop.f32.mrf.mxu0
    %v534 = vadd.f32 0.0, %v533
    %v535 = vpop.f32.mrf.mxu0
    %536 = vdwg.mxu0
    %537 = vrot.lane.b32.xlu0 %v357, 120
    %v538 = vpop.permute.xlu0 %537
    %539 = vrot.lane.b32.xlu0 %v357, 88
    %v540 = vpop.permute.xlu0 %539
    %v541 = vsel %vm373, %v538, 0
    %v543 = vsel %vm373, %v540, 0
    %545 = vmatprep.subr.mxu0 0.0
    %546 = vmatpush1.xpose.msra.mxu0 0.0
    %547 = vmatprep.subr.mxu0 0.0
    %548 = vmatpush1.xpose.msra.mxu0 0.0
    %549 = vmatprep.subr.mxu0 0.0
    %550 = vmatpush1.xpose.msra.mxu0 0.0
    %551 = vmatprep.subr.mxu0 0.0
    %552 = vmatpush1.xpose.msra.mxu0 0.0
    %553 = vmatprep.subr.mxu0 0.0
    %554 = vmatpush1.xpose.msra.mxu0 0.0
    %555 = vmatprep.subr.mxu0 0.0
    %556 = vmatpush1.xpose.msra.mxu0 0.0
    %557 = vmatprep.subr.mxu0 0.0
    %558 = vmatpush1.xpose.msra.mxu0 0.0
    %559 = vmatprep.subr.mxu0 0.0
    %560 = vmatpush1.xpose.msra.mxu0 0.0
    %561 = vmatprep.subr.mxu0 0.0
    %562 = vmatpush1.xpose.msra.mxu0 0.0
    %563 = vmatprep.subr.mxu0 0.0
    %564 = vmatpush1.xpose.msra.mxu0 0.0
    %565 = vmatprep.subr.mxu0 0.0
    %566 = vmatpush1.xpose.msra.mxu0 0.0
    %567 = vmatprep.subr.mxu0 0.0
    %568 = vmatpush1.xpose.msra.mxu0 0.0
    %569 = vmatprep.subr.mxu0 0.0
    %570 = vmatpush1.xpose.msra.mxu0 0.0
    %571 = vmatprep.subr.mxu0 0.0
    %572 = vmatpush1.xpose.msra.mxu0 0.0
    %573 = vmatprep.subr.mxu0 0.0
    %574 = vmatpush1.xpose.msra.mxu0 0.0
    %575 = vmatprep.subr.mxu0 0.0
    %576 = vmatpush1.xpose.msra.mxu0 %v543
    %577 = vmatprep.subr.mxu0 0.0
    %578 = vmatpush2.xpose.msra.mxu0 0.0
    %579 = vmatprep.subr.mxu0 0.0
    %580 = vmatpush2.xpose.msra.mxu0 0.0
    %581 = vmatprep.subr.mxu0 0.0
    %582 = vmatpush2.xpose.msra.mxu0 0.0
    %583 = vmatprep.subr.mxu0 0.0
    %584 = vmatpush2.xpose.msra.mxu0 0.0
    %585 = vmatprep.subr.mxu0 0.0
    %586 = vmatpush2.xpose.msra.mxu0 0.0
    %587 = vmatprep.subr.mxu0 0.0
    %588 = vmatpush2.xpose.msra.mxu0 0.0
    %589 = vmatprep.subr.mxu0 0.0
    %590 = vmatpush2.xpose.msra.mxu0 0.0
    %591 = vmatprep.subr.mxu0 0.0
    %592 = vmatpush2.xpose.msra.mxu0 0.0
    %593 = vmatprep.subr.mxu0 0.0
    %594 = vmatpush2.xpose.msra.mxu0 0.0
    %595 = vmatprep.subr.mxu0 0.0
    %596 = vmatpush2.xpose.msra.mxu0 0.0
    %597 = vmatprep.subr.mxu0 0.0
    %598 = vmatpush2.xpose.msra.mxu0 0.0
    %599 = vmatprep.subr.mxu0 0.0
    %600 = vmatpush2.xpose.msra.mxu0 0.0
    %601 = vmatprep.subr.mxu0 0.0
    %602 = vmatpush2.xpose.msra.mxu0 0.0
    %603 = vmatprep.subr.mxu0 0.0
    %604 = vmatpush2.xpose.msra.mxu0 0.0
    %605 = vmatprep.subr.mxu0 0.0
    %606 = vmatpush2.xpose.msra.mxu0 0.0
    %607 = vmatprep.subr.mxu0 0.0
    %608 = vmatpush2.xpose.msra.mxu0 0.0
    %609 = vmatprep.mubr.f32.mxu0 0.0
    %610 = vmatmul.mubr.f32.gmra.mxu0 %v541
    %v611 = vpop.f32.mrf.mxu0
    %v612 = vadd.f32 0.0, %v611
    %v613 = vpop.f32.mrf.mxu0
    %614 = vdwg.mxu0
    %v615 = vmul.f32 %v612, 0.35355338
    %v616 = vadd.f32 %v615, %v214
    %v617 = vsel %vm373, %v616, -inf
    %618 = vmax.xlane.f32.xlu0 %v617
    %v619 = vpop.xlane.xlu0 %618
    %v620 = vsub.f32 %v616, %v619
    %v621 = vmul.f32 %v620, 1.442695
    %v622 = vpow.pop %v621
    %v623 = vsel %vm373, %v622, 0.0
    %624 = vadd.xlane.f32.xlu0 %v623
    %v625 = vpop.xlane.xlu0 %624
    %v626 = vrcp.pop %v625
    %v627 = vmul.f32 %v622, %v626
    %628 = vrot.lane.b32.xlu0 %v357, 56
    %v629 = vpop.permute.xlu0 %628
    %v632 = vsel %vm373, %v627, 0
    %634 = vmatprep.subr.mxu0 0.0
    %635 = vmatpush1.msra.mxu0 0.0
    %636 = vmatprep.subr.mxu0 0.0
    %637 = vmatpush1.msra.mxu0 0.0
    %638 = vmatprep.subr.mxu0 0.0
    %639 = vmatpush1.msra.mxu0 0.0
    %640 = vmatprep.subr.mxu0 0.0
    %641 = vmatpush1.msra.mxu0 0.0
    %642 = vmatprep.subr.mxu0 0.0
    %643 = vmatpush1.msra.mxu0 0.0
    %644 = vmatprep.subr.mxu0 0.0
    %645 = vmatpush1.msra.mxu0 0.0
    %646 = vmatprep.subr.mxu0 0.0
    %647 = vmatpush1.msra.mxu0 0.0
    %648 = vmatprep.subr.mxu0 0.0
    %649 = vmatpush1.msra.mxu0 0.0
    %650 = vmatprep.subr.mxu0 0.0
    %651 = vmatpush1.msra.mxu0 0.0
    %652 = vmatprep.subr.mxu0 0.0
    %653 = vmatpush1.msra.mxu0 0.0
    %654 = vmatprep.subr.mxu0 0.0
    %655 = vmatpush1.msra.mxu0 0.0
    %656 = vmatprep.subr.mxu0 0.0
    %657 = vmatpush1.msra.mxu0 0.0
    %658 = vmatprep.subr.mxu0 0.0
    %659 = vmatpush1.msra.mxu0 0.0
    %660 = vmatprep.subr.mxu0 0.0
    %661 = vmatpush1.msra.mxu0 0.0
    %662 = vmatprep.subr.mxu0 0.0
    %663 = vmatpush1.msra.mxu0 0.0
    %664 = vmatprep.subr.mxu0 0.0
    %665 = vmatpush1.msra.mxu0 %v629
    %666 = vmatprep.subr.mxu0 0.0
    %667 = vmatpush2.msra.mxu0 0.0
    %668 = vmatprep.subr.mxu0 0.0
    %669 = vmatpush2.msra.mxu0 0.0
    %670 = vmatprep.subr.mxu0 0.0
    %671 = vmatpush2.msra.mxu0 0.0
    %672 = vmatprep.subr.mxu0 0.0
    %673 = vmatpush2.msra.mxu0 0.0
    %674 = vmatprep.subr.mxu0 0.0
    %675 = vmatpush2.msra.mxu0 0.0
    %676 = vmatprep.subr.mxu0 0.0
    %677 = vmatpush2.msra.mxu0 0.0
    %678 = vmatprep.subr.mxu0 0.0
    %679 = vmatpush2.msra.mxu0 0.0
    %680 = vmatprep.subr.mxu0 0.0
    %681 = vmatpush2.msra.mxu0 0.0
    %682 = vmatprep.subr.mxu0 0.0
    %683 = vmatpush2.msra.mxu0 0.0
    %684 = vmatprep.subr.mxu0 0.0
    %685 = vmatpush2.msra.mxu0 0.0
    %686 = vmatprep.subr.mxu0 0.0
    %687 = vmatpush2.msra.mxu0 0.0
    %688 = vmatprep.subr.mxu0 0.0
    %689 = vmatpush2.msra.mxu0 0.0
    %690 = vmatprep.subr.mxu0 0.0
    %691 = vmatpush2.msra.mxu0 0.0
    %692 = vmatprep.subr.mxu0 0.0
    %693 = vmatpush2.msra.mxu0 0.0
    %694 = vmatprep.subr.mxu0 0.0
    %695 = vmatpush2.msra.mxu0 0.0
    %696 = vmatprep.subr.mxu0 0.0
    %697 = vmatpush2.msra.mxu0 0.0
    %698 = vmatprep.mubr.f32.mxu0 0.0
    %699 = vmatmul.mubr.f32.gmra.mxu0 %v632
    %v700 = vpop.f32.mrf.mxu0
    %v701 = vadd.f32 0.0, %v700
    %v702 = vpop.f32.mrf.mxu0
    %703 = vdwg.mxu0
    %704 = vrot.lane.b32.xlu0 %v357, 112
    %v705 = vpop.permute.xlu0 %704
    %706 = vrot.lane.b32.xlu0 %v357, 80
    %v707 = vpop.permute.xlu0 %706
    %v708 = vsel %vm373, %v705, 0
    %v710 = vsel %vm373, %v707, 0
    %712 = vmatprep.subr.mxu0 0.0
    %713 = vmatpush1.xpose.msra.mxu0 0.0
    %714 = vmatprep.subr.mxu0 0.0
    %715 = vmatpush1.xpose.msra.mxu0 0.0
    %716 = vmatprep.subr.mxu0 0.0
    %717 = vmatpush1.xpose.msra.mxu0 0.0
    %718 = vmatprep.subr.mxu0 0.0
    %719 = vmatpush1.xpose.msra.mxu0 0.0
    %720 = vmatprep.subr.mxu0 0.0
    %721 = vmatpush1.xpose.msra.mxu0 0.0
    %722 = vmatprep.subr.mxu0 0.0
    %723 = vmatpush1.xpose.msra.mxu0 0.0
    %724 = vmatprep.subr.mxu0 0.0
    %725 = vmatpush1.xpose.msra.mxu0 0.0
    %726 = vmatprep.subr.mxu0 0.0
    %727 = vmatpush1.xpose.msra.mxu0 0.0
    %728 = vmatprep.subr.mxu0 0.0
    %729 = vmatpush1.xpose.msra.mxu0 0.0
    %730 = vmatprep.subr.mxu0 0.0
    %731 = vmatpush1.xpose.msra.mxu0 0.0
    %732 = vmatprep.subr.mxu0 0.0
    %733 = vmatpush1.xpose.msra.mxu0 0.0
    %734 = vmatprep.subr.mxu0 0.0
    %735 = vmatpush1.xpose.msra.mxu0 0.0
    %736 = vmatprep.subr.mxu0 0.0
    %737 = vmatpush1.xpose.msra.mxu0 0.0
    %738 = vmatprep.subr.mxu0 0.0
    %739 = vmatpush1.xpose.msra.mxu0 0.0
    %740 = vmatprep.subr.mxu0 0.0
    %741 = vmatpush1.xpose.msra.mxu0 0.0
    %742 = vmatprep.subr.mxu0 0.0
    %743 = vmatpush1.xpose.msra.mxu0 %v710
    %744 = vmatprep.subr.mxu0 0.0
    %745 = vmatpush2.xpose.msra.mxu0 0.0
    %746 = vmatprep.subr.mxu0 0.0
    %747 = vmatpush2.xpose.msra.mxu0 0.0
    %748 = vmatprep.subr.mxu0 0.0
    %749 = vmatpush2.xpose.msra.mxu0 0.0
    %750 = vmatprep.subr.mxu0 0.0
    %751 = vmatpush2.xpose.msra.mxu0 0.0
    %752 = vmatprep.subr.mxu0 0.0
    %753 = vmatpush2.xpose.msra.mxu0 0.0
    %754 = vmatprep.subr.mxu0 0.0
    %755 = vmatpush2.xpose.msra.mxu0 0.0
    %756 = vmatprep.subr.mxu0 0.0
    %757 = vmatpush2.xpose.msra.mxu0 0.0
    %758 = vmatprep.subr.mxu0 0.0
    %759 = vmatpush2.xpose.msra.mxu0 0.0
    %760 = vmatprep.subr.mxu0 0.0
    %761 = vmatpush2.xpose.msra.mxu0 0.0
    %762 = vmatprep.subr.mxu0 0.0
    %763 = vmatpush2.xpose.msra.mxu0 0.0
    %764 = vmatprep.subr.mxu0 0.0
    %765 = vmatpush2.xpose.msra.mxu0 0.0
    %766 = vmatprep.subr.mxu0 0.0
    %767 = vmatpush2.xpose.msra.mxu0 0.0
    %768 = vmatprep.subr.mxu0 0.0
    %769 = vmatpush2.xpose.msra.mxu0 0.0
    %770 = vmatprep.subr.mxu0 0.0
    %771 = vmatpush2.xpose.msra.mxu0 0.0
    %772 = vmatprep.subr.mxu0 0.0
    %773 = vmatpush2.xpose.msra.mxu0 0.0
    %774 = vmatprep.subr.mxu0 0.0
    %775 = vmatpush2.xpose.msra.mxu0 0.0
    %776 = vmatprep.mubr.f32.mxu0 0.0
    %777 = vmatmul.mubr.f32.gmra.mxu0 %v708
    %v778 = vpop.f32.mrf.mxu0
    %v779 = vadd.f32 0.0, %v778
    %v780 = vpop.f32.mrf.mxu0
    %781 = vdwg.mxu0
    %v782 = vmul.f32 %v779, 0.35355338
    %v783 = vadd.f32 %v782, %v214
    %v784 = vsel %vm373, %v783, -inf
    %785 = vmax.xlane.f32.xlu0 %v784
    %v786 = vpop.xlane.xlu0 %785
    %v787 = vsub.f32 %v783, %v786
    %v788 = vmul.f32 %v787, 1.442695
    %v789 = vpow.pop %v788
    %v790 = vsel %vm373, %v789, 0.0
    %791 = vadd.xlane.f32.xlu0 %v790
    %v792 = vpop.xlane.xlu0 %791
    %v793 = vrcp.pop %v792
    %v794 = vmul.f32 %v789, %v793
    %795 = vrot.lane.b32.xlu0 %v357, 48
    %v796 = vpop.permute.xlu0 %795
    %v799 = vsel %vm373, %v794, 0
    %801 = vmatprep.subr.mxu0 0.0
    %802 = vmatpush1.msra.mxu0 0.0
    %803 = vmatprep.subr.mxu0 0.0
    %804 = vmatpush1.msra.mxu0 0.0
    %805 = vmatprep.subr.mxu0 0.0
    %806 = vmatpush1.msra.mxu0 0.0
    %807 = vmatprep.subr.mxu0 0.0
    %808 = vmatpush1.msra.mxu0 0.0
    %809 = vmatprep.subr.mxu0 0.0
    %810 = vmatpush1.msra.mxu0 0.0
    %811 = vmatprep.subr.mxu0 0.0
    %812 = vmatpush1.msra.mxu0 0.0
    %813 = vmatprep.subr.mxu0 0.0
    %814 = vmatpush1.msra.mxu0 0.0
    %815 = vmatprep.subr.mxu0 0.0
    %816 = vmatpush1.msra.mxu0 0.0
    %817 = vmatprep.subr.mxu0 0.0
    %818 = vmatpush1.msra.mxu0 0.0
    %819 = vmatprep.subr.mxu0 0.0
    %820 = vmatpush1.msra.mxu0 0.0
    %821 = vmatprep.subr.mxu0 0.0
    %822 = vmatpush1.msra.mxu0 0.0
    %823 = vmatprep.subr.mxu0 0.0
    %824 = vmatpush1.msra.mxu0 0.0
    %825 = vmatprep.subr.mxu0 0.0
    %826 = vmatpush1.msra.mxu0 0.0
    %827 = vmatprep.subr.mxu0 0.0
    %828 = vmatpush1.msra.mxu0 0.0
    %829 = vmatprep.subr.mxu0 0.0
    %830 = vmatpush1.msra.mxu0 0.0
    %831 = vmatprep.subr.mxu0 0.0
    %832 = vmatpush1.msra.mxu0 %v796
    %833 = vmatprep.subr.mxu0 0.0
    %834 = vmatpush2.msra.mxu0 0.0
    %835 = vmatprep.subr.mxu0 0.0
    %836 = vmatpush2.msra.mxu0 0.0
    %837 = vmatprep.subr.mxu0 0.0
    %838 = vmatpush2.msra.mxu0 0.0
    %839 = vmatprep.subr.mxu0 0.0
    %840 = vmatpush2.msra.mxu0 0.0
    %841 = vmatprep.subr.mxu0 0.0
    %842 = vmatpush2.msra.mxu0 0.0
    %843 = vmatprep.subr.mxu0 0.0
    %844 = vmatpush2.msra.mxu0 0.0
    %845 = vmatprep.subr.mxu0 0.0
    %846 = vmatpush2.msra.mxu0 0.0
    %847 = vmatprep.subr.mxu0 0.0
    %848 = vmatpush2.msra.mxu0 0.0
    %849 = vmatprep.subr.mxu0 0.0
    %850 = vmatpush2.msra.mxu0 0.0
    %851 = vmatprep.subr.mxu0 0.0
    %852 = vmatpush2.msra.mxu0 0.0
    %853 = vmatprep.subr.mxu0 0.0
    %854 = vmatpush2.msra.mxu0 0.0
    %855 = vmatprep.subr.mxu0 0.0
    %856 = vmatpush2.msra.mxu0 0.0
    %857 = vmatprep.subr.mxu0 0.0
    %858 = vmatpush2.msra.mxu0 0.0
    %859 = vmatprep.subr.mxu0 0.0
    %860 = vmatpush2.msra.mxu0 0.0
    %861 = vmatprep.subr.mxu0 0.0
    %862 = vmatpush2.msra.mxu0 0.0
    %863 = vmatprep.subr.mxu0 0.0
    %864 = vmatpush2.msra.mxu0 0.0
    %865 = vmatprep.mubr.f32.mxu0 0.0
    %866 = vmatmul.mubr.f32.gmra.mxu0 %v799
    %v867 = vpop.f32.mrf.mxu0
    %v868 = vadd.f32 0.0, %v867
    %v869 = vpop.f32.mrf.mxu0
    %870 = vdwg.mxu0
    %871 = vrot.lane.b32.xlu0 %v357, 104
    %v872 = vpop.permute.xlu0 %871
    %873 = vrot.lane.b32.xlu0 %v357, 72
    %v874 = vpop.permute.xlu0 %873
    %v875 = vsel %vm373, %v872, 0
    %v877 = vsel %vm373, %v874, 0
    %879 = vmatprep.subr.mxu0 0.0
    %880 = vmatpush1.xpose.msra.mxu0 0.0
    %881 = vmatprep.subr.mxu0 0.0
    %882 = vmatpush1.xpose.msra.mxu0 0.0
    %883 = vmatprep.subr.mxu0 0.0
    %884 = vmatpush1.xpose.msra.mxu0 0.0
    %885 = vmatprep.subr.mxu0 0.0
    %886 = vmatpush1.xpose.msra.mxu0 0.0
    %887 = vmatprep.subr.mxu0 0.0
    %888 = vmatpush1.xpose.msra.mxu0 0.0
    %889 = vmatprep.subr.mxu0 0.0
    %890 = vmatpush1.xpose.msra.mxu0 0.0
    %891 = vmatprep.subr.mxu0 0.0
    %892 = vmatpush1.xpose.msra.mxu0 0.0
    %893 = vmatprep.subr.mxu0 0.0
    %894 = vmatpush1.xpose.msra.mxu0 0.0
    %895 = vmatprep.subr.mxu0 0.0
    %896 = vmatpush1.xpose.msra.mxu0 0.0
    %897 = vmatprep.subr.mxu0 0.0
    %898 = vmatpush1.xpose.msra.mxu0 0.0
    %899 = vmatprep.subr.mxu0 0.0
    %900 = vmatpush1.xpose.msra.mxu0 0.0
    %901 = vmatprep.subr.mxu0 0.0
    %902 = vmatpush1.xpose.msra.mxu0 0.0
    %903 = vmatprep.subr.mxu0 0.0
    %904 = vmatpush1.xpose.msra.mxu0 0.0
    %905 = vmatprep.subr.mxu0 0.0
    %906 = vmatpush1.xpose.msra.mxu0 0.0
    %907 = vmatprep.subr.mxu0 0.0
    %908 = vmatpush1.xpose.msra.mxu0 0.0
    %909 = vmatprep.subr.mxu0 0.0
    %910 = vmatpush1.xpose.msra.mxu0 %v877
    %911 = vmatprep.subr.mxu0 0.0
    %912 = vmatpush2.xpose.msra.mxu0 0.0
    %913 = vmatprep.subr.mxu0 0.0
    %914 = vmatpush2.xpose.msra.mxu0 0.0
    %915 = vmatprep.subr.mxu0 0.0
    %916 = vmatpush2.xpose.msra.mxu0 0.0
    %917 = vmatprep.subr.mxu0 0.0
    %918 = vmatpush2.xpose.msra.mxu0 0.0
    %919 = vmatprep.subr.mxu0 0.0
    %920 = vmatpush2.xpose.msra.mxu0 0.0
    %921 = vmatprep.subr.mxu0 0.0
    %922 = vmatpush2.xpose.msra.mxu0 0.0
    %923 = vmatprep.subr.mxu0 0.0
    %924 = vmatpush2.xpose.msra.mxu0 0.0
    %925 = vmatprep.subr.mxu0 0.0
    %926 = vmatpush2.xpose.msra.mxu0 0.0
    %927 = vmatprep.subr.mxu0 0.0
    %928 = vmatpush2.xpose.msra.mxu0 0.0
    %929 = vmatprep.subr.mxu0 0.0
    %930 = vmatpush2.xpose.msra.mxu0 0.0
    %931 = vmatprep.subr.mxu0 0.0
    %932 = vmatpush2.xpose.msra.mxu0 0.0
    %933 = vmatprep.subr.mxu0 0.0
    %934 = vmatpush2.xpose.msra.mxu0 0.0
    %935 = vmatprep.subr.mxu0 0.0
    %936 = vmatpush2.xpose.msra.mxu0 0.0
    %937 = vmatprep.subr.mxu0 0.0
    %938 = vmatpush2.xpose.msra.mxu0 0.0
    %939 = vmatprep.subr.mxu0 0.0
    %940 = vmatpush2.xpose.msra.mxu0 0.0
    %941 = vmatprep.subr.mxu0 0.0
    %942 = vmatpush2.xpose.msra.mxu0 0.0
    %943 = vmatprep.mubr.f32.mxu0 0.0
    %944 = vmatmul.mubr.f32.gmra.mxu0 %v875
    %v945 = vpop.f32.mrf.mxu0
    %v946 = vadd.f32 0.0, %v945
    %v947 = vpop.f32.mrf.mxu0
    %948 = vdwg.mxu0
    %v949 = vmul.f32 %v946, 0.35355338
    %v950 = vadd.f32 %v949, %v214
    %v951 = vsel %vm373, %v950, -inf
    %952 = vmax.xlane.f32.xlu0 %v951
    %v953 = vpop.xlane.xlu0 %952
    %v954 = vsub.f32 %v950, %v953
    %v955 = vmul.f32 %v954, 1.442695
    %v956 = vpow.pop %v955
    %v957 = vsel %vm373, %v956, 0.0
    %958 = vadd.xlane.f32.xlu0 %v957
    %v959 = vpop.xlane.xlu0 %958
    %v960 = vrcp.pop %v959
    %v961 = vmul.f32 %v956, %v960
    %962 = vrot.lane.b32.xlu0 %v357, 40
    %v963 = vpop.permute.xlu0 %962
    %v966 = vsel %vm373, %v961, 0
    %968 = vmatprep.subr.mxu0 0.0
    %969 = vmatpush1.msra.mxu0 0.0
    %970 = vmatprep.subr.mxu0 0.0
    %971 = vmatpush1.msra.mxu0 0.0
    %972 = vmatprep.subr.mxu0 0.0
    %973 = vmatpush1.msra.mxu0 0.0
    %974 = vmatprep.subr.mxu0 0.0
    %975 = vmatpush1.msra.mxu0 0.0
    %976 = vmatprep.subr.mxu0 0.0
    %977 = vmatpush1.msra.mxu0 0.0
    %978 = vmatprep.subr.mxu0 0.0
    %979 = vmatpush1.msra.mxu0 0.0
    %980 = vmatprep.subr.mxu0 0.0
    %981 = vmatpush1.msra.mxu0 0.0
    %982 = vmatprep.subr.mxu0 0.0
    %983 = vmatpush1.msra.mxu0 0.0
    %984 = vmatprep.subr.mxu0 0.0
    %985 = vmatpush1.msra.mxu0 0.0
    %986 = vmatprep.subr.mxu0 0.0
    %987 = vmatpush1.msra.mxu0 0.0
    %988 = vmatprep.subr.mxu0 0.0
    %989 = vmatpush1.msra.mxu0 0.0
    %990 = vmatprep.subr.mxu0 0.0
    %991 = vmatpush1.msra.mxu0 0.0
    %992 = vmatprep.subr.mxu0 0.0
    %993 = vmatpush1.msra.mxu0 0.0
    %994 = vmatprep.subr.mxu0 0.0
    %995 = vmatpush1.msra.mxu0 0.0
    %996 = vmatprep.subr.mxu0 0.0
    %997 = vmatpush1.msra.mxu0 0.0
    %998 = vmatprep.subr.mxu0 0.0
    %999 = vmatpush1.msra.mxu0 %v963
    %1000 = vmatprep.subr.mxu0 0.0
    %1001 = vmatpush2.msra.mxu0 0.0
    %1002 = vmatprep.subr.mxu0 0.0
    %1003 = vmatpush2.msra.mxu0 0.0
    %1004 = vmatprep.subr.mxu0 0.0
    %1005 = vmatpush2.msra.mxu0 0.0
    %1006 = vmatprep.subr.mxu0 0.0
    %1007 = vmatpush2.msra.mxu0 0.0
    %1008 = vmatprep.subr.mxu0 0.0
    %1009 = vmatpush2.msra.mxu0 0.0
    %1010 = vmatprep.subr.mxu0 0.0
    %1011 = vmatpush2.msra.mxu0 0.0
    %1012 = vmatprep.subr.mxu0 0.0
    %1013 = vmatpush2.msra.mxu0 0.0
    %1014 = vmatprep.subr.mxu0 0.0
    %1015 = vmatpush2.msra.mxu0 0.0
    %1016 = vmatprep.subr.mxu0 0.0
    %1017 = vmatpush2.msra.mxu0 0.0
    %1018 = vmatprep.subr.mxu0 0.0
    %1019 = vmatpush2.msra.mxu0 0.0
    %1020 = vmatprep.subr.mxu0 0.0
    %1021 = vmatpush2.msra.mxu0 0.0
    %1022 = vmatprep.subr.mxu0 0.0
    %1023 = vmatpush2.msra.mxu0 0.0
    %1024 = vmatprep.subr.mxu0 0.0
    %1025 = vmatpush2.msra.mxu0 0.0
    %1026 = vmatprep.subr.mxu0 0.0
    %1027 = vmatpush2.msra.mxu0 0.0
    %1028 = vmatprep.subr.mxu0 0.0
    %1029 = vmatpush2.msra.mxu0 0.0
    %1030 = vmatprep.subr.mxu0 0.0
    %1031 = vmatpush2.msra.mxu0 0.0
    %1032 = vmatprep.mubr.f32.mxu0 0.0
    %1033 = vmatmul.mubr.f32.gmra.mxu0 %v966
    %v1034 = vpop.f32.mrf.mxu0
    %v1035 = vadd.f32 0.0, %v1034
    %v1036 = vpop.f32.mrf.mxu0
    %1037 = vdwg.mxu0
    %1039 = vrot.lane.b32.xlu0 %v701, 8
    %v1040 = vpop.permute.xlu0 %1039
    %1043 = vrot.lane.b32.xlu0 %v868, 16
    %v1044 = vpop.permute.xlu0 %1043
    %1047 = vrot.lane.b32.xlu0 %v1035, 24
    %v1048 = vpop.permute.xlu0 %1047
    %v1050 = vsel %vm373, %v534, %v1040
    %vm1051 = vcmask 130048
    %v1052 = vsel %vm1051, %v1050, %v1044
    %vm1053 = vcmask 195584
    %v1054 = vsel %vm1053, %v1052, %v1048
    %1056 = vrot.lane.b32.xlu0 %v362, 96
    %v1057 = vpop.permute.xlu0 %1056
    %v1058 = vsel %vm373, %v362, 0
    %v1060 = vsel %vm373, %v1057, 0
    %1062 = vmatprep.subr.mxu0 0.0
    %1063 = vmatpush1.xpose.msra.mxu0 0.0
    %1064 = vmatprep.subr.mxu0 0.0
    %1065 = vmatpush1.xpose.msra.mxu0 0.0
    %1066 = vmatprep.subr.mxu0 0.0
    %1067 = vmatpush1.xpose.msra.mxu0 0.0
    %1068 = vmatprep.subr.mxu0 0.0
    %1069 = vmatpush1.xpose.msra.mxu0 0.0
    %1070 = vmatprep.subr.mxu0 0.0
    %1071 = vmatpush1.xpose.msra.mxu0 0.0
    %1072 = vmatprep.subr.mxu0 0.0
    %1073 = vmatpush1.xpose.msra.mxu0 0.0
    %1074 = vmatprep.subr.mxu0 0.0
    %1075 = vmatpush1.xpose.msra.mxu0 0.0
    %1076 = vmatprep.subr.mxu0 0.0
    %1077 = vmatpush1.xpose.msra.mxu0 0.0
    %1078 = vmatprep.subr.mxu0 0.0
    %1079 = vmatpush1.xpose.msra.mxu0 0.0
    %1080 = vmatprep.subr.mxu0 0.0
    %1081 = vmatpush1.xpose.msra.mxu0 0.0
    %1082 = vmatprep.subr.mxu0 0.0
    %1083 = vmatpush1.xpose.msra.mxu0 0.0
    %1084 = vmatprep.subr.mxu0 0.0
    %1085 = vmatpush1.xpose.msra.mxu0 0.0
    %1086 = vmatprep.subr.mxu0 0.0
    %1087 = vmatpush1.xpose.msra.mxu0 0.0
    %1088 = vmatprep.subr.mxu0 0.0
    %1089 = vmatpush1.xpose.msra.mxu0 0.0
    %1090 = vmatprep.subr.mxu0 0.0
    %1091 = vmatpush1.xpose.msra.mxu0 0.0
    %1092 = vmatprep.subr.mxu0 0.0
    %1093 = vmatpush1.xpose.msra.mxu0 %v1060
    %1094 = vmatprep.subr.mxu0 0.0
    %1095 = vmatpush2.xpose.msra.mxu0 0.0
    %1096 = vmatprep.subr.mxu0 0.0
    %1097 = vmatpush2.xpose.msra.mxu0 0.0
    %1098 = vmatprep.subr.mxu0 0.0
    %1099 = vmatpush2.xpose.msra.mxu0 0.0
    %1100 = vmatprep.subr.mxu0 0.0
    %1101 = vmatpush2.xpose.msra.mxu0 0.0
    %1102 = vmatprep.subr.mxu0 0.0
    %1103 = vmatpush2.xpose.msra.mxu0 0.0
    %1104 = vmatprep.subr.mxu0 0.0
    %1105 = vmatpush2.xpose.msra.mxu0 0.0
    %1106 = vmatprep.subr.mxu0 0.0
    %1107 = vmatpush2.xpose.msra.mxu0 0.0
    %1108 = vmatprep.subr.mxu0 0.0
    %1109 = vmatpush2.xpose.msra.mxu0 0.0
    %1110 = vmatprep.subr.mxu0 0.0
    %1111 = vmatpush2.xpose.msra.mxu0 0.0
    %1112 = vmatprep.subr.mxu0 0.0
    %1113 = vmatpush2.xpose.msra.mxu0 0.0
    %1114 = vmatprep.subr.mxu0 0.0
    %1115 = vmatpush2.xpose.msra.mxu0 0.0
    %1116 = vmatprep.subr.mxu0 0.0
    %1117 = vmatpush2.xpose.msra.mxu0 0.0
    %1118 = vmatprep.subr.mxu0 0.0
    %1119 = vmatpush2.xpose.msra.mxu0 0.0
    %1120 = vmatprep.subr.mxu0 0.0
    %1121 = vmatpush2.xpose.msra.mxu0 0.0
    %1122 = vmatprep.subr.mxu0 0.0
    %1123 = vmatpush2.xpose.msra.mxu0 0.0
    %1124 = vmatprep.subr.mxu0 0.0
    %1125 = vmatpush2.xpose.msra.mxu0 0.0
    %1126 = vmatprep.mubr.f32.mxu0 0.0
    %1127 = vmatmul.mubr.f32.gmra.mxu0 %v1058
    %v1128 = vpop.f32.mrf.mxu0
    %v1129 = vadd.f32 0.0, %v1128
    %v1130 = vpop.f32.mrf.mxu0
    %1131 = vdwg.mxu0
    %v1132 = vmul.f32 %v1129, 0.35355338
    %v1133 = vadd.f32 %v1132, %v215
    %v1134 = vsel %vm373, %v1133, -inf
    %1135 = vmax.xlane.f32.xlu0 %v1134
    %v1136 = vpop.xlane.xlu0 %1135
    %v1137 = vsub.f32 %v1133, %v1136
    %v1138 = vmul.f32 %v1137, 1.442695
    %v1139 = vpow.pop %v1138
    %v1140 = vsel %vm373, %v1139, 0.0
    %1141 = vadd.xlane.f32.xlu0 %v1140
    %v1142 = vpop.xlane.xlu0 %1141
    %v1143 = vrcp.pop %v1142
    %v1144 = vmul.f32 %v1139, %v1143
    %1145 = vrot.lane.b32.xlu0 %v362, 64
    %v1146 = vpop.permute.xlu0 %1145
    %v1149 = vsel %vm373, %v1144, 0
    %1151 = vmatprep.subr.mxu0 0.0
    %1152 = vmatpush1.msra.mxu0 0.0
    %1153 = vmatprep.subr.mxu0 0.0
    %1154 = vmatpush1.msra.mxu0 0.0
    %1155 = vmatprep.subr.mxu0 0.0
    %1156 = vmatpush1.msra.mxu0 0.0
    %1157 = vmatprep.subr.mxu0 0.0
    %1158 = vmatpush1.msra.mxu0 0.0
    %1159 = vmatprep.subr.mxu0 0.0
    %1160 = vmatpush1.msra.mxu0 0.0
    %1161 = vmatprep.subr.mxu0 0.0
    %1162 = vmatpush1.msra.mxu0 0.0
    %1163 = vmatprep.subr.mxu0 0.0
    %1164 = vmatpush1.msra.mxu0 0.0
    %1165 = vmatprep.subr.mxu0 0.0
    %1166 = vmatpush1.msra.mxu0 0.0
    %1167 = vmatprep.subr.mxu0 0.0
    %1168 = vmatpush1.msra.mxu0 0.0
    %1169 = vmatprep.subr.mxu0 0.0
    %1170 = vmatpush1.msra.mxu0 0.0
    %1171 = vmatprep.subr.mxu0 0.0
    %1172 = vmatpush1.msra.mxu0 0.0
    %1173 = vmatprep.subr.mxu0 0.0
    %1174 = vmatpush1.msra.mxu0 0.0
    %1175 = vmatprep.subr.mxu0 0.0
    %1176 = vmatpush1.msra.mxu0 0.0
    %1177 = vmatprep.subr.mxu0 0.0
    %1178 = vmatpush1.msra.mxu0 0.0
    %1179 = vmatprep.subr.mxu0 0.0
    %1180 = vmatpush1.msra.mxu0 0.0
    %1181 = vmatprep.subr.mxu0 0.0
    %1182 = vmatpush1.msra.mxu0 %v1146
    %1183 = vmatprep.subr.mxu0 0.0
    %1184 = vmatpush2.msra.mxu0 0.0
    %1185 = vmatprep.subr.mxu0 0.0
    %1186 = vmatpush2.msra.mxu0 0.0
    %1187 = vmatprep.subr.mxu0 0.0
    %1188 = vmatpush2.msra.mxu0 0.0
    %1189 = vmatprep.subr.mxu0 0.0
    %1190 = vmatpush2.msra.mxu0 0.0
    %1191 = vmatprep.subr.mxu0 0.0
    %1192 = vmatpush2.msra.mxu0 0.0
    %1193 = vmatprep.subr.mxu0 0.0
    %1194 = vmatpush2.msra.mxu0 0.0
    %1195 = vmatprep.subr.mxu0 0.0
    %1196 = vmatpush2.msra.mxu0 0.0
    %1197 = vmatprep.subr.mxu0 0.0
    %1198 = vmatpush2.msra.mxu0 0.0
    %1199 = vmatprep.subr.mxu0 0.0
    %1200 = vmatpush2.msra.mxu0 0.0
    %1201 = vmatprep.subr.mxu0 0.0
    %1202 = vmatpush2.msra.mxu0 0.0
    %1203 = vmatprep.subr.mxu0 0.0
    %1204 = vmatpush2.msra.mxu0 0.0
    %1205 = vmatprep.subr.mxu0 0.0
    %1206 = vmatpush2.msra.mxu0 0.0
    %1207 = vmatprep.subr.mxu0 0.0
    %1208 = vmatpush2.msra.mxu0 0.0
    %1209 = vmatprep.subr.mxu0 0.0
    %1210 = vmatpush2.msra.mxu0 0.0
    %1211 = vmatprep.subr.mxu0 0.0
    %1212 = vmatpush2.msra.mxu0 0.0
    %1213 = vmatprep.subr.mxu0 0.0
    %1214 = vmatpush2.msra.mxu0 0.0
    %1215 = vmatprep.mubr.f32.mxu0 0.0
    %1216 = vmatmul.mubr.f32.gmra.mxu0 %v1149
    %v1217 = vpop.f32.mrf.mxu0
    %v1218 = vadd.f32 0.0, %v1217
    %v1219 = vpop.f32.mrf.mxu0
    %1220 = vdwg.mxu0
    %1221 = vrot.lane.b32.xlu0 %v362, 120
    %v1222 = vpop.permute.xlu0 %1221
    %1223 = vrot.lane.b32.xlu0 %v362, 88
    %v1224 = vpop.permute.xlu0 %1223
    %v1225 = vsel %vm373, %v1222, 0
    %v1227 = vsel %vm373, %v1224, 0
    %1229 = vmatprep.subr.mxu0 0.0
    %1230 = vmatpush1.xpose.msra.mxu0 0.0
    %1231 = vmatprep.subr.mxu0 0.0
    %1232 = vmatpush1.xpose.msra.mxu0 0.0
    %1233 = vmatprep.subr.mxu0 0.0
    %1234 = vmatpush1.xpose.msra.mxu0 0.0
    %1235 = vmatprep.subr.mxu0 0.0
    %1236 = vmatpush1.xpose.msra.mxu0 0.0
    %1237 = vmatprep.subr.mxu0 0.0
    %1238 = vmatpush1.xpose.msra.mxu0 0.0
    %1239 = vmatprep.subr.mxu0 0.0
    %1240 = vmatpush1.xpose.msra.mxu0 0.0
    %1241 = vmatprep.subr.mxu0 0.0
    %1242 = vmatpush1.xpose.msra.mxu0 0.0
    %1243 = vmatprep.subr.mxu0 0.0
    %1244 = vmatpush1.xpose.msra.mxu0 0.0
    %1245 = vmatprep.subr.mxu0 0.0
    %1246 = vmatpush1.xpose.msra.mxu0 0.0
    %1247 = vmatprep.subr.mxu0 0.0
    %1248 = vmatpush1.xpose.msra.mxu0 0.0
    %1249 = vmatprep.subr.mxu0 0.0
    %1250 = vmatpush1.xpose.msra.mxu0 0.0
    %1251 = vmatprep.subr.mxu0 0.0
    %1252 = vmatpush1.xpose.msra.mxu0 0.0
    %1253 = vmatprep.subr.mxu0 0.0
    %1254 = vmatpush1.xpose.msra.mxu0 0.0
    %1255 = vmatprep.subr.mxu0 0.0
    %1256 = vmatpush1.xpose.msra.mxu0 0.0
    %1257 = vmatprep.subr.mxu0 0.0
    %1258 = vmatpush1.xpose.msra.mxu0 0.0
    %1259 = vmatprep.subr.mxu0 0.0
    %1260 = vmatpush1.xpose.msra.mxu0 %v1227
    %1261 = vmatprep.subr.mxu0 0.0
    %1262 = vmatpush2.xpose.msra.mxu0 0.0
    %1263 = vmatprep.subr.mxu0 0.0
    %1264 = vmatpush2.xpose.msra.mxu0 0.0
    %1265 = vmatprep.subr.mxu0 0.0
    %1266 = vmatpush2.xpose.msra.mxu0 0.0
    %1267 = vmatprep.subr.mxu0 0.0
    %1268 = vmatpush2.xpose.msra.mxu0 0.0
    %1269 = vmatprep.subr.mxu0 0.0
    %1270 = vmatpush2.xpose.msra.mxu0 0.0
    %1271 = vmatprep.subr.mxu0 0.0
    %1272 = vmatpush2.xpose.msra.mxu0 0.0
    %1273 = vmatprep.subr.mxu0 0.0
    %1274 = vmatpush2.xpose.msra.mxu0 0.0
    %1275 = vmatprep.subr.mxu0 0.0
    %1276 = vmatpush2.xpose.msra.mxu0 0.0
    %1277 = vmatprep.subr.mxu0 0.0
    %1278 = vmatpush2.xpose.msra.mxu0 0.0
    %1279 = vmatprep.subr.mxu0 0.0
    %1280 = vmatpush2.xpose.msra.mxu0 0.0
    %1281 = vmatprep.subr.mxu0 0.0
    %1282 = vmatpush2.xpose.msra.mxu0 0.0
    %1283 = vmatprep.subr.mxu0 0.0
    %1284 = vmatpush2.xpose.msra.mxu0 0.0
    %1285 = vmatprep.subr.mxu0 0.0
    %1286 = vmatpush2.xpose.msra.mxu0 0.0
    %1287 = vmatprep.subr.mxu0 0.0
    %1288 = vmatpush2.xpose.msra.mxu0 0.0
    %1289 = vmatprep.subr.mxu0 0.0
    %1290 = vmatpush2.xpose.msra.mxu0 0.0
    %1291 = vmatprep.subr.mxu0 0.0
    %1292 = vmatpush2.xpose.msra.mxu0 0.0
    %1293 = vmatprep.mubr.f32.mxu0 0.0
    %1294 = vmatmul.mubr.f32.gmra.mxu0 %v1225
    %v1295 = vpop.f32.mrf.mxu0
    %v1296 = vadd.f32 0.0, %v1295
    %v1297 = vpop.f32.mrf.mxu0
    %1298 = vdwg.mxu0
    %v1299 = vmul.f32 %v1296, 0.35355338
    %v1300 = vadd.f32 %v1299, %v215
    %v1301 = vsel %vm373, %v1300, -inf
    %1302 = vmax.xlane.f32.xlu0 %v1301
    %v1303 = vpop.xlane.xlu0 %1302
    %v1304 = vsub.f32 %v1300, %v1303
    %v1305 = vmul.f32 %v1304, 1.442695
    %v1306 = vpow.pop %v1305
    %v1307 = vsel %vm373, %v1306, 0.0
    %1308 = vadd.xlane.f32.xlu0 %v1307
    %v1309 = vpop.xlane.xlu0 %1308
    %v1310 = vrcp.pop %v1309
    %v1311 = vmul.f32 %v1306, %v1310
    %1312 = vrot.lane.b32.xlu0 %v362, 56
    %v1313 = vpop.permute.xlu0 %1312
    %v1316 = vsel %vm373, %v1311, 0
    %1318 = vmatprep.subr.mxu0 0.0
    %1319 = vmatpush1.msra.mxu0 0.0
    %1320 = vmatprep.subr.mxu0 0.0
    %1321 = vmatpush1.msra.mxu0 0.0
    %1322 = vmatprep.subr.mxu0 0.0
    %1323 = vmatpush1.msra.mxu0 0.0
    %1324 = vmatprep.subr.mxu0 0.0
    %1325 = vmatpush1.msra.mxu0 0.0
    %1326 = vmatprep.subr.mxu0 0.0
    %1327 = vmatpush1.msra.mxu0 0.0
    %1328 = vmatprep.subr.mxu0 0.0
    %1329 = vmatpush1.msra.mxu0 0.0
    %1330 = vmatprep.subr.mxu0 0.0
    %1331 = vmatpush1.msra.mxu0 0.0
    %1332 = vmatprep.subr.mxu0 0.0
    %1333 = vmatpush1.msra.mxu0 0.0
    %1334 = vmatprep.subr.mxu0 0.0
    %1335 = vmatpush1.msra.mxu0 0.0
    %1336 = vmatprep.subr.mxu0 0.0
    %1337 = vmatpush1.msra.mxu0 0.0
    %1338 = vmatprep.subr.mxu0 0.0
    %1339 = vmatpush1.msra.mxu0 0.0
    %1340 = vmatprep.subr.mxu0 0.0
    %1341 = vmatpush1.msra.mxu0 0.0
    %1342 = vmatprep.subr.mxu0 0.0
    %1343 = vmatpush1.msra.mxu0 0.0
    %1344 = vmatprep.subr.mxu0 0.0
    %1345 = vmatpush1.msra.mxu0 0.0
    %1346 = vmatprep.subr.mxu0 0.0
    %1347 = vmatpush1.msra.mxu0 0.0
    %1348 = vmatprep.subr.mxu0 0.0
    %1349 = vmatpush1.msra.mxu0 %v1313
    %1350 = vmatprep.subr.mxu0 0.0
    %1351 = vmatpush2.msra.mxu0 0.0
    %1352 = vmatprep.subr.mxu0 0.0
    %1353 = vmatpush2.msra.mxu0 0.0
    %1354 = vmatprep.subr.mxu0 0.0
    %1355 = vmatpush2.msra.mxu0 0.0
    %1356 = vmatprep.subr.mxu0 0.0
    %1357 = vmatpush2.msra.mxu0 0.0
    %1358 = vmatprep.subr.mxu0 0.0
    %1359 = vmatpush2.msra.mxu0 0.0
    %1360 = vmatprep.subr.mxu0 0.0
    %1361 = vmatpush2.msra.mxu0 0.0
    %1362 = vmatprep.subr.mxu0 0.0
    %1363 = vmatpush2.msra.mxu0 0.0
    %1364 = vmatprep.subr.mxu0 0.0
    %1365 = vmatpush2.msra.mxu0 0.0
    %1366 = vmatprep.subr.mxu0 0.0
    %1367 = vmatpush2.msra.mxu0 0.0
    %1368 = vmatprep.subr.mxu0 0.0
    %1369 = vmatpush2.msra.mxu0 0.0
    %1370 = vmatprep.subr.mxu0 0.0
    %1371 = vmatpush2.msra.mxu0 0.0
    %1372 = vmatprep.subr.mxu0 0.0
    %1373 = vmatpush2.msra.mxu0 0.0
    %1374 = vmatprep.subr.mxu0 0.0
    %1375 = vmatpush2.msra.mxu0 0.0
    %1376 = vmatprep.subr.mxu0 0.0
    %1377 = vmatpush2.msra.mxu0 0.0
    %1378 = vmatprep.subr.mxu0 0.0
    %1379 = vmatpush2.msra.mxu0 0.0
    %1380 = vmatprep.subr.mxu0 0.0
    %1381 = vmatpush2.msra.mxu0 0.0
    %1382 = vmatprep.mubr.f32.mxu0 0.0
    %1383 = vmatmul.mubr.f32.gmra.mxu0 %v1316
    %v1384 = vpop.f32.mrf.mxu0
    %v1385 = vadd.f32 0.0, %v1384
    %v1386 = vpop.f32.mrf.mxu0
    %1387 = vdwg.mxu0
    %1388 = vrot.lane.b32.xlu0 %v362, 112
    %v1389 = vpop.permute.xlu0 %1388
    %1390 = vrot.lane.b32.xlu0 %v362, 80
    %v1391 = vpop.permute.xlu0 %1390
    %v1392 = vsel %vm373, %v1389, 0
    %v1394 = vsel %vm373, %v1391, 0
    %1396 = vmatprep.subr.mxu0 0.0
    %1397 = vmatpush1.xpose.msra.mxu0 0.0
    %1398 = vmatprep.subr.mxu0 0.0
    %1399 = vmatpush1.xpose.msra.mxu0 0.0
    %1400 = vmatprep.subr.mxu0 0.0
    %1401 = vmatpush1.xpose.msra.mxu0 0.0
    %1402 = vmatprep.subr.mxu0 0.0
    %1403 = vmatpush1.xpose.msra.mxu0 0.0
    %1404 = vmatprep.subr.mxu0 0.0
    %1405 = vmatpush1.xpose.msra.mxu0 0.0
    %1406 = vmatprep.subr.mxu0 0.0
    %1407 = vmatpush1.xpose.msra.mxu0 0.0
    %1408 = vmatprep.subr.mxu0 0.0
    %1409 = vmatpush1.xpose.msra.mxu0 0.0
    %1410 = vmatprep.subr.mxu0 0.0
    %1411 = vmatpush1.xpose.msra.mxu0 0.0
    %1412 = vmatprep.subr.mxu0 0.0
    %1413 = vmatpush1.xpose.msra.mxu0 0.0
    %1414 = vmatprep.subr.mxu0 0.0
    %1415 = vmatpush1.xpose.msra.mxu0 0.0
    %1416 = vmatprep.subr.mxu0 0.0
    %1417 = vmatpush1.xpose.msra.mxu0 0.0
    %1418 = vmatprep.subr.mxu0 0.0
    %1419 = vmatpush1.xpose.msra.mxu0 0.0
    %1420 = vmatprep.subr.mxu0 0.0
    %1421 = vmatpush1.xpose.msra.mxu0 0.0
    %1422 = vmatprep.subr.mxu0 0.0
    %1423 = vmatpush1.xpose.msra.mxu0 0.0
    %1424 = vmatprep.subr.mxu0 0.0
    %1425 = vmatpush1.xpose.msra.mxu0 0.0
    %1426 = vmatprep.subr.mxu0 0.0
    %1427 = vmatpush1.xpose.msra.mxu0 %v1394
    %1428 = vmatprep.subr.mxu0 0.0
    %1429 = vmatpush2.xpose.msra.mxu0 0.0
    %1430 = vmatprep.subr.mxu0 0.0
    %1431 = vmatpush2.xpose.msra.mxu0 0.0
    %1432 = vmatprep.subr.mxu0 0.0
    %1433 = vmatpush2.xpose.msra.mxu0 0.0
    %1434 = vmatprep.subr.mxu0 0.0
    %1435 = vmatpush2.xpose.msra.mxu0 0.0
    %1436 = vmatprep.subr.mxu0 0.0
    %1437 = vmatpush2.xpose.msra.mxu0 0.0
    %1438 = vmatprep.subr.mxu0 0.0
    %1439 = vmatpush2.xpose.msra.mxu0 0.0
    %1440 = vmatprep.subr.mxu0 0.0
    %1441 = vmatpush2.xpose.msra.mxu0 0.0
    %1442 = vmatprep.subr.mxu0 0.0
    %1443 = vmatpush2.xpose.msra.mxu0 0.0
    %1444 = vmatprep.subr.mxu0 0.0
    %1445 = vmatpush2.xpose.msra.mxu0 0.0
    %1446 = vmatprep.subr.mxu0 0.0
    %1447 = vmatpush2.xpose.msra.mxu0 0.0
    %1448 = vmatprep.subr.mxu0 0.0
    %1449 = vmatpush2.xpose.msra.mxu0 0.0
    %1450 = vmatprep.subr.mxu0 0.0
    %1451 = vmatpush2.xpose.msra.mxu0 0.0
    %1452 = vmatprep.subr.mxu0 0.0
    %1453 = vmatpush2.xpose.msra.mxu0 0.0
    %1454 = vmatprep.subr.mxu0 0.0
    %1455 = vmatpush2.xpose.msra.mxu0 0.0
    %1456 = vmatprep.subr.mxu0 0.0
    %1457 = vmatpush2.xpose.msra.mxu0 0.0
    %1458 = vmatprep.subr.mxu0 0.0
    %1459 = vmatpush2.xpose.msra.mxu0 0.0
    %1460 = vmatprep.mubr.f32.mxu0 0.0
    %1461 = vmatmul.mubr.f32.gmra.mxu0 %v1392
    %v1462 = vpop.f32.mrf.mxu0
    %v1463 = vadd.f32 0.0, %v1462
    %v1464 = vpop.f32.mrf.mxu0
    %1465 = vdwg.mxu0
    %v1466 = vmul.f32 %v1463, 0.35355338
    %v1467 = vadd.f32 %v1466, %v215
    %v1468 = vsel %vm373, %v1467, -inf
    %1469 = vmax.xlane.f32.xlu0 %v1468
    %v1470 = vpop.xlane.xlu0 %1469
    %v1471 = vsub.f32 %v1467, %v1470
    %v1472 = vmul.f32 %v1471, 1.442695
    %v1473 = vpow.pop %v1472
    %v1474 = vsel %vm373, %v1473, 0.0
    %1475 = vadd.xlane.f32.xlu0 %v1474
    %v1476 = vpop.xlane.xlu0 %1475
    %v1477 = vrcp.pop %v1476
    %v1478 = vmul.f32 %v1473, %v1477
    %1479 = vrot.lane.b32.xlu0 %v362, 48
    %v1480 = vpop.permute.xlu0 %1479
    %v1483 = vsel %vm373, %v1478, 0
    %1485 = vmatprep.subr.mxu0 0.0
    %1486 = vmatpush1.msra.mxu0 0.0
    %1487 = vmatprep.subr.mxu0 0.0
    %1488 = vmatpush1.msra.mxu0 0.0
    %1489 = vmatprep.subr.mxu0 0.0
    %1490 = vmatpush1.msra.mxu0 0.0
    %1491 = vmatprep.subr.mxu0 0.0
    %1492 = vmatpush1.msra.mxu0 0.0
    %1493 = vmatprep.subr.mxu0 0.0
    %1494 = vmatpush1.msra.mxu0 0.0
    %1495 = vmatprep.subr.mxu0 0.0
    %1496 = vmatpush1.msra.mxu0 0.0
    %1497 = vmatprep.subr.mxu0 0.0
    %1498 = vmatpush1.msra.mxu0 0.0
    %1499 = vmatprep.subr.mxu0 0.0
    %1500 = vmatpush1.msra.mxu0 0.0
    %1501 = vmatprep.subr.mxu0 0.0
    %1502 = vmatpush1.msra.mxu0 0.0
    %1503 = vmatprep.subr.mxu0 0.0
    %1504 = vmatpush1.msra.mxu0 0.0
    %1505 = vmatprep.subr.mxu0 0.0
    %1506 = vmatpush1.msra.mxu0 0.0
    %1507 = vmatprep.subr.mxu0 0.0
    %1508 = vmatpush1.msra.mxu0 0.0
    %1509 = vmatprep.subr.mxu0 0.0
    %1510 = vmatpush1.msra.mxu0 0.0
    %1511 = vmatprep.subr.mxu0 0.0
    %1512 = vmatpush1.msra.mxu0 0.0
    %1513 = vmatprep.subr.mxu0 0.0
    %1514 = vmatpush1.msra.mxu0 0.0
    %1515 = vmatprep.subr.mxu0 0.0
    %1516 = vmatpush1.msra.mxu0 %v1480
    %1517 = vmatprep.subr.mxu0 0.0
    %1518 = vmatpush2.msra.mxu0 0.0
    %1519 = vmatprep.subr.mxu0 0.0
    %1520 = vmatpush2.msra.mxu0 0.0
    %1521 = vmatprep.subr.mxu0 0.0
    %1522 = vmatpush2.msra.mxu0 0.0
    %1523 = vmatprep.subr.mxu0 0.0
    %1524 = vmatpush2.msra.mxu0 0.0
    %1525 = vmatprep.subr.mxu0 0.0
    %1526 = vmatpush2.msra.mxu0 0.0
    %1527 = vmatprep.subr.mxu0 0.0
    %1528 = vmatpush2.msra.mxu0 0.0
    %1529 = vmatprep.subr.mxu0 0.0
    %1530 = vmatpush2.msra.mxu0 0.0
    %1531 = vmatprep.subr.mxu0 0.0
    %1532 = vmatpush2.msra.mxu0 0.0
    %1533 = vmatprep.subr.mxu0 0.0
    %1534 = vmatpush2.msra.mxu0 0.0
    %1535 = vmatprep.subr.mxu0 0.0
    %1536 = vmatpush2.msra.mxu0 0.0
    %1537 = vmatprep.subr.mxu0 0.0
    %1538 = vmatpush2.msra.mxu0 0.0
    %1539 = vmatprep.subr.mxu0 0.0
    %1540 = vmatpush2.msra.mxu0 0.0
    %1541 = vmatprep.subr.mxu0 0.0
    %1542 = vmatpush2.msra.mxu0 0.0
    %1543 = vmatprep.subr.mxu0 0.0
    %1544 = vmatpush2.msra.mxu0 0.0
    %1545 = vmatprep.subr.mxu0 0.0
    %1546 = vmatpush2.msra.mxu0 0.0
    %1547 = vmatprep.subr.mxu0 0.0
    %1548 = vmatpush2.msra.mxu0 0.0
    %1549 = vmatprep.mubr.f32.mxu0 0.0
    %1550 = vmatmul.mubr.f32.gmra.mxu0 %v1483
    %v1551 = vpop.f32.mrf.mxu0
    %v1552 = vadd.f32 0.0, %v1551
    %v1553 = vpop.f32.mrf.mxu0
    %1554 = vdwg.mxu0
    %1555 = vrot.lane.b32.xlu0 %v362, 104
    %v1556 = vpop.permute.xlu0 %1555
    %1557 = vrot.lane.b32.xlu0 %v362, 72
    %v1558 = vpop.permute.xlu0 %1557
    %v1559 = vsel %vm373, %v1556, 0
    %v1561 = vsel %vm373, %v1558, 0
    %1563 = vmatprep.subr.mxu0 0.0
    %1564 = vmatpush1.xpose.msra.mxu0 0.0
    %1565 = vmatprep.subr.mxu0 0.0
    %1566 = vmatpush1.xpose.msra.mxu0 0.0
    %1567 = vmatprep.subr.mxu0 0.0
    %1568 = vmatpush1.xpose.msra.mxu0 0.0
    %1569 = vmatprep.subr.mxu0 0.0
    %1570 = vmatpush1.xpose.msra.mxu0 0.0
    %1571 = vmatprep.subr.mxu0 0.0
    %1572 = vmatpush1.xpose.msra.mxu0 0.0
    %1573 = vmatprep.subr.mxu0 0.0
    %1574 = vmatpush1.xpose.msra.mxu0 0.0
    %1575 = vmatprep.subr.mxu0 0.0
    %1576 = vmatpush1.xpose.msra.mxu0 0.0
    %1577 = vmatprep.subr.mxu0 0.0
    %1578 = vmatpush1.xpose.msra.mxu0 0.0
    %1579 = vmatprep.subr.mxu0 0.0
    %1580 = vmatpush1.xpose.msra.mxu0 0.0
    %1581 = vmatprep.subr.mxu0 0.0
    %1582 = vmatpush1.xpose.msra.mxu0 0.0
    %1583 = vmatprep.subr.mxu0 0.0
    %1584 = vmatpush1.xpose.msra.mxu0 0.0
    %1585 = vmatprep.subr.mxu0 0.0
    %1586 = vmatpush1.xpose.msra.mxu0 0.0
    %1587 = vmatprep.subr.mxu0 0.0
    %1588 = vmatpush1.xpose.msra.mxu0 0.0
    %1589 = vmatprep.subr.mxu0 0.0
    %1590 = vmatpush1.xpose.msra.mxu0 0.0
    %1591 = vmatprep.subr.mxu0 0.0
    %1592 = vmatpush1.xpose.msra.mxu0 0.0
    %1593 = vmatprep.subr.mxu0 0.0
    %1594 = vmatpush1.xpose.msra.mxu0 %v1561
    %1595 = vmatprep.subr.mxu0 0.0
    %1596 = vmatpush2.xpose.msra.mxu0 0.0
    %1597 = vmatprep.subr.mxu0 0.0
    %1598 = vmatpush2.xpose.msra.mxu0 0.0
    %1599 = vmatprep.subr.mxu0 0.0
    %1600 = vmatpush2.xpose.msra.mxu0 0.0
    %1601 = vmatprep.subr.mxu0 0.0
    %1602 = vmatpush2.xpose.msra.mxu0 0.0
    %1603 = vmatprep.subr.mxu0 0.0
    %1604 = vmatpush2.xpose.msra.mxu0 0.0
    %1605 = vmatprep.subr.mxu0 0.0
    %1606 = vmatpush2.xpose.msra.mxu0 0.0
    %1607 = vmatprep.subr.mxu0 0.0
    %1608 = vmatpush2.xpose.msra.mxu0 0.0
    %1609 = vmatprep.subr.mxu0 0.0
    %1610 = vmatpush2.xpose.msra.mxu0 0.0
    %1611 = vmatprep.subr.mxu0 0.0
    %1612 = vmatpush2.xpose.msra.mxu0 0.0
    %1613 = vmatprep.subr.mxu0 0.0
    %1614 = vmatpush2.xpose.msra.mxu0 0.0
    %1615 = vmatprep.subr.mxu0 0.0
    %1616 = vmatpush2.xpose.msra.mxu0 0.0
    %1617 = vmatprep.subr.mxu0 0.0
    %1618 = vmatpush2.xpose.msra.mxu0 0.0
    %1619 = vmatprep.subr.mxu0 0.0
    %1620 = vmatpush2.xpose.msra.mxu0 0.0
    %1621 = vmatprep.subr.mxu0 0.0
    %1622 = vmatpush2.xpose.msra.mxu0 0.0
    %1623 = vmatprep.subr.mxu0 0.0
    %1624 = vmatpush2.xpose.msra.mxu0 0.0
    %1625 = vmatprep.subr.mxu0 0.0
    %1626 = vmatpush2.xpose.msra.mxu0 0.0
    %1627 = vmatprep.mubr.f32.mxu0 0.0
    %1628 = vmatmul.mubr.f32.gmra.mxu0 %v1559
    %v1629 = vpop.f32.mrf.mxu0
    %v1630 = vadd.f32 0.0, %v1629
    %v1631 = vpop.f32.mrf.mxu0
    %1632 = vdwg.mxu0
    %v1633 = vmul.f32 %v1630, 0.35355338
    %v1634 = vadd.f32 %v1633, %v215
    %v1635 = vsel %vm373, %v1634, -inf
    %1636 = vmax.xlane.f32.xlu0 %v1635
    %v1637 = vpop.xlane.xlu0 %1636
    %v1638 = vsub.f32 %v1634, %v1637
    %v1639 = vmul.f32 %v1638, 1.442695
    %v1640 = vpow.pop %v1639
    %v1641 = vsel %vm373, %v1640, 0.0
    %1642 = vadd.xlane.f32.xlu0 %v1641
    %v1643 = vpop.xlane.xlu0 %1642
    %v1644 = vrcp.pop %v1643
    %v1645 = vmul.f32 %v1640, %v1644
    %1646 = vrot.lane.b32.xlu0 %v362, 40
    %v1647 = vpop.permute.xlu0 %1646
    %v1650 = vsel %vm373, %v1645, 0
    %1652 = vmatprep.subr.mxu0 0.0
    %1653 = vmatpush1.msra.mxu0 0.0
    %1654 = vmatprep.subr.mxu0 0.0
    %1655 = vmatpush1.msra.mxu0 0.0
    %1656 = vmatprep.subr.mxu0 0.0
    %1657 = vmatpush1.msra.mxu0 0.0
    %1658 = vmatprep.subr.mxu0 0.0
    %1659 = vmatpush1.msra.mxu0 0.0
    %1660 = vmatprep.subr.mxu0 0.0
    %1661 = vmatpush1.msra.mxu0 0.0
    %1662 = vmatprep.subr.mxu0 0.0
    %1663 = vmatpush1.msra.mxu0 0.0
    %1664 = vmatprep.subr.mxu0 0.0
    %1665 = vmatpush1.msra.mxu0 0.0
    %1666 = vmatprep.subr.mxu0 0.0
    %1667 = vmatpush1.msra.mxu0 0.0
    %1668 = vmatprep.subr.mxu0 0.0
    %1669 = vmatpush1.msra.mxu0 0.0
    %1670 = vmatprep.subr.mxu0 0.0
    %1671 = vmatpush1.msra.mxu0 0.0
    %1672 = vmatprep.subr.mxu0 0.0
    %1673 = vmatpush1.msra.mxu0 0.0
    %1674 = vmatprep.subr.mxu0 0.0
    %1675 = vmatpush1.msra.mxu0 0.0
    %1676 = vmatprep.subr.mxu0 0.0
    %1677 = vmatpush1.msra.mxu0 0.0
    %1678 = vmatprep.subr.mxu0 0.0
    %1679 = vmatpush1.msra.mxu0 0.0
    %1680 = vmatprep.subr.mxu0 0.0
    %1681 = vmatpush1.msra.mxu0 0.0
    %1682 = vmatprep.subr.mxu0 0.0
    %1683 = vmatpush1.msra.mxu0 %v1647
    %1684 = vmatprep.subr.mxu0 0.0
    %1685 = vmatpush2.msra.mxu0 0.0
    %1686 = vmatprep.subr.mxu0 0.0
    %1687 = vmatpush2.msra.mxu0 0.0
    %1688 = vmatprep.subr.mxu0 0.0
    %1689 = vmatpush2.msra.mxu0 0.0
    %1690 = vmatprep.subr.mxu0 0.0
    %1691 = vmatpush2.msra.mxu0 0.0
    %1692 = vmatprep.subr.mxu0 0.0
    %1693 = vmatpush2.msra.mxu0 0.0
    %1694 = vmatprep.subr.mxu0 0.0
    %1695 = vmatpush2.msra.mxu0 0.0
    %1696 = vmatprep.subr.mxu0 0.0
    %1697 = vmatpush2.msra.mxu0 0.0
    %1698 = vmatprep.subr.mxu0 0.0
    %1699 = vmatpush2.msra.mxu0 0.0
    %1700 = vmatprep.subr.mxu0 0.0
    %1701 = vmatpush2.msra.mxu0 0.0
    %1702 = vmatprep.subr.mxu0 0.0
    %1703 = vmatpush2.msra.mxu0 0.0
    %1704 = vmatprep.subr.mxu0 0.0
    %1705 = vmatpush2.msra.mxu0 0.0
    %1706 = vmatprep.subr.mxu0 0.0
    %1707 = vmatpush2.msra.mxu0 0.0
    %1708 = vmatprep.subr.mxu0 0.0
    %1709 = vmatpush2.msra.mxu0 0.0
    %1710 = vmatprep.subr.mxu0 0.0
    %1711 = vmatpush2.msra.mxu0 0.0
    %1712 = vmatprep.subr.mxu0 0.0
    %1713 = vmatpush2.msra.mxu0 0.0
    %1714 = vmatprep.subr.mxu0 0.0
    %1715 = vmatpush2.msra.mxu0 0.0
    %1716 = vmatprep.mubr.f32.mxu0 0.0
    %1717 = vmatmul.mubr.f32.gmra.mxu0 %v1650
    %v1718 = vpop.f32.mrf.mxu0
    %v1719 = vadd.f32 0.0, %v1718
    %v1720 = vpop.f32.mrf.mxu0
    %1721 = vdwg.mxu0
    %1723 = vrot.lane.b32.xlu0 %v1385, 8
    %v1724 = vpop.permute.xlu0 %1723
    %1727 = vrot.lane.b32.xlu0 %v1552, 16
    %v1728 = vpop.permute.xlu0 %1727
    %1731 = vrot.lane.b32.xlu0 %v1719, 24
    %v1732 = vpop.permute.xlu0 %1731
    %v1734 = vsel %vm373, %v1218, %v1724
    %v1735 = vsel %vm1051, %v1734, %v1728
    %v1736 = vsel %vm1053, %v1735, %v1732
    %v1738 = vlaneseq
    %v1739 = vshrl.u32 %v1738, 7
    %v1740 = vsub.s32 0, %v1739
    %v1741 = vrot.slane %v369, %v1740
    %v1744 = vsel %vm219, %v1054, 0
    %v1747 = vsel %vm219, %v1736, 0
    %1749 = vmatprep.subr.mxu0 0.0
    %1750 = vmatpush1.msra.mxu0 0.0
    %1751 = vmatprep.subr.mxu0 0.0
    %1752 = vmatpush1.msra.mxu0 0.0
    %1753 = vmatprep.subr.mxu0 0.0
    %1754 = vmatpush1.msra.mxu0 0.0
    %1755 = vmatprep.subr.mxu0 0.0
    %1756 = vmatpush1.msra.mxu0 0.0
    %1757 = vmatprep.subr.mxu0 0.0
    %1758 = vmatpush1.msra.mxu0 0.0
    %1759 = vmatprep.subr.mxu0 0.0
    %1760 = vmatpush1.msra.mxu0 0.0
    %1761 = vmatprep.subr.mxu0 0.0
    %1762 = vmatpush1.msra.mxu0 0.0
    %1763 = vmatprep.subr.mxu0 0.0
    %1764 = vmatpush1.msra.mxu0 0.0
    %1765 = vmatprep.subr.mxu0 0.0
    %1766 = vmatpush1.msra.mxu0 0.0
    %1767 = vmatprep.subr.mxu0 0.0
    %1768 = vmatpush1.msra.mxu0 0.0
    %1769 = vmatprep.subr.mxu0 0.0
    %1770 = vmatpush1.msra.mxu0 0.0
    %1771 = vmatprep.subr.mxu0 0.0
    %1772 = vmatpush1.msra.mxu0 0.0
    %1773 = vmatprep.subr.mxu0 0.0
    %1774 = vmatpush1.msra.mxu0 %v368
    %1775 = vmatprep.subr.mxu0 0.0
    %1776 = vmatpush1.msra.mxu0 %v367
    %1777 = vmatprep.subr.mxu0 0.0
    %1778 = vmatpush1.msra.mxu0 %v366
    %1779 = vmatprep.subr.mxu0 0.0
    %1780 = vmatpush1.msra.mxu0 %v365
    %1781 = vmatprep.subr.mxu0 0.0
    %1782 = vmatpush2.msra.mxu0 0.0
    %1783 = vmatprep.subr.mxu0 0.0
    %1784 = vmatpush2.msra.mxu0 0.0
    %1785 = vmatprep.subr.mxu0 0.0
    %1786 = vmatpush2.msra.mxu0 0.0
    %1787 = vmatprep.subr.mxu0 0.0
    %1788 = vmatpush2.msra.mxu0 0.0
    %1789 = vmatprep.subr.mxu0 0.0
    %1790 = vmatpush2.msra.mxu0 0.0
    %1791 = vmatprep.subr.mxu0 0.0
    %1792 = vmatpush2.msra.mxu0 0.0
    %1793 = vmatprep.subr.mxu0 0.0
    %1794 = vmatpush2.msra.mxu0 0.0
    %1795 = vmatprep.subr.mxu0 0.0
    %1796 = vmatpush2.msra.mxu0 0.0
    %1797 = vmatprep.subr.mxu0 0.0
    %1798 = vmatpush2.msra.mxu0 0.0
    %1799 = vmatprep.subr.mxu0 0.0
    %1800 = vmatpush2.msra.mxu0 0.0
    %1801 = vmatprep.subr.mxu0 0.0
    %1802 = vmatpush2.msra.mxu0 0.0
    %1803 = vmatprep.subr.mxu0 0.0
    %1804 = vmatpush2.msra.mxu0 0.0
    %1805 = vmatprep.subr.mxu0 0.0
    %1806 = vmatpush2.msra.mxu0 0.0
    %1807 = vmatprep.subr.mxu0 0.0
    %1808 = vmatpush2.msra.mxu0 0.0
    %1809 = vmatprep.subr.mxu0 0.0
    %1810 = vmatpush2.msra.mxu0 0.0
    %1811 = vmatprep.subr.mxu0 0.0
    %1812 = vmatpush2.msra.mxu0 0.0
    %1813 = vmatprep.mubr.f32.mxu0 0.0
    %1814 = vmatmul.mubr.f32.gmra.mxu0 %v1744
    %v1815 = vpop.f32.mrf.mxu0
    %v1816 = vadd.f32 %v1741, %v1815
    %v1817 = vpop.f32.mrf.mxu0
    %1818 = vmatprep.mubr.f32.mxu0 0.0
    %1819 = vmatmul.mubr.f32.gmra.mxu0 %v1747
    %v1820 = vpop.f32.mrf.mxu0
    %v1821 = vadd.f32 %v1741, %v1820
    %v1822 = vpop.f32.mrf.mxu0
    %1823 = vdwg.mxu0
    %v1824 = vadd.f32 %v208, %v1816
    %v1825 = vadd.f32 %v209, %v1821
    %v1826 = vsel %vm219, %v1824, 0.0
    %1827 = vadd.xlane.f32.xlu0 %v1826
    %v1828 = vpop.xlane.xlu0 %1827
    %v1829 = vsel %vm219, %v1825, 0.0
    %1830 = vadd.xlane.f32.xlu0 %v1829
    %v1831 = vpop.xlane.xlu0 %1830
    %v1832 = vmul.f32 %v1828, %v226
    %v1833 = vmul.f32 %v1831, %v226
    %v1834 = vsub.f32 %v1824, %v1832
    %v1835 = vsub.f32 %v1825, %v1833
    %v1836 = vmul.f32 %v1834, %v1834
    %v1837 = vmul.f32 %v1835, %v1835
    %v1838 = vsel %vm219, %v1836, 0.0
    %1839 = vadd.xlane.f32.xlu0 %v1838
    %v1840 = vpop.xlane.xlu0 %1839
    %v1841 = vsel %vm219, %v1837, 0.0
    %1842 = vadd.xlane.f32.xlu0 %v1841
    %v1843 = vpop.xlane.xlu0 %1842
    %v1844 = vmul.f32 %v1840, 0.032258064
    %v1845 = vmul.f32 %v1843, 0.032258064
    %v1846 = vrsqrt.pop %v1844
    %v1847 = vmul.f32 %v1844, %v1846
    %vm1848 = vcmp.eq.f32.partialorder %v1844, inf
    %v1849 = vsel %vm1848, %v1844, %v1847
    %vm1850 = vcmp.eq.f32.partialorder %v1844, 0.0
    %v1851 = vand.u32 %v1844, 2147483648
    %v1852 = vsel %vm1850, %v1851, %v1849
    %v1853 = vrsqrt.pop %v1845
    %v1854 = vmul.f32 %v1845, %v1853
    %vm1855 = vcmp.eq.f32.partialorder %v1845, inf
    %v1856 = vsel %vm1855, %v1845, %v1854
    %vm1857 = vcmp.eq.f32.partialorder %v1845, 0.0
    %v1858 = vand.u32 %v1845, 2147483648
    %v1859 = vsel %vm1857, %v1858, %v1856
    %v1860 = vadd.f32 %v1852, 1e-06
    %v1861 = vadd.f32 %v1859, 1e-06
    %v1862 = vrcp.pop %v1860
    %v1863 = vrcp.pop %v1861
    %v1864 = vmul.f32 %v1834, %v1862
    %v1865 = vmul.f32 %v1835, %v1863
    %v1866 = vlaneseq
    %v1867 = vshrl.u32 %v1866, 7
    %v1868 = vsub.s32 1, %v1867
    %v1869 = vrot.slane %v217, %v1868
    %v1870 = vmul.f32 %v1869, %v1864
    %v1871 = vmul.f32 %v1869, %v1865
    %v1872 = vlaneseq
    %v1873 = vshrl.u32 %v1872, 7
    %v1874 = vsub.s32 1, %v1873
    %v1875 = vrot.slane %v218, %v1874
    %v1876 = vadd.f32 %v1870, %v1875
    %v1877 = vadd.f32 %v1871, %v1875
    %v1878 = vld [vmem:[%s10] sm:$0xff]
    %v1879 = vld [vmem:[%s10 + $0x8] sm:$0xff]
    %v1880 = vld [vmem:[%s10 + $0x10] sm:$0xff]
    %v1881 = vld [vmem:[%s10 + $0x18] sm:$0xff]
    %v1882 = vld [vmem:[#allocation7] sm:$0x1]
    %v1884 = vlaneseq
    %v1885 = vshrl.u32 %v1884, 7
    %v1886 = vsub.s32 0, %v1885
    %v1887 = vrot.slane %v1882, %v1886
    %v1890 = vsel %vm219, %v1876, 0
    %v1893 = vsel %vm219, %v1877, 0
    %1895 = vmatprep.subr.mxu0 0.0
    %1896 = vmatpush1.msra.mxu0 0.0
    %1897 = vmatprep.subr.mxu0 0.0
    %1898 = vmatpush1.msra.mxu0 0.0
    %1899 = vmatprep.subr.mxu0 0.0
    %1900 = vmatpush1.msra.mxu0 0.0
    %1901 = vmatprep.subr.mxu0 0.0
    %1902 = vmatpush1.msra.mxu0 0.0
    %1903 = vmatprep.subr.mxu0 0.0
    %1904 = vmatpush1.msra.mxu0 0.0
    %1905 = vmatprep.subr.mxu0 0.0
    %1906 = vmatpush1.msra.mxu0 0.0
    %1907 = vmatprep.subr.mxu0 0.0
    %1908 = vmatpush1.msra.mxu0 0.0
    %1909 = vmatprep.subr.mxu0 0.0
    %1910 = vmatpush1.msra.mxu0 0.0
    %1911 = vmatprep.subr.mxu0 0.0
    %1912 = vmatpush1.msra.mxu0 0.0
    %1913 = vmatprep.subr.mxu0 0.0
    %1914 = vmatpush1.msra.mxu0 0.0
    %1915 = vmatprep.subr.mxu0 0.0
    %1916 = vmatpush1.msra.mxu0 0.0
    %1917 = vmatprep.subr.mxu0 0.0
    %1918 = vmatpush1.msra.mxu0 0.0
    %1919 = vmatprep.subr.mxu0 0.0
    %1920 = vmatpush1.msra.mxu0 %v1881
    %1921 = vmatprep.subr.mxu0 0.0
    %1922 = vmatpush1.msra.mxu0 %v1880
    %1923 = vmatprep.subr.mxu0 0.0
    %1924 = vmatpush1.msra.mxu0 %v1879
    %1925 = vmatprep.subr.mxu0 0.0
    %1926 = vmatpush1.msra.mxu0 %v1878
    %1927 = vmatprep.subr.mxu0 0.0
    %1928 = vmatpush2.msra.mxu0 0.0
    %1929 = vmatprep.subr.mxu0 0.0
    %1930 = vmatpush2.msra.mxu0 0.0
    %1931 = vmatprep.subr.mxu0 0.0
    %1932 = vmatpush2.msra.mxu0 0.0
    %1933 = vmatprep.subr.mxu0 0.0
    %1934 = vmatpush2.msra.mxu0 0.0
    %1935 = vmatprep.subr.mxu0 0.0
    %1936 = vmatpush2.msra.mxu0 0.0
    %1937 = vmatprep.subr.mxu0 0.0
    %1938 = vmatpush2.msra.mxu0 0.0
    %1939 = vmatprep.subr.mxu0 0.0
    %1940 = vmatpush2.msra.mxu0 0.0
    %1941 = vmatprep.subr.mxu0 0.0
    %1942 = vmatpush2.msra.mxu0 0.0
    %1943 = vmatprep.subr.mxu0 0.0
    %1944 = vmatpush2.msra.mxu0 0.0
    %1945 = vmatprep.subr.mxu0 0.0
    %1946 = vmatpush2.msra.mxu0 0.0
    %1947 = vmatprep.subr.mxu0 0.0
    %1948 = vmatpush2.msra.mxu0 0.0
    %1949 = vmatprep.subr.mxu0 0.0
    %1950 = vmatpush2.msra.mxu0 0.0
    %1951 = vmatprep.subr.mxu0 0.0
    %1952 = vmatpush2.msra.mxu0 0.0
    %1953 = vmatprep.subr.mxu0 0.0
    %1954 = vmatpush2.msra.mxu0 0.0
    %1955 = vmatprep.subr.mxu0 0.0
    %1956 = vmatpush2.msra.mxu0 0.0
    %1957 = vmatprep.subr.mxu0 0.0
    %1958 = vmatpush2.msra.mxu0 0.0
    %1959 = vmatprep.mubr.f32.mxu0 0.0
    %1960 = vmatmul.mubr.f32.gmra.mxu0 %v1890
    %v1961 = vpop.f32.mrf.mxu0
    %v1962 = vadd.f32 %v1887, %v1961
    %v1963 = vpop.f32.mrf.mxu0
    %1964 = vmatprep.mubr.f32.mxu0 0.0
    %1965 = vmatmul.mubr.f32.gmra.mxu0 %v1893
    %v1966 = vpop.f32.mrf.mxu0
    %v1967 = vadd.f32 %v1887, %v1966
    %v1968 = vpop.f32.mrf.mxu0
    %1969 = vdwg.mxu0
    %v1970 = vld [vmem:[#allocation8] sm:$0xff]
    %v1971 = vld [vmem:[#allocation8 + $0x8] sm:$0xff]
    %v1972 = vld [vmem:[#allocation8 + $0x10] sm:$0xff]
    %v1973 = vld [vmem:[#allocation8 + $0x18] sm:$0xff]
    %v1974 = vld [vmem:[#allocation10] sm:$0x1]
    %v1976 = vlaneseq
    %v1977 = vshrl.u32 %v1976, 7
    %v1978 = vsub.s32 0, %v1977
    %v1979 = vrot.slane %v1974, %v1978
    %v1982 = vsel %vm219, %v210, 0
    %v1985 = vsel %vm219, %v211, 0
    %v1988 = vsel %vm219, %v212, 0
    %v1991 = vsel %vm219, %v213, 0
    %1993 = vmatprep.subr.mxu0 0.0
    %1994 = vmatpush1.msra.mxu0 0.0
    %1995 = vmatprep.subr.mxu0 0.0
    %1996 = vmatpush1.msra.mxu0 0.0
    %1997 = vmatprep.subr.mxu0 0.0
    %1998 = vmatpush1.msra.mxu0 0.0
    %1999 = vmatprep.subr.mxu0 0.0
    %2000 = vmatpush1.msra.mxu0 0.0
    %2001 = vmatprep.subr.mxu0 0.0
    %2002 = vmatpush1.msra.mxu0 0.0
    %2003 = vmatprep.subr.mxu0 0.0
    %2004 = vmatpush1.msra.mxu0 0.0
    %2005 = vmatprep.subr.mxu0 0.0
    %2006 = vmatpush1.msra.mxu0 0.0
    %2007 = vmatprep.subr.mxu0 0.0
    %2008 = vmatpush1.msra.mxu0 0.0
    %2009 = vmatprep.subr.mxu0 0.0
    %2010 = vmatpush1.msra.mxu0 0.0
    %2011 = vmatprep.subr.mxu0 0.0
    %2012 = vmatpush1.msra.mxu0 0.0
    %2013 = vmatprep.subr.mxu0 0.0
    %2014 = vmatpush1.msra.mxu0 0.0
    %2015 = vmatprep.subr.mxu0 0.0
    %2016 = vmatpush1.msra.mxu0 0.0
    %2017 = vmatprep.subr.mxu0 0.0
    %2018 = vmatpush1.msra.mxu0 %v1973
    %2019 = vmatprep.subr.mxu0 0.0
    %2020 = vmatpush1.msra.mxu0 %v1972
    %2021 = vmatprep.subr.mxu0 0.0
    %2022 = vmatpush1.msra.mxu0 %v1971
    %2023 = vmatprep.subr.mxu0 0.0
    %2024 = vmatpush1.msra.mxu0 %v1970
    %2025 = vmatprep.subr.mxu0 0.0
    %2026 = vmatpush2.msra.mxu0 0.0
    %2027 = vmatprep.subr.mxu0 0.0
    %2028 = vmatpush2.msra.mxu0 0.0
    %2029 = vmatprep.subr.mxu0 0.0
    %2030 = vmatpush2.msra.mxu0 0.0
    %2031 = vmatprep.subr.mxu0 0.0
    %2032 = vmatpush2.msra.mxu0 0.0
    %2033 = vmatprep.subr.mxu0 0.0
    %2034 = vmatpush2.msra.mxu0 0.0
    %2035 = vmatprep.subr.mxu0 0.0
    %2036 = vmatpush2.msra.mxu0 0.0
    %2037 = vmatprep.subr.mxu0 0.0
    %2038 = vmatpush2.msra.mxu0 0.0
    %2039 = vmatprep.subr.mxu0 0.0
    %2040 = vmatpush2.msra.mxu0 0.0
    %2041 = vmatprep.subr.mxu0 0.0
    %2042 = vmatpush2.msra.mxu0 0.0
    %2043 = vmatprep.subr.mxu0 0.0
    %2044 = vmatpush2.msra.mxu0 0.0
    %2045 = vmatprep.subr.mxu0 0.0
    %2046 = vmatpush2.msra.mxu0 0.0
    %2047 = vmatprep.subr.mxu0 0.0
    %2048 = vmatpush2.msra.mxu0 0.0
    %2049 = vmatprep.subr.mxu0 0.0
    %2050 = vmatpush2.msra.mxu0 0.0
    %2051 = vmatprep.subr.mxu0 0.0
    %2052 = vmatpush2.msra.mxu0 0.0
    %2053 = vmatprep.subr.mxu0 0.0
    %2054 = vmatpush2.msra.mxu0 0.0
    %2055 = vmatprep.subr.mxu0 0.0
    %2056 = vmatpush2.msra.mxu0 0.0
    %2057 = vmatprep.mubr.f32.mxu0 0.0
    %2058 = vmatmul.mubr.f32.gmra.mxu0 %v1982
    %v2059 = vpop.f32.mrf.mxu0
    %v2060 = vadd.f32 %v1979, %v2059
    %v2061 = vpop.f32.mrf.mxu0
    %2062 = vmatprep.mubr.f32.mxu0 0.0
    %2063 = vmatmul.mubr.f32.gmra.mxu0 %v1985
    %v2064 = vpop.f32.mrf.mxu0
    %v2065 = vadd.f32 %v1979, %v2064
    %v2066 = vpop.f32.mrf.mxu0
    %2067 = vmatprep.mubr.f32.mxu0 0.0
    %2068 = vmatmul.mubr.f32.gmra.mxu0 %v1988
    %v2069 = vpop.f32.mrf.mxu0
    %v2070 = vadd.f32 %v1979, %v2069
    %v2071 = vpop.f32.mrf.mxu0
    %2072 = vmatprep.mubr.f32.mxu0 0.0
    %2073 = vmatmul.mubr.f32.gmra.mxu0 %v1991
    %v2074 = vpop.f32.mrf.mxu0
    %v2075 = vadd.f32 %v1979, %v2074
    %v2076 = vpop.f32.mrf.mxu0
    %2077 = vdwg.mxu0
    %v2078 = vld [vmem:[#allocation11] sm:$0xff]
    %v2079 = vld [vmem:[#allocation11 + $0x8] sm:$0xff]
    %v2080 = vld [vmem:[#allocation11 + $0x10] sm:$0xff]
    %v2081 = vld [vmem:[#allocation11 + $0x18] sm:$0xff]
    %v2082 = vld [vmem:[#allocation13] sm:$0x1]
    %v2084 = vsel %vm373, %v1962, 0
    %v2087 = vsel %vm373, %v2060, 0
    %v2090 = vsel %vm373, %v2065, 0
    %2092 = vmatprep.subr.mxu0 0.0
    %2093 = vmatpush1.xpose.msra.mxu0 0.0
    %2094 = vmatprep.subr.mxu0 0.0
    %2095 = vmatpush1.xpose.msra.mxu0 0.0
    %2096 = vmatprep.subr.mxu0 0.0
    %2097 = vmatpush1.xpose.msra.mxu0 0.0
    %2098 = vmatprep.subr.mxu0 0.0
    %2099 = vmatpush1.xpose.msra.mxu0 0.0
    %2100 = vmatprep.subr.mxu0 0.0
    %2101 = vmatpush1.xpose.msra.mxu0 0.0
    %2102 = vmatprep.subr.mxu0 0.0
    %2103 = vmatpush1.xpose.msra.mxu0 0.0
    %2104 = vmatprep.subr.mxu0 0.0
    %2105 = vmatpush1.xpose.msra.mxu0 0.0
    %2106 = vmatprep.subr.mxu0 0.0
    %2107 = vmatpush1.xpose.msra.mxu0 0.0
    %2108 = vmatprep.subr.mxu0 0.0
    %2109 = vmatpush1.xpose.msra.mxu0 0.0
    %2110 = vmatprep.subr.mxu0 0.0
    %2111 = vmatpush1.xpose.msra.mxu0 0.0
    %2112 = vmatprep.subr.mxu0 0.0
    %2113 = vmatpush1.xpose.msra.mxu0 0.0
    %2114 = vmatprep.subr.mxu0 0.0
    %2115 = vmatpush1.xpose.msra.mxu0 0.0
    %2116 = vmatprep.subr.mxu0 0.0
    %2117 = vmatpush1.xpose.msra.mxu0 0.0
    %2118 = vmatprep.subr.mxu0 0.0
    %2119 = vmatpush1.xpose.msra.mxu0 0.0
    %2120 = vmatprep.subr.mxu0 0.0
    %2121 = vmatpush1.xpose.msra.mxu0 %v2090
    %2122 = vmatprep.subr.mxu0 0.0
    %2123 = vmatpush1.xpose.msra.mxu0 %v2087
    %2124 = vmatprep.subr.mxu0 0.0
    %2125 = vmatpush2.xpose.msra.mxu0 0.0
    %2126 = vmatprep.subr.mxu0 0.0
    %2127 = vmatpush2.xpose.msra.mxu0 0.0
    %2128 = vmatprep.subr.mxu0 0.0
    %2129 = vmatpush2.xpose.msra.mxu0 0.0
    %2130 = vmatprep.subr.mxu0 0.0
    %2131 = vmatpush2.xpose.msra.mxu0 0.0
    %2132 = vmatprep.subr.mxu0 0.0
    %2133 = vmatpush2.xpose.msra.mxu0 0.0
    %2134 = vmatprep.subr.mxu0 0.0
    %2135 = vmatpush2.xpose.msra.mxu0 0.0
    %2136 = vmatprep.subr.mxu0 0.0
    %2137 = vmatpush2.xpose.msra.mxu0 0.0
    %2138 = vmatprep.subr.mxu0 0.0
    %2139 = vmatpush2.xpose.msra.mxu0 0.0
    %2140 = vmatprep.subr.mxu0 0.0
    %2141 = vmatpush2.xpose.msra.mxu0 0.0
    %2142 = vmatprep.subr.mxu0 0.0
    %2143 = vmatpush2.xpose.msra.mxu0 0.0
    %2144 = vmatprep.subr.mxu0 0.0
    %2145 = vmatpush2.xpose.msra.mxu0 0.0
    %2146 = vmatprep.subr.mxu0 0.0
    %2147 = vmatpush2.xpose.msra.mxu0 0.0
    %2148 = vmatprep.subr.mxu0 0.0
    %2149 = vmatpush2.xpose.msra.mxu0 0.0
    %2150 = vmatprep.subr.mxu0 0.0
    %2151 = vmatpush2.xpose.msra.mxu0 0.0
    %2152 = vmatprep.subr.mxu0 0.0
    %2153 = vmatpush2.xpose.msra.mxu0 0.0
    %2154 = vmatprep.subr.mxu0 0.0
    %2155 = vmatpush2.xpose.msra.mxu0 0.0
    %2156 = vmatprep.mubr.f32.mxu0 0.0
    %2157 = vmatmul.mubr.f32.gmra.mxu0 %v2084
    %v2158 = vpop.f32.mrf.mxu0
    %v2159 = vadd.f32 0.0, %v2158
    %v2160 = vpop.f32.mrf.mxu0
    %2161 = vdwg.mxu0
    %v2162 = vmul.f32 %v2159, 0.35355338
    %v2163 = vlaneseq
    %v2164 = vshrl.u32 %v2163, 7
    %v2165 = vsub.s32 0, %v2164
    %v2166 = vrot.slane %v216, %v2165
    %v2167 = vadd.f32 %v2162, %v2166
    %v2168 = vsel %vm1051, %v2167, -inf
    %2169 = vmax.xlane.f32.xlu0 %v2168
    %v2170 = vpop.xlane.xlu0 %2169
    %v2171 = vsub.f32 %v2167, %v2170
    %v2172 = vmul.f32 %v2171, 1.442695
    %v2173 = vpow.pop %v2172
    %v2174 = vsel %vm1051, %v2173, 0.0
    %2175 = vadd.xlane.f32.xlu0 %v2174
    %v2176 = vpop.xlane.xlu0 %2175
    %v2177 = vrcp.pop %v2176
    %v2178 = vmul.f32 %v2173, %v2177
    %2179 = vrot.lane.b32.xlu0 %v2060, 96
    %v2180 = vpop.permute.xlu0 %2179
    %2181 = vrot.lane.b32.xlu0 %v2065, 96
    %v2182 = vpop.permute.xlu0 %2181
    %v2186 = vsel %vm1051, %v2178, 0
    %2188 = vmatprep.subr.mxu0 0.0
    %2189 = vmatpush1.msra.mxu0 0.0
    %2190 = vmatprep.subr.mxu0 0.0
    %2191 = vmatpush1.msra.mxu0 0.0
    %2192 = vmatprep.subr.mxu0 0.0
    %2193 = vmatpush1.msra.mxu0 0.0
    %2194 = vmatprep.subr.mxu0 0.0
    %2195 = vmatpush1.msra.mxu0 0.0
    %2196 = vmatprep.subr.mxu0 0.0
    %2197 = vmatpush1.msra.mxu0 0.0
    %2198 = vmatprep.subr.mxu0 0.0
    %2199 = vmatpush1.msra.mxu0 0.0
    %2200 = vmatprep.subr.mxu0 0.0
    %2201 = vmatpush1.msra.mxu0 0.0
    %2202 = vmatprep.subr.mxu0 0.0
    %2203 = vmatpush1.msra.mxu0 0.0
    %2204 = vmatprep.subr.mxu0 0.0
    %2205 = vmatpush1.msra.mxu0 0.0
    %2206 = vmatprep.subr.mxu0 0.0
    %2207 = vmatpush1.msra.mxu0 0.0
    %2208 = vmatprep.subr.mxu0 0.0
    %2209 = vmatpush1.msra.mxu0 0.0
    %2210 = vmatprep.subr.mxu0 0.0
    %2211 = vmatpush1.msra.mxu0 0.0
    %2212 = vmatprep.subr.mxu0 0.0
    %2213 = vmatpush1.msra.mxu0 0.0
    %2214 = vmatprep.subr.mxu0 0.0
    %2215 = vmatpush1.msra.mxu0 0.0
    %2216 = vmatprep.subr.mxu0 0.0
    %2217 = vmatpush1.msra.mxu0 %v2182
    %2218 = vmatprep.subr.mxu0 0.0
    %2219 = vmatpush1.msra.mxu0 %v2180
    %2220 = vmatprep.subr.mxu0 0.0
    %2221 = vmatpush2.msra.mxu0 0.0
    %2222 = vmatprep.subr.mxu0 0.0
    %2223 = vmatpush2.msra.mxu0 0.0
    %2224 = vmatprep.subr.mxu0 0.0
    %2225 = vmatpush2.msra.mxu0 0.0
    %2226 = vmatprep.subr.mxu0 0.0
    %2227 = vmatpush2.msra.mxu0 0.0
    %2228 = vmatprep.subr.mxu0 0.0
    %2229 = vmatpush2.msra.mxu0 0.0
    %2230 = vmatprep.subr.mxu0 0.0
    %2231 = vmatpush2.msra.mxu0 0.0
    %2232 = vmatprep.subr.mxu0 0.0
    %2233 = vmatpush2.msra.mxu0 0.0
    %2234 = vmatprep.subr.mxu0 0.0
    %2235 = vmatpush2.msra.mxu0 0.0
    %2236 = vmatprep.subr.mxu0 0.0
    %2237 = vmatpush2.msra.mxu0 0.0
    %2238 = vmatprep.subr.mxu0 0.0
    %2239 = vmatpush2.msra.mxu0 0.0
    %2240 = vmatprep.subr.mxu0 0.0
    %2241 = vmatpush2.msra.mxu0 0.0
    %2242 = vmatprep.subr.mxu0 0.0
    %2243 = vmatpush2.msra.mxu0 0.0
    %2244 = vmatprep.subr.mxu0 0.0
    %2245 = vmatpush2.msra.mxu0 0.0
    %2246 = vmatprep.subr.mxu0 0.0
    %2247 = vmatpush2.msra.mxu0 0.0
    %2248 = vmatprep.subr.mxu0 0.0
    %2249 = vmatpush2.msra.mxu0 0.0
    %2250 = vmatprep.subr.mxu0 0.0
    %2251 = vmatpush2.msra.mxu0 0.0
    %2252 = vmatprep.mubr.f32.mxu0 0.0
    %2253 = vmatmul.mubr.f32.gmra.mxu0 %v2186
    %v2254 = vpop.f32.mrf.mxu0
    %v2255 = vadd.f32 0.0, %v2254
    %v2256 = vpop.f32.mrf.mxu0
    %2257 = vdwg.mxu0
    %2258 = vrot.lane.b32.xlu0 %v1962, 120
    %v2259 = vpop.permute.xlu0 %2258
    %2260 = vrot.lane.b32.xlu0 %v2060, 120
    %v2261 = vpop.permute.xlu0 %2260
    %2262 = vrot.lane.b32.xlu0 %v2065, 120
    %v2263 = vpop.permute.xlu0 %2262
    %v2264 = vsel %vm373, %v2259, 0
    %v2266 = vsel %vm373, %v2261, 0
    %v2268 = vsel %vm373, %v2263, 0
    %2270 = vmatprep.subr.mxu0 0.0
    %2271 = vmatpush1.xpose.msra.mxu0 0.0
    %2272 = vmatprep.subr.mxu0 0.0
    %2273 = vmatpush1.xpose.msra.mxu0 0.0
    %2274 = vmatprep.subr.mxu0 0.0
    %2275 = vmatpush1.xpose.msra.mxu0 0.0
    %2276 = vmatprep.subr.mxu0 0.0
    %2277 = vmatpush1.xpose.msra.mxu0 0.0
    %2278 = vmatprep.subr.mxu0 0.0
    %2279 = vmatpush1.xpose.msra.mxu0 0.0
    %2280 = vmatprep.subr.mxu0 0.0
    %2281 = vmatpush1.xpose.msra.mxu0 0.0
    %2282 = vmatprep.subr.mxu0 0.0
    %2283 = vmatpush1.xpose.msra.mxu0 0.0
    %2284 = vmatprep.subr.mxu0 0.0
    %2285 = vmatpush1.xpose.msra.mxu0 0.0
    %2286 = vmatprep.subr.mxu0 0.0
    %2287 = vmatpush1.xpose.msra.mxu0 0.0
    %2288 = vmatprep.subr.mxu0 0.0
    %2289 = vmatpush1.xpose.msra.mxu0 0.0
    %2290 = vmatprep.subr.mxu0 0.0
    %2291 = vmatpush1.xpose.msra.mxu0 0.0
    %2292 = vmatprep.subr.mxu0 0.0
    %2293 = vmatpush1.xpose.msra.mxu0 0.0
    %2294 = vmatprep.subr.mxu0 0.0
    %2295 = vmatpush1.xpose.msra.mxu0 0.0
    %2296 = vmatprep.subr.mxu0 0.0
    %2297 = vmatpush1.xpose.msra.mxu0 0.0
    %2298 = vmatprep.subr.mxu0 0.0
    %2299 = vmatpush1.xpose.msra.mxu0 %v2268
    %2300 = vmatprep.subr.mxu0 0.0
    %2301 = vmatpush1.xpose.msra.mxu0 %v2266
    %2302 = vmatprep.subr.mxu0 0.0
    %2303 = vmatpush2.xpose.msra.mxu0 0.0
    %2304 = vmatprep.subr.mxu0 0.0
    %2305 = vmatpush2.xpose.msra.mxu0 0.0
    %2306 = vmatprep.subr.mxu0 0.0
    %2307 = vmatpush2.xpose.msra.mxu0 0.0
    %2308 = vmatprep.subr.mxu0 0.0
    %2309 = vmatpush2.xpose.msra.mxu0 0.0
    %2310 = vmatprep.subr.mxu0 0.0
    %2311 = vmatpush2.xpose.msra.mxu0 0.0
    %2312 = vmatprep.subr.mxu0 0.0
    %2313 = vmatpush2.xpose.msra.mxu0 0.0
    %2314 = vmatprep.subr.mxu0 0.0
    %2315 = vmatpush2.xpose.msra.mxu0 0.0
    %2316 = vmatprep.subr.mxu0 0.0
    %2317 = vmatpush2.xpose.msra.mxu0 0.0
    %2318 = vmatprep.subr.mxu0 0.0
    %2319 = vmatpush2.xpose.msra.mxu0 0.0
    %2320 = vmatprep.subr.mxu0 0.0
    %2321 = vmatpush2.xpose.msra.mxu0 0.0
    %2322 = vmatprep.subr.mxu0 0.0
    %2323 = vmatpush2.xpose.msra.mxu0 0.0
    %2324 = vmatprep.subr.mxu0 0.0
    %2325 = vmatpush2.xpose.msra.mxu0 0.0
    %2326 = vmatprep.subr.mxu0 0.0
    %2327 = vmatpush2.xpose.msra.mxu0 0.0
    %2328 = vmatprep.subr.mxu0 0.0
    %2329 = vmatpush2.xpose.msra.mxu0 0.0
    %2330 = vmatprep.subr.mxu0 0.0
    %2331 = vmatpush2.xpose.msra.mxu0 0.0
    %2332 = vmatprep.subr.mxu0 0.0
    %2333 = vmatpush2.xpose.msra.mxu0 0.0
    %2334 = vmatprep.mubr.f32.mxu0 0.0
    %2335 = vmatmul.mubr.f32.gmra.mxu0 %v2264
    %v2336 = vpop.f32.mrf.mxu0
    %v2337 = vadd.f32 0.0, %v2336
    %v2338 = vpop.f32.mrf.mxu0
    %2339 = vdwg.mxu0
    %v2340 = vmul.f32 %v2337, 0.35355338
    %v2341 = vadd.f32 %v2340, %v2166
    %v2342 = vsel %vm1051, %v2341, -inf
    %2343 = vmax.xlane.f32.xlu0 %v2342
    %v2344 = vpop.xlane.xlu0 %2343
    %v2345 = vsub.f32 %v2341, %v2344
    %v2346 = vmul.f32 %v2345, 1.442695
    %v2347 = vpow.pop %v2346
    %v2348 = vsel %vm1051, %v2347, 0.0
    %2349 = vadd.xlane.f32.xlu0 %v2348
    %v2350 = vpop.xlane.xlu0 %2349
    %v2351 = vrcp.pop %v2350
    %v2352 = vmul.f32 %v2347, %v2351
    %2353 = vrot.lane.b32.xlu0 %v2060, 88
    %v2354 = vpop.permute.xlu0 %2353
    %2355 = vrot.lane.b32.xlu0 %v2065, 88
    %v2356 = vpop.permute.xlu0 %2355
    %v2360 = vsel %vm1051, %v2352, 0
    %2362 = vmatprep.subr.mxu0 0.0
    %2363 = vmatpush1.msra.mxu0 0.0
    %2364 = vmatprep.subr.mxu0 0.0
    %2365 = vmatpush1.msra.mxu0 0.0
    %2366 = vmatprep.subr.mxu0 0.0
    %2367 = vmatpush1.msra.mxu0 0.0
    %2368 = vmatprep.subr.mxu0 0.0
    %2369 = vmatpush1.msra.mxu0 0.0
    %2370 = vmatprep.subr.mxu0 0.0
    %2371 = vmatpush1.msra.mxu0 0.0
    %2372 = vmatprep.subr.mxu0 0.0
    %2373 = vmatpush1.msra.mxu0 0.0
    %2374 = vmatprep.subr.mxu0 0.0
    %2375 = vmatpush1.msra.mxu0 0.0
    %2376 = vmatprep.subr.mxu0 0.0
    %2377 = vmatpush1.msra.mxu0 0.0
    %2378 = vmatprep.subr.mxu0 0.0
    %2379 = vmatpush1.msra.mxu0 0.0
    %2380 = vmatprep.subr.mxu0 0.0
    %2381 = vmatpush1.msra.mxu0 0.0
    %2382 = vmatprep.subr.mxu0 0.0
    %2383 = vmatpush1.msra.mxu0 0.0
    %2384 = vmatprep.subr.mxu0 0.0
    %2385 = vmatpush1.msra.mxu0 0.0
    %2386 = vmatprep.subr.mxu0 0.0
    %2387 = vmatpush1.msra.mxu0 0.0
    %2388 = vmatprep.subr.mxu0 0.0
    %2389 = vmatpush1.msra.mxu0 0.0
    %2390 = vmatprep.subr.mxu0 0.0
    %2391 = vmatpush1.msra.mxu0 %v2356
    %2392 = vmatprep.subr.mxu0 0.0
    %2393 = vmatpush1.msra.mxu0 %v2354
    %2394 = vmatprep.subr.mxu0 0.0
    %2395 = vmatpush2.msra.mxu0 0.0
    %2396 = vmatprep.subr.mxu0 0.0
    %2397 = vmatpush2.msra.mxu0 0.0
    %2398 = vmatprep.subr.mxu0 0.0
    %2399 = vmatpush2.msra.mxu0 0.0
    %2400 = vmatprep.subr.mxu0 0.0
    %2401 = vmatpush2.msra.mxu0 0.0
    %2402 = vmatprep.subr.mxu0 0.0
    %2403 = vmatpush2.msra.mxu0 0.0
    %2404 = vmatprep.subr.mxu0 0.0
    %2405 = vmatpush2.msra.mxu0 0.0
    %2406 = vmatprep.subr.mxu0 0.0
    %2407 = vmatpush2.msra.mxu0 0.0
    %2408 = vmatprep.subr.mxu0 0.0
    %2409 = vmatpush2.msra.mxu0 0.0
    %2410 = vmatprep.subr.mxu0 0.0
    %2411 = vmatpush2.msra.mxu0 0.0
    %2412 = vmatprep.subr.mxu0 0.0
    %2413 = vmatpush2.msra.mxu0 0.0
    %2414 = vmatprep.subr.mxu0 0.0
    %2415 = vmatpush2.msra.mxu0 0.0
    %2416 = vmatprep.subr.mxu0 0.0
    %2417 = vmatpush2.msra.mxu0 0.0
    %2418 = vmatprep.subr.mxu0 0.0
    %2419 = vmatpush2.msra.mxu0 0.0
    %2420 = vmatprep.subr.mxu0 0.0
    %2421 = vmatpush2.msra.mxu0 0.0
    %2422 = vmatprep.subr.mxu0 0.0
    %2423 = vmatpush2.msra.mxu0 0.0
    %2424 = vmatprep.subr.mxu0 0.0
    %2425 = vmatpush2.msra.mxu0 0.0
    %2426 = vmatprep.mubr.f32.mxu0 0.0
    %2427 = vmatmul.mubr.f32.gmra.mxu0 %v2360
    %v2428 = vpop.f32.mrf.mxu0
    %v2429 = vadd.f32 0.0, %v2428
    %v2430 = vpop.f32.mrf.mxu0
    %2431 = vdwg.mxu0
    %2432 = vrot.lane.b32.xlu0 %v1962, 112
    %v2433 = vpop.permute.xlu0 %2432
    %2434 = vrot.lane.b32.xlu0 %v2060, 112
    %v2435 = vpop.permute.xlu0 %2434
    %2436 = vrot.lane.b32.xlu0 %v2065, 112
    %v2437 = vpop.permute.xlu0 %2436
    %v2438 = vsel %vm373, %v2433, 0
    %v2440 = vsel %vm373, %v2435, 0
    %v2442 = vsel %vm373, %v2437, 0
    %2444 = vmatprep.subr.mxu0 0.0
    %2445 = vmatpush1.xpose.msra.mxu0 0.0
    %2446 = vmatprep.subr.mxu0 0.0
    %2447 = vmatpush1.xpose.msra.mxu0 0.0
    %2448 = vmatprep.subr.mxu0 0.0
    %2449 = vmatpush1.xpose.msra.mxu0 0.0
    %2450 = vmatprep.subr.mxu0 0.0
    %2451 = vmatpush1.xpose.msra.mxu0 0.0
    %2452 = vmatprep.subr.mxu0 0.0
    %2453 = vmatpush1.xpose.msra.mxu0 0.0
    %2454 = vmatprep.subr.mxu0 0.0
    %2455 = vmatpush1.xpose.msra.mxu0 0.0
    %2456 = vmatprep.subr.mxu0 0.0
    %2457 = vmatpush1.xpose.msra.mxu0 0.0
    %2458 = vmatprep.subr.mxu0 0.0
    %2459 = vmatpush1.xpose.msra.mxu0 0.0
    %2460 = vmatprep.subr.mxu0 0.0
    %2461 = vmatpush1.xpose.msra.mxu0 0.0
    %2462 = vmatprep.subr.mxu0 0.0
    %2463 = vmatpush1.xpose.msra.mxu0 0.0
    %2464 = vmatprep.subr.mxu0 0.0
    %2465 = vmatpush1.xpose.msra.mxu0 0.0
    %2466 = vmatprep.subr.mxu0 0.0
    %2467 = vmatpush1.xpose.msra.mxu0 0.0
    %2468 = vmatprep.subr.mxu0 0.0
    %2469 = vmatpush1.xpose.msra.mxu0 0.0
    %2470 = vmatprep.subr.mxu0 0.0
    %2471 = vmatpush1.xpose.msra.mxu0 0.0
    %2472 = vmatprep.subr.mxu0 0.0
    %2473 = vmatpush1.xpose.msra.mxu0 %v2442
    %2474 = vmatprep.subr.mxu0 0.0
    %2475 = vmatpush1.xpose.msra.mxu0 %v2440
    %2476 = vmatprep.subr.mxu0 0.0
    %2477 = vmatpush2.xpose.msra.mxu0 0.0
    %2478 = vmatprep.subr.mxu0 0.0
    %2479 = vmatpush2.xpose.msra.mxu0 0.0
    %2480 = vmatprep.subr.mxu0 0.0
    %2481 = vmatpush2.xpose.msra.mxu0 0.0
    %2482 = vmatprep.subr.mxu0 0.0
    %2483 = vmatpush2.xpose.msra.mxu0 0.0
    %2484 = vmatprep.subr.mxu0 0.0
    %2485 = vmatpush2.xpose.msra.mxu0 0.0
    %2486 = vmatprep.subr.mxu0 0.0
    %2487 = vmatpush2.xpose.msra.mxu0 0.0
    %2488 = vmatprep.subr.mxu0 0.0
    %2489 = vmatpush2.xpose.msra.mxu0 0.0
    %2490 = vmatprep.subr.mxu0 0.0
    %2491 = vmatpush2.xpose.msra.mxu0 0.0
    %2492 = vmatprep.subr.mxu0 0.0
    %2493 = vmatpush2.xpose.msra.mxu0 0.0
    %2494 = vmatprep.subr.mxu0 0.0
    %2495 = vmatpush2.xpose.msra.mxu0 0.0
    %2496 = vmatprep.subr.mxu0 0.0
    %2497 = vmatpush2.xpose.msra.mxu0 0.0
    %2498 = vmatprep.subr.mxu0 0.0
    %2499 = vmatpush2.xpose.msra.mxu0 0.0
    %2500 = vmatprep.subr.mxu0 0.0
    %2501 = vmatpush2.xpose.msra.mxu0 0.0
    %2502 = vmatprep.subr.mxu0 0.0
    %2503 = vmatpush2.xpose.msra.mxu0 0.0
    %2504 = vmatprep.subr.mxu0 0.0
    %2505 = vmatpush2.xpose.msra.mxu0 0.0
    %2506 = vmatprep.subr.mxu0 0.0
    %2507 = vmatpush2.xpose.msra.mxu0 0.0
    %2508 = vmatprep.mubr.f32.mxu0 0.0
    %2509 = vmatmul.mubr.f32.gmra.mxu0 %v2438
    %v2510 = vpop.f32.mrf.mxu0
    %v2511 = vadd.f32 0.0, %v2510
    %v2512 = vpop.f32.mrf.mxu0
    %2513 = vdwg.mxu0
    %v2514 = vmul.f32 %v2511, 0.35355338
    %v2515 = vadd.f32 %v2514, %v2166
    %v2516 = vsel %vm1051, %v2515, -inf
    %2517 = vmax.xlane.f32.xlu0 %v2516
    %v2518 = vpop.xlane.xlu0 %2517
    %v2519 = vsub.f32 %v2515, %v2518
    %v2520 = vmul.f32 %v2519, 1.442695
    %v2521 = vpow.pop %v2520
    %v2522 = vsel %vm1051, %v2521, 0.0
    %2523 = vadd.xlane.f32.xlu0 %v2522
    %v2524 = vpop.xlane.xlu0 %2523
    %v2525 = vrcp.pop %v2524
    %v2526 = vmul.f32 %v2521, %v2525
    %2527 = vrot.lane.b32.xlu0 %v2060, 80
    %v2528 = vpop.permute.xlu0 %2527
    %2529 = vrot.lane.b32.xlu0 %v2065, 80
    %v2530 = vpop.permute.xlu0 %2529
    %v2534 = vsel %vm1051, %v2526, 0
    %2536 = vmatprep.subr.mxu0 0.0
    %2537 = vmatpush1.msra.mxu0 0.0
    %2538 = vmatprep.subr.mxu0 0.0
    %2539 = vmatpush1.msra.mxu0 0.0
    %2540 = vmatprep.subr.mxu0 0.0
    %2541 = vmatpush1.msra.mxu0 0.0
    %2542 = vmatprep.subr.mxu0 0.0
    %2543 = vmatpush1.msra.mxu0 0.0
    %2544 = vmatprep.subr.mxu0 0.0
    %2545 = vmatpush1.msra.mxu0 0.0
    %2546 = vmatprep.subr.mxu0 0.0
    %2547 = vmatpush1.msra.mxu0 0.0
    %2548 = vmatprep.subr.mxu0 0.0
    %2549 = vmatpush1.msra.mxu0 0.0
    %2550 = vmatprep.subr.mxu0 0.0
    %2551 = vmatpush1.msra.mxu0 0.0
    %2552 = vmatprep.subr.mxu0 0.0
    %2553 = vmatpush1.msra.mxu0 0.0
    %2554 = vmatprep.subr.mxu0 0.0
    %2555 = vmatpush1.msra.mxu0 0.0
    %2556 = vmatprep.subr.mxu0 0.0
    %2557 = vmatpush1.msra.mxu0 0.0
    %2558 = vmatprep.subr.mxu0 0.0
    %2559 = vmatpush1.msra.mxu0 0.0
    %2560 = vmatprep.subr.mxu0 0.0
    %2561 = vmatpush1.msra.mxu0 0.0
    %2562 = vmatprep.subr.mxu0 0.0
    %2563 = vmatpush1.msra.mxu0 0.0
    %2564 = vmatprep.subr.mxu0 0.0
    %2565 = vmatpush1.msra.mxu0 %v2530
    %2566 = vmatprep.subr.mxu0 0.0
    %2567 = vmatpush1.msra.mxu0 %v2528
    %2568 = vmatprep.subr.mxu0 0.0
    %2569 = vmatpush2.msra.mxu0 0.0
    %2570 = vmatprep.subr.mxu0 0.0
    %2571 = vmatpush2.msra.mxu0 0.0
    %2572 = vmatprep.subr.mxu0 0.0
    %2573 = vmatpush2.msra.mxu0 0.0
    %2574 = vmatprep.subr.mxu0 0.0
    %2575 = vmatpush2.msra.mxu0 0.0
    %2576 = vmatprep.subr.mxu0 0.0
    %2577 = vmatpush2.msra.mxu0 0.0
    %2578 = vmatprep.subr.mxu0 0.0
    %2579 = vmatpush2.msra.mxu0 0.0
    %2580 = vmatprep.subr.mxu0 0.0
    %2581 = vmatpush2.msra.mxu0 0.0
    %2582 = vmatprep.subr.mxu0 0.0
    %2583 = vmatpush2.msra.mxu0 0.0
    %2584 = vmatprep.subr.mxu0 0.0
    %2585 = vmatpush2.msra.mxu0 0.0
    %2586 = vmatprep.subr.mxu0 0.0
    %2587 = vmatpush2.msra.mxu0 0.0
    %2588 = vmatprep.subr.mxu0 0.0
    %2589 = vmatpush2.msra.mxu0 0.0
    %2590 = vmatprep.subr.mxu0 0.0
    %2591 = vmatpush2.msra.mxu0 0.0
    %2592 = vmatprep.subr.mxu0 0.0
    %2593 = vmatpush2.msra.mxu0 0.0
    %2594 = vmatprep.subr.mxu0 0.0
    %2595 = vmatpush2.msra.mxu0 0.0
    %2596 = vmatprep.subr.mxu0 0.0
    %2597 = vmatpush2.msra.mxu0 0.0
    %2598 = vmatprep.subr.mxu0 0.0
    %2599 = vmatpush2.msra.mxu0 0.0
    %2600 = vmatprep.mubr.f32.mxu0 0.0
    %2601 = vmatmul.mubr.f32.gmra.mxu0 %v2534
    %v2602 = vpop.f32.mrf.mxu0
    %v2603 = vadd.f32 0.0, %v2602
    %v2604 = vpop.f32.mrf.mxu0
    %2605 = vdwg.mxu0
    %2606 = vrot.lane.b32.xlu0 %v1962, 104
    %v2607 = vpop.permute.xlu0 %2606
    %2608 = vrot.lane.b32.xlu0 %v2060, 104
    %v2609 = vpop.permute.xlu0 %2608
    %2610 = vrot.lane.b32.xlu0 %v2065, 104
    %v2611 = vpop.permute.xlu0 %2610
    %v2612 = vsel %vm373, %v2607, 0
    %v2614 = vsel %vm373, %v2609, 0
    %v2616 = vsel %vm373, %v2611, 0
    %2618 = vmatprep.subr.mxu0 0.0
    %2619 = vmatpush1.xpose.msra.mxu0 0.0
    %2620 = vmatprep.subr.mxu0 0.0
    %2621 = vmatpush1.xpose.msra.mxu0 0.0
    %2622 = vmatprep.subr.mxu0 0.0
    %2623 = vmatpush1.xpose.msra.mxu0 0.0
    %2624 = vmatprep.subr.mxu0 0.0
    %2625 = vmatpush1.xpose.msra.mxu0 0.0
    %2626 = vmatprep.subr.mxu0 0.0
    %2627 = vmatpush1.xpose.msra.mxu0 0.0
    %2628 = vmatprep.subr.mxu0 0.0
    %2629 = vmatpush1.xpose.msra.mxu0 0.0
    %2630 = vmatprep.subr.mxu0 0.0
    %2631 = vmatpush1.xpose.msra.mxu0 0.0
    %2632 = vmatprep.subr.mxu0 0.0
    %2633 = vmatpush1.xpose.msra.mxu0 0.0
    %2634 = vmatprep.subr.mxu0 0.0
    %2635 = vmatpush1.xpose.msra.mxu0 0.0
    %2636 = vmatprep.subr.mxu0 0.0
    %2637 = vmatpush1.xpose.msra.mxu0 0.0
    %2638 = vmatprep.subr.mxu0 0.0
    %2639 = vmatpush1.xpose.msra.mxu0 0.0
    %2640 = vmatprep.subr.mxu0 0.0
    %2641 = vmatpush1.xpose.msra.mxu0 0.0
    %2642 = vmatprep.subr.mxu0 0.0
    %2643 = vmatpush1.xpose.msra.mxu0 0.0
    %2644 = vmatprep.subr.mxu0 0.0
    %2645 = vmatpush1.xpose.msra.mxu0 0.0
    %2646 = vmatprep.subr.mxu0 0.0
    %2647 = vmatpush1.xpose.msra.mxu0 %v2616
    %2648 = vmatprep.subr.mxu0 0.0
    %2649 = vmatpush1.xpose.msra.mxu0 %v2614
    %2650 = vmatprep.subr.mxu0 0.0
    %2651 = vmatpush2.xpose.msra.mxu0 0.0
    %2652 = vmatprep.subr.mxu0 0.0
    %2653 = vmatpush2.xpose.msra.mxu0 0.0
    %2654 = vmatprep.subr.mxu0 0.0
    %2655 = vmatpush2.xpose.msra.mxu0 0.0
    %2656 = vmatprep.subr.mxu0 0.0
    %2657 = vmatpush2.xpose.msra.mxu0 0.0
    %2658 = vmatprep.subr.mxu0 0.0
    %2659 = vmatpush2.xpose.msra.mxu0 0.0
    %2660 = vmatprep.subr.mxu0 0.0
    %2661 = vmatpush2.xpose.msra.mxu0 0.0
    %2662 = vmatprep.subr.mxu0 0.0
    %2663 = vmatpush2.xpose.msra.mxu0 0.0
    %2664 = vmatprep.subr.mxu0 0.0
    %2665 = vmatpush2.xpose.msra.mxu0 0.0
    %2666 = vmatprep.subr.mxu0 0.0
    %2667 = vmatpush2.xpose.msra.mxu0 0.0
    %2668 = vmatprep.subr.mxu0 0.0
    %2669 = vmatpush2.xpose.msra.mxu0 0.0
    %2670 = vmatprep.subr.mxu0 0.0
    %2671 = vmatpush2.xpose.msra.mxu0 0.0
    %2672 = vmatprep.subr.mxu0 0.0
    %2673 = vmatpush2.xpose.msra.mxu0 0.0
    %2674 = vmatprep.subr.mxu0 0.0
    %2675 = vmatpush2.xpose.msra.mxu0 0.0
    %2676 = vmatprep.subr.mxu0 0.0
    %2677 = vmatpush2.xpose.msra.mxu0 0.0
    %2678 = vmatprep.subr.mxu0 0.0
    %2679 = vmatpush2.xpose.msra.mxu0 0.0
    %2680 = vmatprep.subr.mxu0 0.0
    %2681 = vmatpush2.xpose.msra.mxu0 0.0
    %2682 = vmatprep.mubr.f32.mxu0 0.0
    %2683 = vmatmul.mubr.f32.gmra.mxu0 %v2612
    %v2684 = vpop.f32.mrf.mxu0
    %v2685 = vadd.f32 0.0, %v2684
    %v2686 = vpop.f32.mrf.mxu0
    %2687 = vdwg.mxu0
    %v2688 = vmul.f32 %v2685, 0.35355338
    %v2689 = vadd.f32 %v2688, %v2166
    %v2690 = vsel %vm1051, %v2689, -inf
    %2691 = vmax.xlane.f32.xlu0 %v2690
    %v2692 = vpop.xlane.xlu0 %2691
    %v2693 = vsub.f32 %v2689, %v2692
    %v2694 = vmul.f32 %v2693, 1.442695
    %v2695 = vpow.pop %v2694
    %v2696 = vsel %vm1051, %v2695, 0.0
    %2697 = vadd.xlane.f32.xlu0 %v2696
    %v2698 = vpop.xlane.xlu0 %2697
    %v2699 = vrcp.pop %v2698
    %v2700 = vmul.f32 %v2695, %v2699
    %2701 = vrot.lane.b32.xlu0 %v2060, 72
    %v2702 = vpop.permute.xlu0 %2701
    %2703 = vrot.lane.b32.xlu0 %v2065, 72
    %v2704 = vpop.permute.xlu0 %2703
    %v2708 = vsel %vm1051, %v2700, 0
    %2710 = vmatprep.subr.mxu0 0.0
    %2711 = vmatpush1.msra.mxu0 0.0
    %2712 = vmatprep.subr.mxu0 0.0
    %2713 = vmatpush1.msra.mxu0 0.0
    %2714 = vmatprep.subr.mxu0 0.0
    %2715 = vmatpush1.msra.mxu0 0.0
    %2716 = vmatprep.subr.mxu0 0.0
    %2717 = vmatpush1.msra.mxu0 0.0
    %2718 = vmatprep.subr.mxu0 0.0
    %2719 = vmatpush1.msra.mxu0 0.0
    %2720 = vmatprep.subr.mxu0 0.0
    %2721 = vmatpush1.msra.mxu0 0.0
    %2722 = vmatprep.subr.mxu0 0.0
    %2723 = vmatpush1.msra.mxu0 0.0
    %2724 = vmatprep.subr.mxu0 0.0
    %2725 = vmatpush1.msra.mxu0 0.0
    %2726 = vmatprep.subr.mxu0 0.0
    %2727 = vmatpush1.msra.mxu0 0.0
    %2728 = vmatprep.subr.mxu0 0.0
    %2729 = vmatpush1.msra.mxu0 0.0
    %2730 = vmatprep.subr.mxu0 0.0
    %2731 = vmatpush1.msra.mxu0 0.0
    %2732 = vmatprep.subr.mxu0 0.0
    %2733 = vmatpush1.msra.mxu0 0.0
    %2734 = vmatprep.subr.mxu0 0.0
    %2735 = vmatpush1.msra.mxu0 0.0
    %2736 = vmatprep.subr.mxu0 0.0
    %2737 = vmatpush1.msra.mxu0 0.0
    %2738 = vmatprep.subr.mxu0 0.0
    %2739 = vmatpush1.msra.mxu0 %v2704
    %2740 = vmatprep.subr.mxu0 0.0
    %2741 = vmatpush1.msra.mxu0 %v2702
    %2742 = vmatprep.subr.mxu0 0.0
    %2743 = vmatpush2.msra.mxu0 0.0
    %2744 = vmatprep.subr.mxu0 0.0
    %2745 = vmatpush2.msra.mxu0 0.0
    %2746 = vmatprep.subr.mxu0 0.0
    %2747 = vmatpush2.msra.mxu0 0.0
    %2748 = vmatprep.subr.mxu0 0.0
    %2749 = vmatpush2.msra.mxu0 0.0
    %2750 = vmatprep.subr.mxu0 0.0
    %2751 = vmatpush2.msra.mxu0 0.0
    %2752 = vmatprep.subr.mxu0 0.0
    %2753 = vmatpush2.msra.mxu0 0.0
    %2754 = vmatprep.subr.mxu0 0.0
    %2755 = vmatpush2.msra.mxu0 0.0
    %2756 = vmatprep.subr.mxu0 0.0
    %2757 = vmatpush2.msra.mxu0 0.0
    %2758 = vmatprep.subr.mxu0 0.0
    %2759 = vmatpush2.msra.mxu0 0.0
    %2760 = vmatprep.subr.mxu0 0.0
    %2761 = vmatpush2.msra.mxu0 0.0
    %2762 = vmatprep.subr.mxu0 0.0
    %2763 = vmatpush2.msra.mxu0 0.0
    %2764 = vmatprep.subr.mxu0 0.0
    %2765 = vmatpush2.msra.mxu0 0.0
    %2766 = vmatprep.subr.mxu0 0.0
    %2767 = vmatpush2.msra.mxu0 0.0
    %2768 = vmatprep.subr.mxu0 0.0
    %2769 = vmatpush2.msra.mxu0 0.0
    %2770 = vmatprep.subr.mxu0 0.0
    %2771 = vmatpush2.msra.mxu0 0.0
    %2772 = vmatprep.subr.mxu0 0.0
    %2773 = vmatpush2.msra.mxu0 0.0
    %2774 = vmatprep.mubr.f32.mxu0 0.0
    %2775 = vmatmul.mubr.f32.gmra.mxu0 %v2708
    %v2776 = vpop.f32.mrf.mxu0
    %v2777 = vadd.f32 0.0, %v2776
    %v2778 = vpop.f32.mrf.mxu0
    %2779 = vdwg.mxu0
    %2781 = vrot.lane.b32.xlu0 %v2429, 8
    %v2782 = vpop.permute.xlu0 %2781
    %2785 = vrot.lane.b32.xlu0 %v2603, 16
    %v2786 = vpop.permute.xlu0 %2785
    %2789 = vrot.lane.b32.xlu0 %v2777, 24
    %v2790 = vpop.permute.xlu0 %2789
    %v2792 = vsel %vm373, %v2255, %v2782
    %v2793 = vsel %vm1051, %v2792, %v2786
    %v2794 = vsel %vm1053, %v2793, %v2790
    %v2796 = vsel %vm373, %v1967, 0
    %v2799 = vsel %vm373, %v2070, 0
    %v2802 = vsel %vm373, %v2075, 0
    %2804 = vmatprep.subr.mxu0 0.0
    %2805 = vmatpush1.xpose.msra.mxu0 0.0
    %2806 = vmatprep.subr.mxu0 0.0
    %2807 = vmatpush1.xpose.msra.mxu0 0.0
    %2808 = vmatprep.subr.mxu0 0.0
    %2809 = vmatpush1.xpose.msra.mxu0 0.0
    %2810 = vmatprep.subr.mxu0 0.0
    %2811 = vmatpush1.xpose.msra.mxu0 0.0
    %2812 = vmatprep.subr.mxu0 0.0
    %2813 = vmatpush1.xpose.msra.mxu0 0.0
    %2814 = vmatprep.subr.mxu0 0.0
    %2815 = vmatpush1.xpose.msra.mxu0 0.0
    %2816 = vmatprep.subr.mxu0 0.0
    %2817 = vmatpush1.xpose.msra.mxu0 0.0
    %2818 = vmatprep.subr.mxu0 0.0
    %2819 = vmatpush1.xpose.msra.mxu0 0.0
    %2820 = vmatprep.subr.mxu0 0.0
    %2821 = vmatpush1.xpose.msra.mxu0 0.0
    %2822 = vmatprep.subr.mxu0 0.0
    %2823 = vmatpush1.xpose.msra.mxu0 0.0
    %2824 = vmatprep.subr.mxu0 0.0
    %2825 = vmatpush1.xpose.msra.mxu0 0.0
    %2826 = vmatprep.subr.mxu0 0.0
    %2827 = vmatpush1.xpose.msra.mxu0 0.0
    %2828 = vmatprep.subr.mxu0 0.0
    %2829 = vmatpush1.xpose.msra.mxu0 0.0
    %2830 = vmatprep.subr.mxu0 0.0
    %2831 = vmatpush1.xpose.msra.mxu0 0.0
    %2832 = vmatprep.subr.mxu0 0.0
    %2833 = vmatpush1.xpose.msra.mxu0 %v2802
    %2834 = vmatprep.subr.mxu0 0.0
    %2835 = vmatpush1.xpose.msra.mxu0 %v2799
    %2836 = vmatprep.subr.mxu0 0.0
    %2837 = vmatpush2.xpose.msra.mxu0 0.0
    %2838 = vmatprep.subr.mxu0 0.0
    %2839 = vmatpush2.xpose.msra.mxu0 0.0
    %2840 = vmatprep.subr.mxu0 0.0
    %2841 = vmatpush2.xpose.msra.mxu0 0.0
    %2842 = vmatprep.subr.mxu0 0.0
    %2843 = vmatpush2.xpose.msra.mxu0 0.0
    %2844 = vmatprep.subr.mxu0 0.0
    %2845 = vmatpush2.xpose.msra.mxu0 0.0
    %2846 = vmatprep.subr.mxu0 0.0
    %2847 = vmatpush2.xpose.msra.mxu0 0.0
    %2848 = vmatprep.subr.mxu0 0.0
    %2849 = vmatpush2.xpose.msra.mxu0 0.0
    %2850 = vmatprep.subr.mxu0 0.0
    %2851 = vmatpush2.xpose.msra.mxu0 0.0
    %2852 = vmatprep.subr.mxu0 0.0
    %2853 = vmatpush2.xpose.msra.mxu0 0.0
    %2854 = vmatprep.subr.mxu0 0.0
    %2855 = vmatpush2.xpose.msra.mxu0 0.0
    %2856 = vmatprep.subr.mxu0 0.0
    %2857 = vmatpush2.xpose.msra.mxu0 0.0
    %2858 = vmatprep.subr.mxu0 0.0
    %2859 = vmatpush2.xpose.msra.mxu0 0.0
    %2860 = vmatprep.subr.mxu0 0.0
    %2861 = vmatpush2.xpose.msra.mxu0 0.0
    %2862 = vmatprep.subr.mxu0 0.0
    %2863 = vmatpush2.xpose.msra.mxu0 0.0
    %2864 = vmatprep.subr.mxu0 0.0
    %2865 = vmatpush2.xpose.msra.mxu0 0.0
    %2866 = vmatprep.subr.mxu0 0.0
    %2867 = vmatpush2.xpose.msra.mxu0 0.0
    %2868 = vmatprep.mubr.f32.mxu0 0.0
    %2869 = vmatmul.mubr.f32.gmra.mxu0 %v2796
    %v2870 = vpop.f32.mrf.mxu0
    %v2871 = vadd.f32 0.0, %v2870
    %v2872 = vpop.f32.mrf.mxu0
    %2873 = vdwg.mxu0
    %v2874 = vmul.f32 %v2871, 0.35355338
    %v2875 = vlaneseq
    %v2876 = vshrl.u32 %v2875, 7
    %v2877 = vsub.s32 1, %v2876
    %v2878 = vrot.slane %v216, %v2877
    %v2879 = vadd.f32 %v2874, %v2878
    %v2880 = vsel %vm1051, %v2879, -inf
    %2881 = vmax.xlane.f32.xlu0 %v2880
    %v2882 = vpop.xlane.xlu0 %2881
    %v2883 = vsub.f32 %v2879, %v2882
    %v2884 = vmul.f32 %v2883, 1.442695
    %v2885 = vpow.pop %v2884
    %v2886 = vsel %vm1051, %v2885, 0.0
    %2887 = vadd.xlane.f32.xlu0 %v2886
    %v2888 = vpop.xlane.xlu0 %2887
    %v2889 = vrcp.pop %v2888
    %v2890 = vmul.f32 %v2885, %v2889
    %2891 = vrot.lane.b32.xlu0 %v2070, 96
    %v2892 = vpop.permute.xlu0 %2891
    %2893 = vrot.lane.b32.xlu0 %v2075, 96
    %v2894 = vpop.permute.xlu0 %2893
    %v2898 = vsel %vm1051, %v2890, 0
    %2900 = vmatprep.subr.mxu0 0.0
    %2901 = vmatpush1.msra.mxu0 0.0
    %2902 = vmatprep.subr.mxu0 0.0
    %2903 = vmatpush1.msra.mxu0 0.0
    %2904 = vmatprep.subr.mxu0 0.0
    %2905 = vmatpush1.msra.mxu0 0.0
    %2906 = vmatprep.subr.mxu0 0.0
    %2907 = vmatpush1.msra.mxu0 0.0
    %2908 = vmatprep.subr.mxu0 0.0
    %2909 = vmatpush1.msra.mxu0 0.0
    %2910 = vmatprep.subr.mxu0 0.0
    %2911 = vmatpush1.msra.mxu0 0.0
    %2912 = vmatprep.subr.mxu0 0.0
    %2913 = vmatpush1.msra.mxu0 0.0
    %2914 = vmatprep.subr.mxu0 0.0
    %2915 = vmatpush1.msra.mxu0 0.0
    %2916 = vmatprep.subr.mxu0 0.0
    %2917 = vmatpush1.msra.mxu0 0.0
    %2918 = vmatprep.subr.mxu0 0.0
    %2919 = vmatpush1.msra.mxu0 0.0
    %2920 = vmatprep.subr.mxu0 0.0
    %2921 = vmatpush1.msra.mxu0 0.0
    %2922 = vmatprep.subr.mxu0 0.0
    %2923 = vmatpush1.msra.mxu0 0.0
    %2924 = vmatprep.subr.mxu0 0.0
    %2925 = vmatpush1.msra.mxu0 0.0
    %2926 = vmatprep.subr.mxu0 0.0
    %2927 = vmatpush1.msra.mxu0 0.0
    %2928 = vmatprep.subr.mxu0 0.0
    %2929 = vmatpush1.msra.mxu0 %v2894
    %2930 = vmatprep.subr.mxu0 0.0
    %2931 = vmatpush1.msra.mxu0 %v2892
    %2932 = vmatprep.subr.mxu0 0.0
    %2933 = vmatpush2.msra.mxu0 0.0
    %2934 = vmatprep.subr.mxu0 0.0
    %2935 = vmatpush2.msra.mxu0 0.0
    %2936 = vmatprep.subr.mxu0 0.0
    %2937 = vmatpush2.msra.mxu0 0.0
    %2938 = vmatprep.subr.mxu0 0.0
    %2939 = vmatpush2.msra.mxu0 0.0
    %2940 = vmatprep.subr.mxu0 0.0
    %2941 = vmatpush2.msra.mxu0 0.0
    %2942 = vmatprep.subr.mxu0 0.0
    %2943 = vmatpush2.msra.mxu0 0.0
    %2944 = vmatprep.subr.mxu0 0.0
    %2945 = vmatpush2.msra.mxu0 0.0
    %2946 = vmatprep.subr.mxu0 0.0
    %2947 = vmatpush2.msra.mxu0 0.0
    %2948 = vmatprep.subr.mxu0 0.0
    %2949 = vmatpush2.msra.mxu0 0.0
    %2950 = vmatprep.subr.mxu0 0.0
    %2951 = vmatpush2.msra.mxu0 0.0
    %2952 = vmatprep.subr.mxu0 0.0
    %2953 = vmatpush2.msra.mxu0 0.0
    %2954 = vmatprep.subr.mxu0 0.0
    %2955 = vmatpush2.msra.mxu0 0.0
    %2956 = vmatprep.subr.mxu0 0.0
    %2957 = vmatpush2.msra.mxu0 0.0
    %2958 = vmatprep.subr.mxu0 0.0
    %2959 = vmatpush2.msra.mxu0 0.0
    %2960 = vmatprep.subr.mxu0 0.0
    %2961 = vmatpush2.msra.mxu0 0.0
    %2962 = vmatprep.subr.mxu0 0.0
    %2963 = vmatpush2.msra.mxu0 0.0
    %2964 = vmatprep.mubr.f32.mxu0 0.0
    %2965 = vmatmul.mubr.f32.gmra.mxu0 %v2898
    %v2966 = vpop.f32.mrf.mxu0
    %v2967 = vadd.f32 0.0, %v2966
    %v2968 = vpop.f32.mrf.mxu0
    %2969 = vdwg.mxu0
    %2970 = vrot.lane.b32.xlu0 %v1967, 120
    %v2971 = vpop.permute.xlu0 %2970
    %2972 = vrot.lane.b32.xlu0 %v2070, 120
    %v2973 = vpop.permute.xlu0 %2972
    %2974 = vrot.lane.b32.xlu0 %v2075, 120
    %v2975 = vpop.permute.xlu0 %2974
    %v2976 = vsel %vm373, %v2971, 0
    %v2978 = vsel %vm373, %v2973, 0
    %v2980 = vsel %vm373, %v2975, 0
    %2982 = vmatprep.subr.mxu0 0.0
    %2983 = vmatpush1.xpose.msra.mxu0 0.0
    %2984 = vmatprep.subr.mxu0 0.0
    %2985 = vmatpush1.xpose.msra.mxu0 0.0
    %2986 = vmatprep.subr.mxu0 0.0
    %2987 = vmatpush1.xpose.msra.mxu0 0.0
    %2988 = vmatprep.subr.mxu0 0.0
    %2989 = vmatpush1.xpose.msra.mxu0 0.0
    %2990 = vmatprep.subr.mxu0 0.0
    %2991 = vmatpush1.xpose.msra.mxu0 0.0
    %2992 = vmatprep.subr.mxu0 0.0
    %2993 = vmatpush1.xpose.msra.mxu0 0.0
    %2994 = vmatprep.subr.mxu0 0.0
    %2995 = vmatpush1.xpose.msra.mxu0 0.0
    %2996 = vmatprep.subr.mxu0 0.0
    %2997 = vmatpush1.xpose.msra.mxu0 0.0
    %2998 = vmatprep.subr.mxu0 0.0
    %2999 = vmatpush1.xpose.msra.mxu0 0.0
    %3000 = vmatprep.subr.mxu0 0.0
    %3001 = vmatpush1.xpose.msra.mxu0 0.0
    %3002 = vmatprep.subr.mxu0 0.0
    %3003 = vmatpush1.xpose.msra.mxu0 0.0
    %3004 = vmatprep.subr.mxu0 0.0
    %3005 = vmatpush1.xpose.msra.mxu0 0.0
    %3006 = vmatprep.subr.mxu0 0.0
    %3007 = vmatpush1.xpose.msra.mxu0 0.0
    %3008 = vmatprep.subr.mxu0 0.0
    %3009 = vmatpush1.xpose.msra.mxu0 0.0
    %3010 = vmatprep.subr.mxu0 0.0
    %3011 = vmatpush1.xpose.msra.mxu0 %v2980
    %3012 = vmatprep.subr.mxu0 0.0
    %3013 = vmatpush1.xpose.msra.mxu0 %v2978
    %3014 = vmatprep.subr.mxu0 0.0
    %3015 = vmatpush2.xpose.msra.mxu0 0.0
    %3016 = vmatprep.subr.mxu0 0.0
    %3017 = vmatpush2.xpose.msra.mxu0 0.0
    %3018 = vmatprep.subr.mxu0 0.0
    %3019 = vmatpush2.xpose.msra.mxu0 0.0
    %3020 = vmatprep.subr.mxu0 0.0
    %3021 = vmatpush2.xpose.msra.mxu0 0.0
    %3022 = vmatprep.subr.mxu0 0.0
    %3023 = vmatpush2.xpose.msra.mxu0 0.0
    %3024 = vmatprep.subr.mxu0 0.0
    %3025 = vmatpush2.xpose.msra.mxu0 0.0
    %3026 = vmatprep.subr.mxu0 0.0
    %3027 = vmatpush2.xpose.msra.mxu0 0.0
    %3028 = vmatprep.subr.mxu0 0.0
    %3029 = vmatpush2.xpose.msra.mxu0 0.0
    %3030 = vmatprep.subr.mxu0 0.0
    %3031 = vmatpush2.xpose.msra.mxu0 0.0
    %3032 = vmatprep.subr.mxu0 0.0
    %3033 = vmatpush2.xpose.msra.mxu0 0.0
    %3034 = vmatprep.subr.mxu0 0.0
    %3035 = vmatpush2.xpose.msra.mxu0 0.0
    %3036 = vmatprep.subr.mxu0 0.0
    %3037 = vmatpush2.xpose.msra.mxu0 0.0
    %3038 = vmatprep.subr.mxu0 0.0
    %3039 = vmatpush2.xpose.msra.mxu0 0.0
    %3040 = vmatprep.subr.mxu0 0.0
    %3041 = vmatpush2.xpose.msra.mxu0 0.0
    %3042 = vmatprep.subr.mxu0 0.0
    %3043 = vmatpush2.xpose.msra.mxu0 0.0
    %3044 = vmatprep.subr.mxu0 0.0
    %3045 = vmatpush2.xpose.msra.mxu0 0.0
    %3046 = vmatprep.mubr.f32.mxu0 0.0
    %3047 = vmatmul.mubr.f32.gmra.mxu0 %v2976
    %v3048 = vpop.f32.mrf.mxu0
    %v3049 = vadd.f32 0.0, %v3048
    %v3050 = vpop.f32.mrf.mxu0
    %3051 = vdwg.mxu0
    %v3052 = vmul.f32 %v3049, 0.35355338
    %v3053 = vadd.f32 %v3052, %v2878
    %v3054 = vsel %vm1051, %v3053, -inf
    %3055 = vmax.xlane.f32.xlu0 %v3054
    %v3056 = vpop.xlane.xlu0 %3055
    %v3057 = vsub.f32 %v3053, %v3056
    %v3058 = vmul.f32 %v3057, 1.442695
    %v3059 = vpow.pop %v3058
    %v3060 = vsel %vm1051, %v3059, 0.0
    %3061 = vadd.xlane.f32.xlu0 %v3060
    %v3062 = vpop.xlane.xlu0 %3061
    %v3063 = vrcp.pop %v3062
    %v3064 = vmul.f32 %v3059, %v3063
    %3065 = vrot.lane.b32.xlu0 %v2070, 88
    %v3066 = vpop.permute.xlu0 %3065
    %3067 = vrot.lane.b32.xlu0 %v2075, 88
    %v3068 = vpop.permute.xlu0 %3067
    %v3072 = vsel %vm1051, %v3064, 0
    %3074 = vmatprep.subr.mxu0 0.0
    %3075 = vmatpush1.msra.mxu0 0.0
    %3076 = vmatprep.subr.mxu0 0.0
    %3077 = vmatpush1.msra.mxu0 0.0
    %3078 = vmatprep.subr.mxu0 0.0
    %3079 = vmatpush1.msra.mxu0 0.0
    %3080 = vmatprep.subr.mxu0 0.0
    %3081 = vmatpush1.msra.mxu0 0.0
    %3082 = vmatprep.subr.mxu0 0.0
    %3083 = vmatpush1.msra.mxu0 0.0
    %3084 = vmatprep.subr.mxu0 0.0
    %3085 = vmatpush1.msra.mxu0 0.0
    %3086 = vmatprep.subr.mxu0 0.0
    %3087 = vmatpush1.msra.mxu0 0.0
    %3088 = vmatprep.subr.mxu0 0.0
    %3089 = vmatpush1.msra.mxu0 0.0
    %3090 = vmatprep.subr.mxu0 0.0
    %3091 = vmatpush1.msra.mxu0 0.0
    %3092 = vmatprep.subr.mxu0 0.0
    %3093 = vmatpush1.msra.mxu0 0.0
    %3094 = vmatprep.subr.mxu0 0.0
    %3095 = vmatpush1.msra.mxu0 0.0
    %3096 = vmatprep.subr.mxu0 0.0
    %3097 = vmatpush1.msra.mxu0 0.0
    %3098 = vmatprep.subr.mxu0 0.0
    %3099 = vmatpush1.msra.mxu0 0.0
    %3100 = vmatprep.subr.mxu0 0.0
    %3101 = vmatpush1.msra.mxu0 0.0
    %3102 = vmatprep.subr.mxu0 0.0
    %3103 = vmatpush1.msra.mxu0 %v3068
    %3104 = vmatprep.subr.mxu0 0.0
    %3105 = vmatpush1.msra.mxu0 %v3066
    %3106 = vmatprep.subr.mxu0 0.0
    %3107 = vmatpush2.msra.mxu0 0.0
    %3108 = vmatprep.subr.mxu0 0.0
    %3109 = vmatpush2.msra.mxu0 0.0
    %3110 = vmatprep.subr.mxu0 0.0
    %3111 = vmatpush2.msra.mxu0 0.0
    %3112 = vmatprep.subr.mxu0 0.0
    %3113 = vmatpush2.msra.mxu0 0.0
    %3114 = vmatprep.subr.mxu0 0.0
    %3115 = vmatpush2.msra.mxu0 0.0
    %3116 = vmatprep.subr.mxu0 0.0
    %3117 = vmatpush2.msra.mxu0 0.0
    %3118 = vmatprep.subr.mxu0 0.0
    %3119 = vmatpush2.msra.mxu0 0.0
    %3120 = vmatprep.subr.mxu0 0.0
    %3121 = vmatpush2.msra.mxu0 0.0
    %3122 = vmatprep.subr.mxu0 0.0
    %3123 = vmatpush2.msra.mxu0 0.0
    %3124 = vmatprep.subr.mxu0 0.0
    %3125 = vmatpush2.msra.mxu0 0.0
    %3126 = vmatprep.subr.mxu0 0.0
    %3127 = vmatpush2.msra.mxu0 0.0
    %3128 = vmatprep.subr.mxu0 0.0
    %3129 = vmatpush2.msra.mxu0 0.0
    %3130 = vmatprep.subr.mxu0 0.0
    %3131 = vmatpush2.msra.mxu0 0.0
    %3132 = vmatprep.subr.mxu0 0.0
    %3133 = vmatpush2.msra.mxu0 0.0
    %3134 = vmatprep.subr.mxu0 0.0
    %3135 = vmatpush2.msra.mxu0 0.0
    %3136 = vmatprep.subr.mxu0 0.0
    %3137 = vmatpush2.msra.mxu0 0.0
    %3138 = vmatprep.mubr.f32.mxu0 0.0
    %3139 = vmatmul.mubr.f32.gmra.mxu0 %v3072
    %v3140 = vpop.f32.mrf.mxu0
    %v3141 = vadd.f32 0.0, %v3140
    %v3142 = vpop.f32.mrf.mxu0
    %3143 = vdwg.mxu0
    %3144 = vrot.lane.b32.xlu0 %v1967, 112
    %v3145 = vpop.permute.xlu0 %3144
    %3146 = vrot.lane.b32.xlu0 %v2070, 112
    %v3147 = vpop.permute.xlu0 %3146
    %3148 = vrot.lane.b32.xlu0 %v2075, 112
    %v3149 = vpop.permute.xlu0 %3148
    %v3150 = vsel %vm373, %v3145, 0
    %v3152 = vsel %vm373, %v3147, 0
    %v3154 = vsel %vm373, %v3149, 0
    %3156 = vmatprep.subr.mxu0 0.0
    %3157 = vmatpush1.xpose.msra.mxu0 0.0
    %3158 = vmatprep.subr.mxu0 0.0
    %3159 = vmatpush1.xpose.msra.mxu0 0.0
    %3160 = vmatprep.subr.mxu0 0.0
    %3161 = vmatpush1.xpose.msra.mxu0 0.0
    %3162 = vmatprep.subr.mxu0 0.0
    %3163 = vmatpush1.xpose.msra.mxu0 0.0
    %3164 = vmatprep.subr.mxu0 0.0
    %3165 = vmatpush1.xpose.msra.mxu0 0.0
    %3166 = vmatprep.subr.mxu0 0.0
    %3167 = vmatpush1.xpose.msra.mxu0 0.0
    %3168 = vmatprep.subr.mxu0 0.0
    %3169 = vmatpush1.xpose.msra.mxu0 0.0
    %3170 = vmatprep.subr.mxu0 0.0
    %3171 = vmatpush1.xpose.msra.mxu0 0.0
    %3172 = vmatprep.subr.mxu0 0.0
    %3173 = vmatpush1.xpose.msra.mxu0 0.0
    %3174 = vmatprep.subr.mxu0 0.0
    %3175 = vmatpush1.xpose.msra.mxu0 0.0
    %3176 = vmatprep.subr.mxu0 0.0
    %3177 = vmatpush1.xpose.msra.mxu0 0.0
    %3178 = vmatprep.subr.mxu0 0.0
    %3179 = vmatpush1.xpose.msra.mxu0 0.0
    %3180 = vmatprep.subr.mxu0 0.0
    %3181 = vmatpush1.xpose.msra.mxu0 0.0
    %3182 = vmatprep.subr.mxu0 0.0
    %3183 = vmatpush1.xpose.msra.mxu0 0.0
    %3184 = vmatprep.subr.mxu0 0.0
    %3185 = vmatpush1.xpose.msra.mxu0 %v3154
    %3186 = vmatprep.subr.mxu0 0.0
    %3187 = vmatpush1.xpose.msra.mxu0 %v3152
    %3188 = vmatprep.subr.mxu0 0.0
    %3189 = vmatpush2.xpose.msra.mxu0 0.0
    %3190 = vmatprep.subr.mxu0 0.0
    %3191 = vmatpush2.xpose.msra.mxu0 0.0
    %3192 = vmatprep.subr.mxu0 0.0
    %3193 = vmatpush2.xpose.msra.mxu0 0.0
    %3194 = vmatprep.subr.mxu0 0.0
    %3195 = vmatpush2.xpose.msra.mxu0 0.0
    %3196 = vmatprep.subr.mxu0 0.0
    %3197 = vmatpush2.xpose.msra.mxu0 0.0
    %3198 = vmatprep.subr.mxu0 0.0
    %3199 = vmatpush2.xpose.msra.mxu0 0.0
    %3200 = vmatprep.subr.mxu0 0.0
    %3201 = vmatpush2.xpose.msra.mxu0 0.0
    %3202 = vmatprep.subr.mxu0 0.0
    %3203 = vmatpush2.xpose.msra.mxu0 0.0
    %3204 = vmatprep.subr.mxu0 0.0
    %3205 = vmatpush2.xpose.msra.mxu0 0.0
    %3206 = vmatprep.subr.mxu0 0.0
    %3207 = vmatpush2.xpose.msra.mxu0 0.0
    %3208 = vmatprep.subr.mxu0 0.0
    %3209 = vmatpush2.xpose.msra.mxu0 0.0
    %3210 = vmatprep.subr.mxu0 0.0
    %3211 = vmatpush2.xpose.msra.mxu0 0.0
    %3212 = vmatprep.subr.mxu0 0.0
    %3213 = vmatpush2.xpose.msra.mxu0 0.0
    %3214 = vmatprep.subr.mxu0 0.0
    %3215 = vmatpush2.xpose.msra.mxu0 0.0
    %3216 = vmatprep.subr.mxu0 0.0
    %3217 = vmatpush2.xpose.msra.mxu0 0.0
    %3218 = vmatprep.subr.mxu0 0.0
    %3219 = vmatpush2.xpose.msra.mxu0 0.0
    %3220 = vmatprep.mubr.f32.mxu0 0.0
    %3221 = vmatmul.mubr.f32.gmra.mxu0 %v3150
    %v3222 = vpop.f32.mrf.mxu0
    %v3223 = vadd.f32 0.0, %v3222
    %v3224 = vpop.f32.mrf.mxu0
    %3225 = vdwg.mxu0
    %v3226 = vmul.f32 %v3223, 0.35355338
    %v3227 = vadd.f32 %v3226, %v2878
    %v3228 = vsel %vm1051, %v3227, -inf
    %3229 = vmax.xlane.f32.xlu0 %v3228
    %v3230 = vpop.xlane.xlu0 %3229
    %v3231 = vsub.f32 %v3227, %v3230
    %v3232 = vmul.f32 %v3231, 1.442695
    %v3233 = vpow.pop %v3232
    %v3234 = vsel %vm1051, %v3233, 0.0
    %3235 = vadd.xlane.f32.xlu0 %v3234
    %v3236 = vpop.xlane.xlu0 %3235
    %v3237 = vrcp.pop %v3236
    %v3238 = vmul.f32 %v3233, %v3237
    %3239 = vrot.lane.b32.xlu0 %v2070, 80
    %v3240 = vpop.permute.xlu0 %3239
    %3241 = vrot.lane.b32.xlu0 %v2075, 80
    %v3242 = vpop.permute.xlu0 %3241
    %v3246 = vsel %vm1051, %v3238, 0
    %3248 = vmatprep.subr.mxu0 0.0
    %3249 = vmatpush1.msra.mxu0 0.0
    %3250 = vmatprep.subr.mxu0 0.0
    %3251 = vmatpush1.msra.mxu0 0.0
    %3252 = vmatprep.subr.mxu0 0.0
    %3253 = vmatpush1.msra.mxu0 0.0
    %3254 = vmatprep.subr.mxu0 0.0
    %3255 = vmatpush1.msra.mxu0 0.0
    %3256 = vmatprep.subr.mxu0 0.0
    %3257 = vmatpush1.msra.mxu0 0.0
    %3258 = vmatprep.subr.mxu0 0.0
    %3259 = vmatpush1.msra.mxu0 0.0
    %3260 = vmatprep.subr.mxu0 0.0
    %3261 = vmatpush1.msra.mxu0 0.0
    %3262 = vmatprep.subr.mxu0 0.0
    %3263 = vmatpush1.msra.mxu0 0.0
    %3264 = vmatprep.subr.mxu0 0.0
    %3265 = vmatpush1.msra.mxu0 0.0
    %3266 = vmatprep.subr.mxu0 0.0
    %3267 = vmatpush1.msra.mxu0 0.0
    %3268 = vmatprep.subr.mxu0 0.0
    %3269 = vmatpush1.msra.mxu0 0.0
    %3270 = vmatprep.subr.mxu0 0.0
    %3271 = vmatpush1.msra.mxu0 0.0
    %3272 = vmatprep.subr.mxu0 0.0
    %3273 = vmatpush1.msra.mxu0 0.0
    %3274 = vmatprep.subr.mxu0 0.0
    %3275 = vmatpush1.msra.mxu0 0.0
    %3276 = vmatprep.subr.mxu0 0.0
    %3277 = vmatpush1.msra.mxu0 %v3242
    %3278 = vmatprep.subr.mxu0 0.0
    %3279 = vmatpush1.msra.mxu0 %v3240
    %3280 = vmatprep.subr.mxu0 0.0
    %3281 = vmatpush2.msra.mxu0 0.0
    %3282 = vmatprep.subr.mxu0 0.0
    %3283 = vmatpush2.msra.mxu0 0.0
    %3284 = vmatprep.subr.mxu0 0.0
    %3285 = vmatpush2.msra.mxu0 0.0
    %3286 = vmatprep.subr.mxu0 0.0
    %3287 = vmatpush2.msra.mxu0 0.0
    %3288 = vmatprep.subr.mxu0 0.0
    %3289 = vmatpush2.msra.mxu0 0.0
    %3290 = vmatprep.subr.mxu0 0.0
    %3291 = vmatpush2.msra.mxu0 0.0
    %3292 = vmatprep.subr.mxu0 0.0
    %3293 = vmatpush2.msra.mxu0 0.0
    %3294 = vmatprep.subr.mxu0 0.0
    %3295 = vmatpush2.msra.mxu0 0.0
    %3296 = vmatprep.subr.mxu0 0.0
    %3297 = vmatpush2.msra.mxu0 0.0
    %3298 = vmatprep.subr.mxu0 0.0
    %3299 = vmatpush2.msra.mxu0 0.0
    %3300 = vmatprep.subr.mxu0 0.0
    %3301 = vmatpush2.msra.mxu0 0.0
    %3302 = vmatprep.subr.mxu0 0.0
    %3303 = vmatpush2.msra.mxu0 0.0
    %3304 = vmatprep.subr.mxu0 0.0
    %3305 = vmatpush2.msra.mxu0 0.0
    %3306 = vmatprep.subr.mxu0 0.0
    %3307 = vmatpush2.msra.mxu0 0.0
    %3308 = vmatprep.subr.mxu0 0.0
    %3309 = vmatpush2.msra.mxu0 0.0
    %3310 = vmatprep.subr.mxu0 0.0
    %3311 = vmatpush2.msra.mxu0 0.0
    %3312 = vmatprep.mubr.f32.mxu0 0.0
    %3313 = vmatmul.mubr.f32.gmra.mxu0 %v3246
    %v3314 = vpop.f32.mrf.mxu0
    %v3315 = vadd.f32 0.0, %v3314
    %v3316 = vpop.f32.mrf.mxu0
    %3317 = vdwg.mxu0
    %3318 = vrot.lane.b32.xlu0 %v1967, 104
    %v3319 = vpop.permute.xlu0 %3318
    %3320 = vrot.lane.b32.xlu0 %v2070, 104
    %v3321 = vpop.permute.xlu0 %3320
    %3322 = vrot.lane.b32.xlu0 %v2075, 104
    %v3323 = vpop.permute.xlu0 %3322
    %v3324 = vsel %vm373, %v3319, 0
    %v3326 = vsel %vm373, %v3321, 0
    %v3328 = vsel %vm373, %v3323, 0
    %3330 = vmatprep.subr.mxu0 0.0
    %3331 = vmatpush1.xpose.msra.mxu0 0.0
    %3332 = vmatprep.subr.mxu0 0.0
    %3333 = vmatpush1.xpose.msra.mxu0 0.0
    %3334 = vmatprep.subr.mxu0 0.0
    %3335 = vmatpush1.xpose.msra.mxu0 0.0
    %3336 = vmatprep.subr.mxu0 0.0
    %3337 = vmatpush1.xpose.msra.mxu0 0.0
    %3338 = vmatprep.subr.mxu0 0.0
    %3339 = vmatpush1.xpose.msra.mxu0 0.0
    %3340 = vmatprep.subr.mxu0 0.0
    %3341 = vmatpush1.xpose.msra.mxu0 0.0
    %3342 = vmatprep.subr.mxu0 0.0
    %3343 = vmatpush1.xpose.msra.mxu0 0.0
    %3344 = vmatprep.subr.mxu0 0.0
    %3345 = vmatpush1.xpose.msra.mxu0 0.0
    %3346 = vmatprep.subr.mxu0 0.0
    %3347 = vmatpush1.xpose.msra.mxu0 0.0
    %3348 = vmatprep.subr.mxu0 0.0
    %3349 = vmatpush1.xpose.msra.mxu0 0.0
    %3350 = vmatprep.subr.mxu0 0.0
    %3351 = vmatpush1.xpose.msra.mxu0 0.0
    %3352 = vmatprep.subr.mxu0 0.0
    %3353 = vmatpush1.xpose.msra.mxu0 0.0
    %3354 = vmatprep.subr.mxu0 0.0
    %3355 = vmatpush1.xpose.msra.mxu0 0.0
    %3356 = vmatprep.subr.mxu0 0.0
    %3357 = vmatpush1.xpose.msra.mxu0 0.0
    %3358 = vmatprep.subr.mxu0 0.0
    %3359 = vmatpush1.xpose.msra.mxu0 %v3328
    %3360 = vmatprep.subr.mxu0 0.0
    %3361 = vmatpush1.xpose.msra.mxu0 %v3326
    %3362 = vmatprep.subr.mxu0 0.0
    %3363 = vmatpush2.xpose.msra.mxu0 0.0
    %3364 = vmatprep.subr.mxu0 0.0
    %3365 = vmatpush2.xpose.msra.mxu0 0.0
    %3366 = vmatprep.subr.mxu0 0.0
    %3367 = vmatpush2.xpose.msra.mxu0 0.0
    %3368 = vmatprep.subr.mxu0 0.0
    %3369 = vmatpush2.xpose.msra.mxu0 0.0
    %3370 = vmatprep.subr.mxu0 0.0
    %3371 = vmatpush2.xpose.msra.mxu0 0.0
    %3372 = vmatprep.subr.mxu0 0.0
    %3373 = vmatpush2.xpose.msra.mxu0 0.0
    %3374 = vmatprep.subr.mxu0 0.0
    %3375 = vmatpush2.xpose.msra.mxu0 0.0
    %3376 = vmatprep.subr.mxu0 0.0
    %3377 = vmatpush2.xpose.msra.mxu0 0.0
    %3378 = vmatprep.subr.mxu0 0.0
    %3379 = vmatpush2.xpose.msra.mxu0 0.0
    %3380 = vmatprep.subr.mxu0 0.0
    %3381 = vmatpush2.xpose.msra.mxu0 0.0
    %3382 = vmatprep.subr.mxu0 0.0
    %3383 = vmatpush2.xpose.msra.mxu0 0.0
    %3384 = vmatprep.subr.mxu0 0.0
    %3385 = vmatpush2.xpose.msra.mxu0 0.0
    %3386 = vmatprep.subr.mxu0 0.0
    %3387 = vmatpush2.xpose.msra.mxu0 0.0
    %3388 = vmatprep.subr.mxu0 0.0
    %3389 = vmatpush2.xpose.msra.mxu0 0.0
    %3390 = vmatprep.subr.mxu0 0.0
    %3391 = vmatpush2.xpose.msra.mxu0 0.0
    %3392 = vmatprep.subr.mxu0 0.0
    %3393 = vmatpush2.xpose.msra.mxu0 0.0
    %3394 = vmatprep.mubr.f32.mxu0 0.0
    %3395 = vmatmul.mubr.f32.gmra.mxu0 %v3324
    %v3396 = vpop.f32.mrf.mxu0
    %v3397 = vadd.f32 0.0, %v3396
    %v3398 = vpop.f32.mrf.mxu0
    %3399 = vdwg.mxu0
    %v3400 = vmul.f32 %v3397, 0.35355338
    %v3401 = vadd.f32 %v3400, %v2878
    %v3402 = vsel %vm1051, %v3401, -inf
    %3403 = vmax.xlane.f32.xlu0 %v3402
    %v3404 = vpop.xlane.xlu0 %3403
    %v3405 = vsub.f32 %v3401, %v3404
    %v3406 = vmul.f32 %v3405, 1.442695
    %v3407 = vpow.pop %v3406
    %v3408 = vsel %vm1051, %v3407, 0.0
    %3409 = vadd.xlane.f32.xlu0 %v3408
    %v3410 = vpop.xlane.xlu0 %3409
    %v3411 = vrcp.pop %v3410
    %v3412 = vmul.f32 %v3407, %v3411
    %3413 = vrot.lane.b32.xlu0 %v2070, 72
    %v3414 = vpop.permute.xlu0 %3413
    %3415 = vrot.lane.b32.xlu0 %v2075, 72
    %v3416 = vpop.permute.xlu0 %3415
    %v3420 = vsel %vm1051, %v3412, 0
    %3422 = vmatprep.subr.mxu0 0.0
    %3423 = vmatpush1.msra.mxu0 0.0
    %3424 = vmatprep.subr.mxu0 0.0
    %3425 = vmatpush1.msra.mxu0 0.0
    %3426 = vmatprep.subr.mxu0 0.0
    %3427 = vmatpush1.msra.mxu0 0.0
    %3428 = vmatprep.subr.mxu0 0.0
    %3429 = vmatpush1.msra.mxu0 0.0
    %3430 = vmatprep.subr.mxu0 0.0
    %3431 = vmatpush1.msra.mxu0 0.0
    %3432 = vmatprep.subr.mxu0 0.0
    %3433 = vmatpush1.msra.mxu0 0.0
    %3434 = vmatprep.subr.mxu0 0.0
    %3435 = vmatpush1.msra.mxu0 0.0
    %3436 = vmatprep.subr.mxu0 0.0
    %3437 = vmatpush1.msra.mxu0 0.0
    %3438 = vmatprep.subr.mxu0 0.0
    %3439 = vmatpush1.msra.mxu0 0.0
    %3440 = vmatprep.subr.mxu0 0.0
    %3441 = vmatpush1.msra.mxu0 0.0
    %3442 = vmatprep.subr.mxu0 0.0
    %3443 = vmatpush1.msra.mxu0 0.0
    %3444 = vmatprep.subr.mxu0 0.0
    %3445 = vmatpush1.msra.mxu0 0.0
    %3446 = vmatprep.subr.mxu0 0.0
    %3447 = vmatpush1.msra.mxu0 0.0
    %3448 = vmatprep.subr.mxu0 0.0
    %3449 = vmatpush1.msra.mxu0 0.0
    %3450 = vmatprep.subr.mxu0 0.0
    %3451 = vmatpush1.msra.mxu0 %v3416
    %3452 = vmatprep.subr.mxu0 0.0
    %3453 = vmatpush1.msra.mxu0 %v3414
    %3454 = vmatprep.subr.mxu0 0.0
    %3455 = vmatpush2.msra.mxu0 0.0
    %3456 = vmatprep.subr.mxu0 0.0
    %3457 = vmatpush2.msra.mxu0 0.0
    %3458 = vmatprep.subr.mxu0 0.0
    %3459 = vmatpush2.msra.mxu0 0.0
    %3460 = vmatprep.subr.mxu0 0.0
    %3461 = vmatpush2.msra.mxu0 0.0
    %3462 = vmatprep.subr.mxu0 0.0
    %3463 = vmatpush2.msra.mxu0 0.0
    %3464 = vmatprep.subr.mxu0 0.0
    %3465 = vmatpush2.msra.mxu0 0.0
    %3466 = vmatprep.subr.mxu0 0.0
    %3467 = vmatpush2.msra.mxu0 0.0
    %3468 = vmatprep.subr.mxu0 0.0
    %3469 = vmatpush2.msra.mxu0 0.0
    %3470 = vmatprep.subr.mxu0 0.0
    %3471 = vmatpush2.msra.mxu0 0.0
    %3472 = vmatprep.subr.mxu0 0.0
    %3473 = vmatpush2.msra.mxu0 0.0
    %3474 = vmatprep.subr.mxu0 0.0
    %3475 = vmatpush2.msra.mxu0 0.0
    %3476 = vmatprep.subr.mxu0 0.0
    %3477 = vmatpush2.msra.mxu0 0.0
    %3478 = vmatprep.subr.mxu0 0.0
    %3479 = vmatpush2.msra.mxu0 0.0
    %3480 = vmatprep.subr.mxu0 0.0
    %3481 = vmatpush2.msra.mxu0 0.0
    %3482 = vmatprep.subr.mxu0 0.0
    %3483 = vmatpush2.msra.mxu0 0.0
    %3484 = vmatprep.subr.mxu0 0.0
    %3485 = vmatpush2.msra.mxu0 0.0
    %3486 = vmatprep.mubr.f32.mxu0 0.0
    %3487 = vmatmul.mubr.f32.gmra.mxu0 %v3420
    %v3488 = vpop.f32.mrf.mxu0
    %v3489 = vadd.f32 0.0, %v3488
    %v3490 = vpop.f32.mrf.mxu0
    %3491 = vdwg.mxu0
    %3493 = vrot.lane.b32.xlu0 %v3141, 8
    %v3494 = vpop.permute.xlu0 %3493
    %3497 = vrot.lane.b32.xlu0 %v3315, 16
    %v3498 = vpop.permute.xlu0 %3497
    %3501 = vrot.lane.b32.xlu0 %v3489, 24
    %v3502 = vpop.permute.xlu0 %3501
    %v3504 = vsel %vm373, %v2967, %v3494
    %v3505 = vsel %vm1051, %v3504, %v3498
    %v3506 = vsel %vm1053, %v3505, %v3502
    %v3508 = vlaneseq
    %v3509 = vshrl.u32 %v3508, 7
    %v3510 = vsub.s32 0, %v3509
    %v3511 = vrot.slane %v2082, %v3510
    %v3514 = vsel %vm219, %v2794, 0
    %v3517 = vsel %vm219, %v3506, 0
    %3519 = vmatprep.subr.mxu0 0.0
    %3520 = vmatpush1.msra.mxu0 0.0
    %3521 = vmatprep.subr.mxu0 0.0
    %3522 = vmatpush1.msra.mxu0 0.0
    %3523 = vmatprep.subr.mxu0 0.0
    %3524 = vmatpush1.msra.mxu0 0.0
    %3525 = vmatprep.subr.mxu0 0.0
    %3526 = vmatpush1.msra.mxu0 0.0
    %3527 = vmatprep.subr.mxu0 0.0
    %3528 = vmatpush1.msra.mxu0 0.0
    %3529 = vmatprep.subr.mxu0 0.0
    %3530 = vmatpush1.msra.mxu0 0.0
    %3531 = vmatprep.subr.mxu0 0.0
    %3532 = vmatpush1.msra.mxu0 0.0
    %3533 = vmatprep.subr.mxu0 0.0
    %3534 = vmatpush1.msra.mxu0 0.0
    %3535 = vmatprep.subr.mxu0 0.0
    %3536 = vmatpush1.msra.mxu0 0.0
    %3537 = vmatprep.subr.mxu0 0.0
    %3538 = vmatpush1.msra.mxu0 0.0
    %3539 = vmatprep.subr.mxu0 0.0
    %3540 = vmatpush1.msra.mxu0 0.0
    %3541 = vmatprep.subr.mxu0 0.0
    %3542 = vmatpush1.msra.mxu0 0.0
    %3543 = vmatprep.subr.mxu0 0.0
    %3544 = vmatpush1.msra.mxu0 %v2081
    %3545 = vmatprep.subr.mxu0 0.0
    %3546 = vmatpush1.msra.mxu0 %v2080
    %3547 = vmatprep.subr.mxu0 0.0
    %3548 = vmatpush1.msra.mxu0 %v2079
    %3549 = vmatprep.subr.mxu0 0.0
    %3550 = vmatpush1.msra.mxu0 %v2078
    %3551 = vmatprep.subr.mxu0 0.0
    %3552 = vmatpush2.msra.mxu0 0.0
    %3553 = vmatprep.subr.mxu0 0.0
    %3554 = vmatpush2.msra.mxu0 0.0
    %3555 = vmatprep.subr.mxu0 0.0
    %3556 = vmatpush2.msra.mxu0 0.0
    %3557 = vmatprep.subr.mxu0 0.0
    %3558 = vmatpush2.msra.mxu0 0.0
    %3559 = vmatprep.subr.mxu0 0.0
    %3560 = vmatpush2.msra.mxu0 0.0
    %3561 = vmatprep.subr.mxu0 0.0
    %3562 = vmatpush2.msra.mxu0 0.0
    %3563 = vmatprep.subr.mxu0 0.0
    %3564 = vmatpush2.msra.mxu0 0.0
    %3565 = vmatprep.subr.mxu0 0.0
    %3566 = vmatpush2.msra.mxu0 0.0
    %3567 = vmatprep.subr.mxu0 0.0
    %3568 = vmatpush2.msra.mxu0 0.0
    %3569 = vmatprep.subr.mxu0 0.0
    %3570 = vmatpush2.msra.mxu0 0.0
    %3571 = vmatprep.subr.mxu0 0.0
    %3572 = vmatpush2.msra.mxu0 0.0
    %3573 = vmatprep.subr.mxu0 0.0
    %3574 = vmatpush2.msra.mxu0 0.0
    %3575 = vmatprep.subr.mxu0 0.0
    %3576 = vmatpush2.msra.mxu0 0.0
    %3577 = vmatprep.subr.mxu0 0.0
    %3578 = vmatpush2.msra.mxu0 0.0
    %3579 = vmatprep.subr.mxu0 0.0
    %3580 = vmatpush2.msra.mxu0 0.0
    %3581 = vmatprep.subr.mxu0 0.0
    %3582 = vmatpush2.msra.mxu0 0.0
    %3583 = vmatprep.mubr.f32.mxu0 0.0
    %3584 = vmatmul.mubr.f32.gmra.mxu0 %v3514
    %v3585 = vpop.f32.mrf.mxu0
    %v3586 = vadd.f32 %v3511, %v3585
    %v3587 = vpop.f32.mrf.mxu0
    %3588 = vmatprep.mubr.f32.mxu0 0.0
    %3589 = vmatmul.mubr.f32.gmra.mxu0 %v3517
    %v3590 = vpop.f32.mrf.mxu0
    %v3591 = vadd.f32 %v3511, %v3590
    %v3592 = vpop.f32.mrf.mxu0
    %3593 = vdwg.mxu0
    %v3594 = vadd.f32 %v1824, %v3586
    %v3595 = vadd.f32 %v1825, %v3591
    %v3596 = vsel %vm219, %v3594, 0.0
    %3597 = vadd.xlane.f32.xlu0 %v3596
    %v3598 = vpop.xlane.xlu0 %3597
    %v3599 = vsel %vm219, %v3595, 0.0
    %3600 = vadd.xlane.f32.xlu0 %v3599
    %v3601 = vpop.xlane.xlu0 %3600
    %v3602 = vmul.f32 %v3598, %v226
    %v3603 = vmul.f32 %v3601, %v226
    %v3604 = vsub.f32 %v3594, %v3602
    %v3605 = vsub.f32 %v3595, %v3603
    %v3606 = vmul.f32 %v3604, %v3604
    %v3607 = vmul.f32 %v3605, %v3605
    %v3608 = vsel %vm219, %v3606, 0.0
    %3609 = vadd.xlane.f32.xlu0 %v3608
    %v3610 = vpop.xlane.xlu0 %3609
    %v3611 = vsel %vm219, %v3607, 0.0
    %3612 = vadd.xlane.f32.xlu0 %v3611
    %v3613 = vpop.xlane.xlu0 %3612
    %v3614 = vmul.f32 %v3610, 0.032258064
    %v3615 = vmul.f32 %v3613, 0.032258064
    %v3616 = vrsqrt.pop %v3614
    %v3617 = vmul.f32 %v3614, %v3616
    %vm3618 = vcmp.eq.f32.partialorder %v3614, inf
    %v3619 = vsel %vm3618, %v3614, %v3617
    %vm3620 = vcmp.eq.f32.partialorder %v3614, 0.0
    %v3621 = vand.u32 %v3614, 2147483648
    %v3622 = vsel %vm3620, %v3621, %v3619
    %v3623 = vrsqrt.pop %v3615
    %v3624 = vmul.f32 %v3615, %v3623
    %vm3625 = vcmp.eq.f32.partialorder %v3615, inf
    %v3626 = vsel %vm3625, %v3615, %v3624
    %vm3627 = vcmp.eq.f32.partialorder %v3615, 0.0
    %v3628 = vand.u32 %v3615, 2147483648
    %v3629 = vsel %vm3627, %v3628, %v3626
    %v3630 = vadd.f32 %v3622, 1e-06
    %v3631 = vadd.f32 %v3629, 1e-06
    %v3632 = vrcp.pop %v3630
    %v3633 = vrcp.pop %v3631
    %v3634 = vmul.f32 %v3604, %v3632
    %v3635 = vmul.f32 %v3605, %v3633
    %v3636 = vlaneseq
    %v3637 = vshrl.u32 %v3636, 7
    %v3638 = vsub.s32 2, %v3637
    %v3639 = vrot.slane %v217, %v3638
    %v3640 = vmul.f32 %v3639, %v3634
    %v3641 = vmul.f32 %v3639, %v3635
    %v3642 = vlaneseq
    %v3643 = vshrl.u32 %v3642, 7
    %v3644 = vsub.s32 2, %v3643
    %v3645 = vrot.slane %v218, %v3644
    %v3646 = vadd.f32 %v3640, %v3645
    %v3647 = vadd.f32 %v3641, %v3645
    %v3648 = vld [vmem:[#allocation14] sm:$0xff]
    %v3649 = vld [vmem:[#allocation14 + $0x8] sm:$0xff]
    %v3650 = vld [vmem:[#allocation14 + $0x10] sm:$0xff]
    %v3651 = vld [vmem:[#allocation14 + $0x18] sm:$0xff]
    %v3652 = vld [vmem:[#allocation16] sm:$0x1]
    %v3654 = vlaneseq
    %v3655 = vshrl.u32 %v3654, 7
    %v3656 = vsub.s32 0, %v3655
    %v3657 = vrot.slane %v3652, %v3656
    %v3660 = vsel %vm219, %v3646, 0
    %v3663 = vsel %vm219, %v3647, 0
    %3665 = vmatprep.subr.mxu0 0.0
    %3666 = vmatpush1.msra.mxu0 0.0
    %3667 = vmatprep.subr.mxu0 0.0
    %3668 = vmatpush1.msra.mxu0 0.0
    %3669 = vmatprep.subr.mxu0 0.0
    %3670 = vmatpush1.msra.mxu0 0.0
    %3671 = vmatprep.subr.mxu0 0.0
    %3672 = vmatpush1.msra.mxu0 0.0
    %3673 = vmatprep.subr.mxu0 0.0
    %3674 = vmatpush1.msra.mxu0 0.0
    %3675 = vmatprep.subr.mxu0 0.0
    %3676 = vmatpush1.msra.mxu0 0.0
    %3677 = vmatprep.subr.mxu0 0.0
    %3678 = vmatpush1.msra.mxu0 0.0
    %3679 = vmatprep.subr.mxu0 0.0
    %3680 = vmatpush1.msra.mxu0 0.0
    %3681 = vmatprep.subr.mxu0 0.0
    %3682 = vmatpush1.msra.mxu0 0.0
    %3683 = vmatprep.subr.mxu0 0.0
    %3684 = vmatpush1.msra.mxu0 0.0
    %3685 = vmatprep.subr.mxu0 0.0
    %3686 = vmatpush1.msra.mxu0 0.0
    %3687 = vmatprep.subr.mxu0 0.0
    %3688 = vmatpush1.msra.mxu0 0.0
    %3689 = vmatprep.subr.mxu0 0.0
    %3690 = vmatpush1.msra.mxu0 %v3651
    %3691 = vmatprep.subr.mxu0 0.0
    %3692 = vmatpush1.msra.mxu0 %v3650
    %3693 = vmatprep.subr.mxu0 0.0
    %3694 = vmatpush1.msra.mxu0 %v3649
    %3695 = vmatprep.subr.mxu0 0.0
    %3696 = vmatpush1.msra.mxu0 %v3648
    %3697 = vmatprep.subr.mxu0 0.0
    %3698 = vmatpush2.msra.mxu0 0.0
    %3699 = vmatprep.subr.mxu0 0.0
    %3700 = vmatpush2.msra.mxu0 0.0
    %3701 = vmatprep.subr.mxu0 0.0
    %3702 = vmatpush2.msra.mxu0 0.0
    %3703 = vmatprep.subr.mxu0 0.0
    %3704 = vmatpush2.msra.mxu0 0.0
    %3705 = vmatprep.subr.mxu0 0.0
    %3706 = vmatpush2.msra.mxu0 0.0
    %3707 = vmatprep.subr.mxu0 0.0
    %3708 = vmatpush2.msra.mxu0 0.0
    %3709 = vmatprep.subr.mxu0 0.0
    %3710 = vmatpush2.msra.mxu0 0.0
    %3711 = vmatprep.subr.mxu0 0.0
    %3712 = vmatpush2.msra.mxu0 0.0
    %3713 = vmatprep.subr.mxu0 0.0
    %3714 = vmatpush2.msra.mxu0 0.0
    %3715 = vmatprep.subr.mxu0 0.0
    %3716 = vmatpush2.msra.mxu0 0.0
    %3717 = vmatprep.subr.mxu0 0.0
    %3718 = vmatpush2.msra.mxu0 0.0
    %3719 = vmatprep.subr.mxu0 0.0
    %3720 = vmatpush2.msra.mxu0 0.0
    %3721 = vmatprep.subr.mxu0 0.0
    %3722 = vmatpush2.msra.mxu0 0.0
    %3723 = vmatprep.subr.mxu0 0.0
    %3724 = vmatpush2.msra.mxu0 0.0
    %3725 = vmatprep.subr.mxu0 0.0
    %3726 = vmatpush2.msra.mxu0 0.0
    %3727 = vmatprep.subr.mxu0 0.0
    %3728 = vmatpush2.msra.mxu0 0.0
    %3729 = vmatprep.mubr.f32.mxu0 0.0
    %3730 = vmatmul.mubr.f32.gmra.mxu0 %v3660
    %v3731 = vpop.f32.mrf.mxu0
    %v3732 = vadd.f32 %v3657, %v3731
    %v3733 = vpop.f32.mrf.mxu0
    %3734 = vmatprep.mubr.f32.mxu0 0.0
    %3735 = vmatmul.mubr.f32.gmra.mxu0 %v3663
    %v3736 = vpop.f32.mrf.mxu0
    %v3737 = vadd.f32 %v3657, %v3736
    %v3738 = vpop.f32.mrf.mxu0
    %3739 = vdwg.mxu0
    %v3740 = vmax.f32 %v3732, 0.0
    %v3741 = vmax.f32 %v3737, 0.0
    %v3742 = vld [vmem:[%s18] sm:$0xff]
    %v3743 = vld [vmem:[%s18 + $0x8] sm:$0xff]
    %v3744 = vld [vmem:[%s18 + $0x10] sm:$0xff]
    %v3745 = vld [vmem:[%s18 + $0x18] sm:$0xff]
    %v3746 = vld [vmem:[%s18 + $0x20] sm:$0xff]
    %v3747 = vld [vmem:[%s18 + $0x28] sm:$0xff]
    %v3748 = vld [vmem:[%s18 + $0x30] sm:$0xff]
    %v3749 = vld [vmem:[%s18 + $0x38] sm:$0xff]
    %vm3750 = vcmask 523264
    %v3752 = vsel %vm3750, %v3740, 0
    %v3755 = vsel %vm3750, %v3741, 0
    %3757 = vmatprep.subr.mxu0 0.0
    %3758 = vmatpush1.msra.mxu0 0.0
    %3759 = vmatprep.subr.mxu0 0.0
    %3760 = vmatpush1.msra.mxu0 0.0
    %3761 = vmatprep.subr.mxu0 0.0
    %3762 = vmatpush1.msra.mxu0 0.0
    %3763 = vmatprep.subr.mxu0 0.0
    %3764 = vmatpush1.msra.mxu0 0.0
    %3765 = vmatprep.subr.mxu0 0.0
    %3766 = vmatpush1.msra.mxu0 0.0
    %3767 = vmatprep.subr.mxu0 0.0
    %3768 = vmatpush1.msra.mxu0 0.0
    %3769 = vmatprep.subr.mxu0 0.0
    %3770 = vmatpush1.msra.mxu0 0.0
    %3771 = vmatprep.subr.mxu0 0.0
    %3772 = vmatpush1.msra.mxu0 0.0
    %3773 = vmatprep.subr.mxu0 0.0
    %3774 = vmatpush1.msra.mxu0 %v3749
    %3775 = vmatprep.subr.mxu0 0.0
    %3776 = vmatpush1.msra.mxu0 %v3748
    %3777 = vmatprep.subr.mxu0 0.0
    %3778 = vmatpush1.msra.mxu0 %v3747
    %3779 = vmatprep.subr.mxu0 0.0
    %3780 = vmatpush1.msra.mxu0 %v3746
    %3781 = vmatprep.subr.mxu0 0.0
    %3782 = vmatpush1.msra.mxu0 %v3745
    %3783 = vmatprep.subr.mxu0 0.0
    %3784 = vmatpush1.msra.mxu0 %v3744
    %3785 = vmatprep.subr.mxu0 0.0
    %3786 = vmatpush1.msra.mxu0 %v3743
    %3787 = vmatprep.subr.mxu0 0.0
    %3788 = vmatpush1.msra.mxu0 %v3742
    %3789 = vmatprep.subr.mxu0 0.0
    %3790 = vmatpush2.msra.mxu0 0.0
    %3791 = vmatprep.subr.mxu0 0.0
    %3792 = vmatpush2.msra.mxu0 0.0
    %3793 = vmatprep.subr.mxu0 0.0
    %3794 = vmatpush2.msra.mxu0 0.0
    %3795 = vmatprep.subr.mxu0 0.0
    %3796 = vmatpush2.msra.mxu0 0.0
    %3797 = vmatprep.subr.mxu0 0.0
    %3798 = vmatpush2.msra.mxu0 0.0
    %3799 = vmatprep.subr.mxu0 0.0
    %3800 = vmatpush2.msra.mxu0 0.0
    %3801 = vmatprep.subr.mxu0 0.0
    %3802 = vmatpush2.msra.mxu0 0.0
    %3803 = vmatprep.subr.mxu0 0.0
    %3804 = vmatpush2.msra.mxu0 0.0
    %3805 = vmatprep.subr.mxu0 0.0
    %3806 = vmatpush2.msra.mxu0 0.0
    %3807 = vmatprep.subr.mxu0 0.0
    %3808 = vmatpush2.msra.mxu0 0.0
    %3809 = vmatprep.subr.mxu0 0.0
    %3810 = vmatpush2.msra.mxu0 0.0
    %3811 = vmatprep.subr.mxu0 0.0
    %3812 = vmatpush2.msra.mxu0 0.0
    %3813 = vmatprep.subr.mxu0 0.0
    %3814 = vmatpush2.msra.mxu0 0.0
    %3815 = vmatprep.subr.mxu0 0.0
    %3816 = vmatpush2.msra.mxu0 0.0
    %3817 = vmatprep.subr.mxu0 0.0
    %3818 = vmatpush2.msra.mxu0 0.0
    %3819 = vmatprep.subr.mxu0 0.0
    %3820 = vmatpush2.msra.mxu0 0.0
    %3821 = vmatprep.mubr.f32.mxu0 0.0
    %3822 = vmatmul.mubr.f32.gmra.mxu0 %v3752
    %v3823 = vpop.f32.mrf.mxu0
    %v3824 = vadd.f32 0.0, %v3823
    %v3825 = vpop.f32.mrf.mxu0
    %3826 = vmatprep.mubr.f32.mxu0 0.0
    %3827 = vmatmul.mubr.f32.gmra.mxu0 %v3755
    %v3828 = vpop.f32.mrf.mxu0
    %v3829 = vadd.f32 0.0, %v3828
    %v3830 = vpop.f32.mrf.mxu0
    %3831 = vdwg.mxu0
    %v3832 = vadd.f32 %v3594, %v3824
    %v3833 = vadd.f32 %v3595, %v3829
    %v3834 = vld [vmem:[#allocation17] sm:$0x1]
    %v3836 = vlaneseq
    %v3837 = vshrl.u32 %v3836, 7
    %v3838 = vsub.s32 0, %v3837
    %v3839 = vrot.slane %v3834, %v3838
    %v3841 = vadd.f32 %v3832, %v3839
    %v3842 = vadd.f32 %v3833, %v3839
    %s3843 = scalar_lea.vmem %s4, 4
    %v3844 = vld [vmem:[%s3843] sm:$0x7]
    %s3845 = scalar_lea.vmem %s5, 4
    %v3846 = vld [vmem:[%s3845] sm:$0x7]
    %v3847 = vsel %vm219, %v3841, 0.0
    %3848 = vadd.xlane.f32.xlu0 %v3847
    %v3849 = vpop.xlane.xlu0 %3848
    %v3850 = vsel %vm219, %v3842, 0.0
    %3851 = vadd.xlane.f32.xlu0 %v3850
    %v3852 = vpop.xlane.xlu0 %3851
    %v3853 = vmul.f32 %v3849, %v226
    %v3854 = vmul.f32 %v3852, %v226
    %v3855 = vsub.f32 %v3841, %v3853
    %v3856 = vsub.f32 %v3842, %v3854
    %v3857 = vmul.f32 %v3855, %v3855
    %v3858 = vmul.f32 %v3856, %v3856
    %v3859 = vsel %vm219, %v3857, 0.0
    %3860 = vadd.xlane.f32.xlu0 %v3859
    %v3861 = vpop.xlane.xlu0 %3860
    %v3862 = vsel %vm219, %v3858, 0.0
    %3863 = vadd.xlane.f32.xlu0 %v3862
    %v3864 = vpop.xlane.xlu0 %3863
    %v3865 = vmul.f32 %v3861, 0.032258064
    %v3866 = vmul.f32 %v3864, 0.032258064
    %v3867 = vrsqrt.pop %v3865
    %v3868 = vmul.f32 %v3865, %v3867
    %vm3869 = vcmp.eq.f32.partialorder %v3865, inf
    %v3870 = vsel %vm3869, %v3865, %v3868
    %vm3871 = vcmp.eq.f32.partialorder %v3865, 0.0
    %v3872 = vand.u32 %v3865, 2147483648
    %v3873 = vsel %vm3871, %v3872, %v3870
    %v3874 = vrsqrt.pop %v3866
    %v3875 = vmul.f32 %v3866, %v3874
    %vm3876 = vcmp.eq.f32.partialorder %v3866, inf
    %v3877 = vsel %vm3876, %v3866, %v3875
    %vm3878 = vcmp.eq.f32.partialorder %v3866, 0.0
    %v3879 = vand.u32 %v3866, 2147483648
    %v3880 = vsel %vm3878, %v3879, %v3877
    %v3881 = vadd.f32 %v3873, 1e-06
    %v3882 = vadd.f32 %v3880, 1e-06
    %v3883 = vrcp.pop %v3881
    %v3884 = vrcp.pop %v3882
    %v3885 = vmul.f32 %v3855, %v3883
    %v3886 = vmul.f32 %v3856, %v3884
    %v3887 = vlaneseq
    %v3888 = vshrl.u32 %v3887, 7
    %v3889 = vsub.s32 0, %v3888
    %v3890 = vrot.slane %v3844, %v3889
    %v3891 = vmul.f32 %v3890, %v3885
    %v3892 = vmul.f32 %v3890, %v3886
    %v3893 = vlaneseq
    %v3894 = vshrl.u32 %v3893, 7
    %v3895 = vsub.s32 0, %v3894
    %v3896 = vrot.slane %v3846, %v3895
    %v3897 = vadd.f32 %v3891, %v3896
    %v3898 = vadd.f32 %v3892, %v3896
    %s3899 = scalar_lea.vmem %s6, 32
    %v3900 = vld [vmem:[%s3899] sm:$0xff]
    %v3901 = vld [vmem:[%s3899 + $0x8] sm:$0xff]
    %v3902 = vld [vmem:[%s3899 + $0x10] sm:$0xff]
    %v3903 = vld [vmem:[%s3899 + $0x18] sm:$0xff]
    %s3904 = scalar_lea.vmem %s7, 1
    %v3905 = vld [vmem:[%s3904] sm:$0x1]
    %v3907 = vlaneseq
    %v3908 = vshrl.u32 %v3907, 7
    %v3909 = vsub.s32 0, %v3908
    %v3910 = vrot.slane %v3905, %v3909
    %v3913 = vsel %vm219, %v3897, 0
    %v3916 = vsel %vm219, %v3898, 0
    %3918 = vmatprep.subr.mxu0 0.0
    %3919 = vmatpush1.msra.mxu0 0.0
    %3920 = vmatprep.subr.mxu0 0.0
    %3921 = vmatpush1.msra.mxu0 0.0
    %3922 = vmatprep.subr.mxu0 0.0
    %3923 = vmatpush1.msra.mxu0 0.0
    %3924 = vmatprep.subr.mxu0 0.0
    %3925 = vmatpush1.msra.mxu0 0.0
    %3926 = vmatprep.subr.mxu0 0.0
    %3927 = vmatpush1.msra.mxu0 0.0
    %3928 = vmatprep.subr.mxu0 0.0
    %3929 = vmatpush1.msra.mxu0 0.0
    %3930 = vmatprep.subr.mxu0 0.0
    %3931 = vmatpush1.msra.mxu0 0.0
    %3932 = vmatprep.subr.mxu0 0.0
    %3933 = vmatpush1.msra.mxu0 0.0
    %3934 = vmatprep.subr.mxu0 0.0
    %3935 = vmatpush1.msra.mxu0 0.0
    %3936 = vmatprep.subr.mxu0 0.0
    %3937 = vmatpush1.msra.mxu0 0.0
    %3938 = vmatprep.subr.mxu0 0.0
    %3939 = vmatpush1.msra.mxu0 0.0
    %3940 = vmatprep.subr.mxu0 0.0
    %3941 = vmatpush1.msra.mxu0 0.0
    %3942 = vmatprep.subr.mxu0 0.0
    %3943 = vmatpush1.msra.mxu0 %v3903
    %3944 = vmatprep.subr.mxu0 0.0
    %3945 = vmatpush1.msra.mxu0 %v3902
    %3946 = vmatprep.subr.mxu0 0.0
    %3947 = vmatpush1.msra.mxu0 %v3901
    %3948 = vmatprep.subr.mxu0 0.0
    %3949 = vmatpush1.msra.mxu0 %v3900
    %3950 = vmatprep.subr.mxu0 0.0
    %3951 = vmatpush2.msra.mxu0 0.0
    %3952 = vmatprep.subr.mxu0 0.0
    %3953 = vmatpush2.msra.mxu0 0.0
    %3954 = vmatprep.subr.mxu0 0.0
    %3955 = vmatpush2.msra.mxu0 0.0
    %3956 = vmatprep.subr.mxu0 0.0
    %3957 = vmatpush2.msra.mxu0 0.0
    %3958 = vmatprep.subr.mxu0 0.0
    %3959 = vmatpush2.msra.mxu0 0.0
    %3960 = vmatprep.subr.mxu0 0.0
    %3961 = vmatpush2.msra.mxu0 0.0
    %3962 = vmatprep.subr.mxu0 0.0
    %3963 = vmatpush2.msra.mxu0 0.0
    %3964 = vmatprep.subr.mxu0 0.0
    %3965 = vmatpush2.msra.mxu0 0.0
    %3966 = vmatprep.subr.mxu0 0.0
    %3967 = vmatpush2.msra.mxu0 0.0
    %3968 = vmatprep.subr.mxu0 0.0
    %3969 = vmatpush2.msra.mxu0 0.0
    %3970 = vmatprep.subr.mxu0 0.0
    %3971 = vmatpush2.msra.mxu0 0.0
    %3972 = vmatprep.subr.mxu0 0.0
    %3973 = vmatpush2.msra.mxu0 0.0
    %3974 = vmatprep.subr.mxu0 0.0
    %3975 = vmatpush2.msra.mxu0 0.0
    %3976 = vmatprep.subr.mxu0 0.0
    %3977 = vmatpush2.msra.mxu0 0.0
    %3978 = vmatprep.subr.mxu0 0.0
    %3979 = vmatpush2.msra.mxu0 0.0
    %3980 = vmatprep.subr.mxu0 0.0
    %3981 = vmatpush2.msra.mxu0 0.0
    %3982 = vmatprep.mubr.f32.mxu0 0.0
    %3983 = vmatmul.mubr.f32.gmra.mxu0 %v3913
    %v3984 = vpop.f32.mrf.mxu0
    %v3985 = vadd.f32 %v3910, %v3984
    %v3986 = vpop.f32.mrf.mxu0
    %3987 = vmatprep.mubr.f32.mxu0 0.0
    %3988 = vmatmul.mubr.f32.gmra.mxu0 %v3916
    %v3989 = vpop.f32.mrf.mxu0
    %v3990 = vadd.f32 %v3910, %v3989
    %v3991 = vpop.f32.mrf.mxu0
    %3992 = vdwg.mxu0
    %s3993 = scalar_lea.vmem %s8, 32
    %v3994 = vld [vmem:[%s3993] sm:$0xff]
    %v3995 = vld [vmem:[%s3993 + $0x8] sm:$0xff]
    %v3996 = vld [vmem:[%s3993 + $0x10] sm:$0xff]
    %v3997 = vld [vmem:[%s3993 + $0x18] sm:$0xff]
    %s3998 = scalar_lea.vmem [#allocation5], 1
    %v3999 = vld [vmem:[%s3998] sm:$0x1]
    %4001 = vrot.lane.b32.xlu0 %v3985, 96
    %v4002 = vpop.permute.xlu0 %4001
    %v4003 = vsel %vm373, %v3985, 0
    %v4005 = vsel %vm373, %v4002, 0
    %4007 = vmatprep.subr.mxu0 0.0
    %4008 = vmatpush1.xpose.msra.mxu0 0.0
    %4009 = vmatprep.subr.mxu0 0.0
    %4010 = vmatpush1.xpose.msra.mxu0 0.0
    %4011 = vmatprep.subr.mxu0 0.0
    %4012 = vmatpush1.xpose.msra.mxu0 0.0
    %4013 = vmatprep.subr.mxu0 0.0
    %4014 = vmatpush1.xpose.msra.mxu0 0.0
    %4015 = vmatprep.subr.mxu0 0.0
    %4016 = vmatpush1.xpose.msra.mxu0 0.0
    %4017 = vmatprep.subr.mxu0 0.0
    %4018 = vmatpush1.xpose.msra.mxu0 0.0
    %4019 = vmatprep.subr.mxu0 0.0
    %4020 = vmatpush1.xpose.msra.mxu0 0.0
    %4021 = vmatprep.subr.mxu0 0.0
    %4022 = vmatpush1.xpose.msra.mxu0 0.0
    %4023 = vmatprep.subr.mxu0 0.0
    %4024 = vmatpush1.xpose.msra.mxu0 0.0
    %4025 = vmatprep.subr.mxu0 0.0
    %4026 = vmatpush1.xpose.msra.mxu0 0.0
    %4027 = vmatprep.subr.mxu0 0.0
    %4028 = vmatpush1.xpose.msra.mxu0 0.0
    %4029 = vmatprep.subr.mxu0 0.0
    %4030 = vmatpush1.xpose.msra.mxu0 0.0
    %4031 = vmatprep.subr.mxu0 0.0
    %4032 = vmatpush1.xpose.msra.mxu0 0.0
    %4033 = vmatprep.subr.mxu0 0.0
    %4034 = vmatpush1.xpose.msra.mxu0 0.0
    %4035 = vmatprep.subr.mxu0 0.0
    %4036 = vmatpush1.xpose.msra.mxu0 0.0
    %4037 = vmatprep.subr.mxu0 0.0
    %4038 = vmatpush1.xpose.msra.mxu0 %v4005
    %4039 = vmatprep.subr.mxu0 0.0
    %4040 = vmatpush2.xpose.msra.mxu0 0.0
    %4041 = vmatprep.subr.mxu0 0.0
    %4042 = vmatpush2.xpose.msra.mxu0 0.0
    %4043 = vmatprep.subr.mxu0 0.0
    %4044 = vmatpush2.xpose.msra.mxu0 0.0
    %4045 = vmatprep.subr.mxu0 0.0
    %4046 = vmatpush2.xpose.msra.mxu0 0.0
    %4047 = vmatprep.subr.mxu0 0.0
    %4048 = vmatpush2.xpose.msra.mxu0 0.0
    %4049 = vmatprep.subr.mxu0 0.0
    %4050 = vmatpush2.xpose.msra.mxu0 0.0
    %4051 = vmatprep.subr.mxu0 0.0
    %4052 = vmatpush2.xpose.msra.mxu0 0.0
    %4053 = vmatprep.subr.mxu0 0.0
    %4054 = vmatpush2.xpose.msra.mxu0 0.0
    %4055 = vmatprep.subr.mxu0 0.0
    %4056 = vmatpush2.xpose.msra.mxu0 0.0
    %4057 = vmatprep.subr.mxu0 0.0
    %4058 = vmatpush2.xpose.msra.mxu0 0.0
    %4059 = vmatprep.subr.mxu0 0.0
    %4060 = vmatpush2.xpose.msra.mxu0 0.0
    %4061 = vmatprep.subr.mxu0 0.0
    %4062 = vmatpush2.xpose.msra.mxu0 0.0
    %4063 = vmatprep.subr.mxu0 0.0
    %4064 = vmatpush2.xpose.msra.mxu0 0.0
    %4065 = vmatprep.subr.mxu0 0.0
    %4066 = vmatpush2.xpose.msra.mxu0 0.0
    %4067 = vmatprep.subr.mxu0 0.0
    %4068 = vmatpush2.xpose.msra.mxu0 0.0
    %4069 = vmatprep.subr.mxu0 0.0
    %4070 = vmatpush2.xpose.msra.mxu0 0.0
    %4071 = vmatprep.mubr.f32.mxu0 0.0
    %4072 = vmatmul.mubr.f32.gmra.mxu0 %v4003
    %v4073 = vpop.f32.mrf.mxu0
    %v4074 = vadd.f32 0.0, %v4073
    %v4075 = vpop.f32.mrf.mxu0
    %4076 = vdwg.mxu0
    %v4077 = vmul.f32 %v4074, 0.35355338
    %v4078 = vadd.f32 %v4077, %v214
    %v4079 = vsel %vm373, %v4078, -inf
    %4080 = vmax.xlane.f32.xlu0 %v4079
    %v4081 = vpop.xlane.xlu0 %4080
    %v4082 = vsub.f32 %v4078, %v4081
    %v4083 = vmul.f32 %v4082, 1.442695
    %v4084 = vpow.pop %v4083
    %v4085 = vsel %vm373, %v4084, 0.0
    %4086 = vadd.xlane.f32.xlu0 %v4085
    %v4087 = vpop.xlane.xlu0 %4086
    %v4088 = vrcp.pop %v4087
    %v4089 = vmul.f32 %v4084, %v4088
    %4090 = vrot.lane.b32.xlu0 %v3985, 64
    %v4091 = vpop.permute.xlu0 %4090
    %v4094 = vsel %vm373, %v4089, 0
    %4096 = vmatprep.subr.mxu0 0.0
    %4097 = vmatpush1.msra.mxu0 0.0
    %4098 = vmatprep.subr.mxu0 0.0
    %4099 = vmatpush1.msra.mxu0 0.0
    %4100 = vmatprep.subr.mxu0 0.0
    %4101 = vmatpush1.msra.mxu0 0.0
    %4102 = vmatprep.subr.mxu0 0.0
    %4103 = vmatpush1.msra.mxu0 0.0
    %4104 = vmatprep.subr.mxu0 0.0
    %4105 = vmatpush1.msra.mxu0 0.0
    %4106 = vmatprep.subr.mxu0 0.0
    %4107 = vmatpush1.msra.mxu0 0.0
    %4108 = vmatprep.subr.mxu0 0.0
    %4109 = vmatpush1.msra.mxu0 0.0
    %4110 = vmatprep.subr.mxu0 0.0
    %4111 = vmatpush1.msra.mxu0 0.0
    %4112 = vmatprep.subr.mxu0 0.0
    %4113 = vmatpush1.msra.mxu0 0.0
    %4114 = vmatprep.subr.mxu0 0.0
    %4115 = vmatpush1.msra.mxu0 0.0
    %4116 = vmatprep.subr.mxu0 0.0
    %4117 = vmatpush1.msra.mxu0 0.0
    %4118 = vmatprep.subr.mxu0 0.0
    %4119 = vmatpush1.msra.mxu0 0.0
    %4120 = vmatprep.subr.mxu0 0.0
    %4121 = vmatpush1.msra.mxu0 0.0
    %4122 = vmatprep.subr.mxu0 0.0
    %4123 = vmatpush1.msra.mxu0 0.0
    %4124 = vmatprep.subr.mxu0 0.0
    %4125 = vmatpush1.msra.mxu0 0.0
    %4126 = vmatprep.subr.mxu0 0.0
    %4127 = vmatpush1.msra.mxu0 %v4091
    %4128 = vmatprep.subr.mxu0 0.0
    %4129 = vmatpush2.msra.mxu0 0.0
    %4130 = vmatprep.subr.mxu0 0.0
    %4131 = vmatpush2.msra.mxu0 0.0
    %4132 = vmatprep.subr.mxu0 0.0
    %4133 = vmatpush2.msra.mxu0 0.0
    %4134 = vmatprep.subr.mxu0 0.0
    %4135 = vmatpush2.msra.mxu0 0.0
    %4136 = vmatprep.subr.mxu0 0.0
    %4137 = vmatpush2.msra.mxu0 0.0
    %4138 = vmatprep.subr.mxu0 0.0
    %4139 = vmatpush2.msra.mxu0 0.0
    %4140 = vmatprep.subr.mxu0 0.0
    %4141 = vmatpush2.msra.mxu0 0.0
    %4142 = vmatprep.subr.mxu0 0.0
    %4143 = vmatpush2.msra.mxu0 0.0
    %4144 = vmatprep.subr.mxu0 0.0
    %4145 = vmatpush2.msra.mxu0 0.0
    %4146 = vmatprep.subr.mxu0 0.0
    %4147 = vmatpush2.msra.mxu0 0.0
    %4148 = vmatprep.subr.mxu0 0.0
    %4149 = vmatpush2.msra.mxu0 0.0
    %4150 = vmatprep.subr.mxu0 0.0
    %4151 = vmatpush2.msra.mxu0 0.0
    %4152 = vmatprep.subr.mxu0 0.0
    %4153 = vmatpush2.msra.mxu0 0.0
    %4154 = vmatprep.subr.mxu0 0.0
    %4155 = vmatpush2.msra.mxu0 0.0
    %4156 = vmatprep.subr.mxu0 0.0
    %4157 = vmatpush2.msra.mxu0 0.0
    %4158 = vmatprep.subr.mxu0 0.0
    %4159 = vmatpush2.msra.mxu0 0.0
    %4160 = vmatprep.mubr.f32.mxu0 0.0
    %4161 = vmatmul.mubr.f32.gmra.mxu0 %v4094
    %v4162 = vpop.f32.mrf.mxu0
    %v4163 = vadd.f32 0.0, %v4162
    %v4164 = vpop.f32.mrf.mxu0
    %4165 = vdwg.mxu0
    %4166 = vrot.lane.b32.xlu0 %v3985, 120
    %v4167 = vpop.permute.xlu0 %4166
    %4168 = vrot.lane.b32.xlu0 %v3985, 88
    %v4169 = vpop.permute.xlu0 %4168
    %v4170 = vsel %vm373, %v4167, 0
    %v4172 = vsel %vm373, %v4169, 0
    %4174 = vmatprep.subr.mxu0 0.0
    %4175 = vmatpush1.xpose.msra.mxu0 0.0
    %4176 = vmatprep.subr.mxu0 0.0
    %4177 = vmatpush1.xpose.msra.mxu0 0.0
    %4178 = vmatprep.subr.mxu0 0.0
    %4179 = vmatpush1.xpose.msra.mxu0 0.0
    %4180 = vmatprep.subr.mxu0 0.0
    %4181 = vmatpush1.xpose.msra.mxu0 0.0
    %4182 = vmatprep.subr.mxu0 0.0
    %4183 = vmatpush1.xpose.msra.mxu0 0.0
    %4184 = vmatprep.subr.mxu0 0.0
    %4185 = vmatpush1.xpose.msra.mxu0 0.0
    %4186 = vmatprep.subr.mxu0 0.0
    %4187 = vmatpush1.xpose.msra.mxu0 0.0
    %4188 = vmatprep.subr.mxu0 0.0
    %4189 = vmatpush1.xpose.msra.mxu0 0.0
    %4190 = vmatprep.subr.mxu0 0.0
    %4191 = vmatpush1.xpose.msra.mxu0 0.0
    %4192 = vmatprep.subr.mxu0 0.0
    %4193 = vmatpush1.xpose.msra.mxu0 0.0
    %4194 = vmatprep.subr.mxu0 0.0
    %4195 = vmatpush1.xpose.msra.mxu0 0.0
    %4196 = vmatprep.subr.mxu0 0.0
    %4197 = vmatpush1.xpose.msra.mxu0 0.0
    %4198 = vmatprep.subr.mxu0 0.0
    %4199 = vmatpush1.xpose.msra.mxu0 0.0
    %4200 = vmatprep.subr.mxu0 0.0
    %4201 = vmatpush1.xpose.msra.mxu0 0.0
    %4202 = vmatprep.subr.mxu0 0.0
    %4203 = vmatpush1.xpose.msra.mxu0 0.0
    %4204 = vmatprep.subr.mxu0 0.0
    %4205 = vmatpush1.xpose.msra.mxu0 %v4172
    %4206 = vmatprep.subr.mxu0 0.0
    %4207 = vmatpush2.xpose.msra.mxu0 0.0
    %4208 = vmatprep.subr.mxu0 0.0
    %4209 = vmatpush2.xpose.msra.mxu0 0.0
    %4210 = vmatprep.subr.mxu0 0.0
    %4211 = vmatpush2.xpose.msra.mxu0 0.0
    %4212 = vmatprep.subr.mxu0 0.0
    %4213 = vmatpush2.xpose.msra.mxu0 0.0
    %4214 = vmatprep.subr.mxu0 0.0
    %4215 = vmatpush2.xpose.msra.mxu0 0.0
    %4216 = vmatprep.subr.mxu0 0.0
    %4217 = vmatpush2.xpose.msra.mxu0 0.0
    %4218 = vmatprep.subr.mxu0 0.0
    %4219 = vmatpush2.xpose.msra.mxu0 0.0
    %4220 = vmatprep.subr.mxu0 0.0
    %4221 = vmatpush2.xpose.msra.mxu0 0.0
    %4222 = vmatprep.subr.mxu0 0.0
    %4223 = vmatpush2.xpose.msra.mxu0 0.0
    %4224 = vmatprep.subr.mxu0 0.0
    %4225 = vmatpush2.xpose.msra.mxu0 0.0
    %4226 = vmatprep.subr.mxu0 0.0
    %4227 = vmatpush2.xpose.msra.mxu0 0.0
    %4228 = vmatprep.subr.mxu0 0.0
    %4229 = vmatpush2.xpose.msra.mxu0 0.0
    %4230 = vmatprep.subr.mxu0 0.0
    %4231 = vmatpush2.xpose.msra.mxu0 0.0
    %4232 = vmatprep.subr.mxu0 0.0
    %4233 = vmatpush2.xpose.msra.mxu0 0.0
    %4234 = vmatprep.subr.mxu0 0.0
    %4235 = vmatpush2.xpose.msra.mxu0 0.0
    %4236 = vmatprep.subr.mxu0 0.0
    %4237 = vmatpush2.xpose.msra.mxu0 0.0
    %4238 = vmatprep.mubr.f32.mxu0 0.0
    %4239 = vmatmul.mubr.f32.gmra.mxu0 %v4170
    %v4240 = vpop.f32.mrf.mxu0
    %v4241 = vadd.f32 0.0, %v4240
    %v4242 = vpop.f32.mrf.mxu0
    %4243 = vdwg.mxu0
    %v4244 = vmul.f32 %v4241, 0.35355338
    %v4245 = vadd.f32 %v4244, %v214
    %v4246 = vsel %vm373, %v4245, -inf
    %4247 = vmax.xlane.f32.xlu0 %v4246
    %v4248 = vpop.xlane.xlu0 %4247
    %v4249 = vsub.f32 %v4245, %v4248
    %v4250 = vmul.f32 %v4249, 1.442695
    %v4251 = vpow.pop %v4250
    %v4252 = vsel %vm373, %v4251, 0.0
    %4253 = vadd.xlane.f32.xlu0 %v4252
    %v4254 = vpop.xlane.xlu0 %4253
    %v4255 = vrcp.pop %v4254
    %v4256 = vmul.f32 %v4251, %v4255
    %4257 = vrot.lane.b32.xlu0 %v3985, 56
    %v4258 = vpop.permute.xlu0 %4257
    %v4261 = vsel %vm373, %v4256, 0
    %4263 = vmatprep.subr.mxu0 0.0
    %4264 = vmatpush1.msra.mxu0 0.0
    %4265 = vmatprep.subr.mxu0 0.0
    %4266 = vmatpush1.msra.mxu0 0.0
    %4267 = vmatprep.subr.mxu0 0.0
    %4268 = vmatpush1.msra.mxu0 0.0
    %4269 = vmatprep.subr.mxu0 0.0
    %4270 = vmatpush1.msra.mxu0 0.0
    %4271 = vmatprep.subr.mxu0 0.0
    %4272 = vmatpush1.msra.mxu0 0.0
    %4273 = vmatprep.subr.mxu0 0.0
    %4274 = vmatpush1.msra.mxu0 0.0
    %4275 = vmatprep.subr.mxu0 0.0
    %4276 = vmatpush1.msra.mxu0 0.0
    %4277 = vmatprep.subr.mxu0 0.0
    %4278 = vmatpush1.msra.mxu0 0.0
    %4279 = vmatprep.subr.mxu0 0.0
    %4280 = vmatpush1.msra.mxu0 0.0
    %4281 = vmatprep.subr.mxu0 0.0
    %4282 = vmatpush1.msra.mxu0 0.0
    %4283 = vmatprep.subr.mxu0 0.0
    %4284 = vmatpush1.msra.mxu0 0.0
    %4285 = vmatprep.subr.mxu0 0.0
    %4286 = vmatpush1.msra.mxu0 0.0
    %4287 = vmatprep.subr.mxu0 0.0
    %4288 = vmatpush1.msra.mxu0 0.0
    %4289 = vmatprep.subr.mxu0 0.0
    %4290 = vmatpush1.msra.mxu0 0.0
    %4291 = vmatprep.subr.mxu0 0.0
    %4292 = vmatpush1.msra.mxu0 0.0
    %4293 = vmatprep.subr.mxu0 0.0
    %4294 = vmatpush1.msra.mxu0 %v4258
    %4295 = vmatprep.subr.mxu0 0.0
    %4296 = vmatpush2.msra.mxu0 0.0
    %4297 = vmatprep.subr.mxu0 0.0
    %4298 = vmatpush2.msra.mxu0 0.0
    %4299 = vmatprep.subr.mxu0 0.0
    %4300 = vmatpush2.msra.mxu0 0.0
    %4301 = vmatprep.subr.mxu0 0.0
    %4302 = vmatpush2.msra.mxu0 0.0
    %4303 = vmatprep.subr.mxu0 0.0
    %4304 = vmatpush2.msra.mxu0 0.0
    %4305 = vmatprep.subr.mxu0 0.0
    %4306 = vmatpush2.msra.mxu0 0.0
    %4307 = vmatprep.subr.mxu0 0.0
    %4308 = vmatpush2.msra.mxu0 0.0
    %4309 = vmatprep.subr.mxu0 0.0
    %4310 = vmatpush2.msra.mxu0 0.0
    %4311 = vmatprep.subr.mxu0 0.0
    %4312 = vmatpush2.msra.mxu0 0.0
    %4313 = vmatprep.subr.mxu0 0.0
    %4314 = vmatpush2.msra.mxu0 0.0
    %4315 = vmatprep.subr.mxu0 0.0
    %4316 = vmatpush2.msra.mxu0 0.0
    %4317 = vmatprep.subr.mxu0 0.0
    %4318 = vmatpush2.msra.mxu0 0.0
    %4319 = vmatprep.subr.mxu0 0.0
    %4320 = vmatpush2.msra.mxu0 0.0
    %4321 = vmatprep.subr.mxu0 0.0
    %4322 = vmatpush2.msra.mxu0 0.0
    %4323 = vmatprep.subr.mxu0 0.0
    %4324 = vmatpush2.msra.mxu0 0.0
    %4325 = vmatprep.subr.mxu0 0.0
    %4326 = vmatpush2.msra.mxu0 0.0
    %4327 = vmatprep.mubr.f32.mxu0 0.0
    %4328 = vmatmul.mubr.f32.gmra.mxu0 %v4261
    %v4329 = vpop.f32.mrf.mxu0
    %v4330 = vadd.f32 0.0, %v4329
    %v4331 = vpop.f32.mrf.mxu0
    %4332 = vdwg.mxu0
    %4333 = vrot.lane.b32.xlu0 %v3985, 112
    %v4334 = vpop.permute.xlu0 %4333
    %4335 = vrot.lane.b32.xlu0 %v3985, 80
    %v4336 = vpop.permute.xlu0 %4335
    %v4337 = vsel %vm373, %v4334, 0
    %v4339 = vsel %vm373, %v4336, 0
    %4341 = vmatprep.subr.mxu0 0.0
    %4342 = vmatpush1.xpose.msra.mxu0 0.0
    %4343 = vmatprep.subr.mxu0 0.0
    %4344 = vmatpush1.xpose.msra.mxu0 0.0
    %4345 = vmatprep.subr.mxu0 0.0
    %4346 = vmatpush1.xpose.msra.mxu0 0.0
    %4347 = vmatprep.subr.mxu0 0.0
    %4348 = vmatpush1.xpose.msra.mxu0 0.0
    %4349 = vmatprep.subr.mxu0 0.0
    %4350 = vmatpush1.xpose.msra.mxu0 0.0
    %4351 = vmatprep.subr.mxu0 0.0
    %4352 = vmatpush1.xpose.msra.mxu0 0.0
    %4353 = vmatprep.subr.mxu0 0.0
    %4354 = vmatpush1.xpose.msra.mxu0 0.0
    %4355 = vmatprep.subr.mxu0 0.0
    %4356 = vmatpush1.xpose.msra.mxu0 0.0
    %4357 = vmatprep.subr.mxu0 0.0
    %4358 = vmatpush1.xpose.msra.mxu0 0.0
    %4359 = vmatprep.subr.mxu0 0.0
    %4360 = vmatpush1.xpose.msra.mxu0 0.0
    %4361 = vmatprep.subr.mxu0 0.0
    %4362 = vmatpush1.xpose.msra.mxu0 0.0
    %4363 = vmatprep.subr.mxu0 0.0
    %4364 = vmatpush1.xpose.msra.mxu0 0.0
    %4365 = vmatprep.subr.mxu0 0.0
    %4366 = vmatpush1.xpose.msra.mxu0 0.0
    %4367 = vmatprep.subr.mxu0 0.0
    %4368 = vmatpush1.xpose.msra.mxu0 0.0
    %4369 = vmatprep.subr.mxu0 0.0
    %4370 = vmatpush1.xpose.msra.mxu0 0.0
    %4371 = vmatprep.subr.mxu0 0.0
    %4372 = vmatpush1.xpose.msra.mxu0 %v4339
    %4373 = vmatprep.subr.mxu0 0.0
    %4374 = vmatpush2.xpose.msra.mxu0 0.0
    %4375 = vmatprep.subr.mxu0 0.0
    %4376 = vmatpush2.xpose.msra.mxu0 0.0
    %4377 = vmatprep.subr.mxu0 0.0
    %4378 = vmatpush2.xpose.msra.mxu0 0.0
    %4379 = vmatprep.subr.mxu0 0.0
    %4380 = vmatpush2.xpose.msra.mxu0 0.0
    %4381 = vmatprep.subr.mxu0 0.0
    %4382 = vmatpush2.xpose.msra.mxu0 0.0
    %4383 = vmatprep.subr.mxu0 0.0
    %4384 = vmatpush2.xpose.msra.mxu0 0.0
    %4385 = vmatprep.subr.mxu0 0.0
    %4386 = vmatpush2.xpose.msra.mxu0 0.0
    %4387 = vmatprep.subr.mxu0 0.0
    %4388 = vmatpush2.xpose.msra.mxu0 0.0
    %4389 = vmatprep.subr.mxu0 0.0
    %4390 = vmatpush2.xpose.msra.mxu0 0.0
    %4391 = vmatprep.subr.mxu0 0.0
    %4392 = vmatpush2.xpose.msra.mxu0 0.0
    %4393 = vmatprep.subr.mxu0 0.0
    %4394 = vmatpush2.xpose.msra.mxu0 0.0
    %4395 = vmatprep.subr.mxu0 0.0
    %4396 = vmatpush2.xpose.msra.mxu0 0.0
    %4397 = vmatprep.subr.mxu0 0.0
    %4398 = vmatpush2.xpose.msra.mxu0 0.0
    %4399 = vmatprep.subr.mxu0 0.0
    %4400 = vmatpush2.xpose.msra.mxu0 0.0
    %4401 = vmatprep.subr.mxu0 0.0
    %4402 = vmatpush2.xpose.msra.mxu0 0.0
    %4403 = vmatprep.subr.mxu0 0.0
    %4404 = vmatpush2.xpose.msra.mxu0 0.0
    %4405 = vmatprep.mubr.f32.mxu0 0.0
    %4406 = vmatmul.mubr.f32.gmra.mxu0 %v4337
    %v4407 = vpop.f32.mrf.mxu0
    %v4408 = vadd.f32 0.0, %v4407
    %v4409 = vpop.f32.mrf.mxu0
    %4410 = vdwg.mxu0
    %v4411 = vmul.f32 %v4408, 0.35355338
    %v4412 = vadd.f32 %v4411, %v214
    %v4413 = vsel %vm373, %v4412, -inf
    %4414 = vmax.xlane.f32.xlu0 %v4413
    %v4415 = vpop.xlane.xlu0 %4414
    %v4416 = vsub.f32 %v4412, %v4415
    %v4417 = vmul.f32 %v4416, 1.442695
    %v4418 = vpow.pop %v4417
    %v4419 = vsel %vm373, %v4418, 0.0
    %4420 = vadd.xlane.f32.xlu0 %v4419
    %v4421 = vpop.xlane.xlu0 %4420
    %v4422 = vrcp.pop %v4421
    %v4423 = vmul.f32 %v4418, %v4422
    %4424 = vrot.lane.b32.xlu0 %v3985, 48
    %v4425 = vpop.permute.xlu0 %4424
    %v4428 = vsel %vm373, %v4423, 0
    %4430 = vmatprep.subr.mxu0 0.0
    %4431 = vmatpush1.msra.mxu0 0.0
    %4432 = vmatprep.subr.mxu0 0.0
    %4433 = vmatpush1.msra.mxu0 0.0
    %4434 = vmatprep.subr.mxu0 0.0
    %4435 = vmatpush1.msra.mxu0 0.0
    %4436 = vmatprep.subr.mxu0 0.0
    %4437 = vmatpush1.msra.mxu0 0.0
    %4438 = vmatprep.subr.mxu0 0.0
    %4439 = vmatpush1.msra.mxu0 0.0
    %4440 = vmatprep.subr.mxu0 0.0
    %4441 = vmatpush1.msra.mxu0 0.0
    %4442 = vmatprep.subr.mxu0 0.0
    %4443 = vmatpush1.msra.mxu0 0.0
    %4444 = vmatprep.subr.mxu0 0.0
    %4445 = vmatpush1.msra.mxu0 0.0
    %4446 = vmatprep.subr.mxu0 0.0
    %4447 = vmatpush1.msra.mxu0 0.0
    %4448 = vmatprep.subr.mxu0 0.0
    %4449 = vmatpush1.msra.mxu0 0.0
    %4450 = vmatprep.subr.mxu0 0.0
    %4451 = vmatpush1.msra.mxu0 0.0
    %4452 = vmatprep.subr.mxu0 0.0
    %4453 = vmatpush1.msra.mxu0 0.0
    %4454 = vmatprep.subr.mxu0 0.0
    %4455 = vmatpush1.msra.mxu0 0.0
    %4456 = vmatprep.subr.mxu0 0.0
    %4457 = vmatpush1.msra.mxu0 0.0
    %4458 = vmatprep.subr.mxu0 0.0
    %4459 = vmatpush1.msra.mxu0 0.0
    %4460 = vmatprep.subr.mxu0 0.0
    %4461 = vmatpush1.msra.mxu0 %v4425
    %4462 = vmatprep.subr.mxu0 0.0
    %4463 = vmatpush2.msra.mxu0 0.0
    %4464 = vmatprep.subr.mxu0 0.0
    %4465 = vmatpush2.msra.mxu0 0.0
    %4466 = vmatprep.subr.mxu0 0.0
    %4467 = vmatpush2.msra.mxu0 0.0
    %4468 = vmatprep.subr.mxu0 0.0
    %4469 = vmatpush2.msra.mxu0 0.0
    %4470 = vmatprep.subr.mxu0 0.0
    %4471 = vmatpush2.msra.mxu0 0.0
    %4472 = vmatprep.subr.mxu0 0.0
    %4473 = vmatpush2.msra.mxu0 0.0
    %4474 = vmatprep.subr.mxu0 0.0
    %4475 = vmatpush2.msra.mxu0 0.0
    %4476 = vmatprep.subr.mxu0 0.0
    %4477 = vmatpush2.msra.mxu0 0.0
    %4478 = vmatprep.subr.mxu0 0.0
    %4479 = vmatpush2.msra.mxu0 0.0
    %4480 = vmatprep.subr.mxu0 0.0
    %4481 = vmatpush2.msra.mxu0 0.0
    %4482 = vmatprep.subr.mxu0 0.0
    %4483 = vmatpush2.msra.mxu0 0.0
    %4484 = vmatprep.subr.mxu0 0.0
    %4485 = vmatpush2.msra.mxu0 0.0
    %4486 = vmatprep.subr.mxu0 0.0
    %4487 = vmatpush2.msra.mxu0 0.0
    %4488 = vmatprep.subr.mxu0 0.0
    %4489 = vmatpush2.msra.mxu0 0.0
    %4490 = vmatprep.subr.mxu0 0.0
    %4491 = vmatpush2.msra.mxu0 0.0
    %4492 = vmatprep.subr.mxu0 0.0
    %4493 = vmatpush2.msra.mxu0 0.0
    %4494 = vmatprep.mubr.f32.mxu0 0.0
    %4495 = vmatmul.mubr.f32.gmra.mxu0 %v4428
    %v4496 = vpop.f32.mrf.mxu0
    %v4497 = vadd.f32 0.0, %v4496
    %v4498 = vpop.f32.mrf.mxu0
    %4499 = vdwg.mxu0
    %4500 = vrot.lane.b32.xlu0 %v3985, 104
    %v4501 = vpop.permute.xlu0 %4500
    %4502 = vrot.lane.b32.xlu0 %v3985, 72
    %v4503 = vpop.permute.xlu0 %4502
    %v4504 = vsel %vm373, %v4501, 0
    %v4506 = vsel %vm373, %v4503, 0
    %4508 = vmatprep.subr.mxu0 0.0
    %4509 = vmatpush1.xpose.msra.mxu0 0.0
    %4510 = vmatprep.subr.mxu0 0.0
    %4511 = vmatpush1.xpose.msra.mxu0 0.0
    %4512 = vmatprep.subr.mxu0 0.0
    %4513 = vmatpush1.xpose.msra.mxu0 0.0
    %4514 = vmatprep.subr.mxu0 0.0
    %4515 = vmatpush1.xpose.msra.mxu0 0.0
    %4516 = vmatprep.subr.mxu0 0.0
    %4517 = vmatpush1.xpose.msra.mxu0 0.0
    %4518 = vmatprep.subr.mxu0 0.0
    %4519 = vmatpush1.xpose.msra.mxu0 0.0
    %4520 = vmatprep.subr.mxu0 0.0
    %4521 = vmatpush1.xpose.msra.mxu0 0.0
    %4522 = vmatprep.subr.mxu0 0.0
    %4523 = vmatpush1.xpose.msra.mxu0 0.0
    %4524 = vmatprep.subr.mxu0 0.0
    %4525 = vmatpush1.xpose.msra.mxu0 0.0
    %4526 = vmatprep.subr.mxu0 0.0
    %4527 = vmatpush1.xpose.msra.mxu0 0.0
    %4528 = vmatprep.subr.mxu0 0.0
    %4529 = vmatpush1.xpose.msra.mxu0 0.0
    %4530 = vmatprep.subr.mxu0 0.0
    %4531 = vmatpush1.xpose.msra.mxu0 0.0
    %4532 = vmatprep.subr.mxu0 0.0
    %4533 = vmatpush1.xpose.msra.mxu0 0.0
    %4534 = vmatprep.subr.mxu0 0.0
    %4535 = vmatpush1.xpose.msra.mxu0 0.0
    %4536 = vmatprep.subr.mxu0 0.0
    %4537 = vmatpush1.xpose.msra.mxu0 0.0
    %4538 = vmatprep.subr.mxu0 0.0
    %4539 = vmatpush1.xpose.msra.mxu0 %v4506
    %4540 = vmatprep.subr.mxu0 0.0
    %4541 = vmatpush2.xpose.msra.mxu0 0.0
    %4542 = vmatprep.subr.mxu0 0.0
    %4543 = vmatpush2.xpose.msra.mxu0 0.0
    %4544 = vmatprep.subr.mxu0 0.0
    %4545 = vmatpush2.xpose.msra.mxu0 0.0
    %4546 = vmatprep.subr.mxu0 0.0
    %4547 = vmatpush2.xpose.msra.mxu0 0.0
    %4548 = vmatprep.subr.mxu0 0.0
    %4549 = vmatpush2.xpose.msra.mxu0 0.0
    %4550 = vmatprep.subr.mxu0 0.0
    %4551 = vmatpush2.xpose.msra.mxu0 0.0
    %4552 = vmatprep.subr.mxu0 0.0
    %4553 = vmatpush2.xpose.msra.mxu0 0.0
    %4554 = vmatprep.subr.mxu0 0.0
    %4555 = vmatpush2.xpose.msra.mxu0 0.0
    %4556 = vmatprep.subr.mxu0 0.0
    %4557 = vmatpush2.xpose.msra.mxu0 0.0
    %4558 = vmatprep.subr.mxu0 0.0
    %4559 = vmatpush2.xpose.msra.mxu0 0.0
    %4560 = vmatprep.subr.mxu0 0.0
    %4561 = vmatpush2.xpose.msra.mxu0 0.0
    %4562 = vmatprep.subr.mxu0 0.0
    %4563 = vmatpush2.xpose.msra.mxu0 0.0
    %4564 = vmatprep.subr.mxu0 0.0
    %4565 = vmatpush2.xpose.msra.mxu0 0.0
    %4566 = vmatprep.subr.mxu0 0.0
    %4567 = vmatpush2.xpose.msra.mxu0 0.0
    %4568 = vmatprep.subr.mxu0 0.0
    %4569 = vmatpush2.xpose.msra.mxu0 0.0
    %4570 = vmatprep.subr.mxu0 0.0
    %4571 = vmatpush2.xpose.msra.mxu0 0.0
    %4572 = vmatprep.mubr.f32.mxu0 0.0
    %4573 = vmatmul.mubr.f32.gmra.mxu0 %v4504
    %v4574 = vpop.f32.mrf.mxu0
    %v4575 = vadd.f32 0.0, %v4574
    %v4576 = vpop.f32.mrf.mxu0
    %4577 = vdwg.mxu0
    %v4578 = vmul.f32 %v4575, 0.35355338
    %v4579 = vadd.f32 %v4578, %v214
    %v4580 = vsel %vm373, %v4579, -inf
    %4581 = vmax.xlane.f32.xlu0 %v4580
    %v4582 = vpop.xlane.xlu0 %4581
    %v4583 = vsub.f32 %v4579, %v4582
    %v4584 = vmul.f32 %v4583, 1.442695
    %v4585 = vpow.pop %v4584
    %v4586 = vsel %vm373, %v4585, 0.0
    %4587 = vadd.xlane.f32.xlu0 %v4586
    %v4588 = vpop.xlane.xlu0 %4587
    %v4589 = vrcp.pop %v4588
    %v4590 = vmul.f32 %v4585, %v4589
    %4591 = vrot.lane.b32.xlu0 %v3985, 40
    %v4592 = vpop.permute.xlu0 %4591
    %v4595 = vsel %vm373, %v4590, 0
    %4597 = vmatprep.subr.mxu0 0.0
    %4598 = vmatpush1.msra.mxu0 0.0
    %4599 = vmatprep.subr.mxu0 0.0
    %4600 = vmatpush1.msra.mxu0 0.0
    %4601 = vmatprep.subr.mxu0 0.0
    %4602 = vmatpush1.msra.mxu0 0.0
    %4603 = vmatprep.subr.mxu0 0.0
    %4604 = vmatpush1.msra.mxu0 0.0
    %4605 = vmatprep.subr.mxu0 0.0
    %4606 = vmatpush1.msra.mxu0 0.0
    %4607 = vmatprep.subr.mxu0 0.0
    %4608 = vmatpush1.msra.mxu0 0.0
    %4609 = vmatprep.subr.mxu0 0.0
    %4610 = vmatpush1.msra.mxu0 0.0
    %4611 = vmatprep.subr.mxu0 0.0
    %4612 = vmatpush1.msra.mxu0 0.0
    %4613 = vmatprep.subr.mxu0 0.0
    %4614 = vmatpush1.msra.mxu0 0.0
    %4615 = vmatprep.subr.mxu0 0.0
    %4616 = vmatpush1.msra.mxu0 0.0
    %4617 = vmatprep.subr.mxu0 0.0
    %4618 = vmatpush1.msra.mxu0 0.0
    %4619 = vmatprep.subr.mxu0 0.0
    %4620 = vmatpush1.msra.mxu0 0.0
    %4621 = vmatprep.subr.mxu0 0.0
    %4622 = vmatpush1.msra.mxu0 0.0
    %4623 = vmatprep.subr.mxu0 0.0
    %4624 = vmatpush1.msra.mxu0 0.0
    %4625 = vmatprep.subr.mxu0 0.0
    %4626 = vmatpush1.msra.mxu0 0.0
    %4627 = vmatprep.subr.mxu0 0.0
    %4628 = vmatpush1.msra.mxu0 %v4592
    %4629 = vmatprep.subr.mxu0 0.0
    %4630 = vmatpush2.msra.mxu0 0.0
    %4631 = vmatprep.subr.mxu0 0.0
    %4632 = vmatpush2.msra.mxu0 0.0
    %4633 = vmatprep.subr.mxu0 0.0
    %4634 = vmatpush2.msra.mxu0 0.0
    %4635 = vmatprep.subr.mxu0 0.0
    %4636 = vmatpush2.msra.mxu0 0.0
    %4637 = vmatprep.subr.mxu0 0.0
    %4638 = vmatpush2.msra.mxu0 0.0
    %4639 = vmatprep.subr.mxu0 0.0
    %4640 = vmatpush2.msra.mxu0 0.0
    %4641 = vmatprep.subr.mxu0 0.0
    %4642 = vmatpush2.msra.mxu0 0.0
    %4643 = vmatprep.subr.mxu0 0.0
    %4644 = vmatpush2.msra.mxu0 0.0
    %4645 = vmatprep.subr.mxu0 0.0
    %4646 = vmatpush2.msra.mxu0 0.0
    %4647 = vmatprep.subr.mxu0 0.0
    %4648 = vmatpush2.msra.mxu0 0.0
    %4649 = vmatprep.subr.mxu0 0.0
    %4650 = vmatpush2.msra.mxu0 0.0
    %4651 = vmatprep.subr.mxu0 0.0
    %4652 = vmatpush2.msra.mxu0 0.0
    %4653 = vmatprep.subr.mxu0 0.0
    %4654 = vmatpush2.msra.mxu0 0.0
    %4655 = vmatprep.subr.mxu0 0.0
    %4656 = vmatpush2.msra.mxu0 0.0
    %4657 = vmatprep.subr.mxu0 0.0
    %4658 = vmatpush2.msra.mxu0 0.0
    %4659 = vmatprep.subr.mxu0 0.0
    %4660 = vmatpush2.msra.mxu0 0.0
    %4661 = vmatprep.mubr.f32.mxu0 0.0
    %4662 = vmatmul.mubr.f32.gmra.mxu0 %v4595
    %v4663 = vpop.f32.mrf.mxu0
    %v4664 = vadd.f32 0.0, %v4663
    %v4665 = vpop.f32.mrf.mxu0
    %4666 = vdwg.mxu0
    %4668 = vrot.lane.b32.xlu0 %v4330, 8
    %v4669 = vpop.permute.xlu0 %4668
    %4672 = vrot.lane.b32.xlu0 %v4497, 16
    %v4673 = vpop.permute.xlu0 %4672
    %4676 = vrot.lane.b32.xlu0 %v4664, 24
    %v4677 = vpop.permute.xlu0 %4676
    %v4679 = vsel %vm373, %v4163, %v4669
    %v4680 = vsel %vm1051, %v4679, %v4673
    %v4681 = vsel %vm1053, %v4680, %v4677
    %4683 = vrot.lane.b32.xlu0 %v3990, 96
    %v4684 = vpop.permute.xlu0 %4683
    %v4685 = vsel %vm373, %v3990, 0
    %v4687 = vsel %vm373, %v4684, 0
    %4689 = vmatprep.subr.mxu0 0.0
    %4690 = vmatpush1.xpose.msra.mxu0 0.0
    %4691 = vmatprep.subr.mxu0 0.0
    %4692 = vmatpush1.xpose.msra.mxu0 0.0
    %4693 = vmatprep.subr.mxu0 0.0
    %4694 = vmatpush1.xpose.msra.mxu0 0.0
    %4695 = vmatprep.subr.mxu0 0.0
    %4696 = vmatpush1.xpose.msra.mxu0 0.0
    %4697 = vmatprep.subr.mxu0 0.0
    %4698 = vmatpush1.xpose.msra.mxu0 0.0
    %4699 = vmatprep.subr.mxu0 0.0
    %4700 = vmatpush1.xpose.msra.mxu0 0.0
    %4701 = vmatprep.subr.mxu0 0.0
    %4702 = vmatpush1.xpose.msra.mxu0 0.0
    %4703 = vmatprep.subr.mxu0 0.0
    %4704 = vmatpush1.xpose.msra.mxu0 0.0
    %4705 = vmatprep.subr.mxu0 0.0
    %4706 = vmatpush1.xpose.msra.mxu0 0.0
    %4707 = vmatprep.subr.mxu0 0.0
    %4708 = vmatpush1.xpose.msra.mxu0 0.0
    %4709 = vmatprep.subr.mxu0 0.0
    %4710 = vmatpush1.xpose.msra.mxu0 0.0
    %4711 = vmatprep.subr.mxu0 0.0
    %4712 = vmatpush1.xpose.msra.mxu0 0.0
    %4713 = vmatprep.subr.mxu0 0.0
    %4714 = vmatpush1.xpose.msra.mxu0 0.0
    %4715 = vmatprep.subr.mxu0 0.0
    %4716 = vmatpush1.xpose.msra.mxu0 0.0
    %4717 = vmatprep.subr.mxu0 0.0
    %4718 = vmatpush1.xpose.msra.mxu0 0.0
    %4719 = vmatprep.subr.mxu0 0.0
    %4720 = vmatpush1.xpose.msra.mxu0 %v4687
    %4721 = vmatprep.subr.mxu0 0.0
    %4722 = vmatpush2.xpose.msra.mxu0 0.0
    %4723 = vmatprep.subr.mxu0 0.0
    %4724 = vmatpush2.xpose.msra.mxu0 0.0
    %4725 = vmatprep.subr.mxu0 0.0
    %4726 = vmatpush2.xpose.msra.mxu0 0.0
    %4727 = vmatprep.subr.mxu0 0.0
    %4728 = vmatpush2.xpose.msra.mxu0 0.0
    %4729 = vmatprep.subr.mxu0 0.0
    %4730 = vmatpush2.xpose.msra.mxu0 0.0
    %4731 = vmatprep.subr.mxu0 0.0
    %4732 = vmatpush2.xpose.msra.mxu0 0.0
    %4733 = vmatprep.subr.mxu0 0.0
    %4734 = vmatpush2.xpose.msra.mxu0 0.0
    %4735 = vmatprep.subr.mxu0 0.0
    %4736 = vmatpush2.xpose.msra.mxu0 0.0
    %4737 = vmatprep.subr.mxu0 0.0
    %4738 = vmatpush2.xpose.msra.mxu0 0.0
    %4739 = vmatprep.subr.mxu0 0.0
    %4740 = vmatpush2.xpose.msra.mxu0 0.0
    %4741 = vmatprep.subr.mxu0 0.0
    %4742 = vmatpush2.xpose.msra.mxu0 0.0
    %4743 = vmatprep.subr.mxu0 0.0
    %4744 = vmatpush2.xpose.msra.mxu0 0.0
    %4745 = vmatprep.subr.mxu0 0.0
    %4746 = vmatpush2.xpose.msra.mxu0 0.0
    %4747 = vmatprep.subr.mxu0 0.0
    %4748 = vmatpush2.xpose.msra.mxu0 0.0
    %4749 = vmatprep.subr.mxu0 0.0
    %4750 = vmatpush2.xpose.msra.mxu0 0.0
    %4751 = vmatprep.subr.mxu0 0.0
    %4752 = vmatpush2.xpose.msra.mxu0 0.0
    %4753 = vmatprep.mubr.f32.mxu0 0.0
    %4754 = vmatmul.mubr.f32.gmra.mxu0 %v4685
    %v4755 = vpop.f32.mrf.mxu0
    %v4756 = vadd.f32 0.0, %v4755
    %v4757 = vpop.f32.mrf.mxu0
    %4758 = vdwg.mxu0
    %v4759 = vmul.f32 %v4756, 0.35355338
    %v4760 = vadd.f32 %v4759, %v215
    %v4761 = vsel %vm373, %v4760, -inf
    %4762 = vmax.xlane.f32.xlu0 %v4761
    %v4763 = vpop.xlane.xlu0 %4762
    %v4764 = vsub.f32 %v4760, %v4763
    %v4765 = vmul.f32 %v4764, 1.442695
    %v4766 = vpow.pop %v4765
    %v4767 = vsel %vm373, %v4766, 0.0
    %4768 = vadd.xlane.f32.xlu0 %v4767
    %v4769 = vpop.xlane.xlu0 %4768
    %v4770 = vrcp.pop %v4769
    %v4771 = vmul.f32 %v4766, %v4770
    %4772 = vrot.lane.b32.xlu0 %v3990, 64
    %v4773 = vpop.permute.xlu0 %4772
    %v4776 = vsel %vm373, %v4771, 0
    %4778 = vmatprep.subr.mxu0 0.0
    %4779 = vmatpush1.msra.mxu0 0.0
    %4780 = vmatprep.subr.mxu0 0.0
    %4781 = vmatpush1.msra.mxu0 0.0
    %4782 = vmatprep.subr.mxu0 0.0
    %4783 = vmatpush1.msra.mxu0 0.0
    %4784 = vmatprep.subr.mxu0 0.0
    %4785 = vmatpush1.msra.mxu0 0.0
    %4786 = vmatprep.subr.mxu0 0.0
    %4787 = vmatpush1.msra.mxu0 0.0
    %4788 = vmatprep.subr.mxu0 0.0
    %4789 = vmatpush1.msra.mxu0 0.0
    %4790 = vmatprep.subr.mxu0 0.0
    %4791 = vmatpush1.msra.mxu0 0.0
    %4792 = vmatprep.subr.mxu0 0.0
    %4793 = vmatpush1.msra.mxu0 0.0
    %4794 = vmatprep.subr.mxu0 0.0
    %4795 = vmatpush1.msra.mxu0 0.0
    %4796 = vmatprep.subr.mxu0 0.0
    %4797 = vmatpush1.msra.mxu0 0.0
    %4798 = vmatprep.subr.mxu0 0.0
    %4799 = vmatpush1.msra.mxu0 0.0
    %4800 = vmatprep.subr.mxu0 0.0
    %4801 = vmatpush1.msra.mxu0 0.0
    %4802 = vmatprep.subr.mxu0 0.0
    %4803 = vmatpush1.msra.mxu0 0.0
    %4804 = vmatprep.subr.mxu0 0.0
    %4805 = vmatpush1.msra.mxu0 0.0
    %4806 = vmatprep.subr.mxu0 0.0
    %4807 = vmatpush1.msra.mxu0 0.0
    %4808 = vmatprep.subr.mxu0 0.0
    %4809 = vmatpush1.msra.mxu0 %v4773
    %4810 = vmatprep.subr.mxu0 0.0
    %4811 = vmatpush2.msra.mxu0 0.0
    %4812 = vmatprep.subr.mxu0 0.0
    %4813 = vmatpush2.msra.mxu0 0.0
    %4814 = vmatprep.subr.mxu0 0.0
    %4815 = vmatpush2.msra.mxu0 0.0
    %4816 = vmatprep.subr.mxu0 0.0
    %4817 = vmatpush2.msra.mxu0 0.0
    %4818 = vmatprep.subr.mxu0 0.0
    %4819 = vmatpush2.msra.mxu0 0.0
    %4820 = vmatprep.subr.mxu0 0.0
    %4821 = vmatpush2.msra.mxu0 0.0
    %4822 = vmatprep.subr.mxu0 0.0
    %4823 = vmatpush2.msra.mxu0 0.0
    %4824 = vmatprep.subr.mxu0 0.0
    %4825 = vmatpush2.msra.mxu0 0.0
    %4826 = vmatprep.subr.mxu0 0.0
    %4827 = vmatpush2.msra.mxu0 0.0
    %4828 = vmatprep.subr.mxu0 0.0
    %4829 = vmatpush2.msra.mxu0 0.0
    %4830 = vmatprep.subr.mxu0 0.0
    %4831 = vmatpush2.msra.mxu0 0.0
    %4832 = vmatprep.subr.mxu0 0.0
    %4833 = vmatpush2.msra.mxu0 0.0
    %4834 = vmatprep.subr.mxu0 0.0
    %4835 = vmatpush2.msra.mxu0 0.0
    %4836 = vmatprep.subr.mxu0 0.0
    %4837 = vmatpush2.msra.mxu0 0.0
    %4838 = vmatprep.subr.mxu0 0.0
    %4839 = vmatpush2.msra.mxu0 0.0
    %4840 = vmatprep.subr.mxu0 0.0
    %4841 = vmatpush2.msra.mxu0 0.0
    %4842 = vmatprep.mubr.f32.mxu0 0.0
    %4843 = vmatmul.mubr.f32.gmra.mxu0 %v4776
    %v4844 = vpop.f32.mrf.mxu0
    %v4845 = vadd.f32 0.0, %v4844
    %v4846 = vpop.f32.mrf.mxu0
    %4847 = vdwg.mxu0
    %4848 = vrot.lane.b32.xlu0 %v3990, 120
    %v4849 = vpop.permute.xlu0 %4848
    %4850 = vrot.lane.b32.xlu0 %v3990, 88
    %v4851 = vpop.permute.xlu0 %4850
    %v4852 = vsel %vm373, %v4849, 0
    %v4854 = vsel %vm373, %v4851, 0
    %4856 = vmatprep.subr.mxu0 0.0
    %4857 = vmatpush1.xpose.msra.mxu0 0.0
    %4858 = vmatprep.subr.mxu0 0.0
    %4859 = vmatpush1.xpose.msra.mxu0 0.0
    %4860 = vmatprep.subr.mxu0 0.0
    %4861 = vmatpush1.xpose.msra.mxu0 0.0
    %4862 = vmatprep.subr.mxu0 0.0
    %4863 = vmatpush1.xpose.msra.mxu0 0.0
    %4864 = vmatprep.subr.mxu0 0.0
    %4865 = vmatpush1.xpose.msra.mxu0 0.0
    %4866 = vmatprep.subr.mxu0 0.0
    %4867 = vmatpush1.xpose.msra.mxu0 0.0
    %4868 = vmatprep.subr.mxu0 0.0
    %4869 = vmatpush1.xpose.msra.mxu0 0.0
    %4870 = vmatprep.subr.mxu0 0.0
    %4871 = vmatpush1.xpose.msra.mxu0 0.0
    %4872 = vmatprep.subr.mxu0 0.0
    %4873 = vmatpush1.xpose.msra.mxu0 0.0
    %4874 = vmatprep.subr.mxu0 0.0
    %4875 = vmatpush1.xpose.msra.mxu0 0.0
    %4876 = vmatprep.subr.mxu0 0.0
    %4877 = vmatpush1.xpose.msra.mxu0 0.0
    %4878 = vmatprep.subr.mxu0 0.0
    %4879 = vmatpush1.xpose.msra.mxu0 0.0
    %4880 = vmatprep.subr.mxu0 0.0
    %4881 = vmatpush1.xpose.msra.mxu0 0.0
    %4882 = vmatprep.subr.mxu0 0.0
    %4883 = vmatpush1.xpose.msra.mxu0 0.0
    %4884 = vmatprep.subr.mxu0 0.0
    %4885 = vmatpush1.xpose.msra.mxu0 0.0
    %4886 = vmatprep.subr.mxu0 0.0
    %4887 = vmatpush1.xpose.msra.mxu0 %v4854
    %4888 = vmatprep.subr.mxu0 0.0
    %4889 = vmatpush2.xpose.msra.mxu0 0.0
    %4890 = vmatprep.subr.mxu0 0.0
    %4891 = vmatpush2.xpose.msra.mxu0 0.0
    %4892 = vmatprep.subr.mxu0 0.0
    %4893 = vmatpush2.xpose.msra.mxu0 0.0
    %4894 = vmatprep.subr.mxu0 0.0
    %4895 = vmatpush2.xpose.msra.mxu0 0.0
    %4896 = vmatprep.subr.mxu0 0.0
    %4897 = vmatpush2.xpose.msra.mxu0 0.0
    %4898 = vmatprep.subr.mxu0 0.0
    %4899 = vmatpush2.xpose.msra.mxu0 0.0
    %4900 = vmatprep.subr.mxu0 0.0
    %4901 = vmatpush2.xpose.msra.mxu0 0.0
    %4902 = vmatprep.subr.mxu0 0.0
    %4903 = vmatpush2.xpose.msra.mxu0 0.0
    %4904 = vmatprep.subr.mxu0 0.0
    %4905 = vmatpush2.xpose.msra.mxu0 0.0
    %4906 = vmatprep.subr.mxu0 0.0
    %4907 = vmatpush2.xpose.msra.mxu0 0.0
    %4908 = vmatprep.subr.mxu0 0.0
    %4909 = vmatpush2.xpose.msra.mxu0 0.0
    %4910 = vmatprep.subr.mxu0 0.0
    %4911 = vmatpush2.xpose.msra.mxu0 0.0
    %4912 = vmatprep.subr.mxu0 0.0
    %4913 = vmatpush2.xpose.msra.mxu0 0.0
    %4914 = vmatprep.subr.mxu0 0.0
    %4915 = vmatpush2.xpose.msra.mxu0 0.0
    %4916 = vmatprep.subr.mxu0 0.0
    %4917 = vmatpush2.xpose.msra.mxu0 0.0
    %4918 = vmatprep.subr.mxu0 0.0
    %4919 = vmatpush2.xpose.msra.mxu0 0.0
    %4920 = vmatprep.mubr.f32.mxu0 0.0
    %4921 = vmatmul.mubr.f32.gmra.mxu0 %v4852
    %v4922 = vpop.f32.mrf.mxu0
    %v4923 = vadd.f32 0.0, %v4922
    %v4924 = vpop.f32.mrf.mxu0
    %4925 = vdwg.mxu0
    %v4926 = vmul.f32 %v4923, 0.35355338
    %v4927 = vadd.f32 %v4926, %v215
    %v4928 = vsel %vm373, %v4927, -inf
    %4929 = vmax.xlane.f32.xlu0 %v4928
    %v4930 = vpop.xlane.xlu0 %4929
    %v4931 = vsub.f32 %v4927, %v4930
    %v4932 = vmul.f32 %v4931, 1.442695
    %v4933 = vpow.pop %v4932
    %v4934 = vsel %vm373, %v4933, 0.0
    %4935 = vadd.xlane.f32.xlu0 %v4934
    %v4936 = vpop.xlane.xlu0 %4935
    %v4937 = vrcp.pop %v4936
    %v4938 = vmul.f32 %v4933, %v4937
    %4939 = vrot.lane.b32.xlu0 %v3990, 56
    %v4940 = vpop.permute.xlu0 %4939
    %v4943 = vsel %vm373, %v4938, 0
    %4945 = vmatprep.subr.mxu0 0.0
    %4946 = vmatpush1.msra.mxu0 0.0
    %4947 = vmatprep.subr.mxu0 0.0
    %4948 = vmatpush1.msra.mxu0 0.0
    %4949 = vmatprep.subr.mxu0 0.0
    %4950 = vmatpush1.msra.mxu0 0.0
    %4951 = vmatprep.subr.mxu0 0.0
    %4952 = vmatpush1.msra.mxu0 0.0
    %4953 = vmatprep.subr.mxu0 0.0
    %4954 = vmatpush1.msra.mxu0 0.0
    %4955 = vmatprep.subr.mxu0 0.0
    %4956 = vmatpush1.msra.mxu0 0.0
    %4957 = vmatprep.subr.mxu0 0.0
    %4958 = vmatpush1.msra.mxu0 0.0
    %4959 = vmatprep.subr.mxu0 0.0
    %4960 = vmatpush1.msra.mxu0 0.0
    %4961 = vmatprep.subr.mxu0 0.0
    %4962 = vmatpush1.msra.mxu0 0.0
    %4963 = vmatprep.subr.mxu0 0.0
    %4964 = vmatpush1.msra.mxu0 0.0
    %4965 = vmatprep.subr.mxu0 0.0
    %4966 = vmatpush1.msra.mxu0 0.0
    %4967 = vmatprep.subr.mxu0 0.0
    %4968 = vmatpush1.msra.mxu0 0.0
    %4969 = vmatprep.subr.mxu0 0.0
    %4970 = vmatpush1.msra.mxu0 0.0
    %4971 = vmatprep.subr.mxu0 0.0
    %4972 = vmatpush1.msra.mxu0 0.0
    %4973 = vmatprep.subr.mxu0 0.0
    %4974 = vmatpush1.msra.mxu0 0.0
    %4975 = vmatprep.subr.mxu0 0.0
    %4976 = vmatpush1.msra.mxu0 %v4940
    %4977 = vmatprep.subr.mxu0 0.0
    %4978 = vmatpush2.msra.mxu0 0.0
    %4979 = vmatprep.subr.mxu0 0.0
    %4980 = vmatpush2.msra.mxu0 0.0
    %4981 = vmatprep.subr.mxu0 0.0
    %4982 = vmatpush2.msra.mxu0 0.0
    %4983 = vmatprep.subr.mxu0 0.0
    %4984 = vmatpush2.msra.mxu0 0.0
    %4985 = vmatprep.subr.mxu0 0.0
    %4986 = vmatpush2.msra.mxu0 0.0
    %4987 = vmatprep.subr.mxu0 0.0
    %4988 = vmatpush2.msra.mxu0 0.0
    %4989 = vmatprep.subr.mxu0 0.0
    %4990 = vmatpush2.msra.mxu0 0.0
    %4991 = vmatprep.subr.mxu0 0.0
    %4992 = vmatpush2.msra.mxu0 0.0
    %4993 = vmatprep.subr.mxu0 0.0
    %4994 = vmatpush2.msra.mxu0 0.0
    %4995 = vmatprep.subr.mxu0 0.0
    %4996 = vmatpush2.msra.mxu0 0.0
    %4997 = vmatprep.subr.mxu0 0.0
    %4998 = vmatpush2.msra.mxu0 0.0
    %4999 = vmatprep.subr.mxu0 0.0
    %5000 = vmatpush2.msra.mxu0 0.0
    %5001 = vmatprep.subr.mxu0 0.0
    %5002 = vmatpush2.msra.mxu0 0.0
    %5003 = vmatprep.subr.mxu0 0.0
    %5004 = vmatpush2.msra.mxu0 0.0
    %5005 = vmatprep.subr.mxu0 0.0
    %5006 = vmatpush2.msra.mxu0 0.0
    %5007 = vmatprep.subr.mxu0 0.0
    %5008 = vmatpush2.msra.mxu0 0.0
    %5009 = vmatprep.mubr.f32.mxu0 0.0
    %5010 = vmatmul.mubr.f32.gmra.mxu0 %v4943
    %v5011 = vpop.f32.mrf.mxu0
    %v5012 = vadd.f32 0.0, %v5011
    %v5013 = vpop.f32.mrf.mxu0
    %5014 = vdwg.mxu0
    %5015 = vrot.lane.b32.xlu0 %v3990, 112
    %v5016 = vpop.permute.xlu0 %5015
    %5017 = vrot.lane.b32.xlu0 %v3990, 80
    %v5018 = vpop.permute.xlu0 %5017
    %v5019 = vsel %vm373, %v5016, 0
    %v5021 = vsel %vm373, %v5018, 0
    %5023 = vmatprep.subr.mxu0 0.0
    %5024 = vmatpush1.xpose.msra.mxu0 0.0
    %5025 = vmatprep.subr.mxu0 0.0
    %5026 = vmatpush1.xpose.msra.mxu0 0.0
    %5027 = vmatprep.subr.mxu0 0.0
    %5028 = vmatpush1.xpose.msra.mxu0 0.0
    %5029 = vmatprep.subr.mxu0 0.0
    %5030 = vmatpush1.xpose.msra.mxu0 0.0
    %5031 = vmatprep.subr.mxu0 0.0
    %5032 = vmatpush1.xpose.msra.mxu0 0.0
    %5033 = vmatprep.subr.mxu0 0.0
    %5034 = vmatpush1.xpose.msra.mxu0 0.0
    %5035 = vmatprep.subr.mxu0 0.0
    %5036 = vmatpush1.xpose.msra.mxu0 0.0
    %5037 = vmatprep.subr.mxu0 0.0
    %5038 = vmatpush1.xpose.msra.mxu0 0.0
    %5039 = vmatprep.subr.mxu0 0.0
    %5040 = vmatpush1.xpose.msra.mxu0 0.0
    %5041 = vmatprep.subr.mxu0 0.0
    %5042 = vmatpush1.xpose.msra.mxu0 0.0
    %5043 = vmatprep.subr.mxu0 0.0
    %5044 = vmatpush1.xpose.msra.mxu0 0.0
    %5045 = vmatprep.subr.mxu0 0.0
    %5046 = vmatpush1.xpose.msra.mxu0 0.0
    %5047 = vmatprep.subr.mxu0 0.0
    %5048 = vmatpush1.xpose.msra.mxu0 0.0
    %5049 = vmatprep.subr.mxu0 0.0
    %5050 = vmatpush1.xpose.msra.mxu0 0.0
    %5051 = vmatprep.subr.mxu0 0.0
    %5052 = vmatpush1.xpose.msra.mxu0 0.0
    %5053 = vmatprep.subr.mxu0 0.0
    %5054 = vmatpush1.xpose.msra.mxu0 %v5021
    %5055 = vmatprep.subr.mxu0 0.0
    %5056 = vmatpush2.xpose.msra.mxu0 0.0
    %5057 = vmatprep.subr.mxu0 0.0
    %5058 = vmatpush2.xpose.msra.mxu0 0.0
    %5059 = vmatprep.subr.mxu0 0.0
    %5060 = vmatpush2.xpose.msra.mxu0 0.0
    %5061 = vmatprep.subr.mxu0 0.0
    %5062 = vmatpush2.xpose.msra.mxu0 0.0
    %5063 = vmatprep.subr.mxu0 0.0
    %5064 = vmatpush2.xpose.msra.mxu0 0.0
    %5065 = vmatprep.subr.mxu0 0.0
    %5066 = vmatpush2.xpose.msra.mxu0 0.0
    %5067 = vmatprep.subr.mxu0 0.0
    %5068 = vmatpush2.xpose.msra.mxu0 0.0
    %5069 = vmatprep.subr.mxu0 0.0
    %5070 = vmatpush2.xpose.msra.mxu0 0.0
    %5071 = vmatprep.subr.mxu0 0.0
    %5072 = vmatpush2.xpose.msra.mxu0 0.0
    %5073 = vmatprep.subr.mxu0 0.0
    %5074 = vmatpush2.xpose.msra.mxu0 0.0
    %5075 = vmatprep.subr.mxu0 0.0
    %5076 = vmatpush2.xpose.msra.mxu0 0.0
    %5077 = vmatprep.subr.mxu0 0.0
    %5078 = vmatpush2.xpose.msra.mxu0 0.0
    %5079 = vmatprep.subr.mxu0 0.0
    %5080 = vmatpush2.xpose.msra.mxu0 0.0
    %5081 = vmatprep.subr.mxu0 0.0
    %5082 = vmatpush2.xpose.msra.mxu0 0.0
    %5083 = vmatprep.subr.mxu0 0.0
    %5084 = vmatpush2.xpose.msra.mxu0 0.0
    %5085 = vmatprep.subr.mxu0 0.0
    %5086 = vmatpush2.xpose.msra.mxu0 0.0
    %5087 = vmatprep.mubr.f32.mxu0 0.0
    %5088 = vmatmul.mubr.f32.gmra.mxu0 %v5019
    %v5089 = vpop.f32.mrf.mxu0
    %v5090 = vadd.f32 0.0, %v5089
    %v5091 = vpop.f32.mrf.mxu0
    %5092 = vdwg.mxu0
    %v5093 = vmul.f32 %v5090, 0.35355338
    %v5094 = vadd.f32 %v5093, %v215
    %v5095 = vsel %vm373, %v5094, -inf
    %5096 = vmax.xlane.f32.xlu0 %v5095
    %v5097 = vpop.xlane.xlu0 %5096
    %v5098 = vsub.f32 %v5094, %v5097
    %v5099 = vmul.f32 %v5098, 1.442695
    %v5100 = vpow.pop %v5099
    %v5101 = vsel %vm373, %v5100, 0.0
    %5102 = vadd.xlane.f32.xlu0 %v5101
    %v5103 = vpop.xlane.xlu0 %5102
    %v5104 = vrcp.pop %v5103
    %v5105 = vmul.f32 %v5100, %v5104
    %5106 = vrot.lane.b32.xlu0 %v3990, 48
    %v5107 = vpop.permute.xlu0 %5106
    %v5110 = vsel %vm373, %v5105, 0
    %5112 = vmatprep.subr.mxu0 0.0
    %5113 = vmatpush1.msra.mxu0 0.0
    %5114 = vmatprep.subr.mxu0 0.0
    %5115 = vmatpush1.msra.mxu0 0.0
    %5116 = vmatprep.subr.mxu0 0.0
    %5117 = vmatpush1.msra.mxu0 0.0
    %5118 = vmatprep.subr.mxu0 0.0
    %5119 = vmatpush1.msra.mxu0 0.0
    %5120 = vmatprep.subr.mxu0 0.0
    %5121 = vmatpush1.msra.mxu0 0.0
    %5122 = vmatprep.subr.mxu0 0.0
    %5123 = vmatpush1.msra.mxu0 0.0
    %5124 = vmatprep.subr.mxu0 0.0
    %5125 = vmatpush1.msra.mxu0 0.0
    %5126 = vmatprep.subr.mxu0 0.0
    %5127 = vmatpush1.msra.mxu0 0.0
    %5128 = vmatprep.subr.mxu0 0.0
    %5129 = vmatpush1.msra.mxu0 0.0
    %5130 = vmatprep.subr.mxu0 0.0
    %5131 = vmatpush1.msra.mxu0 0.0
    %5132 = vmatprep.subr.mxu0 0.0
    %5133 = vmatpush1.msra.mxu0 0.0
    %5134 = vmatprep.subr.mxu0 0.0
    %5135 = vmatpush1.msra.mxu0 0.0
    %5136 = vmatprep.subr.mxu0 0.0
    %5137 = vmatpush1.msra.mxu0 0.0
    %5138 = vmatprep.subr.mxu0 0.0
    %5139 = vmatpush1.msra.mxu0 0.0
    %5140 = vmatprep.subr.mxu0 0.0
    %5141 = vmatpush1.msra.mxu0 0.0
    %5142 = vmatprep.subr.mxu0 0.0
    %5143 = vmatpush1.msra.mxu0 %v5107
    %5144 = vmatprep.subr.mxu0 0.0
    %5145 = vmatpush2.msra.mxu0 0.0
    %5146 = vmatprep.subr.mxu0 0.0
    %5147 = vmatpush2.msra.mxu0 0.0
    %5148 = vmatprep.subr.mxu0 0.0
    %5149 = vmatpush2.msra.mxu0 0.0
    %5150 = vmatprep.subr.mxu0 0.0
    %5151 = vmatpush2.msra.mxu0 0.0
    %5152 = vmatprep.subr.mxu0 0.0
    %5153 = vmatpush2.msra.mxu0 0.0
    %5154 = vmatprep.subr.mxu0 0.0
    %5155 = vmatpush2.msra.mxu0 0.0
    %5156 = vmatprep.subr.mxu0 0.0
    %5157 = vmatpush2.msra.mxu0 0.0
    %5158 = vmatprep.subr.mxu0 0.0
    %5159 = vmatpush2.msra.mxu0 0.0
    %5160 = vmatprep.subr.mxu0 0.0
    %5161 = vmatpush2.msra.mxu0 0.0
    %5162 = vmatprep.subr.mxu0 0.0
    %5163 = vmatpush2.msra.mxu0 0.0
    %5164 = vmatprep.subr.mxu0 0.0
    %5165 = vmatpush2.msra.mxu0 0.0
    %5166 = vmatprep.subr.mxu0 0.0
    %5167 = vmatpush2.msra.mxu0 0.0
    %5168 = vmatprep.subr.mxu0 0.0
    %5169 = vmatpush2.msra.mxu0 0.0
    %5170 = vmatprep.subr.mxu0 0.0
    %5171 = vmatpush2.msra.mxu0 0.0
    %5172 = vmatprep.subr.mxu0 0.0
    %5173 = vmatpush2.msra.mxu0 0.0
    %5174 = vmatprep.subr.mxu0 0.0
    %5175 = vmatpush2.msra.mxu0 0.0
    %5176 = vmatprep.mubr.f32.mxu0 0.0
    %5177 = vmatmul.mubr.f32.gmra.mxu0 %v5110
    %v5178 = vpop.f32.mrf.mxu0
    %v5179 = vadd.f32 0.0, %v5178
    %v5180 = vpop.f32.mrf.mxu0
    %5181 = vdwg.mxu0
    %5182 = vrot.lane.b32.xlu0 %v3990, 104
    %v5183 = vpop.permute.xlu0 %5182
    %5184 = vrot.lane.b32.xlu0 %v3990, 72
    %v5185 = vpop.permute.xlu0 %5184
    %v5186 = vsel %vm373, %v5183, 0
    %v5188 = vsel %vm373, %v5185, 0
    %5190 = vmatprep.subr.mxu0 0.0
    %5191 = vmatpush1.xpose.msra.mxu0 0.0
    %5192 = vmatprep.subr.mxu0 0.0
    %5193 = vmatpush1.xpose.msra.mxu0 0.0
    %5194 = vmatprep.subr.mxu0 0.0
    %5195 = vmatpush1.xpose.msra.mxu0 0.0
    %5196 = vmatprep.subr.mxu0 0.0
    %5197 = vmatpush1.xpose.msra.mxu0 0.0
    %5198 = vmatprep.subr.mxu0 0.0
    %5199 = vmatpush1.xpose.msra.mxu0 0.0
    %5200 = vmatprep.subr.mxu0 0.0
    %5201 = vmatpush1.xpose.msra.mxu0 0.0
    %5202 = vmatprep.subr.mxu0 0.0
    %5203 = vmatpush1.xpose.msra.mxu0 0.0
    %5204 = vmatprep.subr.mxu0 0.0
    %5205 = vmatpush1.xpose.msra.mxu0 0.0
    %5206 = vmatprep.subr.mxu0 0.0
    %5207 = vmatpush1.xpose.msra.mxu0 0.0
    %5208 = vmatprep.subr.mxu0 0.0
    %5209 = vmatpush1.xpose.msra.mxu0 0.0
    %5210 = vmatprep.subr.mxu0 0.0
    %5211 = vmatpush1.xpose.msra.mxu0 0.0
    %5212 = vmatprep.subr.mxu0 0.0
    %5213 = vmatpush1.xpose.msra.mxu0 0.0
    %5214 = vmatprep.subr.mxu0 0.0
    %5215 = vmatpush1.xpose.msra.mxu0 0.0
    %5216 = vmatprep.subr.mxu0 0.0
    %5217 = vmatpush1.xpose.msra.mxu0 0.0
    %5218 = vmatprep.subr.mxu0 0.0
    %5219 = vmatpush1.xpose.msra.mxu0 0.0
    %5220 = vmatprep.subr.mxu0 0.0
    %5221 = vmatpush1.xpose.msra.mxu0 %v5188
    %5222 = vmatprep.subr.mxu0 0.0
    %5223 = vmatpush2.xpose.msra.mxu0 0.0
    %5224 = vmatprep.subr.mxu0 0.0
    %5225 = vmatpush2.xpose.msra.mxu0 0.0
    %5226 = vmatprep.subr.mxu0 0.0
    %5227 = vmatpush2.xpose.msra.mxu0 0.0
    %5228 = vmatprep.subr.mxu0 0.0
    %5229 = vmatpush2.xpose.msra.mxu0 0.0
    %5230 = vmatprep.subr.mxu0 0.0
    %5231 = vmatpush2.xpose.msra.mxu0 0.0
    %5232 = vmatprep.subr.mxu0 0.0
    %5233 = vmatpush2.xpose.msra.mxu0 0.0
    %5234 = vmatprep.subr.mxu0 0.0
    %5235 = vmatpush2.xpose.msra.mxu0 0.0
    %5236 = vmatprep.subr.mxu0 0.0
    %5237 = vmatpush2.xpose.msra.mxu0 0.0
    %5238 = vmatprep.subr.mxu0 0.0
    %5239 = vmatpush2.xpose.msra.mxu0 0.0
    %5240 = vmatprep.subr.mxu0 0.0
    %5241 = vmatpush2.xpose.msra.mxu0 0.0
    %5242 = vmatprep.subr.mxu0 0.0
    %5243 = vmatpush2.xpose.msra.mxu0 0.0
    %5244 = vmatprep.subr.mxu0 0.0
    %5245 = vmatpush2.xpose.msra.mxu0 0.0
    %5246 = vmatprep.subr.mxu0 0.0
    %5247 = vmatpush2.xpose.msra.mxu0 0.0
    %5248 = vmatprep.subr.mxu0 0.0
    %5249 = vmatpush2.xpose.msra.mxu0 0.0
    %5250 = vmatprep.subr.mxu0 0.0
    %5251 = vmatpush2.xpose.msra.mxu0 0.0
    %5252 = vmatprep.subr.mxu0 0.0
    %5253 = vmatpush2.xpose.msra.mxu0 0.0
    %5254 = vmatprep.mubr.f32.mxu0 0.0
    %5255 = vmatmul.mubr.f32.gmra.mxu0 %v5186
    %v5256 = vpop.f32.mrf.mxu0
    %v5257 = vadd.f32 0.0, %v5256
    %v5258 = vpop.f32.mrf.mxu0
    %5259 = vdwg.mxu0
    %v5260 = vmul.f32 %v5257, 0.35355338
    %v5261 = vadd.f32 %v5260, %v215
    %v5262 = vsel %vm373, %v5261, -inf
    %5263 = vmax.xlane.f32.xlu0 %v5262
    %v5264 = vpop.xlane.xlu0 %5263
    %v5265 = vsub.f32 %v5261, %v5264
    %v5266 = vmul.f32 %v5265, 1.442695
    %v5267 = vpow.pop %v5266
    %v5268 = vsel %vm373, %v5267, 0.0
    %5269 = vadd.xlane.f32.xlu0 %v5268
    %v5270 = vpop.xlane.xlu0 %5269
    %v5271 = vrcp.pop %v5270
    %v5272 = vmul.f32 %v5267, %v5271
    %5273 = vrot.lane.b32.xlu0 %v3990, 40
    %v5274 = vpop.permute.xlu0 %5273
    %v5277 = vsel %vm373, %v5272, 0
    %5279 = vmatprep.subr.mxu0 0.0
    %5280 = vmatpush1.msra.mxu0 0.0
    %5281 = vmatprep.subr.mxu0 0.0
    %5282 = vmatpush1.msra.mxu0 0.0
    %5283 = vmatprep.subr.mxu0 0.0
    %5284 = vmatpush1.msra.mxu0 0.0
    %5285 = vmatprep.subr.mxu0 0.0
    %5286 = vmatpush1.msra.mxu0 0.0
    %5287 = vmatprep.subr.mxu0 0.0
    %5288 = vmatpush1.msra.mxu0 0.0
    %5289 = vmatprep.subr.mxu0 0.0
    %5290 = vmatpush1.msra.mxu0 0.0
    %5291 = vmatprep.subr.mxu0 0.0
    %5292 = vmatpush1.msra.mxu0 0.0
    %5293 = vmatprep.subr.mxu0 0.0
    %5294 = vmatpush1.msra.mxu0 0.0
    %5295 = vmatprep.subr.mxu0 0.0
    %5296 = vmatpush1.msra.mxu0 0.0
    %5297 = vmatprep.subr.mxu0 0.0
    %5298 = vmatpush1.msra.mxu0 0.0
    %5299 = vmatprep.subr.mxu0 0.0
    %5300 = vmatpush1.msra.mxu0 0.0
    %5301 = vmatprep.subr.mxu0 0.0
    %5302 = vmatpush1.msra.mxu0 0.0
    %5303 = vmatprep.subr.mxu0 0.0
    %5304 = vmatpush1.msra.mxu0 0.0
    %5305 = vmatprep.subr.mxu0 0.0
    %5306 = vmatpush1.msra.mxu0 0.0
    %5307 = vmatprep.subr.mxu0 0.0
    %5308 = vmatpush1.msra.mxu0 0.0
    %5309 = vmatprep.subr.mxu0 0.0
    %5310 = vmatpush1.msra.mxu0 %v5274
    %5311 = vmatprep.subr.mxu0 0.0
    %5312 = vmatpush2.msra.mxu0 0.0
    %5313 = vmatprep.subr.mxu0 0.0
    %5314 = vmatpush2.msra.mxu0 0.0
    %5315 = vmatprep.subr.mxu0 0.0
    %5316 = vmatpush2.msra.mxu0 0.0
    %5317 = vmatprep.subr.mxu0 0.0
    %5318 = vmatpush2.msra.mxu0 0.0
    %5319 = vmatprep.subr.mxu0 0.0
    %5320 = vmatpush2.msra.mxu0 0.0
    %5321 = vmatprep.subr.mxu0 0.0
    %5322 = vmatpush2.msra.mxu0 0.0
    %5323 = vmatprep.subr.mxu0 0.0
    %5324 = vmatpush2.msra.mxu0 0.0
    %5325 = vmatprep.subr.mxu0 0.0
    %5326 = vmatpush2.msra.mxu0 0.0
    %5327 = vmatprep.subr.mxu0 0.0
    %5328 = vmatpush2.msra.mxu0 0.0
    %5329 = vmatprep.subr.mxu0 0.0
    %5330 = vmatpush2.msra.mxu0 0.0
    %5331 = vmatprep.subr.mxu0 0.0
    %5332 = vmatpush2.msra.mxu0 0.0
    %5333 = vmatprep.subr.mxu0 0.0
    %5334 = vmatpush2.msra.mxu0 0.0
    %5335 = vmatprep.subr.mxu0 0.0
    %5336 = vmatpush2.msra.mxu0 0.0
    %5337 = vmatprep.subr.mxu0 0.0
    %5338 = vmatpush2.msra.mxu0 0.0
    %5339 = vmatprep.subr.mxu0 0.0
    %5340 = vmatpush2.msra.mxu0 0.0
    %5341 = vmatprep.subr.mxu0 0.0
    %5342 = vmatpush2.msra.mxu0 0.0
    %5343 = vmatprep.mubr.f32.mxu0 0.0
    %5344 = vmatmul.mubr.f32.gmra.mxu0 %v5277
    %v5345 = vpop.f32.mrf.mxu0
    %v5346 = vadd.f32 0.0, %v5345
    %v5347 = vpop.f32.mrf.mxu0
    %5348 = vdwg.mxu0
    %5350 = vrot.lane.b32.xlu0 %v5012, 8
    %v5351 = vpop.permute.xlu0 %5350
    %5354 = vrot.lane.b32.xlu0 %v5179, 16
    %v5355 = vpop.permute.xlu0 %5354
    %5358 = vrot.lane.b32.xlu0 %v5346, 24
    %v5359 = vpop.permute.xlu0 %5358
    %v5361 = vsel %vm373, %v4845, %v5351
    %v5362 = vsel %vm1051, %v5361, %v5355
    %v5363 = vsel %vm1053, %v5362, %v5359
    %v5365 = vlaneseq
    %v5366 = vshrl.u32 %v5365, 7
    %v5367 = vsub.s32 0, %v5366
    %v5368 = vrot.slane %v3999, %v5367
    %v5371 = vsel %vm219, %v4681, 0
    %v5374 = vsel %vm219, %v5363, 0
    %5376 = vmatprep.subr.mxu0 0.0
    %5377 = vmatpush1.msra.mxu0 0.0
    %5378 = vmatprep.subr.mxu0 0.0
    %5379 = vmatpush1.msra.mxu0 0.0
    %5380 = vmatprep.subr.mxu0 0.0
    %5381 = vmatpush1.msra.mxu0 0.0
    %5382 = vmatprep.subr.mxu0 0.0
    %5383 = vmatpush1.msra.mxu0 0.0
    %5384 = vmatprep.subr.mxu0 0.0
    %5385 = vmatpush1.msra.mxu0 0.0
    %5386 = vmatprep.subr.mxu0 0.0
    %5387 = vmatpush1.msra.mxu0 0.0
    %5388 = vmatprep.subr.mxu0 0.0
    %5389 = vmatpush1.msra.mxu0 0.0
    %5390 = vmatprep.subr.mxu0 0.0
    %5391 = vmatpush1.msra.mxu0 0.0
    %5392 = vmatprep.subr.mxu0 0.0
    %5393 = vmatpush1.msra.mxu0 0.0
    %5394 = vmatprep.subr.mxu0 0.0
    %5395 = vmatpush1.msra.mxu0 0.0
    %5396 = vmatprep.subr.mxu0 0.0
    %5397 = vmatpush1.msra.mxu0 0.0
    %5398 = vmatprep.subr.mxu0 0.0
    %5399 = vmatpush1.msra.mxu0 0.0
    %5400 = vmatprep.subr.mxu0 0.0
    %5401 = vmatpush1.msra.mxu0 %v3997
    %5402 = vmatprep.subr.mxu0 0.0
    %5403 = vmatpush1.msra.mxu0 %v3996
    %5404 = vmatprep.subr.mxu0 0.0
    %5405 = vmatpush1.msra.mxu0 %v3995
    %5406 = vmatprep.subr.mxu0 0.0
    %5407 = vmatpush1.msra.mxu0 %v3994
    %5408 = vmatprep.subr.mxu0 0.0
    %5409 = vmatpush2.msra.mxu0 0.0
    %5410 = vmatprep.subr.mxu0 0.0
    %5411 = vmatpush2.msra.mxu0 0.0
    %5412 = vmatprep.subr.mxu0 0.0
    %5413 = vmatpush2.msra.mxu0 0.0
    %5414 = vmatprep.subr.mxu0 0.0
    %5415 = vmatpush2.msra.mxu0 0.0
    %5416 = vmatprep.subr.mxu0 0.0
    %5417 = vmatpush2.msra.mxu0 0.0
    %5418 = vmatprep.subr.mxu0 0.0
    %5419 = vmatpush2.msra.mxu0 0.0
    %5420 = vmatprep.subr.mxu0 0.0
    %5421 = vmatpush2.msra.mxu0 0.0
    %5422 = vmatprep.subr.mxu0 0.0
    %5423 = vmatpush2.msra.mxu0 0.0
    %5424 = vmatprep.subr.mxu0 0.0
    %5425 = vmatpush2.msra.mxu0 0.0
    %5426 = vmatprep.subr.mxu0 0.0
    %5427 = vmatpush2.msra.mxu0 0.0
    %5428 = vmatprep.subr.mxu0 0.0
    %5429 = vmatpush2.msra.mxu0 0.0
    %5430 = vmatprep.subr.mxu0 0.0
    %5431 = vmatpush2.msra.mxu0 0.0
    %5432 = vmatprep.subr.mxu0 0.0
    %5433 = vmatpush2.msra.mxu0 0.0
    %5434 = vmatprep.subr.mxu0 0.0
    %5435 = vmatpush2.msra.mxu0 0.0
    %5436 = vmatprep.subr.mxu0 0.0
    %5437 = vmatpush2.msra.mxu0 0.0
    %5438 = vmatprep.subr.mxu0 0.0
    %5439 = vmatpush2.msra.mxu0 0.0
    %5440 = vmatprep.mubr.f32.mxu0 0.0
    %5441 = vmatmul.mubr.f32.gmra.mxu0 %v5371
    %v5442 = vpop.f32.mrf.mxu0
    %v5443 = vadd.f32 %v5368, %v5442
    %v5444 = vpop.f32.mrf.mxu0
    %5445 = vmatprep.mubr.f32.mxu0 0.0
    %5446 = vmatmul.mubr.f32.gmra.mxu0 %v5374
    %v5447 = vpop.f32.mrf.mxu0
    %v5448 = vadd.f32 %v5368, %v5447
    %v5449 = vpop.f32.mrf.mxu0
    %5450 = vdwg.mxu0
    %v5451 = vadd.f32 %v3841, %v5443
    %v5452 = vadd.f32 %v3842, %v5448
    %v5453 = vsel %vm219, %v5451, 0.0
    %5454 = vadd.xlane.f32.xlu0 %v5453
    %v5455 = vpop.xlane.xlu0 %5454
    %v5456 = vsel %vm219, %v5452, 0.0
    %5457 = vadd.xlane.f32.xlu0 %v5456
    %v5458 = vpop.xlane.xlu0 %5457
    %v5459 = vmul.f32 %v5455, %v226
    %v5460 = vmul.f32 %v5458, %v226
    %v5461 = vsub.f32 %v5451, %v5459
    %v5462 = vsub.f32 %v5452, %v5460
    %v5463 = vmul.f32 %v5461, %v5461
    %v5464 = vmul.f32 %v5462, %v5462
    %v5465 = vsel %vm219, %v5463, 0.0
    %5466 = vadd.xlane.f32.xlu0 %v5465
    %v5467 = vpop.xlane.xlu0 %5466
    %v5468 = vsel %vm219, %v5464, 0.0
    %5469 = vadd.xlane.f32.xlu0 %v5468
    %v5470 = vpop.xlane.xlu0 %5469
    %v5471 = vmul.f32 %v5467, 0.032258064
    %v5472 = vmul.f32 %v5470, 0.032258064
    %v5473 = vrsqrt.pop %v5471
    %v5474 = vmul.f32 %v5471, %v5473
    %vm5475 = vcmp.eq.f32.partialorder %v5471, inf
    %v5476 = vsel %vm5475, %v5471, %v5474
    %vm5477 = vcmp.eq.f32.partialorder %v5471, 0.0
    %v5478 = vand.u32 %v5471, 2147483648
    %v5479 = vsel %vm5477, %v5478, %v5476
    %v5480 = vrsqrt.pop %v5472
    %v5481 = vmul.f32 %v5472, %v5480
    %vm5482 = vcmp.eq.f32.partialorder %v5472, inf
    %v5483 = vsel %vm5482, %v5472, %v5481
    %vm5484 = vcmp.eq.f32.partialorder %v5472, 0.0
    %v5485 = vand.u32 %v5472, 2147483648
    %v5486 = vsel %vm5484, %v5485, %v5483
    %v5487 = vadd.f32 %v5479, 1e-06
    %v5488 = vadd.f32 %v5486, 1e-06
    %v5489 = vrcp.pop %v5487
    %v5490 = vrcp.pop %v5488
    %v5491 = vmul.f32 %v5461, %v5489
    %v5492 = vmul.f32 %v5462, %v5490
    %v5493 = vlaneseq
    %v5494 = vshrl.u32 %v5493, 7
    %v5495 = vsub.s32 1, %v5494
    %v5496 = vrot.slane %v3844, %v5495
    %v5497 = vmul.f32 %v5496, %v5491
    %v5498 = vmul.f32 %v5496, %v5492
    %v5499 = vlaneseq
    %v5500 = vshrl.u32 %v5499, 7
    %v5501 = vsub.s32 1, %v5500
    %v5502 = vrot.slane %v3846, %v5501
    %v5503 = vadd.f32 %v5497, %v5502
    %v5504 = vadd.f32 %v5498, %v5502
    %s5505 = scalar_lea.vmem %s10, 32
    %v5506 = vld [vmem:[%s5505] sm:$0xff]
    %v5507 = vld [vmem:[%s5505 + $0x8] sm:$0xff]
    %v5508 = vld [vmem:[%s5505 + $0x10] sm:$0xff]
    %v5509 = vld [vmem:[%s5505 + $0x18] sm:$0xff]
    %s5510 = scalar_lea.vmem [#allocation7], 1
    %v5511 = vld [vmem:[%s5510] sm:$0x1]
    %v5513 = vlaneseq
    %v5514 = vshrl.u32 %v5513, 7
    %v5515 = vsub.s32 0, %v5514
    %v5516 = vrot.slane %v5511, %v5515
    %v5519 = vsel %vm219, %v5503, 0
    %v5522 = vsel %vm219, %v5504, 0
    %5524 = vmatprep.subr.mxu0 0.0
    %5525 = vmatpush1.msra.mxu0 0.0
    %5526 = vmatprep.subr.mxu0 0.0
    %5527 = vmatpush1.msra.mxu0 0.0
    %5528 = vmatprep.subr.mxu0 0.0
    %5529 = vmatpush1.msra.mxu0 0.0
    %5530 = vmatprep.subr.mxu0 0.0
    %5531 = vmatpush1.msra.mxu0 0.0
    %5532 = vmatprep.subr.mxu0 0.0
    %5533 = vmatpush1.msra.mxu0 0.0
    %5534 = vmatprep.subr.mxu0 0.0
    %5535 = vmatpush1.msra.mxu0 0.0
    %5536 = vmatprep.subr.mxu0 0.0
    %5537 = vmatpush1.msra.mxu0 0.0
    %5538 = vmatprep.subr.mxu0 0.0
    %5539 = vmatpush1.msra.mxu0 0.0
    %5540 = vmatprep.subr.mxu0 0.0
    %5541 = vmatpush1.msra.mxu0 0.0
    %5542 = vmatprep.subr.mxu0 0.0
    %5543 = vmatpush1.msra.mxu0 0.0
    %5544 = vmatprep.subr.mxu0 0.0
    %5545 = vmatpush1.msra.mxu0 0.0
    %5546 = vmatprep.subr.mxu0 0.0
    %5547 = vmatpush1.msra.mxu0 0.0
    %5548 = vmatprep.subr.mxu0 0.0
    %5549 = vmatpush1.msra.mxu0 %v5509
    %5550 = vmatprep.subr.mxu0 0.0
    %5551 = vmatpush1.msra.mxu0 %v5508
    %5552 = vmatprep.subr.mxu0 0.0
    %5553 = vmatpush1.msra.mxu0 %v5507
    %5554 = vmatprep.subr.mxu0 0.0
    %5555 = vmatpush1.msra.mxu0 %v5506
    %5556 = vmatprep.subr.mxu0 0.0
    %5557 = vmatpush2.msra.mxu0 0.0
    %5558 = vmatprep.subr.mxu0 0.0
    %5559 = vmatpush2.msra.mxu0 0.0
    %5560 = vmatprep.subr.mxu0 0.0
    %5561 = vmatpush2.msra.mxu0 0.0
    %5562 = vmatprep.subr.mxu0 0.0
    %5563 = vmatpush2.msra.mxu0 0.0
    %5564 = vmatprep.subr.mxu0 0.0
    %5565 = vmatpush2.msra.mxu0 0.0
    %5566 = vmatprep.subr.mxu0 0.0
    %5567 = vmatpush2.msra.mxu0 0.0
    %5568 = vmatprep.subr.mxu0 0.0
    %5569 = vmatpush2.msra.mxu0 0.0
    %5570 = vmatprep.subr.mxu0 0.0
    %5571 = vmatpush2.msra.mxu0 0.0
    %5572 = vmatprep.subr.mxu0 0.0
    %5573 = vmatpush2.msra.mxu0 0.0
    %5574 = vmatprep.subr.mxu0 0.0
    %5575 = vmatpush2.msra.mxu0 0.0
    %5576 = vmatprep.subr.mxu0 0.0
    %5577 = vmatpush2.msra.mxu0 0.0
    %5578 = vmatprep.subr.mxu0 0.0
    %5579 = vmatpush2.msra.mxu0 0.0
    %5580 = vmatprep.subr.mxu0 0.0
    %5581 = vmatpush2.msra.mxu0 0.0
    %5582 = vmatprep.subr.mxu0 0.0
    %5583 = vmatpush2.msra.mxu0 0.0
    %5584 = vmatprep.subr.mxu0 0.0
    %5585 = vmatpush2.msra.mxu0 0.0
    %5586 = vmatprep.subr.mxu0 0.0
    %5587 = vmatpush2.msra.mxu0 0.0
    %5588 = vmatprep.mubr.f32.mxu0 0.0
    %5589 = vmatmul.mubr.f32.gmra.mxu0 %v5519
    %v5590 = vpop.f32.mrf.mxu0
    %v5591 = vadd.f32 %v5516, %v5590
    %v5592 = vpop.f32.mrf.mxu0
    %5593 = vmatprep.mubr.f32.mxu0 0.0
    %5594 = vmatmul.mubr.f32.gmra.mxu0 %v5522
    %v5595 = vpop.f32.mrf.mxu0
    %v5596 = vadd.f32 %v5516, %v5595
    %v5597 = vpop.f32.mrf.mxu0
    %5598 = vdwg.mxu0
    %s5599 = scalar_lea.vmem [#allocation8], 32
    %v5600 = vld [vmem:[%s5599] sm:$0xff]
    %v5601 = vld [vmem:[%s5599 + $0x8] sm:$0xff]
    %v5602 = vld [vmem:[%s5599 + $0x10] sm:$0xff]
    %v5603 = vld [vmem:[%s5599 + $0x18] sm:$0xff]
    %s5604 = scalar_lea.vmem [#allocation10], 1
    %v5605 = vld [vmem:[%s5604] sm:$0x1]
    %v5607 = vlaneseq
    %v5608 = vshrl.u32 %v5607, 7
    %v5609 = vsub.s32 0, %v5608
    %v5610 = vrot.slane %v5605, %v5609
    %5612 = vmatprep.subr.mxu0 0.0
    %5613 = vmatpush1.msra.mxu0 0.0
    %5614 = vmatprep.subr.mxu0 0.0
    %5615 = vmatpush1.msra.mxu0 0.0
    %5616 = vmatprep.subr.mxu0 0.0
    %5617 = vmatpush1.msra.mxu0 0.0
    %5618 = vmatprep.subr.mxu0 0.0
    %5619 = vmatpush1.msra.mxu0 0.0
    %5620 = vmatprep.subr.mxu0 0.0
    %5621 = vmatpush1.msra.mxu0 0.0
    %5622 = vmatprep.subr.mxu0 0.0
    %5623 = vmatpush1.msra.mxu0 0.0
    %5624 = vmatprep.subr.mxu0 0.0
    %5625 = vmatpush1.msra.mxu0 0.0
    %5626 = vmatprep.subr.mxu0 0.0
    %5627 = vmatpush1.msra.mxu0 0.0
    %5628 = vmatprep.subr.mxu0 0.0
    %5629 = vmatpush1.msra.mxu0 0.0
    %5630 = vmatprep.subr.mxu0 0.0
    %5631 = vmatpush1.msra.mxu0 0.0
    %5632 = vmatprep.subr.mxu0 0.0
    %5633 = vmatpush1.msra.mxu0 0.0
    %5634 = vmatprep.subr.mxu0 0.0
    %5635 = vmatpush1.msra.mxu0 0.0
    %5636 = vmatprep.subr.mxu0 0.0
    %5637 = vmatpush1.msra.mxu0 %v5603
    %5638 = vmatprep.subr.mxu0 0.0
    %5639 = vmatpush1.msra.mxu0 %v5602
    %5640 = vmatprep.subr.mxu0 0.0
    %5641 = vmatpush1.msra.mxu0 %v5601
    %5642 = vmatprep.subr.mxu0 0.0
    %5643 = vmatpush1.msra.mxu0 %v5600
    %5644 = vmatprep.subr.mxu0 0.0
    %5645 = vmatpush2.msra.mxu0 0.0
    %5646 = vmatprep.subr.mxu0 0.0
    %5647 = vmatpush2.msra.mxu0 0.0
    %5648 = vmatprep.subr.mxu0 0.0
    %5649 = vmatpush2.msra.mxu0 0.0
    %5650 = vmatprep.subr.mxu0 0.0
    %5651 = vmatpush2.msra.mxu0 0.0
    %5652 = vmatprep.subr.mxu0 0.0
    %5653 = vmatpush2.msra.mxu0 0.0
    %5654 = vmatprep.subr.mxu0 0.0
    %5655 = vmatpush2.msra.mxu0 0.0
    %5656 = vmatprep.subr.mxu0 0.0
    %5657 = vmatpush2.msra.mxu0 0.0
    %5658 = vmatprep.subr.mxu0 0.0
    %5659 = vmatpush2.msra.mxu0 0.0
    %5660 = vmatprep.subr.mxu0 0.0
    %5661 = vmatpush2.msra.mxu0 0.0
    %5662 = vmatprep.subr.mxu0 0.0
    %5663 = vmatpush2.msra.mxu0 0.0
    %5664 = vmatprep.subr.mxu0 0.0
    %5665 = vmatpush2.msra.mxu0 0.0
    %5666 = vmatprep.subr.mxu0 0.0
    %5667 = vmatpush2.msra.mxu0 0.0
    %5668 = vmatprep.subr.mxu0 0.0
    %5669 = vmatpush2.msra.mxu0 0.0
    %5670 = vmatprep.subr.mxu0 0.0
    %5671 = vmatpush2.msra.mxu0 0.0
    %5672 = vmatprep.subr.mxu0 0.0
    %5673 = vmatpush2.msra.mxu0 0.0
    %5674 = vmatprep.subr.mxu0 0.0
    %5675 = vmatpush2.msra.mxu0 0.0
    %5676 = vmatprep.mubr.f32.mxu0 0.0
    %5677 = vmatmul.mubr.f32.gmra.mxu0 %v1982
    %v5678 = vpop.f32.mrf.mxu0
    %v5679 = vadd.f32 %v5610, %v5678
    %v5680 = vpop.f32.mrf.mxu0
    %5681 = vmatprep.mubr.f32.mxu0 0.0
    %5682 = vmatmul.mubr.f32.gmra.mxu0 %v1985
    %v5683 = vpop.f32.mrf.mxu0
    %v5684 = vadd.f32 %v5610, %v5683
    %v5685 = vpop.f32.mrf.mxu0
    %5686 = vmatprep.mubr.f32.mxu0 0.0
    %5687 = vmatmul.mubr.f32.gmra.mxu0 %v1988
    %v5688 = vpop.f32.mrf.mxu0
    %v5689 = vadd.f32 %v5610, %v5688
    %v5690 = vpop.f32.mrf.mxu0
    %5691 = vmatprep.mubr.f32.mxu0 0.0
    %5692 = vmatmul.mubr.f32.gmra.mxu0 %v1991
    %v5693 = vpop.f32.mrf.mxu0
    %v5694 = vadd.f32 %v5610, %v5693
    %v5695 = vpop.f32.mrf.mxu0
    %5696 = vdwg.mxu0
    %s5697 = scalar_lea.vmem [#allocation11], 32
    %v5698 = vld [vmem:[%s5697] sm:$0xff]
    %v5699 = vld [vmem:[%s5697 + $0x8] sm:$0xff]
    %v5700 = vld [vmem:[%s5697 + $0x10] sm:$0xff]
    %v5701 = vld [vmem:[%s5697 + $0x18] sm:$0xff]
    %s5702 = scalar_lea.vmem [#allocation13], 1
    %v5703 = vld [vmem:[%s5702] sm:$0x1]
    %v5705 = vsel %vm373, %v5591, 0
    %v5708 = vsel %vm373, %v5679, 0
    %v5711 = vsel %vm373, %v5684, 0
    %5713 = vmatprep.subr.mxu0 0.0
    %5714 = vmatpush1.xpose.msra.mxu0 0.0
    %5715 = vmatprep.subr.mxu0 0.0
    %5716 = vmatpush1.xpose.msra.mxu0 0.0
    %5717 = vmatprep.subr.mxu0 0.0
    %5718 = vmatpush1.xpose.msra.mxu0 0.0
    %5719 = vmatprep.subr.mxu0 0.0
    %5720 = vmatpush1.xpose.msra.mxu0 0.0
    %5721 = vmatprep.subr.mxu0 0.0
    %5722 = vmatpush1.xpose.msra.mxu0 0.0
    %5723 = vmatprep.subr.mxu0 0.0
    %5724 = vmatpush1.xpose.msra.mxu0 0.0
    %5725 = vmatprep.subr.mxu0 0.0
    %5726 = vmatpush1.xpose.msra.mxu0 0.0
    %5727 = vmatprep.subr.mxu0 0.0
    %5728 = vmatpush1.xpose.msra.mxu0 0.0
    %5729 = vmatprep.subr.mxu0 0.0
    %5730 = vmatpush1.xpose.msra.mxu0 0.0
    %5731 = vmatprep.subr.mxu0 0.0
    %5732 = vmatpush1.xpose.msra.mxu0 0.0
    %5733 = vmatprep.subr.mxu0 0.0
    %5734 = vmatpush1.xpose.msra.mxu0 0.0
    %5735 = vmatprep.subr.mxu0 0.0
    %5736 = vmatpush1.xpose.msra.mxu0 0.0
    %5737 = vmatprep.subr.mxu0 0.0
    %5738 = vmatpush1.xpose.msra.mxu0 0.0
    %5739 = vmatprep.subr.mxu0 0.0
    %5740 = vmatpush1.xpose.msra.mxu0 0.0
    %5741 = vmatprep.subr.mxu0 0.0
    %5742 = vmatpush1.xpose.msra.mxu0 %v5711
    %5743 = vmatprep.subr.mxu0 0.0
    %5744 = vmatpush1.xpose.msra.mxu0 %v5708
    %5745 = vmatprep.subr.mxu0 0.0
    %5746 = vmatpush2.xpose.msra.mxu0 0.0
    %5747 = vmatprep.subr.mxu0 0.0
    %5748 = vmatpush2.xpose.msra.mxu0 0.0
    %5749 = vmatprep.subr.mxu0 0.0
    %5750 = vmatpush2.xpose.msra.mxu0 0.0
    %5751 = vmatprep.subr.mxu0 0.0
    %5752 = vmatpush2.xpose.msra.mxu0 0.0
    %5753 = vmatprep.subr.mxu0 0.0
    %5754 = vmatpush2.xpose.msra.mxu0 0.0
    %5755 = vmatprep.subr.mxu0 0.0
    %5756 = vmatpush2.xpose.msra.mxu0 0.0
    %5757 = vmatprep.subr.mxu0 0.0
    %5758 = vmatpush2.xpose.msra.mxu0 0.0
    %5759 = vmatprep.subr.mxu0 0.0
    %5760 = vmatpush2.xpose.msra.mxu0 0.0
    %5761 = vmatprep.subr.mxu0 0.0
    %5762 = vmatpush2.xpose.msra.mxu0 0.0
    %5763 = vmatprep.subr.mxu0 0.0
    %5764 = vmatpush2.xpose.msra.mxu0 0.0
    %5765 = vmatprep.subr.mxu0 0.0
    %5766 = vmatpush2.xpose.msra.mxu0 0.0
    %5767 = vmatprep.subr.mxu0 0.0
    %5768 = vmatpush2.xpose.msra.mxu0 0.0
    %5769 = vmatprep.subr.mxu0 0.0
    %5770 = vmatpush2.xpose.msra.mxu0 0.0
    %5771 = vmatprep.subr.mxu0 0.0
    %5772 = vmatpush2.xpose.msra.mxu0 0.0
    %5773 = vmatprep.subr.mxu0 0.0
    %5774 = vmatpush2.xpose.msra.mxu0 0.0
    %5775 = vmatprep.subr.mxu0 0.0
    %5776 = vmatpush2.xpose.msra.mxu0 0.0
    %5777 = vmatprep.mubr.f32.mxu0 0.0
    %5778 = vmatmul.mubr.f32.gmra.mxu0 %v5705
    %v5779 = vpop.f32.mrf.mxu0
    %v5780 = vadd.f32 0.0, %v5779
    %v5781 = vpop.f32.mrf.mxu0
    %5782 = vdwg.mxu0
    %v5783 = vmul.f32 %v5780, 0.35355338
    %v5784 = vadd.f32 %v5783, %v2166
    %v5785 = vsel %vm1051, %v5784, -inf
    %5786 = vmax.xlane.f32.xlu0 %v5785
    %v5787 = vpop.xlane.xlu0 %5786
    %v5788 = vsub.f32 %v5784, %v5787
    %v5789 = vmul.f32 %v5788, 1.442695
    %v5790 = vpow.pop %v5789
    %v5791 = vsel %vm1051, %v5790, 0.0
    %5792 = vadd.xlane.f32.xlu0 %v5791
    %v5793 = vpop.xlane.xlu0 %5792
    %v5794 = vrcp.pop %v5793
    %v5795 = vmul.f32 %v5790, %v5794
    %5796 = vrot.lane.b32.xlu0 %v5679, 96
    %v5797 = vpop.permute.xlu0 %5796
    %5798 = vrot.lane.b32.xlu0 %v5684, 96
    %v5799 = vpop.permute.xlu0 %5798
    %v5803 = vsel %vm1051, %v5795, 0
    %5805 = vmatprep.subr.mxu0 0.0
    %5806 = vmatpush1.msra.mxu0 0.0
    %5807 = vmatprep.subr.mxu0 0.0
    %5808 = vmatpush1.msra.mxu0 0.0
    %5809 = vmatprep.subr.mxu0 0.0
    %5810 = vmatpush1.msra.mxu0 0.0
    %5811 = vmatprep.subr.mxu0 0.0
    %5812 = vmatpush1.msra.mxu0 0.0
    %5813 = vmatprep.subr.mxu0 0.0
    %5814 = vmatpush1.msra.mxu0 0.0
    %5815 = vmatprep.subr.mxu0 0.0
    %5816 = vmatpush1.msra.mxu0 0.0
    %5817 = vmatprep.subr.mxu0 0.0
    %5818 = vmatpush1.msra.mxu0 0.0
    %5819 = vmatprep.subr.mxu0 0.0
    %5820 = vmatpush1.msra.mxu0 0.0
    %5821 = vmatprep.subr.mxu0 0.0
    %5822 = vmatpush1.msra.mxu0 0.0
    %5823 = vmatprep.subr.mxu0 0.0
    %5824 = vmatpush1.msra.mxu0 0.0
    %5825 = vmatprep.subr.mxu0 0.0
    %5826 = vmatpush1.msra.mxu0 0.0
    %5827 = vmatprep.subr.mxu0 0.0
    %5828 = vmatpush1.msra.mxu0 0.0
    %5829 = vmatprep.subr.mxu0 0.0
    %5830 = vmatpush1.msra.mxu0 0.0
    %5831 = vmatprep.subr.mxu0 0.0
    %5832 = vmatpush1.msra.mxu0 0.0
    %5833 = vmatprep.subr.mxu0 0.0
    %5834 = vmatpush1.msra.mxu0 %v5799
    %5835 = vmatprep.subr.mxu0 0.0
    %5836 = vmatpush1.msra.mxu0 %v5797
    %5837 = vmatprep.subr.mxu0 0.0
    %5838 = vmatpush2.msra.mxu0 0.0
    %5839 = vmatprep.subr.mxu0 0.0
    %5840 = vmatpush2.msra.mxu0 0.0
    %5841 = vmatprep.subr.mxu0 0.0
    %5842 = vmatpush2.msra.mxu0 0.0
    %5843 = vmatprep.subr.mxu0 0.0
    %5844 = vmatpush2.msra.mxu0 0.0
    %5845 = vmatprep.subr.mxu0 0.0
    %5846 = vmatpush2.msra.mxu0 0.0
    %5847 = vmatprep.subr.mxu0 0.0
    %5848 = vmatpush2.msra.mxu0 0.0
    %5849 = vmatprep.subr.mxu0 0.0
    %5850 = vmatpush2.msra.mxu0 0.0
    %5851 = vmatprep.subr.mxu0 0.0
    %5852 = vmatpush2.msra.mxu0 0.0
    %5853 = vmatprep.subr.mxu0 0.0
    %5854 = vmatpush2.msra.mxu0 0.0
    %5855 = vmatprep.subr.mxu0 0.0
    %5856 = vmatpush2.msra.mxu0 0.0
    %5857 = vmatprep.subr.mxu0 0.0
    %5858 = vmatpush2.msra.mxu0 0.0
    %5859 = vmatprep.subr.mxu0 0.0
    %5860 = vmatpush2.msra.mxu0 0.0
    %5861 = vmatprep.subr.mxu0 0.0
    %5862 = vmatpush2.msra.mxu0 0.0
    %5863 = vmatprep.subr.mxu0 0.0
    %5864 = vmatpush2.msra.mxu0 0.0
    %5865 = vmatprep.subr.mxu0 0.0
    %5866 = vmatpush2.msra.mxu0 0.0
    %5867 = vmatprep.subr.mxu0 0.0
    %5868 = vmatpush2.msra.mxu0 0.0
    %5869 = vmatprep.mubr.f32.mxu0 0.0
    %5870 = vmatmul.mubr.f32.gmra.mxu0 %v5803
    %v5871 = vpop.f32.mrf.mxu0
    %v5872 = vadd.f32 0.0, %v5871
    %v5873 = vpop.f32.mrf.mxu0
    %5874 = vdwg.mxu0
    %5875 = vrot.lane.b32.xlu0 %v5591, 120
    %v5876 = vpop.permute.xlu0 %5875
    %5877 = vrot.lane.b32.xlu0 %v5679, 120
    %v5878 = vpop.permute.xlu0 %5877
    %5879 = vrot.lane.b32.xlu0 %v5684, 120
    %v5880 = vpop.permute.xlu0 %5879
    %v5881 = vsel %vm373, %v5876, 0
    %v5883 = vsel %vm373, %v5878, 0
    %v5885 = vsel %vm373, %v5880, 0
    %5887 = vmatprep.subr.mxu0 0.0
    %5888 = vmatpush1.xpose.msra.mxu0 0.0
    %5889 = vmatprep.subr.mxu0 0.0
    %5890 = vmatpush1.xpose.msra.mxu0 0.0
    %5891 = vmatprep.subr.mxu0 0.0
    %5892 = vmatpush1.xpose.msra.mxu0 0.0
    %5893 = vmatprep.subr.mxu0 0.0
    %5894 = vmatpush1.xpose.msra.mxu0 0.0
    %5895 = vmatprep.subr.mxu0 0.0
    %5896 = vmatpush1.xpose.msra.mxu0 0.0
    %5897 = vmatprep.subr.mxu0 0.0
    %5898 = vmatpush1.xpose.msra.mxu0 0.0
    %5899 = vmatprep.subr.mxu0 0.0
    %5900 = vmatpush1.xpose.msra.mxu0 0.0
    %5901 = vmatprep.subr.mxu0 0.0
    %5902 = vmatpush1.xpose.msra.mxu0 0.0
    %5903 = vmatprep.subr.mxu0 0.0
    %5904 = vmatpush1.xpose.msra.mxu0 0.0
    %5905 = vmatprep.subr.mxu0 0.0
    %5906 = vmatpush1.xpose.msra.mxu0 0.0
    %5907 = vmatprep.subr.mxu0 0.0
    %5908 = vmatpush1.xpose.msra.mxu0 0.0
    %5909 = vmatprep.subr.mxu0 0.0
    %5910 = vmatpush1.xpose.msra.mxu0 0.0
    %5911 = vmatprep.subr.mxu0 0.0
    %5912 = vmatpush1.xpose.msra.mxu0 0.0
    %5913 = vmatprep.subr.mxu0 0.0
    %5914 = vmatpush1.xpose.msra.mxu0 0.0
    %5915 = vmatprep.subr.mxu0 0.0
    %5916 = vmatpush1.xpose.msra.mxu0 %v5885
    %5917 = vmatprep.subr.mxu0 0.0
    %5918 = vmatpush1.xpose.msra.mxu0 %v5883
    %5919 = vmatprep.subr.mxu0 0.0
    %5920 = vmatpush2.xpose.msra.mxu0 0.0
    %5921 = vmatprep.subr.mxu0 0.0
    %5922 = vmatpush2.xpose.msra.mxu0 0.0
    %5923 = vmatprep.subr.mxu0 0.0
    %5924 = vmatpush2.xpose.msra.mxu0 0.0
    %5925 = vmatprep.subr.mxu0 0.0
    %5926 = vmatpush2.xpose.msra.mxu0 0.0
    %5927 = vmatprep.subr.mxu0 0.0
    %5928 = vmatpush2.xpose.msra.mxu0 0.0
    %5929 = vmatprep.subr.mxu0 0.0
    %5930 = vmatpush2.xpose.msra.mxu0 0.0
    %5931 = vmatprep.subr.mxu0 0.0
    %5932 = vmatpush2.xpose.msra.mxu0 0.0
    %5933 = vmatprep.subr.mxu0 0.0
    %5934 = vmatpush2.xpose.msra.mxu0 0.0
    %5935 = vmatprep.subr.mxu0 0.0
    %5936 = vmatpush2.xpose.msra.mxu0 0.0
    %5937 = vmatprep.subr.mxu0 0.0
    %5938 = vmatpush2.xpose.msra.mxu0 0.0
    %5939 = vmatprep.subr.mxu0 0.0
    %5940 = vmatpush2.xpose.msra.mxu0 0.0
    %5941 = vmatprep.subr.mxu0 0.0
    %5942 = vmatpush2.xpose.msra.mxu0 0.0
    %5943 = vmatprep.subr.mxu0 0.0
    %5944 = vmatpush2.xpose.msra.mxu0 0.0
    %5945 = vmatprep.subr.mxu0 0.0
    %5946 = vmatpush2.xpose.msra.mxu0 0.0
    %5947 = vmatprep.subr.mxu0 0.0
    %5948 = vmatpush2.xpose.msra.mxu0 0.0
    %5949 = vmatprep.subr.mxu0 0.0
    %5950 = vmatpush2.xpose.msra.mxu0 0.0
    %5951 = vmatprep.mubr.f32.mxu0 0.0
    %5952 = vmatmul.mubr.f32.gmra.mxu0 %v5881
    %v5953 = vpop.f32.mrf.mxu0
    %v5954 = vadd.f32 0.0, %v5953
    %v5955 = vpop.f32.mrf.mxu0
    %5956 = vdwg.mxu0
    %v5957 = vmul.f32 %v5954, 0.35355338
    %v5958 = vadd.f32 %v5957, %v2166
    %v5959 = vsel %vm1051, %v5958, -inf
    %5960 = vmax.xlane.f32.xlu0 %v5959
    %v5961 = vpop.xlane.xlu0 %5960
    %v5962 = vsub.f32 %v5958, %v5961
    %v5963 = vmul.f32 %v5962, 1.442695
    %v5964 = vpow.pop %v5963
    %v5965 = vsel %vm1051, %v5964, 0.0
    %5966 = vadd.xlane.f32.xlu0 %v5965
    %v5967 = vpop.xlane.xlu0 %5966
    %v5968 = vrcp.pop %v5967
    %v5969 = vmul.f32 %v5964, %v5968
    %5970 = vrot.lane.b32.xlu0 %v5679, 88
    %v5971 = vpop.permute.xlu0 %5970
    %5972 = vrot.lane.b32.xlu0 %v5684, 88
    %v5973 = vpop.permute.xlu0 %5972
    %v5977 = vsel %vm1051, %v5969, 0
    %5979 = vmatprep.subr.mxu0 0.0
    %5980 = vmatpush1.msra.mxu0 0.0
    %5981 = vmatprep.subr.mxu0 0.0
    %5982 = vmatpush1.msra.mxu0 0.0
    %5983 = vmatprep.subr.mxu0 0.0
    %5984 = vmatpush1.msra.mxu0 0.0
    %5985 = vmatprep.subr.mxu0 0.0
    %5986 = vmatpush1.msra.mxu0 0.0
    %5987 = vmatprep.subr.mxu0 0.0
    %5988 = vmatpush1.msra.mxu0 0.0
    %5989 = vmatprep.subr.mxu0 0.0
    %5990 = vmatpush1.msra.mxu0 0.0
    %5991 = vmatprep.subr.mxu0 0.0
    %5992 = vmatpush1.msra.mxu0 0.0
    %5993 = vmatprep.subr.mxu0 0.0
    %5994 = vmatpush1.msra.mxu0 0.0
    %5995 = vmatprep.subr.mxu0 0.0
    %5996 = vmatpush1.msra.mxu0 0.0
    %5997 = vmatprep.subr.mxu0 0.0
    %5998 = vmatpush1.msra.mxu0 0.0
    %5999 = vmatprep.subr.mxu0 0.0
    %6000 = vmatpush1.msra.mxu0 0.0
    %6001 = vmatprep.subr.mxu0 0.0
    %6002 = vmatpush1.msra.mxu0 0.0
    %6003 = vmatprep.subr.mxu0 0.0
    %6004 = vmatpush1.msra.mxu0 0.0
    %6005 = vmatprep.subr.mxu0 0.0
    %6006 = vmatpush1.msra.mxu0 0.0
    %6007 = vmatprep.subr.mxu0 0.0
    %6008 = vmatpush1.msra.mxu0 %v5973
    %6009 = vmatprep.subr.mxu0 0.0
    %6010 = vmatpush1.msra.mxu0 %v5971
    %6011 = vmatprep.subr.mxu0 0.0
    %6012 = vmatpush2.msra.mxu0 0.0
    %6013 = vmatprep.subr.mxu0 0.0
    %6014 = vmatpush2.msra.mxu0 0.0
    %6015 = vmatprep.subr.mxu0 0.0
    %6016 = vmatpush2.msra.mxu0 0.0
    %6017 = vmatprep.subr.mxu0 0.0
    %6018 = vmatpush2.msra.mxu0 0.0
    %6019 = vmatprep.subr.mxu0 0.0
    %6020 = vmatpush2.msra.mxu0 0.0
    %6021 = vmatprep.subr.mxu0 0.0
    %6022 = vmatpush2.msra.mxu0 0.0
    %6023 = vmatprep.subr.mxu0 0.0
    %6024 = vmatpush2.msra.mxu0 0.0
    %6025 = vmatprep.subr.mxu0 0.0
    %6026 = vmatpush2.msra.mxu0 0.0
    %6027 = vmatprep.subr.mxu0 0.0
    %6028 = vmatpush2.msra.mxu0 0.0
    %6029 = vmatprep.subr.mxu0 0.0
    %6030 = vmatpush2.msra.mxu0 0.0
    %6031 = vmatprep.subr.mxu0 0.0
    %6032 = vmatpush2.msra.mxu0 0.0
    %6033 = vmatprep.subr.mxu0 0.0
    %6034 = vmatpush2.msra.mxu0 0.0
    %6035 = vmatprep.subr.mxu0 0.0
    %6036 = vmatpush2.msra.mxu0 0.0
    %6037 = vmatprep.subr.mxu0 0.0
    %6038 = vmatpush2.msra.mxu0 0.0
    %6039 = vmatprep.subr.mxu0 0.0
    %6040 = vmatpush2.msra.mxu0 0.0
    %6041 = vmatprep.subr.mxu0 0.0
    %6042 = vmatpush2.msra.mxu0 0.0
    %6043 = vmatprep.mubr.f32.mxu0 0.0
    %6044 = vmatmul.mubr.f32.gmra.mxu0 %v5977
    %v6045 = vpop.f32.mrf.mxu0
    %v6046 = vadd.f32 0.0, %v6045
    %v6047 = vpop.f32.mrf.mxu0
    %6048 = vdwg.mxu0
    %6049 = vrot.lane.b32.xlu0 %v5591, 112
    %v6050 = vpop.permute.xlu0 %6049
    %6051 = vrot.lane.b32.xlu0 %v5679, 112
    %v6052 = vpop.permute.xlu0 %6051
    %6053 = vrot.lane.b32.xlu0 %v5684, 112
    %v6054 = vpop.permute.xlu0 %6053
    %v6055 = vsel %vm373, %v6050, 0
    %v6057 = vsel %vm373, %v6052, 0
    %v6059 = vsel %vm373, %v6054, 0
    %6061 = vmatprep.subr.mxu0 0.0
    %6062 = vmatpush1.xpose.msra.mxu0 0.0
    %6063 = vmatprep.subr.mxu0 0.0
    %6064 = vmatpush1.xpose.msra.mxu0 0.0
    %6065 = vmatprep.subr.mxu0 0.0
    %6066 = vmatpush1.xpose.msra.mxu0 0.0
    %6067 = vmatprep.subr.mxu0 0.0
    %6068 = vmatpush1.xpose.msra.mxu0 0.0
    %6069 = vmatprep.subr.mxu0 0.0
    %6070 = vmatpush1.xpose.msra.mxu0 0.0
    %6071 = vmatprep.subr.mxu0 0.0
    %6072 = vmatpush1.xpose.msra.mxu0 0.0
    %6073 = vmatprep.subr.mxu0 0.0
    %6074 = vmatpush1.xpose.msra.mxu0 0.0
    %6075 = vmatprep.subr.mxu0 0.0
    %6076 = vmatpush1.xpose.msra.mxu0 0.0
    %6077 = vmatprep.subr.mxu0 0.0
    %6078 = vmatpush1.xpose.msra.mxu0 0.0
    %6079 = vmatprep.subr.mxu0 0.0
    %6080 = vmatpush1.xpose.msra.mxu0 0.0
    %6081 = vmatprep.subr.mxu0 0.0
    %6082 = vmatpush1.xpose.msra.mxu0 0.0
    %6083 = vmatprep.subr.mxu0 0.0
    %6084 = vmatpush1.xpose.msra.mxu0 0.0
    %6085 = vmatprep.subr.mxu0 0.0
    %6086 = vmatpush1.xpose.msra.mxu0 0.0
    %6087 = vmatprep.subr.mxu0 0.0
    %6088 = vmatpush1.xpose.msra.mxu0 0.0
    %6089 = vmatprep.subr.mxu0 0.0
    %6090 = vmatpush1.xpose.msra.mxu0 %v6059
    %6091 = vmatprep.subr.mxu0 0.0
    %6092 = vmatpush1.xpose.msra.mxu0 %v6057
    %6093 = vmatprep.subr.mxu0 0.0
    %6094 = vmatpush2.xpose.msra.mxu0 0.0
    %6095 = vmatprep.subr.mxu0 0.0
    %6096 = vmatpush2.xpose.msra.mxu0 0.0
    %6097 = vmatprep.subr.mxu0 0.0
    %6098 = vmatpush2.xpose.msra.mxu0 0.0
    %6099 = vmatprep.subr.mxu0 0.0
    %6100 = vmatpush2.xpose.msra.mxu0 0.0
    %6101 = vmatprep.subr.mxu0 0.0
    %6102 = vmatpush2.xpose.msra.mxu0 0.0
    %6103 = vmatprep.subr.mxu0 0.0
    %6104 = vmatpush2.xpose.msra.mxu0 0.0
    %6105 = vmatprep.subr.mxu0 0.0
    %6106 = vmatpush2.xpose.msra.mxu0 0.0
    %6107 = vmatprep.subr.mxu0 0.0
    %6108 = vmatpush2.xpose.msra.mxu0 0.0
    %6109 = vmatprep.subr.mxu0 0.0
    %6110 = vmatpush2.xpose.msra.mxu0 0.0
    %6111 = vmatprep.subr.mxu0 0.0
    %6112 = vmatpush2.xpose.msra.mxu0 0.0
    %6113 = vmatprep.subr.mxu0 0.0
    %6114 = vmatpush2.xpose.msra.mxu0 0.0
    %6115 = vmatprep.subr.mxu0 0.0
    %6116 = vmatpush2.xpose.msra.mxu0 0.0
    %6117 = vmatprep.subr.mxu0 0.0
    %6118 = vmatpush2.xpose.msra.mxu0 0.0
    %6119 = vmatprep.subr.mxu0 0.0
    %6120 = vmatpush2.xpose.msra.mxu0 0.0
    %6121 = vmatprep.subr.mxu0 0.0
    %6122 = vmatpush2.xpose.msra.mxu0 0.0
    %6123 = vmatprep.subr.mxu0 0.0
    %6124 = vmatpush2.xpose.msra.mxu0 0.0
    %6125 = vmatprep.mubr.f32.mxu0 0.0
    %6126 = vmatmul.mubr.f32.gmra.mxu0 %v6055
    %v6127 = vpop.f32.mrf.mxu0
    %v6128 = vadd.f32 0.0, %v6127
    %v6129 = vpop.f32.mrf.mxu0
    %6130 = vdwg.mxu0
    %v6131 = vmul.f32 %v6128, 0.35355338
    %v6132 = vadd.f32 %v6131, %v2166
    %v6133 = vsel %vm1051, %v6132, -inf
    %6134 = vmax.xlane.f32.xlu0 %v6133
    %v6135 = vpop.xlane.xlu0 %6134
    %v6136 = vsub.f32 %v6132, %v6135
    %v6137 = vmul.f32 %v6136, 1.442695
    %v6138 = vpow.pop %v6137
    %v6139 = vsel %vm1051, %v6138, 0.0
    %6140 = vadd.xlane.f32.xlu0 %v6139
    %v6141 = vpop.xlane.xlu0 %6140
    %v6142 = vrcp.pop %v6141
    %v6143 = vmul.f32 %v6138, %v6142
    %6144 = vrot.lane.b32.xlu0 %v5679, 80
    %v6145 = vpop.permute.xlu0 %6144
    %6146 = vrot.lane.b32.xlu0 %v5684, 80
    %v6147 = vpop.permute.xlu0 %6146
    %v6151 = vsel %vm1051, %v6143, 0
    %6153 = vmatprep.subr.mxu0 0.0
    %6154 = vmatpush1.msra.mxu0 0.0
    %6155 = vmatprep.subr.mxu0 0.0
    %6156 = vmatpush1.msra.mxu0 0.0
    %6157 = vmatprep.subr.mxu0 0.0
    %6158 = vmatpush1.msra.mxu0 0.0
    %6159 = vmatprep.subr.mxu0 0.0
    %6160 = vmatpush1.msra.mxu0 0.0
    %6161 = vmatprep.subr.mxu0 0.0
    %6162 = vmatpush1.msra.mxu0 0.0
    %6163 = vmatprep.subr.mxu0 0.0
    %6164 = vmatpush1.msra.mxu0 0.0
    %6165 = vmatprep.subr.mxu0 0.0
    %6166 = vmatpush1.msra.mxu0 0.0
    %6167 = vmatprep.subr.mxu0 0.0
    %6168 = vmatpush1.msra.mxu0 0.0
    %6169 = vmatprep.subr.mxu0 0.0
    %6170 = vmatpush1.msra.mxu0 0.0
    %6171 = vmatprep.subr.mxu0 0.0
    %6172 = vmatpush1.msra.mxu0 0.0
    %6173 = vmatprep.subr.mxu0 0.0
    %6174 = vmatpush1.msra.mxu0 0.0
    %6175 = vmatprep.subr.mxu0 0.0
    %6176 = vmatpush1.msra.mxu0 0.0
    %6177 = vmatprep.subr.mxu0 0.0
    %6178 = vmatpush1.msra.mxu0 0.0
    %6179 = vmatprep.subr.mxu0 0.0
    %6180 = vmatpush1.msra.mxu0 0.0
    %6181 = vmatprep.subr.mxu0 0.0
    %6182 = vmatpush1.msra.mxu0 %v6147
    %6183 = vmatprep.subr.mxu0 0.0
    %6184 = vmatpush1.msra.mxu0 %v6145
    %6185 = vmatprep.subr.mxu0 0.0
    %6186 = vmatpush2.msra.mxu0 0.0
    %6187 = vmatprep.subr.mxu0 0.0
    %6188 = vmatpush2.msra.mxu0 0.0
    %6189 = vmatprep.subr.mxu0 0.0
    %6190 = vmatpush2.msra.mxu0 0.0
    %6191 = vmatprep.subr.mxu0 0.0
    %6192 = vmatpush2.msra.mxu0 0.0
    %6193 = vmatprep.subr.mxu0 0.0
    %6194 = vmatpush2.msra.mxu0 0.0
    %6195 = vmatprep.subr.mxu0 0.0
    %6196 = vmatpush2.msra.mxu0 0.0
    %6197 = vmatprep.subr.mxu0 0.0
    %6198 = vmatpush2.msra.mxu0 0.0
    %6199 = vmatprep.subr.mxu0 0.0
    %6200 = vmatpush2.msra.mxu0 0.0
    %6201 = vmatprep.subr.mxu0 0.0
    %6202 = vmatpush2.msra.mxu0 0.0
    %6203 = vmatprep.subr.mxu0 0.0
    %6204 = vmatpush2.msra.mxu0 0.0
    %6205 = vmatprep.subr.mxu0 0.0
    %6206 = vmatpush2.msra.mxu0 0.0
    %6207 = vmatprep.subr.mxu0 0.0
    %6208 = vmatpush2.msra.mxu0 0.0
    %6209 = vmatprep.subr.mxu0 0.0
    %6210 = vmatpush2.msra.mxu0 0.0
    %6211 = vmatprep.subr.mxu0 0.0
    %6212 = vmatpush2.msra.mxu0 0.0
    %6213 = vmatprep.subr.mxu0 0.0
    %6214 = vmatpush2.msra.mxu0 0.0
    %6215 = vmatprep.subr.mxu0 0.0
    %6216 = vmatpush2.msra.mxu0 0.0
    %6217 = vmatprep.mubr.f32.mxu0 0.0
    %6218 = vmatmul.mubr.f32.gmra.mxu0 %v6151
    %v6219 = vpop.f32.mrf.mxu0
    %v6220 = vadd.f32 0.0, %v6219
    %v6221 = vpop.f32.mrf.mxu0
    %6222 = vdwg.mxu0
    %6223 = vrot.lane.b32.xlu0 %v5591, 104
    %v6224 = vpop.permute.xlu0 %6223
    %6225 = vrot.lane.b32.xlu0 %v5679, 104
    %v6226 = vpop.permute.xlu0 %6225
    %6227 = vrot.lane.b32.xlu0 %v5684, 104
    %v6228 = vpop.permute.xlu0 %6227
    %v6229 = vsel %vm373, %v6224, 0
    %v6231 = vsel %vm373, %v6226, 0
    %v6233 = vsel %vm373, %v6228, 0
    %6235 = vmatprep.subr.mxu0 0.0
    %6236 = vmatpush1.xpose.msra.mxu0 0.0
    %6237 = vmatprep.subr.mxu0 0.0
    %6238 = vmatpush1.xpose.msra.mxu0 0.0
    %6239 = vmatprep.subr.mxu0 0.0
    %6240 = vmatpush1.xpose.msra.mxu0 0.0
    %6241 = vmatprep.subr.mxu0 0.0
    %6242 = vmatpush1.xpose.msra.mxu0 0.0
    %6243 = vmatprep.subr.mxu0 0.0
    %6244 = vmatpush1.xpose.msra.mxu0 0.0
    %6245 = vmatprep.subr.mxu0 0.0
    %6246 = vmatpush1.xpose.msra.mxu0 0.0
    %6247 = vmatprep.subr.mxu0 0.0
    %6248 = vmatpush1.xpose.msra.mxu0 0.0
    %6249 = vmatprep.subr.mxu0 0.0
    %6250 = vmatpush1.xpose.msra.mxu0 0.0
    %6251 = vmatprep.subr.mxu0 0.0
    %6252 = vmatpush1.xpose.msra.mxu0 0.0
    %6253 = vmatprep.subr.mxu0 0.0
    %6254 = vmatpush1.xpose.msra.mxu0 0.0
    %6255 = vmatprep.subr.mxu0 0.0
    %6256 = vmatpush1.xpose.msra.mxu0 0.0
    %6257 = vmatprep.subr.mxu0 0.0
    %6258 = vmatpush1.xpose.msra.mxu0 0.0
    %6259 = vmatprep.subr.mxu0 0.0
    %6260 = vmatpush1.xpose.msra.mxu0 0.0
    %6261 = vmatprep.subr.mxu0 0.0
    %6262 = vmatpush1.xpose.msra.mxu0 0.0
    %6263 = vmatprep.subr.mxu0 0.0
    %6264 = vmatpush1.xpose.msra.mxu0 %v6233
    %6265 = vmatprep.subr.mxu0 0.0
    %6266 = vmatpush1.xpose.msra.mxu0 %v6231
    %6267 = vmatprep.subr.mxu0 0.0
    %6268 = vmatpush2.xpose.msra.mxu0 0.0
    %6269 = vmatprep.subr.mxu0 0.0
    %6270 = vmatpush2.xpose.msra.mxu0 0.0
    %6271 = vmatprep.subr.mxu0 0.0
    %6272 = vmatpush2.xpose.msra.mxu0 0.0
    %6273 = vmatprep.subr.mxu0 0.0
    %6274 = vmatpush2.xpose.msra.mxu0 0.0
    %6275 = vmatprep.subr.mxu0 0.0
    %6276 = vmatpush2.xpose.msra.mxu0 0.0
    %6277 = vmatprep.subr.mxu0 0.0
    %6278 = vmatpush2.xpose.msra.mxu0 0.0
    %6279 = vmatprep.subr.mxu0 0.0
    %6280 = vmatpush2.xpose.msra.mxu0 0.0
    %6281 = vmatprep.subr.mxu0 0.0
    %6282 = vmatpush2.xpose.msra.mxu0 0.0
    %6283 = vmatprep.subr.mxu0 0.0
    %6284 = vmatpush2.xpose.msra.mxu0 0.0
    %6285 = vmatprep.subr.mxu0 0.0
    %6286 = vmatpush2.xpose.msra.mxu0 0.0
    %6287 = vmatprep.subr.mxu0 0.0
    %6288 = vmatpush2.xpose.msra.mxu0 0.0
    %6289 = vmatprep.subr.mxu0 0.0
    %6290 = vmatpush2.xpose.msra.mxu0 0.0
    %6291 = vmatprep.subr.mxu0 0.0
    %6292 = vmatpush2.xpose.msra.mxu0 0.0
    %6293 = vmatprep.subr.mxu0 0.0
    %6294 = vmatpush2.xpose.msra.mxu0 0.0
    %6295 = vmatprep.subr.mxu0 0.0
    %6296 = vmatpush2.xpose.msra.mxu0 0.0
    %6297 = vmatprep.subr.mxu0 0.0
    %6298 = vmatpush2.xpose.msra.mxu0 0.0
    %6299 = vmatprep.mubr.f32.mxu0 0.0
    %6300 = vmatmul.mubr.f32.gmra.mxu0 %v6229
    %v6301 = vpop.f32.mrf.mxu0
    %v6302 = vadd.f32 0.0, %v6301
    %v6303 = vpop.f32.mrf.mxu0
    %6304 = vdwg.mxu0
    %v6305 = vmul.f32 %v6302, 0.35355338
    %v6306 = vadd.f32 %v6305, %v2166
    %v6307 = vsel %vm1051, %v6306, -inf
    %6308 = vmax.xlane.f32.xlu0 %v6307
    %v6309 = vpop.xlane.xlu0 %6308
    %v6310 = vsub.f32 %v6306, %v6309
    %v6311 = vmul.f32 %v6310, 1.442695
    %v6312 = vpow.pop %v6311
    %v6313 = vsel %vm1051, %v6312, 0.0
    %6314 = vadd.xlane.f32.xlu0 %v6313
    %v6315 = vpop.xlane.xlu0 %6314
    %v6316 = vrcp.pop %v6315
    %v6317 = vmul.f32 %v6312, %v6316
    %6318 = vrot.lane.b32.xlu0 %v5679, 72
    %v6319 = vpop.permute.xlu0 %6318
    %6320 = vrot.lane.b32.xlu0 %v5684, 72
    %v6321 = vpop.permute.xlu0 %6320
    %v6325 = vsel %vm1051, %v6317, 0
    %6327 = vmatprep.subr.mxu0 0.0
    %6328 = vmatpush1.msra.mxu0 0.0
    %6329 = vmatprep.subr.mxu0 0.0
    %6330 = vmatpush1.msra.mxu0 0.0
    %6331 = vmatprep.subr.mxu0 0.0
    %6332 = vmatpush1.msra.mxu0 0.0
    %6333 = vmatprep.subr.mxu0 0.0
    %6334 = vmatpush1.msra.mxu0 0.0
    %6335 = vmatprep.subr.mxu0 0.0
    %6336 = vmatpush1.msra.mxu0 0.0
    %6337 = vmatprep.subr.mxu0 0.0
    %6338 = vmatpush1.msra.mxu0 0.0
    %6339 = vmatprep.subr.mxu0 0.0
    %6340 = vmatpush1.msra.mxu0 0.0
    %6341 = vmatprep.subr.mxu0 0.0
    %6342 = vmatpush1.msra.mxu0 0.0
    %6343 = vmatprep.subr.mxu0 0.0
    %6344 = vmatpush1.msra.mxu0 0.0
    %6345 = vmatprep.subr.mxu0 0.0
    %6346 = vmatpush1.msra.mxu0 0.0
    %6347 = vmatprep.subr.mxu0 0.0
    %6348 = vmatpush1.msra.mxu0 0.0
    %6349 = vmatprep.subr.mxu0 0.0
    %6350 = vmatpush1.msra.mxu0 0.0
    %6351 = vmatprep.subr.mxu0 0.0
    %6352 = vmatpush1.msra.mxu0 0.0
    %6353 = vmatprep.subr.mxu0 0.0
    %6354 = vmatpush1.msra.mxu0 0.0
    %6355 = vmatprep.subr.mxu0 0.0
    %6356 = vmatpush1.msra.mxu0 %v6321
    %6357 = vmatprep.subr.mxu0 0.0
    %6358 = vmatpush1.msra.mxu0 %v6319
    %6359 = vmatprep.subr.mxu0 0.0
    %6360 = vmatpush2.msra.mxu0 0.0
    %6361 = vmatprep.subr.mxu0 0.0
    %6362 = vmatpush2.msra.mxu0 0.0
    %6363 = vmatprep.subr.mxu0 0.0
    %6364 = vmatpush2.msra.mxu0 0.0
    %6365 = vmatprep.subr.mxu0 0.0
    %6366 = vmatpush2.msra.mxu0 0.0
    %6367 = vmatprep.subr.mxu0 0.0
    %6368 = vmatpush2.msra.mxu0 0.0
    %6369 = vmatprep.subr.mxu0 0.0
    %6370 = vmatpush2.msra.mxu0 0.0
    %6371 = vmatprep.subr.mxu0 0.0
    %6372 = vmatpush2.msra.mxu0 0.0
    %6373 = vmatprep.subr.mxu0 0.0
    %6374 = vmatpush2.msra.mxu0 0.0
    %6375 = vmatprep.subr.mxu0 0.0
    %6376 = vmatpush2.msra.mxu0 0.0
    %6377 = vmatprep.subr.mxu0 0.0
    %6378 = vmatpush2.msra.mxu0 0.0
    %6379 = vmatprep.subr.mxu0 0.0
    %6380 = vmatpush2.msra.mxu0 0.0
    %6381 = vmatprep.subr.mxu0 0.0
    %6382 = vmatpush2.msra.mxu0 0.0
    %6383 = vmatprep.subr.mxu0 0.0
    %6384 = vmatpush2.msra.mxu0 0.0
    %6385 = vmatprep.subr.mxu0 0.0
    %6386 = vmatpush2.msra.mxu0 0.0
    %6387 = vmatprep.subr.mxu0 0.0
    %6388 = vmatpush2.msra.mxu0 0.0
    %6389 = vmatprep.subr.mxu0 0.0
    %6390 = vmatpush2.msra.mxu0 0.0
    %6391 = vmatprep.mubr.f32.mxu0 0.0
    %6392 = vmatmul.mubr.f32.gmra.mxu0 %v6325
    %v6393 = vpop.f32.mrf.mxu0
    %v6394 = vadd.f32 0.0, %v6393
    %v6395 = vpop.f32.mrf.mxu0
    %6396 = vdwg.mxu0
    %6398 = vrot.lane.b32.xlu0 %v6046, 8
    %v6399 = vpop.permute.xlu0 %6398
    %6402 = vrot.lane.b32.xlu0 %v6220, 16
    %v6403 = vpop.permute.xlu0 %6402
    %6406 = vrot.lane.b32.xlu0 %v6394, 24
    %v6407 = vpop.permute.xlu0 %6406
    %v6409 = vsel %vm373, %v5872, %v6399
    %v6410 = vsel %vm1051, %v6409, %v6403
    %v6411 = vsel %vm1053, %v6410, %v6407
    %v6413 = vsel %vm373, %v5596, 0
    %v6416 = vsel %vm373, %v5689, 0
    %v6419 = vsel %vm373, %v5694, 0
    %6421 = vmatprep.subr.mxu0 0.0
    %6422 = vmatpush1.xpose.msra.mxu0 0.0
    %6423 = vmatprep.subr.mxu0 0.0
    %6424 = vmatpush1.xpose.msra.mxu0 0.0
    %6425 = vmatprep.subr.mxu0 0.0
    %6426 = vmatpush1.xpose.msra.mxu0 0.0
    %6427 = vmatprep.subr.mxu0 0.0
    %6428 = vmatpush1.xpose.msra.mxu0 0.0
    %6429 = vmatprep.subr.mxu0 0.0
    %6430 = vmatpush1.xpose.msra.mxu0 0.0
    %6431 = vmatprep.subr.mxu0 0.0
    %6432 = vmatpush1.xpose.msra.mxu0 0.0
    %6433 = vmatprep.subr.mxu0 0.0
    %6434 = vmatpush1.xpose.msra.mxu0 0.0
    %6435 = vmatprep.subr.mxu0 0.0
    %6436 = vmatpush1.xpose.msra.mxu0 0.0
    %6437 = vmatprep.subr.mxu0 0.0
    %6438 = vmatpush1.xpose.msra.mxu0 0.0
    %6439 = vmatprep.subr.mxu0 0.0
    %6440 = vmatpush1.xpose.msra.mxu0 0.0
    %6441 = vmatprep.subr.mxu0 0.0
    %6442 = vmatpush1.xpose.msra.mxu0 0.0
    %6443 = vmatprep.subr.mxu0 0.0
    %6444 = vmatpush1.xpose.msra.mxu0 0.0
    %6445 = vmatprep.subr.mxu0 0.0
    %6446 = vmatpush1.xpose.msra.mxu0 0.0
    %6447 = vmatprep.subr.mxu0 0.0
    %6448 = vmatpush1.xpose.msra.mxu0 0.0
    %6449 = vmatprep.subr.mxu0 0.0
    %6450 = vmatpush1.xpose.msra.mxu0 %v6419
    %6451 = vmatprep.subr.mxu0 0.0
    %6452 = vmatpush1.xpose.msra.mxu0 %v6416
    %6453 = vmatprep.subr.mxu0 0.0
    %6454 = vmatpush2.xpose.msra.mxu0 0.0
    %6455 = vmatprep.subr.mxu0 0.0
    %6456 = vmatpush2.xpose.msra.mxu0 0.0
    %6457 = vmatprep.subr.mxu0 0.0
    %6458 = vmatpush2.xpose.msra.mxu0 0.0
    %6459 = vmatprep.subr.mxu0 0.0
    %6460 = vmatpush2.xpose.msra.mxu0 0.0
    %6461 = vmatprep.subr.mxu0 0.0
    %6462 = vmatpush2.xpose.msra.mxu0 0.0
    %6463 = vmatprep.subr.mxu0 0.0
    %6464 = vmatpush2.xpose.msra.mxu0 0.0
    %6465 = vmatprep.subr.mxu0 0.0
    %6466 = vmatpush2.xpose.msra.mxu0 0.0
    %6467 = vmatprep.subr.mxu0 0.0
    %6468 = vmatpush2.xpose.msra.mxu0 0.0
    %6469 = vmatprep.subr.mxu0 0.0
    %6470 = vmatpush2.xpose.msra.mxu0 0.0
    %6471 = vmatprep.subr.mxu0 0.0
    %6472 = vmatpush2.xpose.msra.mxu0 0.0
    %6473 = vmatprep.subr.mxu0 0.0
    %6474 = vmatpush2.xpose.msra.mxu0 0.0
    %6475 = vmatprep.subr.mxu0 0.0
    %6476 = vmatpush2.xpose.msra.mxu0 0.0
    %6477 = vmatprep.subr.mxu0 0.0
    %6478 = vmatpush2.xpose.msra.mxu0 0.0
    %6479 = vmatprep.subr.mxu0 0.0
    %6480 = vmatpush2.xpose.msra.mxu0 0.0
    %6481 = vmatprep.subr.mxu0 0.0
    %6482 = vmatpush2.xpose.msra.mxu0 0.0
    %6483 = vmatprep.subr.mxu0 0.0
    %6484 = vmatpush2.xpose.msra.mxu0 0.0
    %6485 = vmatprep.mubr.f32.mxu0 0.0
    %6486 = vmatmul.mubr.f32.gmra.mxu0 %v6413
    %v6487 = vpop.f32.mrf.mxu0
    %v6488 = vadd.f32 0.0, %v6487
    %v6489 = vpop.f32.mrf.mxu0
    %6490 = vdwg.mxu0
    %v6491 = vmul.f32 %v6488, 0.35355338
    %v6492 = vadd.f32 %v6491, %v2878
    %v6493 = vsel %vm1051, %v6492, -inf
    %6494 = vmax.xlane.f32.xlu0 %v6493
    %v6495 = vpop.xlane.xlu0 %6494
    %v6496 = vsub.f32 %v6492, %v6495
    %v6497 = vmul.f32 %v6496, 1.442695
    %v6498 = vpow.pop %v6497
    %v6499 = vsel %vm1051, %v6498, 0.0
    %6500 = vadd.xlane.f32.xlu0 %v6499
    %v6501 = vpop.xlane.xlu0 %6500
    %v6502 = vrcp.pop %v6501
    %v6503 = vmul.f32 %v6498, %v6502
    %6504 = vrot.lane.b32.xlu0 %v5689, 96
    %v6505 = vpop.permute.xlu0 %6504
    %6506 = vrot.lane.b32.xlu0 %v5694, 96
    %v6507 = vpop.permute.xlu0 %6506
    %v6511 = vsel %vm1051, %v6503, 0
    %6513 = vmatprep.subr.mxu0 0.0
    %6514 = vmatpush1.msra.mxu0 0.0
    %6515 = vmatprep.subr.mxu0 0.0
    %6516 = vmatpush1.msra.mxu0 0.0
    %6517 = vmatprep.subr.mxu0 0.0
    %6518 = vmatpush1.msra.mxu0 0.0
    %6519 = vmatprep.subr.mxu0 0.0
    %6520 = vmatpush1.msra.mxu0 0.0
    %6521 = vmatprep.subr.mxu0 0.0
    %6522 = vmatpush1.msra.mxu0 0.0
    %6523 = vmatprep.subr.mxu0 0.0
    %6524 = vmatpush1.msra.mxu0 0.0
    %6525 = vmatprep.subr.mxu0 0.0
    %6526 = vmatpush1.msra.mxu0 0.0
    %6527 = vmatprep.subr.mxu0 0.0
    %6528 = vmatpush1.msra.mxu0 0.0
    %6529 = vmatprep.subr.mxu0 0.0
    %6530 = vmatpush1.msra.mxu0 0.0
    %6531 = vmatprep.subr.mxu0 0.0
    %6532 = vmatpush1.msra.mxu0 0.0
    %6533 = vmatprep.subr.mxu0 0.0
    %6534 = vmatpush1.msra.mxu0 0.0
    %6535 = vmatprep.subr.mxu0 0.0
    %6536 = vmatpush1.msra.mxu0 0.0
    %6537 = vmatprep.subr.mxu0 0.0
    %6538 = vmatpush1.msra.mxu0 0.0
    %6539 = vmatprep.subr.mxu0 0.0
    %6540 = vmatpush1.msra.mxu0 0.0
    %6541 = vmatprep.subr.mxu0 0.0
    %6542 = vmatpush1.msra.mxu0 %v6507
    %6543 = vmatprep.subr.mxu0 0.0
    %6544 = vmatpush1.msra.mxu0 %v6505
    %6545 = vmatprep.subr.mxu0 0.0
    %6546 = vmatpush2.msra.mxu0 0.0
    %6547 = vmatprep.subr.mxu0 0.0
    %6548 = vmatpush2.msra.mxu0 0.0
    %6549 = vmatprep.subr.mxu0 0.0
    %6550 = vmatpush2.msra.mxu0 0.0
    %6551 = vmatprep.subr.mxu0 0.0
    %6552 = vmatpush2.msra.mxu0 0.0
    %6553 = vmatprep.subr.mxu0 0.0
    %6554 = vmatpush2.msra.mxu0 0.0
    %6555 = vmatprep.subr.mxu0 0.0
    %6556 = vmatpush2.msra.mxu0 0.0
    %6557 = vmatprep.subr.mxu0 0.0
    %6558 = vmatpush2.msra.mxu0 0.0
    %6559 = vmatprep.subr.mxu0 0.0
    %6560 = vmatpush2.msra.mxu0 0.0
    %6561 = vmatprep.subr.mxu0 0.0
    %6562 = vmatpush2.msra.mxu0 0.0
    %6563 = vmatprep.subr.mxu0 0.0
    %6564 = vmatpush2.msra.mxu0 0.0
    %6565 = vmatprep.subr.mxu0 0.0
    %6566 = vmatpush2.msra.mxu0 0.0
    %6567 = vmatprep.subr.mxu0 0.0
    %6568 = vmatpush2.msra.mxu0 0.0
    %6569 = vmatprep.subr.mxu0 0.0
    %6570 = vmatpush2.msra.mxu0 0.0
    %6571 = vmatprep.subr.mxu0 0.0
    %6572 = vmatpush2.msra.mxu0 0.0
    %6573 = vmatprep.subr.mxu0 0.0
    %6574 = vmatpush2.msra.mxu0 0.0
    %6575 = vmatprep.subr.mxu0 0.0
    %6576 = vmatpush2.msra.mxu0 0.0
    %6577 = vmatprep.mubr.f32.mxu0 0.0
    %6578 = vmatmul.mubr.f32.gmra.mxu0 %v6511
    %v6579 = vpop.f32.mrf.mxu0
    %v6580 = vadd.f32 0.0, %v6579
    %v6581 = vpop.f32.mrf.mxu0
    %6582 = vdwg.mxu0
    %6583 = vrot.lane.b32.xlu0 %v5596, 120
    %v6584 = vpop.permute.xlu0 %6583
    %6585 = vrot.lane.b32.xlu0 %v5689, 120
    %v6586 = vpop.permute.xlu0 %6585
    %6587 = vrot.lane.b32.xlu0 %v5694, 120
    %v6588 = vpop.permute.xlu0 %6587
    %v6589 = vsel %vm373, %v6584, 0
    %v6591 = vsel %vm373, %v6586, 0
    %v6593 = vsel %vm373, %v6588, 0
    %6595 = vmatprep.subr.mxu0 0.0
    %6596 = vmatpush1.xpose.msra.mxu0 0.0
    %6597 = vmatprep.subr.mxu0 0.0
    %6598 = vmatpush1.xpose.msra.mxu0 0.0
    %6599 = vmatprep.subr.mxu0 0.0
    %6600 = vmatpush1.xpose.msra.mxu0 0.0
    %6601 = vmatprep.subr.mxu0 0.0
    %6602 = vmatpush1.xpose.msra.mxu0 0.0
    %6603 = vmatprep.subr.mxu0 0.0
    %6604 = vmatpush1.xpose.msra.mxu0 0.0
    %6605 = vmatprep.subr.mxu0 0.0
    %6606 = vmatpush1.xpose.msra.mxu0 0.0
    %6607 = vmatprep.subr.mxu0 0.0
    %6608 = vmatpush1.xpose.msra.mxu0 0.0
    %6609 = vmatprep.subr.mxu0 0.0
    %6610 = vmatpush1.xpose.msra.mxu0 0.0
    %6611 = vmatprep.subr.mxu0 0.0
    %6612 = vmatpush1.xpose.msra.mxu0 0.0
    %6613 = vmatprep.subr.mxu0 0.0
    %6614 = vmatpush1.xpose.msra.mxu0 0.0
    %6615 = vmatprep.subr.mxu0 0.0
    %6616 = vmatpush1.xpose.msra.mxu0 0.0
    %6617 = vmatprep.subr.mxu0 0.0
    %6618 = vmatpush1.xpose.msra.mxu0 0.0
    %6619 = vmatprep.subr.mxu0 0.0
    %6620 = vmatpush1.xpose.msra.mxu0 0.0
    %6621 = vmatprep.subr.mxu0 0.0
    %6622 = vmatpush1.xpose.msra.mxu0 0.0
    %6623 = vmatprep.subr.mxu0 0.0
    %6624 = vmatpush1.xpose.msra.mxu0 %v6593
    %6625 = vmatprep.subr.mxu0 0.0
    %6626 = vmatpush1.xpose.msra.mxu0 %v6591
    %6627 = vmatprep.subr.mxu0 0.0
    %6628 = vmatpush2.xpose.msra.mxu0 0.0
    %6629 = vmatprep.subr.mxu0 0.0
    %6630 = vmatpush2.xpose.msra.mxu0 0.0
    %6631 = vmatprep.subr.mxu0 0.0
    %6632 = vmatpush2.xpose.msra.mxu0 0.0
    %6633 = vmatprep.subr.mxu0 0.0
    %6634 = vmatpush2.xpose.msra.mxu0 0.0
    %6635 = vmatprep.subr.mxu0 0.0
    %6636 = vmatpush2.xpose.msra.mxu0 0.0
    %6637 = vmatprep.subr.mxu0 0.0
    %6638 = vmatpush2.xpose.msra.mxu0 0.0
    %6639 = vmatprep.subr.mxu0 0.0
    %6640 = vmatpush2.xpose.msra.mxu0 0.0
    %6641 = vmatprep.subr.mxu0 0.0
    %6642 = vmatpush2.xpose.msra.mxu0 0.0
    %6643 = vmatprep.subr.mxu0 0.0
    %6644 = vmatpush2.xpose.msra.mxu0 0.0
    %6645 = vmatprep.subr.mxu0 0.0
    %6646 = vmatpush2.xpose.msra.mxu0 0.0
    %6647 = vmatprep.subr.mxu0 0.0
    %6648 = vmatpush2.xpose.msra.mxu0 0.0
    %6649 = vmatprep.subr.mxu0 0.0
    %6650 = vmatpush2.xpose.msra.mxu0 0.0
    %6651 = vmatprep.subr.mxu0 0.0
    %6652 = vmatpush2.xpose.msra.mxu0 0.0
    %6653 = vmatprep.subr.mxu0 0.0
    %6654 = vmatpush2.xpose.msra.mxu0 0.0
    %6655 = vmatprep.subr.mxu0 0.0
    %6656 = vmatpush2.xpose.msra.mxu0 0.0
    %6657 = vmatprep.subr.mxu0 0.0
    %6658 = vmatpush2.xpose.msra.mxu0 0.0
    %6659 = vmatprep.mubr.f32.mxu0 0.0
    %6660 = vmatmul.mubr.f32.gmra.mxu0 %v6589
    %v6661 = vpop.f32.mrf.mxu0
    %v6662 = vadd.f32 0.0, %v6661
    %v6663 = vpop.f32.mrf.mxu0
    %6664 = vdwg.mxu0
    %v6665 = vmul.f32 %v6662, 0.35355338
    %v6666 = vadd.f32 %v6665, %v2878
    %v6667 = vsel %vm1051, %v6666, -inf
    %6668 = vmax.xlane.f32.xlu0 %v6667
    %v6669 = vpop.xlane.xlu0 %6668
    %v6670 = vsub.f32 %v6666, %v6669
    %v6671 = vmul.f32 %v6670, 1.442695
    %v6672 = vpow.pop %v6671
    %v6673 = vsel %vm1051, %v6672, 0.0
    %6674 = vadd.xlane.f32.xlu0 %v6673
    %v6675 = vpop.xlane.xlu0 %6674
    %v6676 = vrcp.pop %v6675
    %v6677 = vmul.f32 %v6672, %v6676
    %6678 = vrot.lane.b32.xlu0 %v5689, 88
    %v6679 = vpop.permute.xlu0 %6678
    %6680 = vrot.lane.b32.xlu0 %v5694, 88
    %v6681 = vpop.permute.xlu0 %6680
    %v6685 = vsel %vm1051, %v6677, 0
    %6687 = vmatprep.subr.mxu0 0.0
    %6688 = vmatpush1.msra.mxu0 0.0
    %6689 = vmatprep.subr.mxu0 0.0
    %6690 = vmatpush1.msra.mxu0 0.0
    %6691 = vmatprep.subr.mxu0 0.0
    %6692 = vmatpush1.msra.mxu0 0.0
    %6693 = vmatprep.subr.mxu0 0.0
    %6694 = vmatpush1.msra.mxu0 0.0
    %6695 = vmatprep.subr.mxu0 0.0
    %6696 = vmatpush1.msra.mxu0 0.0
    %6697 = vmatprep.subr.mxu0 0.0
    %6698 = vmatpush1.msra.mxu0 0.0
    %6699 = vmatprep.subr.mxu0 0.0
    %6700 = vmatpush1.msra.mxu0 0.0
    %6701 = vmatprep.subr.mxu0 0.0
    %6702 = vmatpush1.msra.mxu0 0.0
    %6703 = vmatprep.subr.mxu0 0.0
    %6704 = vmatpush1.msra.mxu0 0.0
    %6705 = vmatprep.subr.mxu0 0.0
    %6706 = vmatpush1.msra.mxu0 0.0
    %6707 = vmatprep.subr.mxu0 0.0
    %6708 = vmatpush1.msra.mxu0 0.0
    %6709 = vmatprep.subr.mxu0 0.0
    %6710 = vmatpush1.msra.mxu0 0.0
    %6711 = vmatprep.subr.mxu0 0.0
    %6712 = vmatpush1.msra.mxu0 0.0
    %6713 = vmatprep.subr.mxu0 0.0
    %6714 = vmatpush1.msra.mxu0 0.0
    %6715 = vmatprep.subr.mxu0 0.0
    %6716 = vmatpush1.msra.mxu0 %v6681
    %6717 = vmatprep.subr.mxu0 0.0
    %6718 = vmatpush1.msra.mxu0 %v6679
    %6719 = vmatprep.subr.mxu0 0.0
    %6720 = vmatpush2.msra.mxu0 0.0
    %6721 = vmatprep.subr.mxu0 0.0
    %6722 = vmatpush2.msra.mxu0 0.0
    %6723 = vmatprep.subr.mxu0 0.0
    %6724 = vmatpush2.msra.mxu0 0.0
    %6725 = vmatprep.subr.mxu0 0.0
    %6726 = vmatpush2.msra.mxu0 0.0
    %6727 = vmatprep.subr.mxu0 0.0
    %6728 = vmatpush2.msra.mxu0 0.0
    %6729 = vmatprep.subr.mxu0 0.0
    %6730 = vmatpush2.msra.mxu0 0.0
    %6731 = vmatprep.subr.mxu0 0.0
    %6732 = vmatpush2.msra.mxu0 0.0
    %6733 = vmatprep.subr.mxu0 0.0
    %6734 = vmatpush2.msra.mxu0 0.0
    %6735 = vmatprep.subr.mxu0 0.0
    %6736 = vmatpush2.msra.mxu0 0.0
    %6737 = vmatprep.subr.mxu0 0.0
    %6738 = vmatpush2.msra.mxu0 0.0
    %6739 = vmatprep.subr.mxu0 0.0
    %6740 = vmatpush2.msra.mxu0 0.0
    %6741 = vmatprep.subr.mxu0 0.0
    %6742 = vmatpush2.msra.mxu0 0.0
    %6743 = vmatprep.subr.mxu0 0.0
    %6744 = vmatpush2.msra.mxu0 0.0
    %6745 = vmatprep.subr.mxu0 0.0
    %6746 = vmatpush2.msra.mxu0 0.0
    %6747 = vmatprep.subr.mxu0 0.0
    %6748 = vmatpush2.msra.mxu0 0.0
    %6749 = vmatprep.subr.mxu0 0.0
    %6750 = vmatpush2.msra.mxu0 0.0
    %6751 = vmatprep.mubr.f32.mxu0 0.0
    %6752 = vmatmul.mubr.f32.gmra.mxu0 %v6685
    %v6753 = vpop.f32.mrf.mxu0
    %v6754 = vadd.f32 0.0, %v6753
    %v6755 = vpop.f32.mrf.mxu0
    %6756 = vdwg.mxu0
    %6757 = vrot.lane.b32.xlu0 %v5596, 112
    %v6758 = vpop.permute.xlu0 %6757
    %6759 = vrot.lane.b32.xlu0 %v5689, 112
    %v6760 = vpop.permute.xlu0 %6759
    %6761 = vrot.lane.b32.xlu0 %v5694, 112
    %v6762 = vpop.permute.xlu0 %6761
    %v6763 = vsel %vm373, %v6758, 0
    %v6765 = vsel %vm373, %v6760, 0
    %v6767 = vsel %vm373, %v6762, 0
    %6769 = vmatprep.subr.mxu0 0.0
    %6770 = vmatpush1.xpose.msra.mxu0 0.0
    %6771 = vmatprep.subr.mxu0 0.0
    %6772 = vmatpush1.xpose.msra.mxu0 0.0
    %6773 = vmatprep.subr.mxu0 0.0
    %6774 = vmatpush1.xpose.msra.mxu0 0.0
    %6775 = vmatprep.subr.mxu0 0.0
    %6776 = vmatpush1.xpose.msra.mxu0 0.0
    %6777 = vmatprep.subr.mxu0 0.0
    %6778 = vmatpush1.xpose.msra.mxu0 0.0
    %6779 = vmatprep.subr.mxu0 0.0
    %6780 = vmatpush1.xpose.msra.mxu0 0.0
    %6781 = vmatprep.subr.mxu0 0.0
    %6782 = vmatpush1.xpose.msra.mxu0 0.0
    %6783 = vmatprep.subr.mxu0 0.0
    %6784 = vmatpush1.xpose.msra.mxu0 0.0
    %6785 = vmatprep.subr.mxu0 0.0
    %6786 = vmatpush1.xpose.msra.mxu0 0.0
    %6787 = vmatprep.subr.mxu0 0.0
    %6788 = vmatpush1.xpose.msra.mxu0 0.0
    %6789 = vmatprep.subr.mxu0 0.0
    %6790 = vmatpush1.xpose.msra.mxu0 0.0
    %6791 = vmatprep.subr.mxu0 0.0
    %6792 = vmatpush1.xpose.msra.mxu0 0.0
    %6793 = vmatprep.subr.mxu0 0.0
    %6794 = vmatpush1.xpose.msra.mxu0 0.0
    %6795 = vmatprep.subr.mxu0 0.0
    %6796 = vmatpush1.xpose.msra.mxu0 0.0
    %6797 = vmatprep.subr.mxu0 0.0
    %6798 = vmatpush1.xpose.msra.mxu0 %v6767
    %6799 = vmatprep.subr.mxu0 0.0
    %6800 = vmatpush1.xpose.msra.mxu0 %v6765
    %6801 = vmatprep.subr.mxu0 0.0
    %6802 = vmatpush2.xpose.msra.mxu0 0.0
    %6803 = vmatprep.subr.mxu0 0.0
    %6804 = vmatpush2.xpose.msra.mxu0 0.0
    %6805 = vmatprep.subr.mxu0 0.0
    %6806 = vmatpush2.xpose.msra.mxu0 0.0
    %6807 = vmatprep.subr.mxu0 0.0
    %6808 = vmatpush2.xpose.msra.mxu0 0.0
    %6809 = vmatprep.subr.mxu0 0.0
    %6810 = vmatpush2.xpose.msra.mxu0 0.0
    %6811 = vmatprep.subr.mxu0 0.0
    %6812 = vmatpush2.xpose.msra.mxu0 0.0
    %6813 = vmatprep.subr.mxu0 0.0
    %6814 = vmatpush2.xpose.msra.mxu0 0.0
    %6815 = vmatprep.subr.mxu0 0.0
    %6816 = vmatpush2.xpose.msra.mxu0 0.0
    %6817 = vmatprep.subr.mxu0 0.0
    %6818 = vmatpush2.xpose.msra.mxu0 0.0
    %6819 = vmatprep.subr.mxu0 0.0
    %6820 = vmatpush2.xpose.msra.mxu0 0.0
    %6821 = vmatprep.subr.mxu0 0.0
    %6822 = vmatpush2.xpose.msra.mxu0 0.0
    %6823 = vmatprep.subr.mxu0 0.0
    %6824 = vmatpush2.xpose.msra.mxu0 0.0
    %6825 = vmatprep.subr.mxu0 0.0
    %6826 = vmatpush2.xpose.msra.mxu0 0.0
    %6827 = vmatprep.subr.mxu0 0.0
    %6828 = vmatpush2.xpose.msra.mxu0 0.0
    %6829 = vmatprep.subr.mxu0 0.0
    %6830 = vmatpush2.xpose.msra.mxu0 0.0
    %6831 = vmatprep.subr.mxu0 0.0
    %6832 = vmatpush2.xpose.msra.mxu0 0.0
    %6833 = vmatprep.mubr.f32.mxu0 0.0
    %6834 = vmatmul.mubr.f32.gmra.mxu0 %v6763
    %v6835 = vpop.f32.mrf.mxu0
    %v6836 = vadd.f32 0.0, %v6835
    %v6837 = vpop.f32.mrf.mxu0
    %6838 = vdwg.mxu0
    %v6839 = vmul.f32 %v6836, 0.35355338
    %v6840 = vadd.f32 %v6839, %v2878
    %v6841 = vsel %vm1051, %v6840, -inf
    %6842 = vmax.xlane.f32.xlu0 %v6841
    %v6843 = vpop.xlane.xlu0 %6842
    %v6844 = vsub.f32 %v6840, %v6843
    %v6845 = vmul.f32 %v6844, 1.442695
    %v6846 = vpow.pop %v6845
    %v6847 = vsel %vm1051, %v6846, 0.0
    %6848 = vadd.xlane.f32.xlu0 %v6847
    %v6849 = vpop.xlane.xlu0 %6848
    %v6850 = vrcp.pop %v6849
    %v6851 = vmul.f32 %v6846, %v6850
    %6852 = vrot.lane.b32.xlu0 %v5689, 80
    %v6853 = vpop.permute.xlu0 %6852
    %6854 = vrot.lane.b32.xlu0 %v5694, 80
    %v6855 = vpop.permute.xlu0 %6854
    %v6859 = vsel %vm1051, %v6851, 0
    %6861 = vmatprep.subr.mxu0 0.0
    %6862 = vmatpush1.msra.mxu0 0.0
    %6863 = vmatprep.subr.mxu0 0.0
    %6864 = vmatpush1.msra.mxu0 0.0
    %6865 = vmatprep.subr.mxu0 0.0
    %6866 = vmatpush1.msra.mxu0 0.0
    %6867 = vmatprep.subr.mxu0 0.0
    %6868 = vmatpush1.msra.mxu0 0.0
    %6869 = vmatprep.subr.mxu0 0.0
    %6870 = vmatpush1.msra.mxu0 0.0
    %6871 = vmatprep.subr.mxu0 0.0
    %6872 = vmatpush1.msra.mxu0 0.0
    %6873 = vmatprep.subr.mxu0 0.0
    %6874 = vmatpush1.msra.mxu0 0.0
    %6875 = vmatprep.subr.mxu0 0.0
    %6876 = vmatpush1.msra.mxu0 0.0
    %6877 = vmatprep.subr.mxu0 0.0
    %6878 = vmatpush1.msra.mxu0 0.0
    %6879 = vmatprep.subr.mxu0 0.0
    %6880 = vmatpush1.msra.mxu0 0.0
    %6881 = vmatprep.subr.mxu0 0.0
    %6882 = vmatpush1.msra.mxu0 0.0
    %6883 = vmatprep.subr.mxu0 0.0
    %6884 = vmatpush1.msra.mxu0 0.0
    %6885 = vmatprep.subr.mxu0 0.0
    %6886 = vmatpush1.msra.mxu0 0.0
    %6887 = vmatprep.subr.mxu0 0.0
    %6888 = vmatpush1.msra.mxu0 0.0
    %6889 = vmatprep.subr.mxu0 0.0
    %6890 = vmatpush1.msra.mxu0 %v6855
    %6891 = vmatprep.subr.mxu0 0.0
    %6892 = vmatpush1.msra.mxu0 %v6853
    %6893 = vmatprep.subr.mxu0 0.0
    %6894 = vmatpush2.msra.mxu0 0.0
    %6895 = vmatprep.subr.mxu0 0.0
    %6896 = vmatpush2.msra.mxu0 0.0
    %6897 = vmatprep.subr.mxu0 0.0
    %6898 = vmatpush2.msra.mxu0 0.0
    %6899 = vmatprep.subr.mxu0 0.0
    %6900 = vmatpush2.msra.mxu0 0.0
    %6901 = vmatprep.subr.mxu0 0.0
    %6902 = vmatpush2.msra.mxu0 0.0
    %6903 = vmatprep.subr.mxu0 0.0
    %6904 = vmatpush2.msra.mxu0 0.0
    %6905 = vmatprep.subr.mxu0 0.0
    %6906 = vmatpush2.msra.mxu0 0.0
    %6907 = vmatprep.subr.mxu0 0.0
    %6908 = vmatpush2.msra.mxu0 0.0
    %6909 = vmatprep.subr.mxu0 0.0
    %6910 = vmatpush2.msra.mxu0 0.0
    %6911 = vmatprep.subr.mxu0 0.0
    %6912 = vmatpush2.msra.mxu0 0.0
    %6913 = vmatprep.subr.mxu0 0.0
    %6914 = vmatpush2.msra.mxu0 0.0
    %6915 = vmatprep.subr.mxu0 0.0
    %6916 = vmatpush2.msra.mxu0 0.0
    %6917 = vmatprep.subr.mxu0 0.0
    %6918 = vmatpush2.msra.mxu0 0.0
    %6919 = vmatprep.subr.mxu0 0.0
    %6920 = vmatpush2.msra.mxu0 0.0
    %6921 = vmatprep.subr.mxu0 0.0
    %6922 = vmatpush2.msra.mxu0 0.0
    %6923 = vmatprep.subr.mxu0 0.0
    %6924 = vmatpush2.msra.mxu0 0.0
    %6925 = vmatprep.mubr.f32.mxu0 0.0
    %6926 = vmatmul.mubr.f32.gmra.mxu0 %v6859
    %v6927 = vpop.f32.mrf.mxu0
    %v6928 = vadd.f32 0.0, %v6927
    %v6929 = vpop.f32.mrf.mxu0
    %6930 = vdwg.mxu0
    %6931 = vrot.lane.b32.xlu0 %v5596, 104
    %v6932 = vpop.permute.xlu0 %6931
    %6933 = vrot.lane.b32.xlu0 %v5689, 104
    %v6934 = vpop.permute.xlu0 %6933
    %6935 = vrot.lane.b32.xlu0 %v5694, 104
    %v6936 = vpop.permute.xlu0 %6935
    %v6937 = vsel %vm373, %v6932, 0
    %v6939 = vsel %vm373, %v6934, 0
    %v6941 = vsel %vm373, %v6936, 0
    %6943 = vmatprep.subr.mxu0 0.0
    %6944 = vmatpush1.xpose.msra.mxu0 0.0
    %6945 = vmatprep.subr.mxu0 0.0
    %6946 = vmatpush1.xpose.msra.mxu0 0.0
    %6947 = vmatprep.subr.mxu0 0.0
    %6948 = vmatpush1.xpose.msra.mxu0 0.0
    %6949 = vmatprep.subr.mxu0 0.0
    %6950 = vmatpush1.xpose.msra.mxu0 0.0
    %6951 = vmatprep.subr.mxu0 0.0
    %6952 = vmatpush1.xpose.msra.mxu0 0.0
    %6953 = vmatprep.subr.mxu0 0.0
    %6954 = vmatpush1.xpose.msra.mxu0 0.0
    %6955 = vmatprep.subr.mxu0 0.0
    %6956 = vmatpush1.xpose.msra.mxu0 0.0
    %6957 = vmatprep.subr.mxu0 0.0
    %6958 = vmatpush1.xpose.msra.mxu0 0.0
    %6959 = vmatprep.subr.mxu0 0.0
    %6960 = vmatpush1.xpose.msra.mxu0 0.0
    %6961 = vmatprep.subr.mxu0 0.0
    %6962 = vmatpush1.xpose.msra.mxu0 0.0
    %6963 = vmatprep.subr.mxu0 0.0
    %6964 = vmatpush1.xpose.msra.mxu0 0.0
    %6965 = vmatprep.subr.mxu0 0.0
    %6966 = vmatpush1.xpose.msra.mxu0 0.0
    %6967 = vmatprep.subr.mxu0 0.0
    %6968 = vmatpush1.xpose.msra.mxu0 0.0
    %6969 = vmatprep.subr.mxu0 0.0
    %6970 = vmatpush1.xpose.msra.mxu0 0.0
    %6971 = vmatprep.subr.mxu0 0.0
    %6972 = vmatpush1.xpose.msra.mxu0 %v6941
    %6973 = vmatprep.subr.mxu0 0.0
    %6974 = vmatpush1.xpose.msra.mxu0 %v6939
    %6975 = vmatprep.subr.mxu0 0.0
    %6976 = vmatpush2.xpose.msra.mxu0 0.0
    %6977 = vmatprep.subr.mxu0 0.0
    %6978 = vmatpush2.xpose.msra.mxu0 0.0
    %6979 = vmatprep.subr.mxu0 0.0
    %6980 = vmatpush2.xpose.msra.mxu0 0.0
    %6981 = vmatprep.subr.mxu0 0.0
    %6982 = vmatpush2.xpose.msra.mxu0 0.0
    %6983 = vmatprep.subr.mxu0 0.0
    %6984 = vmatpush2.xpose.msra.mxu0 0.0
    %6985 = vmatprep.subr.mxu0 0.0
    %6986 = vmatpush2.xpose.msra.mxu0 0.0
    %6987 = vmatprep.subr.mxu0 0.0
    %6988 = vmatpush2.xpose.msra.mxu0 0.0
    %6989 = vmatprep.subr.mxu0 0.0
    %6990 = vmatpush2.xpose.msra.mxu0 0.0
    %6991 = vmatprep.subr.mxu0 0.0
    %6992 = vmatpush2.xpose.msra.mxu0 0.0
    %6993 = vmatprep.subr.mxu0 0.0
    %6994 = vmatpush2.xpose.msra.mxu0 0.0
    %6995 = vmatprep.subr.mxu0 0.0
    %6996 = vmatpush2.xpose.msra.mxu0 0.0
    %6997 = vmatprep.subr.mxu0 0.0
    %6998 = vmatpush2.xpose.msra.mxu0 0.0
    %6999 = vmatprep.subr.mxu0 0.0
    %7000 = vmatpush2.xpose.msra.mxu0 0.0
    %7001 = vmatprep.subr.mxu0 0.0
    %7002 = vmatpush2.xpose.msra.mxu0 0.0
    %7003 = vmatprep.subr.mxu0 0.0
    %7004 = vmatpush2.xpose.msra.mxu0 0.0
    %7005 = vmatprep.subr.mxu0 0.0
    %7006 = vmatpush2.xpose.msra.mxu0 0.0
    %7007 = vmatprep.mubr.f32.mxu0 0.0
    %7008 = vmatmul.mubr.f32.gmra.mxu0 %v6937
    %v7009 = vpop.f32.mrf.mxu0
    %v7010 = vadd.f32 0.0, %v7009
    %v7011 = vpop.f32.mrf.mxu0
    %7012 = vdwg.mxu0
    %v7013 = vmul.f32 %v7010, 0.35355338
    %v7014 = vadd.f32 %v7013, %v2878
    %v7015 = vsel %vm1051, %v7014, -inf
    %7016 = vmax.xlane.f32.xlu0 %v7015
    %v7017 = vpop.xlane.xlu0 %7016
    %v7018 = vsub.f32 %v7014, %v7017
    %v7019 = vmul.f32 %v7018, 1.442695
    %v7020 = vpow.pop %v7019
    %v7021 = vsel %vm1051, %v7020, 0.0
    %7022 = vadd.xlane.f32.xlu0 %v7021
    %v7023 = vpop.xlane.xlu0 %7022
    %v7024 = vrcp.pop %v7023
    %v7025 = vmul.f32 %v7020, %v7024
    %7026 = vrot.lane.b32.xlu0 %v5689, 72
    %v7027 = vpop.permute.xlu0 %7026
    %7028 = vrot.lane.b32.xlu0 %v5694, 72
    %v7029 = vpop.permute.xlu0 %7028
    %v7033 = vsel %vm1051, %v7025, 0
    %7035 = vmatprep.subr.mxu0 0.0
    %7036 = vmatpush1.msra.mxu0 0.0
    %7037 = vmatprep.subr.mxu0 0.0
    %7038 = vmatpush1.msra.mxu0 0.0
    %7039 = vmatprep.subr.mxu0 0.0
    %7040 = vmatpush1.msra.mxu0 0.0
    %7041 = vmatprep.subr.mxu0 0.0
    %7042 = vmatpush1.msra.mxu0 0.0
    %7043 = vmatprep.subr.mxu0 0.0
    %7044 = vmatpush1.msra.mxu0 0.0
    %7045 = vmatprep.subr.mxu0 0.0
    %7046 = vmatpush1.msra.mxu0 0.0
    %7047 = vmatprep.subr.mxu0 0.0
    %7048 = vmatpush1.msra.mxu0 0.0
    %7049 = vmatprep.subr.mxu0 0.0
    %7050 = vmatpush1.msra.mxu0 0.0
    %7051 = vmatprep.subr.mxu0 0.0
    %7052 = vmatpush1.msra.mxu0 0.0
    %7053 = vmatprep.subr.mxu0 0.0
    %7054 = vmatpush1.msra.mxu0 0.0
    %7055 = vmatprep.subr.mxu0 0.0
    %7056 = vmatpush1.msra.mxu0 0.0
    %7057 = vmatprep.subr.mxu0 0.0
    %7058 = vmatpush1.msra.mxu0 0.0
    %7059 = vmatprep.subr.mxu0 0.0
    %7060 = vmatpush1.msra.mxu0 0.0
    %7061 = vmatprep.subr.mxu0 0.0
    %7062 = vmatpush1.msra.mxu0 0.0
    %7063 = vmatprep.subr.mxu0 0.0
    %7064 = vmatpush1.msra.mxu0 %v7029
    %7065 = vmatprep.subr.mxu0 0.0
    %7066 = vmatpush1.msra.mxu0 %v7027
    %7067 = vmatprep.subr.mxu0 0.0
    %7068 = vmatpush2.msra.mxu0 0.0
    %7069 = vmatprep.subr.mxu0 0.0
    %7070 = vmatpush2.msra.mxu0 0.0
    %7071 = vmatprep.subr.mxu0 0.0
    %7072 = vmatpush2.msra.mxu0 0.0
    %7073 = vmatprep.subr.mxu0 0.0
    %7074 = vmatpush2.msra.mxu0 0.0
    %7075 = vmatprep.subr.mxu0 0.0
    %7076 = vmatpush2.msra.mxu0 0.0
    %7077 = vmatprep.subr.mxu0 0.0
    %7078 = vmatpush2.msra.mxu0 0.0
    %7079 = vmatprep.subr.mxu0 0.0
    %7080 = vmatpush2.msra.mxu0 0.0
    %7081 = vmatprep.subr.mxu0 0.0
    %7082 = vmatpush2.msra.mxu0 0.0
    %7083 = vmatprep.subr.mxu0 0.0
    %7084 = vmatpush2.msra.mxu0 0.0
    %7085 = vmatprep.subr.mxu0 0.0
    %7086 = vmatpush2.msra.mxu0 0.0
    %7087 = vmatprep.subr.mxu0 0.0
    %7088 = vmatpush2.msra.mxu0 0.0
    %7089 = vmatprep.subr.mxu0 0.0
    %7090 = vmatpush2.msra.mxu0 0.0
    %7091 = vmatprep.subr.mxu0 0.0
    %7092 = vmatpush2.msra.mxu0 0.0
    %7093 = vmatprep.subr.mxu0 0.0
    %7094 = vmatpush2.msra.mxu0 0.0
    %7095 = vmatprep.subr.mxu0 0.0
    %7096 = vmatpush2.msra.mxu0 0.0
    %7097 = vmatprep.subr.mxu0 0.0
    %7098 = vmatpush2.msra.mxu0 0.0
    %7099 = vmatprep.mubr.f32.mxu0 0.0
    %7100 = vmatmul.mubr.f32.gmra.mxu0 %v7033
    %v7101 = vpop.f32.mrf.mxu0
    %v7102 = vadd.f32 0.0, %v7101
    %v7103 = vpop.f32.mrf.mxu0
    %7104 = vdwg.mxu0
    %7106 = vrot.lane.b32.xlu0 %v6754, 8
    %v7107 = vpop.permute.xlu0 %7106
    %7110 = vrot.lane.b32.xlu0 %v6928, 16
    %v7111 = vpop.permute.xlu0 %7110
    %7114 = vrot.lane.b32.xlu0 %v7102, 24
    %v7115 = vpop.permute.xlu0 %7114
    %v7117 = vsel %vm373, %v6580, %v7107
    %v7118 = vsel %vm1051, %v7117, %v7111
    %v7119 = vsel %vm1053, %v7118, %v7115
    %v7121 = vlaneseq
    %v7122 = vshrl.u32 %v7121, 7
    %v7123 = vsub.s32 0, %v7122
    %v7124 = vrot.slane %v5703, %v7123
    %v7127 = vsel %vm219, %v6411, 0
    %v7130 = vsel %vm219, %v7119, 0
    %7132 = vmatprep.subr.mxu0 0.0
    %7133 = vmatpush1.msra.mxu0 0.0
    %7134 = vmatprep.subr.mxu0 0.0
    %7135 = vmatpush1.msra.mxu0 0.0
    %7136 = vmatprep.subr.mxu0 0.0
    %7137 = vmatpush1.msra.mxu0 0.0
    %7138 = vmatprep.subr.mxu0 0.0
    %7139 = vmatpush1.msra.mxu0 0.0
    %7140 = vmatprep.subr.mxu0 0.0
    %7141 = vmatpush1.msra.mxu0 0.0
    %7142 = vmatprep.subr.mxu0 0.0
    %7143 = vmatpush1.msra.mxu0 0.0
    %7144 = vmatprep.subr.mxu0 0.0
    %7145 = vmatpush1.msra.mxu0 0.0
    %7146 = vmatprep.subr.mxu0 0.0
    %7147 = vmatpush1.msra.mxu0 0.0
    %7148 = vmatprep.subr.mxu0 0.0
    %7149 = vmatpush1.msra.mxu0 0.0
    %7150 = vmatprep.subr.mxu0 0.0
    %7151 = vmatpush1.msra.mxu0 0.0
    %7152 = vmatprep.subr.mxu0 0.0
    %7153 = vmatpush1.msra.mxu0 0.0
    %7154 = vmatprep.subr.mxu0 0.0
    %7155 = vmatpush1.msra.mxu0 0.0
    %7156 = vmatprep.subr.mxu0 0.0
    %7157 = vmatpush1.msra.mxu0 %v5701
    %7158 = vmatprep.subr.mxu0 0.0
    %7159 = vmatpush1.msra.mxu0 %v5700
    %7160 = vmatprep.subr.mxu0 0.0
    %7161 = vmatpush1.msra.mxu0 %v5699
    %7162 = vmatprep.subr.mxu0 0.0
    %7163 = vmatpush1.msra.mxu0 %v5698
    %7164 = vmatprep.subr.mxu0 0.0
    %7165 = vmatpush2.msra.mxu0 0.0
    %7166 = vmatprep.subr.mxu0 0.0
    %7167 = vmatpush2.msra.mxu0 0.0
    %7168 = vmatprep.subr.mxu0 0.0
    %7169 = vmatpush2.msra.mxu0 0.0
    %7170 = vmatprep.subr.mxu0 0.0
    %7171 = vmatpush2.msra.mxu0 0.0
    %7172 = vmatprep.subr.mxu0 0.0
    %7173 = vmatpush2.msra.mxu0 0.0
    %7174 = vmatprep.subr.mxu0 0.0
    %7175 = vmatpush2.msra.mxu0 0.0
    %7176 = vmatprep.subr.mxu0 0.0
    %7177 = vmatpush2.msra.mxu0 0.0
    %7178 = vmatprep.subr.mxu0 0.0
    %7179 = vmatpush2.msra.mxu0 0.0
    %7180 = vmatprep.subr.mxu0 0.0
    %7181 = vmatpush2.msra.mxu0 0.0
    %7182 = vmatprep.subr.mxu0 0.0
    %7183 = vmatpush2.msra.mxu0 0.0
    %7184 = vmatprep.subr.mxu0 0.0
    %7185 = vmatpush2.msra.mxu0 0.0
    %7186 = vmatprep.subr.mxu0 0.0
    %7187 = vmatpush2.msra.mxu0 0.0
    %7188 = vmatprep.subr.mxu0 0.0
    %7189 = vmatpush2.msra.mxu0 0.0
    %7190 = vmatprep.subr.mxu0 0.0
    %7191 = vmatpush2.msra.mxu0 0.0
    %7192 = vmatprep.subr.mxu0 0.0
    %7193 = vmatpush2.msra.mxu0 0.0
    %7194 = vmatprep.subr.mxu0 0.0
    %7195 = vmatpush2.msra.mxu0 0.0
    %7196 = vmatprep.mubr.f32.mxu0 0.0
    %7197 = vmatmul.mubr.f32.gmra.mxu0 %v7127
    %v7198 = vpop.f32.mrf.mxu0
    %v7199 = vadd.f32 %v7124, %v7198
    %v7200 = vpop.f32.mrf.mxu0
    %7201 = vmatprep.mubr.f32.mxu0 0.0
    %7202 = vmatmul.mubr.f32.gmra.mxu0 %v7130
    %v7203 = vpop.f32.mrf.mxu0
    %v7204 = vadd.f32 %v7124, %v7203
    %v7205 = vpop.f32.mrf.mxu0
    %7206 = vdwg.mxu0
    %v7207 = vadd.f32 %v5451, %v7199
    %v7208 = vadd.f32 %v5452, %v7204
    %v7209 = vsel %vm219, %v7207, 0.0
    %7210 = vadd.xlane.f32.xlu0 %v7209
    %v7211 = vpop.xlane.xlu0 %7210
    %v7212 = vsel %vm219, %v7208, 0.0
    %7213 = vadd.xlane.f32.xlu0 %v7212
    %v7214 = vpop.xlane.xlu0 %7213
    %v7215 = vmul.f32 %v7211, %v226
    %v7216 = vmul.f32 %v7214, %v226
    %v7217 = vsub.f32 %v7207, %v7215
    %v7218 = vsub.f32 %v7208, %v7216
    %v7219 = vmul.f32 %v7217, %v7217
    %v7220 = vmul.f32 %v7218, %v7218
    %v7221 = vsel %vm219, %v7219, 0.0
    %7222 = vadd.xlane.f32.xlu0 %v7221
    %v7223 = vpop.xlane.xlu0 %7222
    %v7224 = vsel %vm219, %v7220, 0.0
    %7225 = vadd.xlane.f32.xlu0 %v7224
    %v7226 = vpop.xlane.xlu0 %7225
    %v7227 = vmul.f32 %v7223, 0.032258064
    %v7228 = vmul.f32 %v7226, 0.032258064
    %v7229 = vrsqrt.pop %v7227
    %v7230 = vmul.f32 %v7227, %v7229
    %vm7231 = vcmp.eq.f32.partialorder %v7227, inf
    %v7232 = vsel %vm7231, %v7227, %v7230
    %vm7233 = vcmp.eq.f32.partialorder %v7227, 0.0
    %v7234 = vand.u32 %v7227, 2147483648
    %v7235 = vsel %vm7233, %v7234, %v7232
    %v7236 = vrsqrt.pop %v7228
    %v7237 = vmul.f32 %v7228, %v7236
    %vm7238 = vcmp.eq.f32.partialorder %v7228, inf
    %v7239 = vsel %vm7238, %v7228, %v7237
    %vm7240 = vcmp.eq.f32.partialorder %v7228, 0.0
    %v7241 = vand.u32 %v7228, 2147483648
    %v7242 = vsel %vm7240, %v7241, %v7239
    %v7243 = vadd.f32 %v7235, 1e-06
    %v7244 = vadd.f32 %v7242, 1e-06
    %v7245 = vrcp.pop %v7243
    %v7246 = vrcp.pop %v7244
    %v7247 = vmul.f32 %v7217, %v7245
    %v7248 = vmul.f32 %v7218, %v7246
    %v7249 = vlaneseq
    %v7250 = vshrl.u32 %v7249, 7
    %v7251 = vsub.s32 2, %v7250
    %v7252 = vrot.slane %v3844, %v7251
    %v7253 = vmul.f32 %v7252, %v7247
    %v7254 = vmul.f32 %v7252, %v7248
    %v7255 = vlaneseq
    %v7256 = vshrl.u32 %v7255, 7
    %v7257 = vsub.s32 2, %v7256
    %v7258 = vrot.slane %v3846, %v7257
    %v7259 = vadd.f32 %v7253, %v7258
    %v7260 = vadd.f32 %v7254, %v7258
    %s7261 = scalar_lea.vmem [#allocation14], 32
    %v7262 = vld [vmem:[%s7261] sm:$0xff]
    %v7263 = vld [vmem:[%s7261 + $0x8] sm:$0xff]
    %v7264 = vld [vmem:[%s7261 + $0x10] sm:$0xff]
    %v7265 = vld [vmem:[%s7261 + $0x18] sm:$0xff]
    %s7266 = scalar_lea.vmem [#allocation16], 1
    %v7267 = vld [vmem:[%s7266] sm:$0x1]
    %v7269 = vlaneseq
    %v7270 = vshrl.u32 %v7269, 7
    %v7271 = vsub.s32 0, %v7270
    %v7272 = vrot.slane %v7267, %v7271
    %v7275 = vsel %vm219, %v7259, 0
    %v7278 = vsel %vm219, %v7260, 0
    %7280 = vmatprep.subr.mxu0 0.0
    %7281 = vmatpush1.msra.mxu0 0.0
    %7282 = vmatprep.subr.mxu0 0.0
    %7283 = vmatpush1.msra.mxu0 0.0
    %7284 = vmatprep.subr.mxu0 0.0
    %7285 = vmatpush1.msra.mxu0 0.0
    %7286 = vmatprep.subr.mxu0 0.0
    %7287 = vmatpush1.msra.mxu0 0.0
    %7288 = vmatprep.subr.mxu0 0.0
    %7289 = vmatpush1.msra.mxu0 0.0
    %7290 = vmatprep.subr.mxu0 0.0
    %7291 = vmatpush1.msra.mxu0 0.0
    %7292 = vmatprep.subr.mxu0 0.0
    %7293 = vmatpush1.msra.mxu0 0.0
    %7294 = vmatprep.subr.mxu0 0.0
    %7295 = vmatpush1.msra.mxu0 0.0
    %7296 = vmatprep.subr.mxu0 0.0
    %7297 = vmatpush1.msra.mxu0 0.0
    %7298 = vmatprep.subr.mxu0 0.0
    %7299 = vmatpush1.msra.mxu0 0.0
    %7300 = vmatprep.subr.mxu0 0.0
    %7301 = vmatpush1.msra.mxu0 0.0
    %7302 = vmatprep.subr.mxu0 0.0
    %7303 = vmatpush1.msra.mxu0 0.0
    %7304 = vmatprep.subr.mxu0 0.0
    %7305 = vmatpush1.msra.mxu0 %v7265
    %7306 = vmatprep.subr.mxu0 0.0
    %7307 = vmatpush1.msra.mxu0 %v7264
    %7308 = vmatprep.subr.mxu0 0.0
    %7309 = vmatpush1.msra.mxu0 %v7263
    %7310 = vmatprep.subr.mxu0 0.0
    %7311 = vmatpush1.msra.mxu0 %v7262
    %7312 = vmatprep.subr.mxu0 0.0
    %7313 = vmatpush2.msra.mxu0 0.0
    %7314 = vmatprep.subr.mxu0 0.0
    %7315 = vmatpush2.msra.mxu0 0.0
    %7316 = vmatprep.subr.mxu0 0.0
    %7317 = vmatpush2.msra.mxu0 0.0
    %7318 = vmatprep.subr.mxu0 0.0
    %7319 = vmatpush2.msra.mxu0 0.0
    %7320 = vmatprep.subr.mxu0 0.0
    %7321 = vmatpush2.msra.mxu0 0.0
    %7322 = vmatprep.subr.mxu0 0.0
    %7323 = vmatpush2.msra.mxu0 0.0
    %7324 = vmatprep.subr.mxu0 0.0
    %7325 = vmatpush2.msra.mxu0 0.0
    %7326 = vmatprep.subr.mxu0 0.0
    %7327 = vmatpush2.msra.mxu0 0.0
    %7328 = vmatprep.subr.mxu0 0.0
    %7329 = vmatpush2.msra.mxu0 0.0
    %7330 = vmatprep.subr.mxu0 0.0
    %7331 = vmatpush2.msra.mxu0 0.0
    %7332 = vmatprep.subr.mxu0 0.0
    %7333 = vmatpush2.msra.mxu0 0.0
    %7334 = vmatprep.subr.mxu0 0.0
    %7335 = vmatpush2.msra.mxu0 0.0
    %7336 = vmatprep.subr.mxu0 0.0
    %7337 = vmatpush2.msra.mxu0 0.0
    %7338 = vmatprep.subr.mxu0 0.0
    %7339 = vmatpush2.msra.mxu0 0.0
    %7340 = vmatprep.subr.mxu0 0.0
    %7341 = vmatpush2.msra.mxu0 0.0
    %7342 = vmatprep.subr.mxu0 0.0
    %7343 = vmatpush2.msra.mxu0 0.0
    %7344 = vmatprep.mubr.f32.mxu0 0.0
    %7345 = vmatmul.mubr.f32.gmra.mxu0 %v7275
    %v7346 = vpop.f32.mrf.mxu0
    %v7347 = vadd.f32 %v7272, %v7346
    %v7348 = vpop.f32.mrf.mxu0
    %7349 = vmatprep.mubr.f32.mxu0 0.0
    %7350 = vmatmul.mubr.f32.gmra.mxu0 %v7278
    %v7351 = vpop.f32.mrf.mxu0
    %v7352 = vadd.f32 %v7272, %v7351
    %v7353 = vpop.f32.mrf.mxu0
    %7354 = vdwg.mxu0
    %v7355 = vmax.f32 %v7347, 0.0
    %v7356 = vmax.f32 %v7352, 0.0
    %s7357 = scalar_lea.vmem %s18, 64
    %v7358 = vld [vmem:[%s7357] sm:$0xff]
    %v7359 = vld [vmem:[%s7357 + $0x8] sm:$0xff]
    %v7360 = vld [vmem:[%s7357 + $0x10] sm:$0xff]
    %v7361 = vld [vmem:[%s7357 + $0x18] sm:$0xff]
    %v7362 = vld [vmem:[%s7357 + $0x20] sm:$0xff]
    %v7363 = vld [vmem:[%s7357 + $0x28] sm:$0xff]
    %v7364 = vld [vmem:[%s7357 + $0x30] sm:$0xff]
    %v7365 = vld [vmem:[%s7357 + $0x38] sm:$0xff]
    %v7367 = vsel %vm3750, %v7355, 0
    %v7370 = vsel %vm3750, %v7356, 0
    %7372 = vmatprep.subr.mxu0 0.0
    %7373 = vmatpush1.msra.mxu0 0.0
    %7374 = vmatprep.subr.mxu0 0.0
    %7375 = vmatpush1.msra.mxu0 0.0
    %7376 = vmatprep.subr.mxu0 0.0
    %7377 = vmatpush1.msra.mxu0 0.0
    %7378 = vmatprep.subr.mxu0 0.0
    %7379 = vmatpush1.msra.mxu0 0.0
    %7380 = vmatprep.subr.mxu0 0.0
    %7381 = vmatpush1.msra.mxu0 0.0
    %7382 = vmatprep.subr.mxu0 0.0
    %7383 = vmatpush1.msra.mxu0 0.0
    %7384 = vmatprep.subr.mxu0 0.0
    %7385 = vmatpush1.msra.mxu0 0.0
    %7386 = vmatprep.subr.mxu0 0.0
    %7387 = vmatpush1.msra.mxu0 0.0
    %7388 = vmatprep.subr.mxu0 0.0
    %7389 = vmatpush1.msra.mxu0 %v7365
    %7390 = vmatprep.subr.mxu0 0.0
    %7391 = vmatpush1.msra.mxu0 %v7364
    %7392 = vmatprep.subr.mxu0 0.0
    %7393 = vmatpush1.msra.mxu0 %v7363
    %7394 = vmatprep.subr.mxu0 0.0
    %7395 = vmatpush1.msra.mxu0 %v7362
    %7396 = vmatprep.subr.mxu0 0.0
    %7397 = vmatpush1.msra.mxu0 %v7361
    %7398 = vmatprep.subr.mxu0 0.0
    %7399 = vmatpush1.msra.mxu0 %v7360
    %7400 = vmatprep.subr.mxu0 0.0
    %7401 = vmatpush1.msra.mxu0 %v7359
    %7402 = vmatprep.subr.mxu0 0.0
    %7403 = vmatpush1.msra.mxu0 %v7358
    %7404 = vmatprep.subr.mxu0 0.0
    %7405 = vmatpush2.msra.mxu0 0.0
    %7406 = vmatprep.subr.mxu0 0.0
    %7407 = vmatpush2.msra.mxu0 0.0
    %7408 = vmatprep.subr.mxu0 0.0
    %7409 = vmatpush2.msra.mxu0 0.0
    %7410 = vmatprep.subr.mxu0 0.0
    %7411 = vmatpush2.msra.mxu0 0.0
    %7412 = vmatprep.subr.mxu0 0.0
    %7413 = vmatpush2.msra.mxu0 0.0
    %7414 = vmatprep.subr.mxu0 0.0
    %7415 = vmatpush2.msra.mxu0 0.0
    %7416 = vmatprep.subr.mxu0 0.0
    %7417 = vmatpush2.msra.mxu0 0.0
    %7418 = vmatprep.subr.mxu0 0.0
    %7419 = vmatpush2.msra.mxu0 0.0
    %7420 = vmatprep.subr.mxu0 0.0
    %7421 = vmatpush2.msra.mxu0 0.0
    %7422 = vmatprep.subr.mxu0 0.0
    %7423 = vmatpush2.msra.mxu0 0.0
    %7424 = vmatprep.subr.mxu0 0.0
    %7425 = vmatpush2.msra.mxu0 0.0
    %7426 = vmatprep.subr.mxu0 0.0
    %7427 = vmatpush2.msra.mxu0 0.0
    %7428 = vmatprep.subr.mxu0 0.0
    %7429 = vmatpush2.msra.mxu0 0.0
    %7430 = vmatprep.subr.mxu0 0.0
    %7431 = vmatpush2.msra.mxu0 0.0
    %7432 = vmatprep.subr.mxu0 0.0
    %7433 = vmatpush2.msra.mxu0 0.0
    %7434 = vmatprep.subr.mxu0 0.0
    %7435 = vmatpush2.msra.mxu0 0.0
    %7436 = vmatprep.mubr.f32.mxu0 0.0
    %7437 = vmatmul.mubr.f32.gmra.mxu0 %v7367
    %v7438 = vpop.f32.mrf.mxu0
    %v7439 = vadd.f32 0.0, %v7438
    %v7440 = vpop.f32.mrf.mxu0
    %7441 = vmatprep.mubr.f32.mxu0 0.0
    %7442 = vmatmul.mubr.f32.gmra.mxu0 %v7370
    %v7443 = vpop.f32.mrf.mxu0
    %v7444 = vadd.f32 0.0, %v7443
    %v7445 = vpop.f32.mrf.mxu0
    %7446 = vdwg.mxu0
    %v7447 = vadd.f32 %v7207, %v7439
    %v7448 = vadd.f32 %v7208, %v7444
    %s7449 = scalar_lea.vmem [#allocation17], 1
    %v7450 = vld [vmem:[%s7449] sm:$0x1]
    %v7452 = vlaneseq
    %v7453 = vshrl.u32 %v7452, 7
    %v7454 = vsub.s32 0, %v7453
    %v7455 = vrot.slane %v7450, %v7454
    %v7457 = vadd.f32 %v7447, %v7455
    %v7458 = vadd.f32 %v7448, %v7455
    %v7459 = vld [vmem:[%s20] sm:$0x1]
    %v7460 = vld [vmem:[%s21] sm:$0x1]
    %v7461 = vsel %vm219, %v7457, 0.0
    %7462 = vadd.xlane.f32.xlu0 %v7461
    %v7463 = vpop.xlane.xlu0 %7462
    %v7464 = vsel %vm219, %v7458, 0.0
    %7465 = vadd.xlane.f32.xlu0 %v7464
    %v7466 = vpop.xlane.xlu0 %7465
    %v7467 = vmul.f32 %v7463, %v226
    %v7468 = vmul.f32 %v7466, %v226
    %v7469 = vsub.f32 %v7457, %v7467
    %v7470 = vsub.f32 %v7458, %v7468
    %v7471 = vmul.f32 %v7469, %v7469
    %v7472 = vmul.f32 %v7470, %v7470
    %v7473 = vsel %vm219, %v7471, 0.0
    %7474 = vadd.xlane.f32.xlu0 %v7473
    %v7475 = vpop.xlane.xlu0 %7474
    %v7476 = vsel %vm219, %v7472, 0.0
    %7477 = vadd.xlane.f32.xlu0 %v7476
    %v7478 = vpop.xlane.xlu0 %7477
    %v7479 = vmul.f32 %v7475, 0.032258064
    %v7480 = vmul.f32 %v7478, 0.032258064
    %v7481 = vrsqrt.pop %v7479
    %v7482 = vmul.f32 %v7479, %v7481
    %vm7483 = vcmp.eq.f32.partialorder %v7479, inf
    %v7484 = vsel %vm7483, %v7479, %v7482
    %vm7485 = vcmp.eq.f32.partialorder %v7479, 0.0
    %v7486 = vand.u32 %v7479, 2147483648
    %v7487 = vsel %vm7485, %v7486, %v7484
    %v7488 = vrsqrt.pop %v7480
    %v7489 = vmul.f32 %v7480, %v7488
    %vm7490 = vcmp.eq.f32.partialorder %v7480, inf
    %v7491 = vsel %vm7490, %v7480, %v7489
    %vm7492 = vcmp.eq.f32.partialorder %v7480, 0.0
    %v7493 = vand.u32 %v7480, 2147483648
    %v7494 = vsel %vm7492, %v7493, %v7491
    %v7495 = vadd.f32 %v7487, 1e-06
    %v7496 = vadd.f32 %v7494, 1e-06
    %v7497 = vrcp.pop %v7495
    %v7498 = vrcp.pop %v7496
    %v7499 = vmul.f32 %v7469, %v7497
    %v7500 = vmul.f32 %v7470, %v7498
    %v7502 = vlaneseq
    %v7503 = vshrl.u32 %v7502, 7
    %v7504 = vsub.s32 0, %v7503
    %v7505 = vrot.slane %v7459, %v7504
    %v7507 = vmul.f32 %v7505, %v7499
    %v7508 = vmul.f32 %v7505, %v7500
    %v7510 = vlaneseq
    %v7511 = vshrl.u32 %v7510, 7
    %v7512 = vsub.s32 0, %v7511
    %v7513 = vrot.slane %v7460, %v7512
    %v7515 = vadd.f32 %v7507, %v7513
    %v7516 = vadd.f32 %v7508, %v7513
    %7517 = vst.msk [vmem:[#allocation19] sm:$0xff] %vm219, %v7515
    %7518 = vst.msk [vmem:[#allocation19 + $0x8] sm:$0xff] %vm219, %v7516
    // Predicated region
    $region130: #{tpu_custom_call.1} parent=1 // pred_check
      _
    $region131: #{tpu_custom_call.1} parent=1 // pred_check_branch
      %7520 = sbr.rel (0) target = $region133
    $region132: #{tpu_custom_call.1} parent=1 // pred_region
      %s7522 = ssub.s32 256, 256
      %7523 = vsyncadd [#allocation4], %s7522
      %s7524 = sshll.u32 [#allocation19], 4
      %s7525 = int_to_ptr.vmem [resolvable:$true] %s7524
      %7530 = dma.vmem_to_hbm [thread:$0]  %s7525, 256, %s22, [#allocation4], 128, 128, 8
    $region133: #{tpu_custom_call.1} parent=1 // pred_fallthru
      _
    // Predicated region
    $region134: #{tpu_custom_call.1} parent=1 // pred_check
      _
    $region135: #{tpu_custom_call.1} parent=1 // pred_check_branch
      %7532 = sbr.rel (0) target = $region137
    $region136: #{tpu_custom_call.1} parent=1 // pred_region
      %7533 = dma.done [#allocation4], 256
    $region137: #{tpu_custom_call.1} parent=1 // pred_fallthru
      _
    %7534 = vsyncpa [#allocation3], 1
    %7535 = vsyncpa [#allocation6], 1
    %7536 = vsyncpa [#allocation9], 1
    %7537 = vsyncpa [#allocation12], 1
    %7538 = vsyncpa [#allocation15], 1
    %7539 = vsyncpa [#allocation18], 1
    %7540 = vsyncpa [#allocation4], 1

</llo_original>
